<compile_context>
chip_gen: v6e
topology: v6e:2x2x1
jax: 0.10.0
libtpu: 0.0.40
codegen_flags: <defaults>
</compile_context>

<pallas_src>
import jax
import jax.numpy as jnp
from jax.experimental import pallas as pl
from jax.experimental.pallas import tpu as pltpu


GROUP = 8                       # pooled pixels per matmul row -> 8*16 = 128 output lanes
NLANE = 4 * GROUP * 16          # 512 matmul output lanes (4 block pixels x 8 px x 16 ch)
K_FC1 = 50 * 50 * 16            # 40000 logical fc1 input features
M2_PAD = 2560                   # conv2 pooled pixels padded 2500 -> 2560 (5 blocks of 512)
KP_FC1 = M2_PAD * 16            # 40960 padded fc1 K  (== padded conv2 feature count)
TK = 8192                       # fc1 K tile -> 5 grid steps


# ----------------------------------------------------------------------------
# Fused conv 3x3 (pad=1) + ReLU + 2x2 max-pool, 8 pooled pixels per matmul row
#
#   xq : (B, G, K)        bf16  flattened 4x4 padded-input patches, 8 px / row
#   w  : (K, 512)         bf16  block-diagonal grouped conv weight
#   out: (B, G, 128)            pooled activation, lane-dense (8 px x 16 ch)
# ----------------------------------------------------------------------------
def _conv_relu_pool_kernel(xq_ref, w_ref, b_ref, o_ref):
    # xq_ref: (1, TG, K), w_ref: (K, 512), b_ref: (1, 512), o_ref: (1, TG, 128)
    z = jnp.dot(xq_ref[0], w_ref[...], preferred_element_type=jnp.float32)
    z = jnp.maximum(z + b_ref[...], 0.0)            # relu(conv) for the 4 block pixels
    # 2x2 max-pool == max over the four 128-lane groups (lane-aligned slices)
    p = jnp.maximum(jnp.maximum(z[:, 0:128], z[:, 128:256]),
                    jnp.maximum(z[:, 256:384], z[:, 384:512]))
    o_ref[0] = p.astype(o_ref.dtype)                # dense (TG, 128) store


def conv3x3_relu_pool(xq_g, w_g, b_g, *, block_groups, out_dtype):
    B, G, K = xq_g.shape
    assert G % block_groups == 0 and block_groups % 8 == 0
    assert w_g.shape == (K, NLANE)
    nblk = G // block_groups
    return pl.pallas_call(
        _conv_relu_pool_kernel,
        out_shape=jax.ShapeDtypeStruct((B, G, 128), out_dtype),
        grid_spec=pltpu.PrefetchScalarGridSpec(
            num_scalar_prefetch=0,
            grid=(B, nblk),
            in_specs=[
                pl.BlockSpec((1, block_groups, K), lambda b, i: (b, i, 0)),
                pl.BlockSpec((K, NLANE), lambda b, i: (0, 0)),
                pl.BlockSpec((1, NLANE), lambda b, i: (0, 0)),
            ],
            out_specs=pl.BlockSpec((1, block_groups, 128), lambda b, i: (b, i, 0)),
        ),
        compiler_params=pltpu.CompilerParams(
            dimension_semantics=("parallel", "parallel")),
    )(xq_g, w_g, b_g)


def pack_conv_input(x, m_pad):
    """NHWC (B, H, W, Cin) -> grouped patch matrix (B, m_pad/8, 8*16*Cin).

    Pooled pixel m = hq*(W/2) + wq owns the flattened 4x4 zero-padded input
    patch feeding its 2x2 conv-output block; 8 consecutive pixels share one
    matmul row.  Pure XLA reshape/transpose/concat glue (cast to bf16 first).
    TODO(synk): fold this packing into the conv kernel via halo-row DMA.
    """
    B, H, W, Cin = x.shape
    H2, W2 = H // 2, W // 2
    xp = jnp.pad(x, ((0, 0), (1, 1), (1, 1), (0, 0)))              # (B, H+2, W+2, Cin)
    xb = xp.reshape(B, H2 + 1, 2, W2 + 1, 2, Cin)
    xb = xb.transpose(0, 1, 3, 2, 4, 5).reshape(B, H2 + 1, W2 + 1, 4 * Cin)
    xq = jnp.concatenate([
        xb[:, 0:H2,     0:W2,     :],                              # (bi, bj) = (0, 0)
        xb[:, 0:H2,     1:W2 + 1, :],                              # (0, 1)
        xb[:, 1:H2 + 1, 0:W2,     :],                              # (1, 0)
        xb[:, 1:H2 + 1, 1:W2 + 1, :],                              # (1, 1)
    ], axis=-1).reshape(B, H2 * W2, 16 * Cin)
    xq = jnp.pad(xq, ((0, 0), (0, m_pad - H2 * W2), (0, 0)))       # garbage rows -> fine
    return xq.reshape(B, m_pad // GROUP, GROUP * 16 * Cin)         # free reshape


def pack_conv_weight(wc, bc, group=GROUP):
    """PyTorch OIHW (Cout, Cin, 3, 3) -> grouped fused conv+pool matmul weight.

    Per-pixel matrix w4 (16*Cin, 4*Cout) is expanded block-diagonally over a
    group of 8 pooled pixels so the matmul output is 512 lanes and the pooled
    store is 128 lanes dense.  Done once at init.
    """
    Cout, Cin = wc.shape[0], wc.shape[1]
    K1 = 16 * Cin
    w4 = jnp.zeros((K1, 4 * Cout), jnp.float32)
    for bi in range(2):
        for bj in range(2):
            for r2 in range(2):
                for c2 in range(2):
                    dr, dc = 2 * bi + r2, 2 * bj + c2
                    blk = (bi * 2 + bj) * 4 + (r2 * 2 + c2)
                    for dh in range(2):
                        for dw in range(2):
                            kh, kw = dr - dh, dc - dw
                            if 0 <= kh <= 2 and 0 <= kw <= 2:
                                j = dh * 2 + dw
                                w4 = w4.at[
                                    blk * Cin:(blk + 1) * Cin,
                                    j * Cout:(j + 1) * Cout,
                                ].set(jnp.transpose(wc[:, :, kh, kw]))
    # Block-diagonal group expansion:
    #   wg[p*K1 + t, j*group*Cout + q*Cout + c] = (p == q) * w4[t, j*Cout + c]
    w4r = w4.reshape(K1, 4, Cout)
    eye = jnp.eye(group, dtype=jnp.float32)
    wg = jnp.einsum("pq,tjc->ptjqc", eye, w4r).reshape(group * K1, 4 * group * Cout)
    bg = jnp.tile(bc.astype(jnp.float32), 4 * group).reshape(1, 4 * group * Cout)
    return wg.astype(jnp.bfloat16), bg


# ----------------------------------------------------------------------------
# FC head: relu(fc1) -> relu(fc2) -> fc3, fused in one kernel (K-tiled fc1)
# ----------------------------------------------------------------------------
def _fc_head_kernel(x_ref, w1_ref, b1_ref, w2_ref, b2_ref, w3_ref, b3_ref,
                    o_ref, acc_ref):
    k = pl.program_id(0)

    @pl.when(k == 0)
    def _():
        acc_ref[...] = jnp.zeros_like(acc_ref)

    acc_ref[...] += jnp.dot(x_ref[...], w1_ref[...],
                            preferred_element_type=jnp.float32)

    @pl.when(k == pl.num_programs(0) - 1)
    def _():
        h1 = jnp.maximum(acc_ref[...] + b1_ref[...], 0.0)
        h2 = jnp.maximum(
            jnp.dot(h1, w2_ref[...], preferred_element_type=jnp.float32)
            + b2_ref[...], 0.0)
        y = jnp.dot(h2, w3_ref[...], preferred_element_type=jnp.float32) + b3_ref[...]
        o_ref[...] = y.astype(o_ref.dtype)


def fc_head(flat, kp):
    """flat: (B, KP_FC1) bf16 NHWC-order features (zero-weight padded tail) -> (B, 2)."""
    B, Kp = flat.shape
    nk = Kp // TK
    D1 = kp["fc1_w"].shape[1]      # 128
    D2 = kp["fc2_w"].shape[1]      # 64
    NOUT = kp["fc3_w"].shape[1]    # 2
    return pl.pallas_call(
        _fc_head_kernel,
        out_shape=jax.ShapeDtypeStruct((B, NOUT), jnp.float32),
        grid_spec=pltpu.PrefetchScalarGridSpec(
            num_scalar_prefetch=0,
            grid=(nk,),
            in_specs=[
                pl.BlockSpec((B, TK), lambda k: (0, k)),
                pl.BlockSpec((TK, D1), lambda k: (k, 0)),
                pl.BlockSpec((1, D1), lambda k: (0, 0)),
                pl.BlockSpec((D1, D2), lambda k: (0, 0)),
                pl.BlockSpec((1, D2), lambda k: (0, 0)),
                pl.BlockSpec((D2, NOUT), lambda k: (0, 0)),
                pl.BlockSpec((1, NOUT), lambda k: (0, 0)),
            ],
            out_specs=pl.BlockSpec((B, NOUT), lambda k: (0, 0)),
            scratch_shapes=[pltpu.VMEM((B, D1), jnp.float32)],
        ),
        compiler_params=pltpu.CompilerParams(dimension_semantics=("arbitrary",)),
    )(flat, kp["fc1_w"], kp["fc1_b"], kp["fc2_w"], kp["fc2_b"],
      kp["fc3_w"], kp["fc3_b"])


# ----------------------------------------------------------------------------
# Parameter handling (PyTorch layout -> kernel layout, one-time)
# ----------------------------------------------------------------------------
def init_params(key):
    """Random params in PyTorch layout (Conv2d: OIHW, Linear: (out, in))."""
    ks = jax.random.split(key, 10)

    def winit(k, shape, fan_in):
        return jax.random.normal(k, shape, jnp.float32) / jnp.sqrt(float(fan_in))

    return {
        "conv1_w": winit(ks[0], (16, 3, 3, 3), 3 * 3 * 3),
        "conv1_b": winit(ks[1], (16,), 3 * 3 * 3),
        "conv2_w": winit(ks[2], (16, 16, 3, 3), 3 * 3 * 16),
        "conv2_b": winit(ks[3], (16,), 3 * 3 * 16),
        "fc1_w": winit(ks[4], (128, K_FC1), K_FC1),
        "fc1_b": winit(ks[5], (128,), K_FC1),
        "fc2_w": winit(ks[6], (64, 128), 128),
        "fc2_b": winit(ks[7], (64,), 128),
        "fc3_w": winit(ks[8], (2, 64), 64),
        "fc3_b": winit(ks[9], (2,), 64),
    }


def prepare_params(p):
    """One-time repacking / bf16 casting (hoisted out of the per-forward path)."""
    wg1, bg1 = pack_conv_weight(p["conv1_w"], p["conv1_b"])
    wg2, bg2 = pack_conv_weight(p["conv2_w"], p["conv2_b"])
    # fc1: (out, in) with `in` indexed in NCHW flatten order (c, h, w).
    # Transpose to (in, out), permute rows to NHWC flatten order (h, w, c),
    # zero-pad K to KP_FC1 (covers the 60 garbage conv2 pixels), cast to bf16.
    w1 = jnp.transpose(p["fc1_w"])                                   # (40000, 128)
    w1 = w1.reshape(16, 50, 50, 128).transpose(1, 2, 0, 3).reshape(K_FC1, 128)
    w1 = jnp.pad(w1, ((0, KP_FC1 - K_FC1), (0, 0))).astype(jnp.bfloat16)
    return {
        "conv1_w": wg1, "conv1_b": bg1,
        "conv2_w": wg2, "conv2_b": bg2,
        "fc1_w": w1, "fc1_b": p["fc1_b"].reshape(1, -1),
        "fc2_w": jnp.transpose(p["fc2_w"]), "fc2_b": p["fc2_b"].reshape(1, -1),
        "fc3_w": jnp.transpose(p["fc3_w"]), "fc3_b": p["fc3_b"].reshape(1, -1),
    }


# ----------------------------------------------------------------------------
# Forward passes
# ----------------------------------------------------------------------------
def net_forward(x_nchw, kp):
    """Pallas forward.  x_nchw: (B, 3, 200, 200) -> (B, 2)."""
    B = x_nchw.shape[0]
    x = jnp.transpose(x_nchw, (0, 2, 3, 1)).astype(jnp.bfloat16)    # NCHW -> NHWC bf16
    xq1 = pack_conv_input(x, m_pad=10240)                           # (B, 1280, 384)
    y1 = conv3x3_relu_pool(xq1, kp["conv1_w"], kp["conv1_b"],
                           block_groups=256, out_dtype=jnp.bfloat16)  # (B, 1280, 128)
    y1 = y1[:, :(100 * 100) // GROUP, :].reshape(B, 100, 100, 16)   # drop pad groups
    xq2 = pack_conv_input(y1, m_pad=M2_PAD)                         # (B, 320, 2048)
    y2 = conv3x3_relu_pool(xq2, kp["conv2_w"], kp["conv2_b"],
                           block_groups=64, out_dtype=jnp.bfloat16)   # (B, 320, 128)
    # NHWC flatten; features 40000..40959 come from padded pixels and hit the
    # zero rows of the padded fc1 weight, so no per-forward activation pad.
    flat = y2.reshape(B, KP_FC1)
    return fc_head(flat, kp)


def net_forward_reference(x_nchw, p):
    """Pure-XLA f32 reference matching the PyTorch forward (for validation)."""
    prec = jax.lax.Precision.HIGHEST

    def conv(z, w, b):
        z = jax.lax.conv_general_dilated(
            z, w, window_strides=(1, 1), padding=((1, 1), (1, 1)),
            dimension_numbers=("NCHW", "OIHW", "NCHW"), precision=prec)
        return jax.nn.relu(z + b[None, :, None, None])

    def pool(z):
        return jax.lax.reduce_window(z, -jnp.inf, jax.lax.max,
                                     (1, 1, 2, 2), (1, 1, 2, 2), "VALID")

    z = pool(conv(x_nchw, p["conv1_w"], p["conv1_b"]))
    z = pool(conv(z, p["conv2_w"], p["conv2_b"]))
    flat = z.reshape(z.shape[0], -1)                                # NCHW flatten
    h1 = jax.nn.relu(jnp.dot(flat, p["fc1_w"].T, precision=prec) + p["fc1_b"])
    h2 = jax.nn.relu(jnp.dot(h1, p["fc2_w"].T, precision=prec) + p["fc2_b"])
    return jnp.dot(h2, p["fc3_w"].T, precision=prec) + p["fc3_b"]


if __name__ == "__main__":
    key = jax.random.PRNGKey(0)
    pkey, xkey = jax.random.split(key)
    params = init_params(pkey)           # PyTorch-layout params
    kparams = prepare_params(params)     # one-time kernel-layout repack (hoisted)

    # fc1 expects 50*50*16 features => input spatial must be 200x200 (two 2x pools)
    x = jax.random.normal(xkey, (2, 3, 200, 200), jnp.float32)

    y = jax.jit(net_forward)(x, kparams)
    y = jax.block_until_ready(y)
    assert y.shape == (2, 2), y.shape
    assert bool(jnp.all(jnp.isfinite(y)))

    # numerical check against the pure-XLA HIGHEST-precision f32 reference.
    # Tolerance covers bf16 storage of conv/fc1 weights and conv activations
    # (MXU default-precision matmul is bf16-equivalent anyway).
    y_ref = jax.block_until_ready(jax.jit(net_forward_reference)(x, params))
    max_err = float(jnp.max(jnp.abs(y - y_ref)))
    assert max_err < 3e-2, f"mismatch vs reference: max abs err {max_err}"

    print("KERNEL_OK")
</pallas_src>

<mosaic_0001>
module attributes {stable_mosaic.version = 11 : i64} {
  func.func @_conv_relu_pool_kernel(%arg0: i32, %arg1: i32, %arg2: memref<1x256x384xbf16, #tpu.memory_space<vmem>>, %arg3: memref<384x512xbf16, #tpu.memory_space<vmem>>, %arg4: memref<1x512xf32, #tpu.memory_space<vmem>>, %arg5: memref<1x256x128xbf16, #tpu.memory_space<vmem>>) attributes {dimension_semantics = [#tpu.dimension_semantics<parallel>, #tpu.dimension_semantics<parallel>], iteration_bounds = array<i64: 2, 5>, scalar_prefetch = 0 : i64, scratch_operands = 0 : i64, tpu.core_type = #tpu.core_type<tc>, window_params = [{transform_indices = @transform_0, window_bounds = array<i64: 1, 256, 384>}, {pipeline_mode = #tpu.pipeline_mode<synchronous>, transform_indices = @transform_1, window_bounds = array<i64: 384, 512>}, {pipeline_mode = #tpu.pipeline_mode<synchronous>, transform_indices = @transform_2, window_bounds = array<i64: 1, 512>}, {transform_indices = @transform_3, window_bounds = array<i64: 1, 256, 128>}]} {
    %c0 = arith.constant 0 : index
    %c0_0 = arith.constant 0 : index
    %c0_1 = arith.constant 0 : index
    %0 = vector.load %arg2[%c0, %c0_0, %c0_1] : memref<1x256x384xbf16, #tpu.memory_space<vmem>>, vector<1x256x384xbf16>
    %1 = vector.shape_cast %0 : vector<1x256x384xbf16> to vector<256x384xbf16>
    %c0_2 = arith.constant 0 : index
    %c0_3 = arith.constant 0 : index
    %2 = vector.load %arg3[%c0_2, %c0_3] : memref<384x512xbf16, #tpu.memory_space<vmem>>, vector<384x512xbf16>
    %cst = arith.constant dense<0.000000e+00> : vector<256x512xf32>
    %3 = tpu.matmul %1, %2, %cst {dimension_numbers = #tpu.dot_dimension_numbers<[1], [0], [0], [1], [0, 0, 1, 1], [], []>} : vector<256x384xbf16>, vector<384x512xbf16>, vector<256x512xf32> -> vector<256x512xf32>
    %c0_4 = arith.constant 0 : index
    %c0_5 = arith.constant 0 : index
    %4 = vector.load %arg4[%c0_4, %c0_5] : memref<1x512xf32, #tpu.memory_space<vmem>>, vector<1x512xf32>
    %5 = vector.broadcast %4 : vector<1x512xf32> to vector<256x512xf32>
    %6 = arith.addf %3, %5 : vector<256x512xf32>
    %cst_6 = arith.constant 0.000000e+00 : f32
    %7 = vector.broadcast %cst_6 : f32 to vector<256x512xf32>
    %8 = arith.maximumf %6, %7 : vector<256x512xf32>
    %9 = vector.extract_strided_slice %8 {offsets = [0, 0], sizes = [256, 128], strides = [1, 1]} : vector<256x512xf32> to vector<256x128xf32>
    %10 = vector.extract_strided_slice %8 {offsets = [0, 128], sizes = [256, 128], strides = [1, 1]} : vector<256x512xf32> to vector<256x128xf32>
    %11 = arith.maximumf %9, %10 : vector<256x128xf32>
    %12 = vector.extract_strided_slice %8 {offsets = [0, 256], sizes = [256, 128], strides = [1, 1]} : vector<256x512xf32> to vector<256x128xf32>
    %13 = vector.extract_strided_slice %8 {offsets = [0, 384], sizes = [256, 128], strides = [1, 1]} : vector<256x512xf32> to vector<256x128xf32>
    %14 = arith.maximumf %12, %13 : vector<256x128xf32>
    %15 = arith.maximumf %11, %14 : vector<256x128xf32>
    %16 = arith.truncf %15 : vector<256x128xf32> to vector<256x128xbf16>
    %c0_7 = arith.constant 0 : index
    %c0_8 = arith.constant 0 : index
    %c0_9 = arith.constant 0 : index
    %17 = vector.load %arg5[%c0_7, %c0_8, %c0_9] : memref<1x256x128xbf16, #tpu.memory_space<vmem>>, vector<1x256x128xbf16>
    %18 = vector.shape_cast %17 : vector<1x256x128xbf16> to vector<256x128xbf16>
    %19 = vector.shape_cast %16 : vector<256x128xbf16> to vector<1x256x128xbf16>
    tpu.vector_store %arg5[%c0_7, %c0_8, %c0_9], %19 {strides = array<i32>} : memref<1x256x128xbf16, #tpu.memory_space<vmem>>, vector<1x256x128xbf16>,
    return
  }
  func.func @transform_0(%arg0: i32, %arg1: i32) -> (i32, i32, i32) {
    %c0_i32 = arith.constant 0 : i32
    %c0_i32_0 = arith.constant 0 : i32
    return %arg0, %arg1, %c0_i32 : i32, i32, i32
  }
  func.func @transform_1(%arg0: i32, %arg1: i32) -> (i32, i32) {
    %c0_i32 = arith.constant 0 : i32
    %c0_i32_0 = arith.constant 0 : i32
    %c0_i32_1 = arith.constant 0 : i32
    return %c0_i32, %c0_i32_0 : i32, i32
  }
  func.func @transform_2(%arg0: i32, %arg1: i32) -> (i32, i32) {
    %c0_i32 = arith.constant 0 : i32
    %c0_i32_0 = arith.constant 0 : i32
    %c0_i32_1 = arith.constant 0 : i32
    return %c0_i32, %c0_i32_0 : i32, i32
  }
  func.func @transform_3(%arg0: i32, %arg1: i32) -> (i32, i32, i32) {
    %c0_i32 = arith.constant 0 : i32
    %c0_i32_0 = arith.constant 0 : i32
    return %arg0, %arg1, %c0_i32 : i32, i32, i32
  }
}

module attributes {stable_mosaic.version = 11 : i64} {
  func.func @_conv_relu_pool_kernel(%arg0: i32, %arg1: i32, %arg2: memref<1x64x2048xbf16, #tpu.memory_space<vmem>>, %arg3: memref<2048x512xbf16, #tpu.memory_space<vmem>>, %arg4: memref<1x512xf32, #tpu.memory_space<vmem>>, %arg5: memref<1x64x128xbf16, #tpu.memory_space<vmem>>) attributes {dimension_semantics = [#tpu.dimension_semantics<parallel>, #tpu.dimension_semantics<parallel>], iteration_bounds = array<i64: 2, 5>, scalar_prefetch = 0 : i64, scratch_operands = 0 : i64, tpu.core_type = #tpu.core_type<tc>, window_params = [{transform_indices = @transform_0, window_bounds = array<i64: 1, 64, 2048>}, {pipeline_mode = #tpu.pipeline_mode<synchronous>, transform_indices = @transform_1, window_bounds = array<i64: 2048, 512>}, {pipeline_mode = #tpu.pipeline_mode<synchronous>, transform_indices = @transform_2, window_bounds = array<i64: 1, 512>}, {transform_indices = @transform_3, window_bounds = array<i64: 1, 64, 128>}]} {
    %c0 = arith.constant 0 : index
    %c0_0 = arith.constant 0 : index
    %c0_1 = arith.constant 0 : index
    %0 = vector.load %arg2[%c0, %c0_0, %c0_1] : memref<1x64x2048xbf16, #tpu.memory_space<vmem>>, vector<1x64x2048xbf16>
    %1 = vector.shape_cast %0 : vector<1x64x2048xbf16> to vector<64x2048xbf16>
    %c0_2 = arith.constant 0 : index
    %c0_3 = arith.constant 0 : index
    %2 = vector.load %arg3[%c0_2, %c0_3] : memref<2048x512xbf16, #tpu.memory_space<vmem>>, vector<2048x512xbf16>
    %cst = arith.constant dense<0.000000e+00> : vector<64x512xf32>
    %3 = tpu.matmul %1, %2, %cst {dimension_numbers = #tpu.dot_dimension_numbers<[1], [0], [0], [1], [0, 0, 1, 1], [], []>} : vector<64x2048xbf16>, vector<2048x512xbf16>, vector<64x512xf32> -> vector<64x512xf32>
    %c0_4 = arith.constant 0 : index
    %c0_5 = arith.constant 0 : index
    %4 = vector.load %arg4[%c0_4, %c0_5] : memref<1x512xf32, #tpu.memory_space<vmem>>, vector<1x512xf32>
    %5 = vector.broadcast %4 : vector<1x512xf32> to vector<64x512xf32>
    %6 = arith.addf %3, %5 : vector<64x512xf32>
    %cst_6 = arith.constant 0.000000e+00 : f32
    %7 = vector.broadcast %cst_6 : f32 to vector<64x512xf32>
    %8 = arith.maximumf %6, %7 : vector<64x512xf32>
    %9 = vector.extract_strided_slice %8 {offsets = [0, 0], sizes = [64, 128], strides = [1, 1]} : vector<64x512xf32> to vector<64x128xf32>
    %10 = vector.extract_strided_slice %8 {offsets = [0, 128], sizes = [64, 128], strides = [1, 1]} : vector<64x512xf32> to vector<64x128xf32>
    %11 = arith.maximumf %9, %10 : vector<64x128xf32>
    %12 = vector.extract_strided_slice %8 {offsets = [0, 256], sizes = [64, 128], strides = [1, 1]} : vector<64x512xf32> to vector<64x128xf32>
    %13 = vector.extract_strided_slice %8 {offsets = [0, 384], sizes = [64, 128], strides = [1, 1]} : vector<64x512xf32> to vector<64x128xf32>
    %14 = arith.maximumf %12, %13 : vector<64x128xf32>
    %15 = arith.maximumf %11, %14 : vector<64x128xf32>
    %16 = arith.truncf %15 : vector<64x128xf32> to vector<64x128xbf16>
    %c0_7 = arith.constant 0 : index
    %c0_8 = arith.constant 0 : index
    %c0_9 = arith.constant 0 : index
    %17 = vector.load %arg5[%c0_7, %c0_8, %c0_9] : memref<1x64x128xbf16, #tpu.memory_space<vmem>>, vector<1x64x128xbf16>
    %18 = vector.shape_cast %17 : vector<1x64x128xbf16> to vector<64x128xbf16>
    %19 = vector.shape_cast %16 : vector<64x128xbf16> to vector<1x64x128xbf16>
    tpu.vector_store %arg5[%c0_7, %c0_8, %c0_9], %19 {strides = array<i32>} : memref<1x64x128xbf16, #tpu.memory_space<vmem>>, vector<1x64x128xbf16>,
    return
  }
  func.func @transform_0(%arg0: i32, %arg1: i32) -> (i32, i32, i32) {
    %c0_i32 = arith.constant 0 : i32
    %c0_i32_0 = arith.constant 0 : i32
    return %arg0, %arg1, %c0_i32 : i32, i32, i32
  }
  func.func @transform_1(%arg0: i32, %arg1: i32) -> (i32, i32) {
    %c0_i32 = arith.constant 0 : i32
    %c0_i32_0 = arith.constant 0 : i32
    %c0_i32_1 = arith.constant 0 : i32
    return %c0_i32, %c0_i32_0 : i32, i32
  }
  func.func @transform_2(%arg0: i32, %arg1: i32) -> (i32, i32) {
    %c0_i32 = arith.constant 0 : i32
    %c0_i32_0 = arith.constant 0 : i32
    %c0_i32_1 = arith.constant 0 : i32
    return %c0_i32, %c0_i32_0 : i32, i32
  }
  func.func @transform_3(%arg0: i32, %arg1: i32) -> (i32, i32, i32) {
    %c0_i32 = arith.constant 0 : i32
    %c0_i32_0 = arith.constant 0 : i32
    return %arg0, %arg1, %c0_i32 : i32, i32, i32
  }
}

module attributes {stable_mosaic.version = 11 : i64} {
  func.func @_fc_head_kernel(%arg0: i32, %arg1: memref<2x8192xbf16, #tpu.memory_space<vmem>>, %arg2: memref<8192x128xbf16, #tpu.memory_space<vmem>>, %arg3: memref<1x128xf32, #tpu.memory_space<vmem>>, %arg4: memref<128x64xf32, #tpu.memory_space<vmem>>, %arg5: memref<1x64xf32, #tpu.memory_space<vmem>>, %arg6: memref<64x2xf32, #tpu.memory_space<vmem>>, %arg7: memref<1x2xf32, #tpu.memory_space<vmem>>, %arg8: memref<2x2xf32, #tpu.memory_space<vmem>>, %arg9: memref<2x128xf32, #tpu.memory_space<vmem>>) attributes {dimension_semantics = [#tpu.dimension_semantics<arbitrary>], iteration_bounds = array<i64: 5>, scalar_prefetch = 0 : i64, scratch_operands = 1 : i64, tpu.core_type = #tpu.core_type<tc>, window_params = [{transform_indices = @transform_0, window_bounds = array<i64: 2, 8192>}, {transform_indices = @transform_1, window_bounds = array<i64: 8192, 128>}, {pipeline_mode = #tpu.pipeline_mode<synchronous>, transform_indices = @transform_2, window_bounds = array<i64: 1, 128>}, {pipeline_mode = #tpu.pipeline_mode<synchronous>, transform_indices = @transform_3, window_bounds = array<i64: 128, 64>}, {pipeline_mode = #tpu.pipeline_mode<synchronous>, transform_indices = @transform_4, window_bounds = array<i64: 1, 64>}, {pipeline_mode = #tpu.pipeline_mode<synchronous>, transform_indices = @transform_5, window_bounds = array<i64: 64, 2>}, {pipeline_mode = #tpu.pipeline_mode<synchronous>, transform_indices = @transform_6, window_bounds = array<i64: 1, 2>}, {pipeline_mode = #tpu.pipeline_mode<synchronous>, transform_indices = @transform_7, window_bounds = array<i64: 2, 2>}]} {
    %c0_i32 = arith.constant 0 : i32
    %0 = arith.cmpi eq, %arg0, %c0_i32 : i32
    %1 = arith.extui %0 : i1 to i32
    %c0_i32_0 = arith.constant 0 : i32
    %2 = arith.cmpi ne, %1, %c0_i32_0 : i32
    scf.if %2 {
      %cst_9 = arith.constant 0.000000e+00 : f32
      %12 = vector.broadcast %cst_9 : f32 to vector<2x128xf32>
      %c0_10 = arith.constant 0 : index
      %c0_11 = arith.constant 0 : index
      %13 = vector.load %arg9[%c0_10, %c0_11] : memref<2x128xf32, #tpu.memory_space<vmem>>, vector<2x128xf32>
      tpu.vector_store %arg9[%c0_10, %c0_11], %12 {strides = array<i32>} : memref<2x128xf32, #tpu.memory_space<vmem>>, vector<2x128xf32>,
    } else {
    }
    %c0 = arith.constant 0 : index
    %c0_1 = arith.constant 0 : index
    %3 = vector.load %arg9[%c0, %c0_1] : memref<2x128xf32, #tpu.memory_space<vmem>>, vector<2x128xf32>
    %c0_2 = arith.constant 0 : index
    %c0_3 = arith.constant 0 : index
    %4 = vector.load %arg1[%c0_2, %c0_3] : memref<2x8192xbf16, #tpu.memory_space<vmem>>, vector<2x8192xbf16>
    %c0_4 = arith.constant 0 : index
    %c0_5 = arith.constant 0 : index
    %5 = vector.load %arg2[%c0_4, %c0_5] : memref<8192x128xbf16, #tpu.memory_space<vmem>>, vector<8192x128xbf16>
    %cst = arith.constant dense<0.000000e+00> : vector<2x128xf32>
    %6 = tpu.matmul %4, %5, %cst {dimension_numbers = #tpu.dot_dimension_numbers<[1], [0], [0], [1], [0, 0, 1, 1], [], []>} : vector<2x8192xbf16>, vector<8192x128xbf16>, vector<2x128xf32> -> vector<2x128xf32>
    %7 = arith.addf %3, %6 : vector<2x128xf32>
    %c0_6 = arith.constant 0 : index
    %c0_7 = arith.constant 0 : index
    %8 = vector.load %arg9[%c0_6, %c0_7] : memref<2x128xf32, #tpu.memory_space<vmem>>, vector<2x128xf32>
    tpu.vector_store %arg9[%c0_6, %c0_7], %7 {strides = array<i32>} : memref<2x128xf32, #tpu.memory_space<vmem>>, vector<2x128xf32>,
    %c4_i32 = arith.constant 4 : i32
    %9 = arith.cmpi eq, %arg0, %c4_i32 : i32
    %10 = arith.extui %9 : i1 to i32
    %c0_i32_8 = arith.constant 0 : i32
    %11 = arith.cmpi ne, %10, %c0_i32_8 : i32
    scf.if %11 {
      %c0_9 = arith.constant 0 : index
      %c0_10 = arith.constant 0 : index
      %12 = vector.load %arg9[%c0_9, %c0_10] : memref<2x128xf32, #tpu.memory_space<vmem>>, vector<2x128xf32>
      %c0_11 = arith.constant 0 : index
      %c0_12 = arith.constant 0 : index
      %13 = vector.load %arg3[%c0_11, %c0_12] : memref<1x128xf32, #tpu.memory_space<vmem>>, vector<1x128xf32>
      %14 = vector.broadcast %13 : vector<1x128xf32> to vector<2x128xf32>
      %15 = arith.addf %12, %14 : vector<2x128xf32>
      %cst_13 = arith.constant 0.000000e+00 : f32
      %16 = vector.broadcast %cst_13 : f32 to vector<2x128xf32>
      %17 = arith.maximumf %15, %16 : vector<2x128xf32>
      %c0_14 = arith.constant 0 : index
      %c0_15 = arith.constant 0 : index
      %18 = vector.load %arg4[%c0_14, %c0_15] : memref<128x64xf32, #tpu.memory_space<vmem>>, vector<128x64xf32>
      %cst_16 = arith.constant dense<0.000000e+00> : vector<2x64xf32>
      %19 = tpu.matmul %17, %18, %cst_16 {dimension_numbers = #tpu.dot_dimension_numbers<[1], [0], [0], [1], [0, 0, 1, 1], [], []>} : vector<2x128xf32>, vector<128x64xf32>, vector<2x64xf32> -> vector<2x64xf32>
      %c0_17 = arith.constant 0 : index
      %c0_18 = arith.constant 0 : index
      %20 = vector.load %arg5[%c0_17, %c0_18] : memref<1x64xf32, #tpu.memory_space<vmem>>, vector<1x64xf32>
      %21 = vector.broadcast %20 : vector<1x64xf32> to vector<2x64xf32>
      %22 = arith.addf %19, %21 : vector<2x64xf32>
      %cst_19 = arith.constant 0.000000e+00 : f32
      %23 = vector.broadcast %cst_19 : f32 to vector<2x64xf32>
      %24 = arith.maximumf %22, %23 : vector<2x64xf32>
      %c0_20 = arith.constant 0 : index
      %c0_21 = arith.constant 0 : index
      %25 = vector.load %arg6[%c0_20, %c0_21] : memref<64x2xf32, #tpu.memory_space<vmem>>, vector<64x2xf32>
      %cst_22 = arith.constant dense<0.000000e+00> : vector<2x2xf32>
      %26 = tpu.matmul %24, %25, %cst_22 {dimension_numbers = #tpu.dot_dimension_numbers<[1], [0], [0], [1], [0, 0, 1, 1], [], []>} : vector<2x64xf32>, vector<64x2xf32>, vector<2x2xf32> -> vector<2x2xf32>
      %c0_23 = arith.constant 0 : index
      %c0_24 = arith.constant 0 : index
      %27 = vector.load %arg7[%c0_23, %c0_24] : memref<1x2xf32, #tpu.memory_space<vmem>>, vector<1x2xf32>
      %28 = vector.broadcast %27 : vector<1x2xf32> to vector<2x2xf32>
      %29 = arith.addf %26, %28 : vector<2x2xf32>
      %c0_25 = arith.constant 0 : index
      %c0_26 = arith.constant 0 : index
      %30 = vector.load %arg8[%c0_25, %c0_26] : memref<2x2xf32, #tpu.memory_space<vmem>>, vector<2x2xf32>
      tpu.vector_store %arg8[%c0_25, %c0_26], %29 {strides = array<i32>} : memref<2x2xf32, #tpu.memory_space<vmem>>, vector<2x2xf32>,
    } else {
    }
    return
  }
  func.func @transform_0(%arg0: i32) -> (i32, i32) {
    %c0_i32 = arith.constant 0 : i32
    %c0_i32_0 = arith.constant 0 : i32
    return %c0_i32, %arg0 : i32, i32
  }
  func.func @transform_1(%arg0: i32) -> (i32, i32) {
    %c0_i32 = arith.constant 0 : i32
    %c0_i32_0 = arith.constant 0 : i32
    return %arg0, %c0_i32 : i32, i32
  }
  func.func @transform_2(%arg0: i32) -> (i32, i32) {
    %c0_i32 = arith.constant 0 : i32
    %c0_i32_0 = arith.constant 0 : i32
    %c0_i32_1 = arith.constant 0 : i32
    return %c0_i32, %c0_i32_0 : i32, i32
  }
  func.func @transform_3(%arg0: i32) -> (i32, i32) {
    %c0_i32 = arith.constant 0 : i32
    %c0_i32_0 = arith.constant 0 : i32
    %c0_i32_1 = arith.constant 0 : i32
    return %c0_i32, %c0_i32_0 : i32, i32
  }
  func.func @transform_4(%arg0: i32) -> (i32, i32) {
    %c0_i32 = arith.constant 0 : i32
    %c0_i32_0 = arith.constant 0 : i32
    %c0_i32_1 = arith.constant 0 : i32
    return %c0_i32, %c0_i32_0 : i32, i32
  }
  func.func @transform_5(%arg0: i32) -> (i32, i32) {
    %c0_i32 = arith.constant 0 : i32
    %c0_i32_0 = arith.constant 0 : i32
    %c0_i32_1 = arith.constant 0 : i32
    return %c0_i32, %c0_i32_0 : i32, i32
  }
  func.func @transform_6(%arg0: i32) -> (i32, i32) {
    %c0_i32 = arith.constant 0 : i32
    %c0_i32_0 = arith.constant 0 : i32
    %c0_i32_1 = arith.constant 0 : i32
    return %c0_i32, %c0_i32_0 : i32, i32
  }
  func.func @transform_7(%arg0: i32) -> (i32, i32) {
    %c0_i32 = arith.constant 0 : i32
    %c0_i32_0 = arith.constant 0 : i32
    %c0_i32_1 = arith.constant 0 : i32
    return %c0_i32, %c0_i32_0 : i32, i32
  }
}

</mosaic_0001>

<llo_original>
// kernel: net_forward.3
$region0: #{net_forward.3}
  #allocation0 [shape = 'u32[]', space=smem, size = 0x4, offset = 0x4, fixed_abs, tag = 'smem constant byte address 0x4 - core index']
  #allocation1 [shape = 'u32[144,128]{1,0:T(1,128)}', space=vmem, size = 0x12000, scoped, tag = 'internal scratch']
  %s0 = inlined_call_operand.vmem [shape: bf16[2,1280,384], index: 0, kind: input, shape index: {}]
  %s1 = inlined_call_operand.vmem [shape: bf16[384,512], index: 1, kind: input, shape index: {}]
  %s2 = inlined_call_operand.vmem [shape: f32[1,512], index: 2, kind: input, shape index: {}]
  %s3 = inlined_call_operand.vmem [shape: bf16[2,1280,128], index: 3, kind: output, shape index: {}]
  %s4 = sld [smem:[#allocation0]]
  $region45: #{net_forward.3} parent=0
    _
  %s6 = ssub.s32 1, %s4
  %s7 = scalar_select 0, %s6, %s4
  loop: start=0, step=1, limit=12
  $region2: #{net_forward.3} parent=0 // loop_pre_header
    _
  $region3: #{net_forward.3} parent=0 // loop_header
    %s9 = sphi 0, %s13
    %p10 = scmp.ge.s32.totalorder %s9, 12
    %s16 = sphi 0, %s28
    %s17 = sphi 0, %s24
    %s18 = sphi 0, %s16
    %s19 = sphi 0, %s17
    %s20 = sphi 0, %s18
    %s21 = sphi 0, %s19
    %s33 = sphi 0, %s35
    %s36 = sphi 0, %s33
    %s37 = sphi 0, %s36
    %s53 = sphi 0, %s37
    %s57 = sphi 0, %s57
    %s59 = sphi 0, %s57
    %s60 = sphi 0, %s59
    %s74 = sphi 0, %s60
    %s78 = sphi 0, %s78
    %s80 = sphi 0, %s78
    %s81 = sphi 0, %s80
    %s95 = sphi 0, %s81
    %s103 = sphi 0, %s105
    %s106 = sphi 0, %s103
    %s107 = sphi 0, %s106
    %s123 = sphi 0, %s107
  $region4: #{net_forward.3} parent=0 // loop_header_branch
    %12 = sbr.rel (%p10) target = $region8
  $region5: #{net_forward.3} parent=0 // loop_body
    %s14 = ssub.s32 %s9, 1
    %s15 = ssub.s32 %s9, 2
    %s22 = sadd.s32 1, %s17
    %p23 = scmp.ge.s32.totalorder %s22, 5
    %s24 = scalar_select %p23, 0, %s22
    %s25 = sadd.s32 1, %s16
    %s26 = scalar_select %p23, %s25, %s16
    %p27 = scmp.ge.s32.totalorder %s26, 2
    %s28 = scalar_select %p27, 0, %s26
    %s29 = ssub.s32 %s16, %s28
    %s30 = ssub.s32 %s17, %s24
    %s31 = sor.u32 %s29, %s30
    %p32 = scmp.eq.s32.totalorder %s31, 0
    %s34 = sadd.s32 %s33, 1
    %s35 = scalar_select %p32, %s33, %s34
    %p38 = pneg %p32
    %p39 = scmp.eq.s32.totalorder %s9, 9
    %p40 = por %p38, %p39
    %p41 = scmp.ne.s32.totalorder %s33, %s36
    %p42 = scmp.eq.s32.totalorder %s9, 0
    %p43 = por %p41, %p42
    %p44 = scmp.ne.s32.totalorder %s33, %s36
    %p45 = scmp.eq.s32.totalorder %s14, 9
    %p46 = por %p44, %p45
    %p47 = scmp.ne.s32.totalorder %s36, %s37
    %p48 = scmp.eq.s32.totalorder %s14, 0
    %p49 = por %p47, %p48
    %p50 = scmp.ne.s32.totalorder %s36, %s37
    %p51 = scmp.eq.s32.totalorder %s15, 9
    %p52 = por %p50, %p51
    %p54 = scmp.ne.s32.totalorder %s37, %s53
    %p55 = scmp.eq.s32.totalorder %s15, 0
    %p56 = por %p54, %p55
    %s58 = sadd.s32 %s57, 1
    %p61 = scmp.eq.s32.totalorder %s9, 9
    %p62 = scmp.ne.s32.totalorder %s57, %s59
    %p63 = scmp.eq.s32.totalorder %s9, 0
    %p64 = por %p62, %p63
    %p65 = scmp.ne.s32.totalorder %s57, %s59
    %p66 = scmp.eq.s32.totalorder %s14, 9
    %p67 = por %p65, %p66
    %p68 = scmp.ne.s32.totalorder %s59, %s60
    %p69 = scmp.eq.s32.totalorder %s14, 0
    %p70 = por %p68, %p69
    %p71 = scmp.ne.s32.totalorder %s59, %s60
    %p72 = scmp.eq.s32.totalorder %s15, 9
    %p73 = por %p71, %p72
    %p75 = scmp.ne.s32.totalorder %s60, %s74
    %p76 = scmp.eq.s32.totalorder %s15, 0
    %p77 = por %p75, %p76
    %s79 = sadd.s32 %s78, 1
    %p82 = scmp.eq.s32.totalorder %s9, 9
    %p83 = scmp.ne.s32.totalorder %s78, %s80
    %p84 = scmp.eq.s32.totalorder %s9, 0
    %p85 = por %p83, %p84
    %p86 = scmp.ne.s32.totalorder %s78, %s80
    %p87 = scmp.eq.s32.totalorder %s14, 9
    %p88 = por %p86, %p87
    %p89 = scmp.ne.s32.totalorder %s80, %s81
    %p90 = scmp.eq.s32.totalorder %s14, 0
    %p91 = por %p89, %p90
    %p92 = scmp.ne.s32.totalorder %s80, %s81
    %p93 = scmp.eq.s32.totalorder %s15, 9
    %p94 = por %p92, %p93
    %p96 = scmp.ne.s32.totalorder %s81, %s95
    %p97 = scmp.eq.s32.totalorder %s15, 0
    %p98 = por %p96, %p97
    %s99 = ssub.s32 %s16, %s28
    %s100 = ssub.s32 %s17, %s24
    %s101 = sor.u32 %s99, %s100
    %p102 = scmp.eq.s32.totalorder %s101, 0
    %s104 = sadd.s32 %s103, 1
    %s105 = scalar_select %p102, %s103, %s104
    %p108 = pneg %p102
    %p109 = scmp.eq.s32.totalorder %s9, 9
    %p110 = por %p108, %p109
    %p111 = scmp.ne.s32.totalorder %s103, %s106
    %p112 = scmp.eq.s32.totalorder %s9, 0
    %p113 = por %p111, %p112
    %p114 = scmp.ne.s32.totalorder %s103, %s106
    %p115 = scmp.eq.s32.totalorder %s14, 9
    %p116 = por %p114, %p115
    %p117 = scmp.ne.s32.totalorder %s106, %s107
    %p118 = scmp.eq.s32.totalorder %s14, 0
    %p119 = por %p117, %p118
    %p120 = scmp.ne.s32.totalorder %s106, %s107
    %p121 = scmp.eq.s32.totalorder %s15, 9
    %p122 = por %p120, %p121
    %p124 = scmp.ne.s32.totalorder %s107, %s123
    %p125 = scmp.eq.s32.totalorder %s15, 0
    %p126 = por %p124, %p125
    %p127 = scmp.le.s32.totalorder 1, %s9
    %p128 = scmp.lt.s32.totalorder %s9, 11
    %p129 = pnand %p127, %p128
    %p130 = pneg %p129
    // Predicated region
    $region9: #{net_forward.3} parent=5 // pred_check
      _
    $region10: #{net_forward.3} parent=5 // pred_check_branch
      %132 = sbr.rel (%p129) target = $region12
    $region11: #{net_forward.3} parent=5 // pred_region
      %s133 = ssub.s32 %s9, 1
      // Predicated region
      $region13: #{net_forward.3} parent=11 // pred_check
        %p134 = pneg %p70
      $region14: #{net_forward.3} parent=11 // pred_check_branch
        %136 = sbr.rel (%p134) target = $region16
      $region15: #{net_forward.3} parent=11 // pred_region
        _
      $region16: #{net_forward.3} parent=11 // pred_fallthru
        _
      // Predicated region
      $region17: #{net_forward.3} parent=11 // pred_check
        %p137 = pneg %p91
      $region18: #{net_forward.3} parent=11 // pred_check_branch
        %139 = sbr.rel (%p137) target = $region20
      $region19: #{net_forward.3} parent=11 // pred_region
        _
      $region20: #{net_forward.3} parent=11 // pred_fallthru
        _
    $region12: #{net_forward.3} parent=5 // pred_fallthru
      _
    %p140 = scmp.lt.s32.totalorder %s9, 10
    // Predicated region
    $region21: #{net_forward.3} parent=5 // pred_check
      %p141 = pneg %p140
    $region22: #{net_forward.3} parent=5 // pred_check_branch
      %143 = sbr.rel (%p141) target = $region24
    $region23: #{net_forward.3} parent=5 // pred_region
      // Predicated region
      $region25: #{net_forward.3} parent=23 // pred_check
        %p144 = pneg %p43
      $region26: #{net_forward.3} parent=23 // pred_check_branch
        %146 = sbr.rel (%p144) target = $region28
      $region27: #{net_forward.3} parent=23 // pred_region
        %s147 = smul.u32 32, %s17
        %p148 = scmp.lt.s32.totalorder %s16, 1
        %s149 = scalar_select %p148, %s16, 1
        %p150 = scmp.lt.s32.totalorder %s147, 159
        %s151 = scalar_select %p150, %s147, 159
        %s152 = smul.addr %s151, 3
        %s153 = smul.addr %s149, 480
        %s154 = sadd.s32 %s152, %s153
        %s155 = smul.addr %s154, 4
        %s156 = scalar_lea.vmem %s0, %s155
        %s157 = smul.u32 32, %s17
      $region28: #{net_forward.3} parent=23 // pred_fallthru
        _
    $region24: #{net_forward.3} parent=5 // pred_fallthru
      _
    %p158 = scmp.le.s32.totalorder 1, %s9
    %p159 = scmp.lt.s32.totalorder %s9, 11
    %p160 = pnand %p158, %p159
    %p161 = pneg %p160
    // Predicated region
    $region29: #{net_forward.3} parent=5 // pred_check
      _
    $region30: #{net_forward.3} parent=5 // pred_check_branch
      %163 = sbr.rel (%p160) target = $region32
    $region31: #{net_forward.3} parent=5 // pred_region
      %s164 = ssub.s32 %s9, 1
      %s165 = smul.u32 32, %s19
      %p166 = scmp.lt.s32.totalorder %s18, 1
      %s167 = scalar_select %p166, %s18, 1
      %p168 = scmp.lt.s32.totalorder %s165, 159
      %s169 = scalar_select %p168, %s165, 159
      %s170 = smul.addr %s169, 3
      %s171 = smul.addr %s167, 480
      %s172 = sadd.s32 %s170, %s171
      %s173 = smul.addr %s172, 4
      %s174 = scalar_lea.vmem %s0, %s173
      %p175 = pneg %p49
      %p176 = pneg %p46
      %p177 = pneg %p70
      %p178 = pneg %p67
      %p179 = pneg %p91
      %p180 = pneg %p88
      %p181 = pneg %p119
      %p182 = pneg %p116
      %s183 = smul.u32 32, %s19
      %p184 = scmp.lt.s32.totalorder %s18, 1
      %s185 = scalar_select %p184, %s18, 1
      %p186 = scmp.lt.s32.totalorder %s183, 159
      %s187 = scalar_select %p186, %s183, 159
      %s188 = smul.addr %s185, 160
      %s189 = sadd.s32 %s187, %s188
      %s190 = smul.addr %s189, 4
      %s191 = scalar_lea.vmem %s3, %s190
      %s192 = smul.u32 32, %s19
      %p193 = scmp.lt.s32.totalorder %s18, 1
      %s194 = scalar_select %p193, %s18, 1
      %p195 = scmp.lt.s32.totalorder %s192, 159
      %s196 = scalar_select %p195, %s192, 159
      %s197 = smul.addr %s196, 3
      %s198 = smul.addr %s194, 480
      %s199 = sadd.s32 %s197, %s198
      %s200 = smul.addr %s199, 4
      %s201 = scalar_lea.vmem %s0, %s200
      %s202 = smul.u32 32, %s19
      %s203 = smul.u32 32, %s19
      %p204 = scmp.lt.s32.totalorder %s18, 1
      %s205 = scalar_select %p204, %s18, 1
      %p206 = scmp.lt.s32.totalorder %s203, 159
      %s207 = scalar_select %p206, %s203, 159
      %s208 = smul.addr %s205, 160
      %s209 = sadd.s32 %s207, %s208
      %s210 = smul.addr %s209, 4
      %s211 = scalar_lea.vmem %s3, %s210
      %s212 = smul.u32 32, %s19
      %v214 = vld [vmem:[%s201] sm:$0xff]
      %v215 = vld [vmem:[%s201 + $0x8] sm:$0xf]
      %v216 = vld [vmem:[%s201 + $0xc] sm:$0xff]
      %v217 = vld [vmem:[%s201 + $0x14] sm:$0xf]
      %v218 = vld [vmem:[%s201 + $0x18] sm:$0xff]
      %v219 = vld [vmem:[%s201 + $0x20] sm:$0xf]
      %v220 = vld [vmem:[%s201 + $0x24] sm:$0xff]
      %v221 = vld [vmem:[%s201 + $0x2c] sm:$0xf]
      %v222 = vld [vmem:[%s201 + $0x30] sm:$0xff]
      %v223 = vld [vmem:[%s201 + $0x38] sm:$0xf]
      %v224 = vld [vmem:[%s201 + $0x3c] sm:$0xff]
      %v225 = vld [vmem:[%s201 + $0x44] sm:$0xf]
      %v226 = vld [vmem:[%s201 + $0x48] sm:$0xff]
      %v227 = vld [vmem:[%s201 + $0x50] sm:$0xf]
      %v228 = vld [vmem:[%s201 + $0x54] sm:$0xff]
      %v229 = vld [vmem:[%s201 + $0x5c] sm:$0xf]
      %v230 = vld [vmem:[%s201 + $0x60] sm:$0xff]
      %v231 = vld [vmem:[%s201 + $0x68] sm:$0xf]
      %v232 = vld [vmem:[%s201 + $0x6c] sm:$0xff]
      %v233 = vld [vmem:[%s201 + $0x74] sm:$0xf]
      %v234 = vld [vmem:[%s201 + $0x78] sm:$0xff]
      %v235 = vld [vmem:[%s201 + $0x80] sm:$0xf]
      %v236 = vld [vmem:[%s201 + $0x84] sm:$0xff]
      %v237 = vld [vmem:[%s201 + $0x8c] sm:$0xf]
      %v238 = vld [vmem:[%s201 + $0x90] sm:$0xff]
      %v239 = vld [vmem:[%s201 + $0x98] sm:$0xf]
      %v240 = vld [vmem:[%s201 + $0x9c] sm:$0xff]
      %v241 = vld [vmem:[%s201 + $0xa4] sm:$0xf]
      %v242 = vld [vmem:[%s201 + $0xa8] sm:$0xff]
      %v243 = vld [vmem:[%s201 + $0xb0] sm:$0xf]
      %v244 = vld [vmem:[%s201 + $0xb4] sm:$0xff]
      %v245 = vld [vmem:[%s201 + $0xbc] sm:$0xf]
      %v246 = vld [vmem:[%s201 + $0xc0] sm:$0xff]
      %v247 = vld [vmem:[%s201 + $0xc8] sm:$0xf]
      %v248 = vld [vmem:[%s201 + $0xcc] sm:$0xff]
      %v249 = vld [vmem:[%s201 + $0xd4] sm:$0xf]
      %v250 = vld [vmem:[%s201 + $0xd8] sm:$0xff]
      %v251 = vld [vmem:[%s201 + $0xe0] sm:$0xf]
      %v252 = vld [vmem:[%s201 + $0xe4] sm:$0xff]
      %v253 = vld [vmem:[%s201 + $0xec] sm:$0xf]
      %v254 = vld [vmem:[%s201 + $0xf0] sm:$0xff]
      %v255 = vld [vmem:[%s201 + $0xf8] sm:$0xf]
      %v256 = vld [vmem:[%s201 + $0xfc] sm:$0xff]
      %v257 = vld [vmem:[%s201 + $0x104] sm:$0xf]
      %v258 = vld [vmem:[%s201 + $0x108] sm:$0xff]
      %v259 = vld [vmem:[%s201 + $0x110] sm:$0xf]
      %v260 = vld [vmem:[%s201 + $0x114] sm:$0xff]
      %v261 = vld [vmem:[%s201 + $0x11c] sm:$0xf]
      %v262 = vld [vmem:[%s201 + $0x120] sm:$0xff]
      %v263 = vld [vmem:[%s201 + $0x128] sm:$0xf]
      %v264 = vld [vmem:[%s201 + $0x12c] sm:$0xff]
      %v265 = vld [vmem:[%s201 + $0x134] sm:$0xf]
      %v266 = vld [vmem:[%s201 + $0x138] sm:$0xff]
      %v267 = vld [vmem:[%s201 + $0x140] sm:$0xf]
      %v268 = vld [vmem:[%s201 + $0x144] sm:$0xff]
      %v269 = vld [vmem:[%s201 + $0x14c] sm:$0xf]
      %v270 = vld [vmem:[%s201 + $0x150] sm:$0xff]
      %v271 = vld [vmem:[%s201 + $0x158] sm:$0xf]
      %v272 = vld [vmem:[%s201 + $0x15c] sm:$0xff]
      %v273 = vld [vmem:[%s201 + $0x164] sm:$0xf]
      %v274 = vld [vmem:[%s201 + $0x168] sm:$0xff]
      %v275 = vld [vmem:[%s201 + $0x170] sm:$0xf]
      %v276 = vld [vmem:[%s201 + $0x174] sm:$0xff]
      %v277 = vld [vmem:[%s201 + $0x17c] sm:$0xf]
      %v278 = vld [vmem:[%s1] sm:$0xff]
      %v279 = vld [vmem:[%s1 + $0x8] sm:$0xff]
      %v280 = vld [vmem:[%s1 + $0x10] sm:$0xff]
      %v281 = vld [vmem:[%s1 + $0x18] sm:$0xff]
      %v282 = vld [vmem:[%s1 + $0x20] sm:$0xff]
      %v283 = vld [vmem:[%s1 + $0x28] sm:$0xff]
      %v284 = vld [vmem:[%s1 + $0x30] sm:$0xff]
      %v285 = vld [vmem:[%s1 + $0x38] sm:$0xff]
      %v286 = vld [vmem:[%s1 + $0x40] sm:$0xff]
      %v287 = vld [vmem:[%s1 + $0x48] sm:$0xff]
      %v288 = vld [vmem:[%s1 + $0x50] sm:$0xff]
      %v289 = vld [vmem:[%s1 + $0x58] sm:$0xff]
      %v290 = vld [vmem:[%s1 + $0x60] sm:$0xff]
      %v291 = vld [vmem:[%s1 + $0x68] sm:$0xff]
      %v292 = vld [vmem:[%s1 + $0x70] sm:$0xff]
      %v293 = vld [vmem:[%s1 + $0x78] sm:$0xff]
      %v294 = vld [vmem:[%s1 + $0x80] sm:$0xff]
      %v295 = vld [vmem:[%s1 + $0x88] sm:$0xff]
      %v296 = vld [vmem:[%s1 + $0x90] sm:$0xff]
      %v297 = vld [vmem:[%s1 + $0x98] sm:$0xff]
      %v298 = vld [vmem:[%s1 + $0xa0] sm:$0xff]
      %v299 = vld [vmem:[%s1 + $0xa8] sm:$0xff]
      %v300 = vld [vmem:[%s1 + $0xb0] sm:$0xff]
      %v301 = vld [vmem:[%s1 + $0xb8] sm:$0xff]
      %v302 = vld [vmem:[%s1 + $0xc0] sm:$0xff]
      %v303 = vld [vmem:[%s1 + $0xc8] sm:$0xff]
      %v304 = vld [vmem:[%s1 + $0xd0] sm:$0xff]
      %v305 = vld [vmem:[%s1 + $0xd8] sm:$0xff]
      %v306 = vld [vmem:[%s1 + $0xe0] sm:$0xff]
      %v307 = vld [vmem:[%s1 + $0xe8] sm:$0xff]
      %v308 = vld [vmem:[%s1 + $0xf0] sm:$0xff]
      %v309 = vld [vmem:[%s1 + $0xf8] sm:$0xff]
      %v310 = vld [vmem:[%s1 + $0x100] sm:$0xff]
      %v311 = vld [vmem:[%s1 + $0x108] sm:$0xff]
      %v312 = vld [vmem:[%s1 + $0x110] sm:$0xff]
      %v313 = vld [vmem:[%s1 + $0x118] sm:$0xff]
      %v314 = vld [vmem:[%s1 + $0x120] sm:$0xff]
      %v315 = vld [vmem:[%s1 + $0x128] sm:$0xff]
      %v316 = vld [vmem:[%s1 + $0x130] sm:$0xff]
      %v317 = vld [vmem:[%s1 + $0x138] sm:$0xff]
      %v318 = vld [vmem:[%s1 + $0x140] sm:$0xff]
      %v319 = vld [vmem:[%s1 + $0x148] sm:$0xff]
      %v320 = vld [vmem:[%s1 + $0x150] sm:$0xff]
      %v321 = vld [vmem:[%s1 + $0x158] sm:$0xff]
      %v322 = vld [vmem:[%s1 + $0x160] sm:$0xff]
      %v323 = vld [vmem:[%s1 + $0x168] sm:$0xff]
      %v324 = vld [vmem:[%s1 + $0x170] sm:$0xff]
      %v325 = vld [vmem:[%s1 + $0x178] sm:$0xff]
      %v326 = vld [vmem:[%s1 + $0x180] sm:$0xff]
      %v327 = vld [vmem:[%s1 + $0x188] sm:$0xff]
      %v328 = vld [vmem:[%s1 + $0x190] sm:$0xff]
      %v329 = vld [vmem:[%s1 + $0x198] sm:$0xff]
      %v330 = vld [vmem:[%s1 + $0x1a0] sm:$0xff]
      %v331 = vld [vmem:[%s1 + $0x1a8] sm:$0xff]
      %v332 = vld [vmem:[%s1 + $0x1b0] sm:$0xff]
      %v333 = vld [vmem:[%s1 + $0x1b8] sm:$0xff]
      %v334 = vld [vmem:[%s1 + $0x1c0] sm:$0xff]
      %v335 = vld [vmem:[%s1 + $0x1c8] sm:$0xff]
      %v336 = vld [vmem:[%s1 + $0x1d0] sm:$0xff]
      %v337 = vld [vmem:[%s1 + $0x1d8] sm:$0xff]
      %v338 = vld [vmem:[%s1 + $0x1e0] sm:$0xff]
      %v339 = vld [vmem:[%s1 + $0x1e8] sm:$0xff]
      %v340 = vld [vmem:[%s1 + $0x1f0] sm:$0xff]
      %v341 = vld [vmem:[%s1 + $0x1f8] sm:$0xff]
      %v342 = vld [vmem:[%s1 + $0x200] sm:$0xff]
      %v343 = vld [vmem:[%s1 + $0x208] sm:$0xff]
      %v344 = vld [vmem:[%s1 + $0x210] sm:$0xff]
      %v345 = vld [vmem:[%s1 + $0x218] sm:$0xff]
      %v346 = vld [vmem:[%s1 + $0x220] sm:$0xff]
      %v347 = vld [vmem:[%s1 + $0x228] sm:$0xff]
      %v348 = vld [vmem:[%s1 + $0x230] sm:$0xff]
      %v349 = vld [vmem:[%s1 + $0x238] sm:$0xff]
      %v350 = vld [vmem:[%s1 + $0x240] sm:$0xff]
      %v351 = vld [vmem:[%s1 + $0x248] sm:$0xff]
      %v352 = vld [vmem:[%s1 + $0x250] sm:$0xff]
      %v353 = vld [vmem:[%s1 + $0x258] sm:$0xff]
      %v354 = vld [vmem:[%s1 + $0x260] sm:$0xff]
      %v355 = vld [vmem:[%s1 + $0x268] sm:$0xff]
      %v356 = vld [vmem:[%s1 + $0x270] sm:$0xff]
      %v357 = vld [vmem:[%s1 + $0x278] sm:$0xff]
      %v358 = vld [vmem:[%s1 + $0x280] sm:$0xff]
      %v359 = vld [vmem:[%s1 + $0x288] sm:$0xff]
      %v360 = vld [vmem:[%s1 + $0x290] sm:$0xff]
      %v361 = vld [vmem:[%s1 + $0x298] sm:$0xff]
      %v362 = vld [vmem:[%s1 + $0x2a0] sm:$0xff]
      %v363 = vld [vmem:[%s1 + $0x2a8] sm:$0xff]
      %v364 = vld [vmem:[%s1 + $0x2b0] sm:$0xff]
      %v365 = vld [vmem:[%s1 + $0x2b8] sm:$0xff]
      %v366 = vld [vmem:[%s1 + $0x2c0] sm:$0xff]
      %v367 = vld [vmem:[%s1 + $0x2c8] sm:$0xff]
      %v368 = vld [vmem:[%s1 + $0x2d0] sm:$0xff]
      %v369 = vld [vmem:[%s1 + $0x2d8] sm:$0xff]
      %v370 = vld [vmem:[%s1 + $0x2e0] sm:$0xff]
      %v371 = vld [vmem:[%s1 + $0x2e8] sm:$0xff]
      %v372 = vld [vmem:[%s1 + $0x2f0] sm:$0xff]
      %v373 = vld [vmem:[%s1 + $0x2f8] sm:$0xff]
      %v374 = vld [vmem:[%s2] sm:$0xf]
      %v376 = vlaneseq
      %v377 = vshrl.u32 %v376, 7
      %v378 = vsub.s32 0, %v377
      %v379 = vrot.slane %v374, %v378
      %v380 = vlaneseq
      %v381 = vshrl.u32 %v380, 7
      %v382 = vsub.s32 1, %v381
      %v383 = vrot.slane %v374, %v382
      %v384 = vlaneseq
      %v385 = vshrl.u32 %v384, 7
      %v386 = vsub.s32 2, %v385
      %v387 = vrot.slane %v374, %v386
      %v388 = vlaneseq
      %v389 = vshrl.u32 %v388, 7
      %v390 = vsub.s32 3, %v389
      %v391 = vrot.slane %v374, %v390
      %v460 = vunpack.c.l.b16 %v214
      %v461 = vunpack.c.h.b16 %v214
      %v462 = vunpack.c.l.b16 %v215
      %v463 = vunpack.c.l.b16 %v216
      %v464 = vunpack.c.h.b16 %v216
      %v465 = vunpack.c.l.b16 %v217
      %v466 = vunpack.c.l.b16 %v218
      %v467 = vunpack.c.h.b16 %v218
      %v468 = vunpack.c.l.b16 %v219
      %v469 = vunpack.c.l.b16 %v220
      %v470 = vunpack.c.h.b16 %v220
      %v471 = vunpack.c.l.b16 %v221
      %v472 = vunpack.c.l.b16 %v222
      %v473 = vunpack.c.h.b16 %v222
      %v474 = vunpack.c.l.b16 %v223
      %v475 = vunpack.c.l.b16 %v224
      %v476 = vunpack.c.h.b16 %v224
      %v477 = vunpack.c.l.b16 %v225
      %v478 = vunpack.c.l.b16 %v226
      %v479 = vunpack.c.h.b16 %v226
      %v480 = vunpack.c.l.b16 %v227
      %v481 = vunpack.c.l.b16 %v228
      %v482 = vunpack.c.h.b16 %v228
      %v483 = vunpack.c.l.b16 %v229
      %v484 = vunpack.c.l.b16 %v230
      %v485 = vunpack.c.h.b16 %v230
      %v486 = vunpack.c.l.b16 %v231
      %v487 = vunpack.c.l.b16 %v232
      %v488 = vunpack.c.h.b16 %v232
      %v489 = vunpack.c.l.b16 %v233
      %v490 = vunpack.c.l.b16 %v234
      %v491 = vunpack.c.h.b16 %v234
      %v492 = vunpack.c.l.b16 %v235
      %v493 = vunpack.c.l.b16 %v236
      %v494 = vunpack.c.h.b16 %v236
      %v495 = vunpack.c.l.b16 %v237
      %v496 = vunpack.c.l.b16 %v238
      %v497 = vunpack.c.h.b16 %v238
      %v498 = vunpack.c.l.b16 %v239
      %v499 = vunpack.c.l.b16 %v240
      %v500 = vunpack.c.h.b16 %v240
      %v501 = vunpack.c.l.b16 %v241
      %v502 = vunpack.c.l.b16 %v242
      %v503 = vunpack.c.h.b16 %v242
      %v504 = vunpack.c.l.b16 %v243
      %v505 = vunpack.c.l.b16 %v244
      %v506 = vunpack.c.h.b16 %v244
      %v507 = vunpack.c.l.b16 %v245
      %v508 = vunpack.c.l.b16 %v246
      %v509 = vunpack.c.h.b16 %v246
      %v510 = vunpack.c.l.b16 %v247
      %v511 = vunpack.c.l.b16 %v248
      %v512 = vunpack.c.h.b16 %v248
      %v513 = vunpack.c.l.b16 %v249
      %v514 = vunpack.c.l.b16 %v250
      %v515 = vunpack.c.h.b16 %v250
      %v516 = vunpack.c.l.b16 %v251
      %v517 = vunpack.c.l.b16 %v252
      %v518 = vunpack.c.h.b16 %v252
      %v519 = vunpack.c.l.b16 %v253
      %v520 = vunpack.c.l.b16 %v254
      %v521 = vunpack.c.h.b16 %v254
      %v522 = vunpack.c.l.b16 %v255
      %v523 = vunpack.c.l.b16 %v256
      %v524 = vunpack.c.h.b16 %v256
      %v525 = vunpack.c.l.b16 %v257
      %v526 = vunpack.c.l.b16 %v258
      %v527 = vunpack.c.h.b16 %v258
      %v528 = vunpack.c.l.b16 %v259
      %v529 = vunpack.c.l.b16 %v260
      %v530 = vunpack.c.h.b16 %v260
      %v531 = vunpack.c.l.b16 %v261
      %v532 = vunpack.c.l.b16 %v262
      %v533 = vunpack.c.h.b16 %v262
      %v534 = vunpack.c.l.b16 %v263
      %v535 = vunpack.c.l.b16 %v264
      %v536 = vunpack.c.h.b16 %v264
      %v537 = vunpack.c.l.b16 %v265
      %v538 = vunpack.c.l.b16 %v266
      %v539 = vunpack.c.h.b16 %v266
      %v540 = vunpack.c.l.b16 %v267
      %v541 = vunpack.c.l.b16 %v268
      %v542 = vunpack.c.h.b16 %v268
      %v543 = vunpack.c.l.b16 %v269
      %v544 = vunpack.c.l.b16 %v270
      %v545 = vunpack.c.h.b16 %v270
      %v546 = vunpack.c.l.b16 %v271
      %v547 = vunpack.c.l.b16 %v272
      %v548 = vunpack.c.h.b16 %v272
      %v549 = vunpack.c.l.b16 %v273
      %v550 = vunpack.c.l.b16 %v274
      %v551 = vunpack.c.h.b16 %v274
      %v552 = vunpack.c.l.b16 %v275
      %v553 = vunpack.c.l.b16 %v276
      %v554 = vunpack.c.h.b16 %v276
      %v555 = vunpack.c.l.b16 %v277
      %v556 = vpack.c.b16 %v463, %v460
      %v557 = vpack.c.b16 %v464, %v461
      %v558 = vpack.c.b16 %v465, %v462
      %v559 = vpack.c.b16 %v469, %v466
      %v560 = vpack.c.b16 %v470, %v467
      %v561 = vpack.c.b16 %v471, %v468
      %v562 = vpack.c.b16 %v475, %v472
      %v563 = vpack.c.b16 %v476, %v473
      %v564 = vpack.c.b16 %v477, %v474
      %v565 = vpack.c.b16 %v481, %v478
      %v566 = vpack.c.b16 %v482, %v479
      %v567 = vpack.c.b16 %v483, %v480
      %v568 = vpack.c.b16 %v487, %v484
      %v569 = vpack.c.b16 %v488, %v485
      %v570 = vpack.c.b16 %v489, %v486
      %v571 = vpack.c.b16 %v493, %v490
      %v572 = vpack.c.b16 %v494, %v491
      %v573 = vpack.c.b16 %v495, %v492
      %v574 = vpack.c.b16 %v499, %v496
      %v575 = vpack.c.b16 %v500, %v497
      %v576 = vpack.c.b16 %v501, %v498
      %v577 = vpack.c.b16 %v505, %v502
      %v578 = vpack.c.b16 %v506, %v503
      %v579 = vpack.c.b16 %v507, %v504
      %v580 = vpack.c.b16 %v511, %v508
      %v581 = vpack.c.b16 %v512, %v509
      %v582 = vpack.c.b16 %v513, %v510
      %v583 = vpack.c.b16 %v517, %v514
      %v584 = vpack.c.b16 %v518, %v515
      %v585 = vpack.c.b16 %v519, %v516
      %v586 = vpack.c.b16 %v523, %v520
      %v587 = vpack.c.b16 %v524, %v521
      %v588 = vpack.c.b16 %v525, %v522
      %v589 = vpack.c.b16 %v529, %v526
      %v590 = vpack.c.b16 %v530, %v527
      %v591 = vpack.c.b16 %v531, %v528
      %v592 = vpack.c.b16 %v535, %v532
      %v593 = vpack.c.b16 %v536, %v533
      %v594 = vpack.c.b16 %v537, %v534
      %v595 = vpack.c.b16 %v541, %v538
      %v596 = vpack.c.b16 %v542, %v539
      %v597 = vpack.c.b16 %v543, %v540
      %v598 = vpack.c.b16 %v547, %v544
      %v599 = vpack.c.b16 %v548, %v545
      %v600 = vpack.c.b16 %v549, %v546
      %v601 = vpack.c.b16 %v553, %v550
      %v602 = vpack.c.b16 %v554, %v551
      %v603 = vpack.c.b16 %v555, %v552
      %v748 = vunpack.c.l.b16 %v278
      %v749 = vunpack.c.h.b16 %v278
      %v750 = vunpack.c.l.b16 %v279
      %v751 = vunpack.c.h.b16 %v279
      %v752 = vunpack.c.l.b16 %v280
      %v753 = vunpack.c.h.b16 %v280
      %v754 = vunpack.c.l.b16 %v281
      %v755 = vunpack.c.h.b16 %v281
      %v756 = vunpack.c.l.b16 %v282
      %v757 = vunpack.c.h.b16 %v282
      %v758 = vunpack.c.l.b16 %v283
      %v759 = vunpack.c.h.b16 %v283
      %v760 = vunpack.c.l.b16 %v284
      %v761 = vunpack.c.h.b16 %v284
      %v762 = vunpack.c.l.b16 %v285
      %v763 = vunpack.c.h.b16 %v285
      %v764 = vunpack.c.l.b16 %v286
      %v765 = vunpack.c.h.b16 %v286
      %v766 = vunpack.c.l.b16 %v287
      %v767 = vunpack.c.h.b16 %v287
      %v768 = vunpack.c.l.b16 %v288
      %v769 = vunpack.c.h.b16 %v288
      %v770 = vunpack.c.l.b16 %v289
      %v771 = vunpack.c.h.b16 %v289
      %v772 = vunpack.c.l.b16 %v290
      %v773 = vunpack.c.h.b16 %v290
      %v774 = vunpack.c.l.b16 %v291
      %v775 = vunpack.c.h.b16 %v291
      %v776 = vunpack.c.l.b16 %v292
      %v777 = vunpack.c.h.b16 %v292
      %v778 = vunpack.c.l.b16 %v293
      %v779 = vunpack.c.h.b16 %v293
      %v780 = vunpack.c.l.b16 %v294
      %v781 = vunpack.c.h.b16 %v294
      %v782 = vunpack.c.l.b16 %v295
      %v783 = vunpack.c.h.b16 %v295
      %v784 = vunpack.c.l.b16 %v296
      %v785 = vunpack.c.h.b16 %v296
      %v786 = vunpack.c.l.b16 %v297
      %v787 = vunpack.c.h.b16 %v297
      %v788 = vunpack.c.l.b16 %v298
      %v789 = vunpack.c.h.b16 %v298
      %v790 = vunpack.c.l.b16 %v299
      %v791 = vunpack.c.h.b16 %v299
      %v792 = vunpack.c.l.b16 %v300
      %v793 = vunpack.c.h.b16 %v300
      %v794 = vunpack.c.l.b16 %v301
      %v795 = vunpack.c.h.b16 %v301
      %v796 = vunpack.c.l.b16 %v302
      %v797 = vunpack.c.h.b16 %v302
      %v798 = vunpack.c.l.b16 %v303
      %v799 = vunpack.c.h.b16 %v303
      %v800 = vunpack.c.l.b16 %v304
      %v801 = vunpack.c.h.b16 %v304
      %v802 = vunpack.c.l.b16 %v305
      %v803 = vunpack.c.h.b16 %v305
      %v804 = vunpack.c.l.b16 %v306
      %v805 = vunpack.c.h.b16 %v306
      %v806 = vunpack.c.l.b16 %v307
      %v807 = vunpack.c.h.b16 %v307
      %v808 = vunpack.c.l.b16 %v308
      %v809 = vunpack.c.h.b16 %v308
      %v810 = vunpack.c.l.b16 %v309
      %v811 = vunpack.c.h.b16 %v309
      %v812 = vunpack.c.l.b16 %v310
      %v813 = vunpack.c.h.b16 %v310
      %v814 = vunpack.c.l.b16 %v311
      %v815 = vunpack.c.h.b16 %v311
      %v816 = vunpack.c.l.b16 %v312
      %v817 = vunpack.c.h.b16 %v312
      %v818 = vunpack.c.l.b16 %v313
      %v819 = vunpack.c.h.b16 %v313
      %v820 = vunpack.c.l.b16 %v314
      %v821 = vunpack.c.h.b16 %v314
      %v822 = vunpack.c.l.b16 %v315
      %v823 = vunpack.c.h.b16 %v315
      %v824 = vunpack.c.l.b16 %v316
      %v825 = vunpack.c.h.b16 %v316
      %v826 = vunpack.c.l.b16 %v317
      %v827 = vunpack.c.h.b16 %v317
      %v828 = vunpack.c.l.b16 %v318
      %v829 = vunpack.c.h.b16 %v318
      %v830 = vunpack.c.l.b16 %v319
      %v831 = vunpack.c.h.b16 %v319
      %v832 = vunpack.c.l.b16 %v320
      %v833 = vunpack.c.h.b16 %v320
      %v834 = vunpack.c.l.b16 %v321
      %v835 = vunpack.c.h.b16 %v321
      %v836 = vunpack.c.l.b16 %v322
      %v837 = vunpack.c.h.b16 %v322
      %v838 = vunpack.c.l.b16 %v323
      %v839 = vunpack.c.h.b16 %v323
      %v840 = vunpack.c.l.b16 %v324
      %v841 = vunpack.c.h.b16 %v324
      %v842 = vunpack.c.l.b16 %v325
      %v843 = vunpack.c.h.b16 %v325
      %v844 = vunpack.c.l.b16 %v326
      %v845 = vunpack.c.h.b16 %v326
      %v846 = vunpack.c.l.b16 %v327
      %v847 = vunpack.c.h.b16 %v327
      %v848 = vunpack.c.l.b16 %v328
      %v849 = vunpack.c.h.b16 %v328
      %v850 = vunpack.c.l.b16 %v329
      %v851 = vunpack.c.h.b16 %v329
      %v852 = vunpack.c.l.b16 %v330
      %v853 = vunpack.c.h.b16 %v330
      %v854 = vunpack.c.l.b16 %v331
      %v855 = vunpack.c.h.b16 %v331
      %v856 = vunpack.c.l.b16 %v332
      %v857 = vunpack.c.h.b16 %v332
      %v858 = vunpack.c.l.b16 %v333
      %v859 = vunpack.c.h.b16 %v333
      %v860 = vunpack.c.l.b16 %v334
      %v861 = vunpack.c.h.b16 %v334
      %v862 = vunpack.c.l.b16 %v335
      %v863 = vunpack.c.h.b16 %v335
      %v864 = vunpack.c.l.b16 %v336
      %v865 = vunpack.c.h.b16 %v336
      %v866 = vunpack.c.l.b16 %v337
      %v867 = vunpack.c.h.b16 %v337
      %v868 = vunpack.c.l.b16 %v338
      %v869 = vunpack.c.h.b16 %v338
      %v870 = vunpack.c.l.b16 %v339
      %v871 = vunpack.c.h.b16 %v339
      %v872 = vunpack.c.l.b16 %v340
      %v873 = vunpack.c.h.b16 %v340
      %v874 = vunpack.c.l.b16 %v341
      %v875 = vunpack.c.h.b16 %v341
      %v876 = vunpack.c.l.b16 %v342
      %v877 = vunpack.c.h.b16 %v342
      %v878 = vunpack.c.l.b16 %v343
      %v879 = vunpack.c.h.b16 %v343
      %v880 = vunpack.c.l.b16 %v344
      %v881 = vunpack.c.h.b16 %v344
      %v882 = vunpack.c.l.b16 %v345
      %v883 = vunpack.c.h.b16 %v345
      %v884 = vunpack.c.l.b16 %v346
      %v885 = vunpack.c.h.b16 %v346
      %v886 = vunpack.c.l.b16 %v347
      %v887 = vunpack.c.h.b16 %v347
      %v888 = vunpack.c.l.b16 %v348
      %v889 = vunpack.c.h.b16 %v348
      %v890 = vunpack.c.l.b16 %v349
      %v891 = vunpack.c.h.b16 %v349
      %v892 = vunpack.c.l.b16 %v350
      %v893 = vunpack.c.h.b16 %v350
      %v894 = vunpack.c.l.b16 %v351
      %v895 = vunpack.c.h.b16 %v351
      %v896 = vunpack.c.l.b16 %v352
      %v897 = vunpack.c.h.b16 %v352
      %v898 = vunpack.c.l.b16 %v353
      %v899 = vunpack.c.h.b16 %v353
      %v900 = vunpack.c.l.b16 %v354
      %v901 = vunpack.c.h.b16 %v354
      %v902 = vunpack.c.l.b16 %v355
      %v903 = vunpack.c.h.b16 %v355
      %v904 = vunpack.c.l.b16 %v356
      %v905 = vunpack.c.h.b16 %v356
      %v906 = vunpack.c.l.b16 %v357
      %v907 = vunpack.c.h.b16 %v357
      %v908 = vunpack.c.l.b16 %v358
      %v909 = vunpack.c.h.b16 %v358
      %v910 = vunpack.c.l.b16 %v359
      %v911 = vunpack.c.h.b16 %v359
      %v912 = vunpack.c.l.b16 %v360
      %v913 = vunpack.c.h.b16 %v360
      %v914 = vunpack.c.l.b16 %v361
      %v915 = vunpack.c.h.b16 %v361
      %v916 = vunpack.c.l.b16 %v362
      %v917 = vunpack.c.h.b16 %v362
      %v918 = vunpack.c.l.b16 %v363
      %v919 = vunpack.c.h.b16 %v363
      %v920 = vunpack.c.l.b16 %v364
      %v921 = vunpack.c.h.b16 %v364
      %v922 = vunpack.c.l.b16 %v365
      %v923 = vunpack.c.h.b16 %v365
      %v924 = vunpack.c.l.b16 %v366
      %v925 = vunpack.c.h.b16 %v366
      %v926 = vunpack.c.l.b16 %v367
      %v927 = vunpack.c.h.b16 %v367
      %v928 = vunpack.c.l.b16 %v368
      %v929 = vunpack.c.h.b16 %v368
      %v930 = vunpack.c.l.b16 %v369
      %v931 = vunpack.c.h.b16 %v369
      %v932 = vunpack.c.l.b16 %v370
      %v933 = vunpack.c.h.b16 %v370
      %v934 = vunpack.c.l.b16 %v371
      %v935 = vunpack.c.h.b16 %v371
      %v936 = vunpack.c.l.b16 %v372
      %v937 = vunpack.c.h.b16 %v372
      %v938 = vunpack.c.l.b16 %v373
      %v939 = vunpack.c.h.b16 %v373
      %v940 = vpack.c.b16 %v752, %v748
      %v941 = vpack.c.b16 %v753, %v749
      %v942 = vpack.c.b16 %v754, %v750
      %v943 = vpack.c.b16 %v755, %v751
      %v944 = vpack.c.b16 %v760, %v756
      %v945 = vpack.c.b16 %v761, %v757
      %v946 = vpack.c.b16 %v762, %v758
      %v947 = vpack.c.b16 %v763, %v759
      %v948 = vpack.c.b16 %v768, %v764
      %v949 = vpack.c.b16 %v769, %v765
      %v950 = vpack.c.b16 %v770, %v766
      %v951 = vpack.c.b16 %v771, %v767
      %v952 = vpack.c.b16 %v776, %v772
      %v953 = vpack.c.b16 %v777, %v773
      %v954 = vpack.c.b16 %v778, %v774
      %v955 = vpack.c.b16 %v779, %v775
      %v956 = vpack.c.b16 %v784, %v780
      %v957 = vpack.c.b16 %v785, %v781
      %v958 = vpack.c.b16 %v786, %v782
      %v959 = vpack.c.b16 %v787, %v783
      %v960 = vpack.c.b16 %v792, %v788
      %v961 = vpack.c.b16 %v793, %v789
      %v962 = vpack.c.b16 %v794, %v790
      %v963 = vpack.c.b16 %v795, %v791
      %v964 = vpack.c.b16 %v800, %v796
      %v965 = vpack.c.b16 %v801, %v797
      %v966 = vpack.c.b16 %v802, %v798
      %v967 = vpack.c.b16 %v803, %v799
      %v968 = vpack.c.b16 %v808, %v804
      %v969 = vpack.c.b16 %v809, %v805
      %v970 = vpack.c.b16 %v810, %v806
      %v971 = vpack.c.b16 %v811, %v807
      %v972 = vpack.c.b16 %v816, %v812
      %v973 = vpack.c.b16 %v817, %v813
      %v974 = vpack.c.b16 %v818, %v814
      %v975 = vpack.c.b16 %v819, %v815
      %v976 = vpack.c.b16 %v824, %v820
      %v977 = vpack.c.b16 %v825, %v821
      %v978 = vpack.c.b16 %v826, %v822
      %v979 = vpack.c.b16 %v827, %v823
      %v980 = vpack.c.b16 %v832, %v828
      %v981 = vpack.c.b16 %v833, %v829
      %v982 = vpack.c.b16 %v834, %v830
      %v983 = vpack.c.b16 %v835, %v831
      %v984 = vpack.c.b16 %v840, %v836
      %v985 = vpack.c.b16 %v841, %v837
      %v986 = vpack.c.b16 %v842, %v838
      %v987 = vpack.c.b16 %v843, %v839
      %v988 = vpack.c.b16 %v848, %v844
      %v989 = vpack.c.b16 %v849, %v845
      %v990 = vpack.c.b16 %v850, %v846
      %v991 = vpack.c.b16 %v851, %v847
      %v992 = vpack.c.b16 %v856, %v852
      %v993 = vpack.c.b16 %v857, %v853
      %v994 = vpack.c.b16 %v858, %v854
      %v995 = vpack.c.b16 %v859, %v855
      %v996 = vpack.c.b16 %v864, %v860
      %v997 = vpack.c.b16 %v865, %v861
      %v998 = vpack.c.b16 %v866, %v862
      %v999 = vpack.c.b16 %v867, %v863
      %v1000 = vpack.c.b16 %v872, %v868
      %v1001 = vpack.c.b16 %v873, %v869
      %v1002 = vpack.c.b16 %v874, %v870
      %v1003 = vpack.c.b16 %v875, %v871
      %v1004 = vpack.c.b16 %v880, %v876
      %v1005 = vpack.c.b16 %v881, %v877
      %v1006 = vpack.c.b16 %v882, %v878
      %v1007 = vpack.c.b16 %v883, %v879
      %v1008 = vpack.c.b16 %v888, %v884
      %v1009 = vpack.c.b16 %v889, %v885
      %v1010 = vpack.c.b16 %v890, %v886
      %v1011 = vpack.c.b16 %v891, %v887
      %v1012 = vpack.c.b16 %v896, %v892
      %v1013 = vpack.c.b16 %v897, %v893
      %v1014 = vpack.c.b16 %v898, %v894
      %v1015 = vpack.c.b16 %v899, %v895
      %v1016 = vpack.c.b16 %v904, %v900
      %v1017 = vpack.c.b16 %v905, %v901
      %v1018 = vpack.c.b16 %v906, %v902
      %v1019 = vpack.c.b16 %v907, %v903
      %v1020 = vpack.c.b16 %v912, %v908
      %v1021 = vpack.c.b16 %v913, %v909
      %v1022 = vpack.c.b16 %v914, %v910
      %v1023 = vpack.c.b16 %v915, %v911
      %v1024 = vpack.c.b16 %v920, %v916
      %v1025 = vpack.c.b16 %v921, %v917
      %v1026 = vpack.c.b16 %v922, %v918
      %v1027 = vpack.c.b16 %v923, %v919
      %v1028 = vpack.c.b16 %v928, %v924
      %v1029 = vpack.c.b16 %v929, %v925
      %v1030 = vpack.c.b16 %v930, %v926
      %v1031 = vpack.c.b16 %v931, %v927
      %v1032 = vpack.c.b16 %v936, %v932
      %v1033 = vpack.c.b16 %v937, %v933
      %v1034 = vpack.c.b16 %v938, %v934
      %v1035 = vpack.c.b16 %v939, %v935
      %1132 = vmatprep.subr.bf16.mxu0 %v969
      %1133 = vmatpush1.bf16.msra.mxu0 %v968
      %1134 = vmatprep.subr.bf16.mxu0 %v965
      %1135 = vmatpush1.bf16.msra.mxu0 %v964
      %1136 = vmatprep.subr.bf16.mxu0 %v961
      %1137 = vmatpush1.bf16.msra.mxu0 %v960
      %1138 = vmatprep.subr.bf16.mxu0 %v957
      %1139 = vmatpush1.bf16.msra.mxu0 %v956
      %1140 = vmatprep.subr.bf16.mxu0 %v953
      %1141 = vmatpush1.bf16.msra.mxu0 %v952
      %1142 = vmatprep.subr.bf16.mxu0 %v949
      %1143 = vmatpush1.bf16.msra.mxu0 %v948
      %1144 = vmatprep.subr.bf16.mxu0 %v945
      %1145 = vmatpush1.bf16.msra.mxu0 %v944
      %1146 = vmatprep.subr.bf16.mxu0 %v941
      %1147 = vmatpush1.bf16.msra.mxu0 %v940
      %1148 = vmatprep.subr.bf16.mxu0 %v1001
      %1149 = vmatpush2.bf16.msra.mxu0 %v1000
      %1150 = vmatprep.subr.bf16.mxu0 %v997
      %1151 = vmatpush2.bf16.msra.mxu0 %v996
      %1152 = vmatprep.subr.bf16.mxu0 %v993
      %1153 = vmatpush2.bf16.msra.mxu0 %v992
      %1154 = vmatprep.subr.bf16.mxu0 %v989
      %1155 = vmatpush2.bf16.msra.mxu0 %v988
      %1156 = vmatprep.subr.bf16.mxu0 %v985
      %1157 = vmatpush2.bf16.msra.mxu0 %v984
      %1158 = vmatprep.subr.bf16.mxu0 %v981
      %1159 = vmatpush2.bf16.msra.mxu0 %v980
      %1160 = vmatprep.subr.bf16.mxu0 %v977
      %1161 = vmatpush2.bf16.msra.mxu0 %v976
      %1162 = vmatprep.subr.bf16.mxu0 %v973
      %1163 = vmatpush2.bf16.msra.mxu0 %v972
      %1164 = vmatprep.mubr.bf16.mxu0 %v557
      %1165 = vmatmul.mubr.bf16.gmra.mxu0 %v556
      %v1166 = vpop.f32.mrf.mxu0
      %v1167 = vadd.f32 %v379, %v1166
      %v1168 = vpop.f32.mrf.mxu0
      %v1169 = vadd.f32 %v383, %v1168
      %v1170 = vpop.f32.mrf.mxu0
      %v1171 = vadd.f32 %v379, %v1170
      %v1172 = vpop.f32.mrf.mxu0
      %v1173 = vadd.f32 %v383, %v1172
      %1174 = vmatprep.mubr.bf16.mxu0 %v560
      %1175 = vmatmul.mubr.bf16.gmra.mxu0 %v559
      %v1176 = vpop.f32.mrf.mxu0
      %v1177 = vadd.f32 %v379, %v1176
      %v1178 = vpop.f32.mrf.mxu0
      %v1179 = vadd.f32 %v383, %v1178
      %v1180 = vpop.f32.mrf.mxu0
      %v1181 = vadd.f32 %v379, %v1180
      %v1182 = vpop.f32.mrf.mxu0
      %v1183 = vadd.f32 %v383, %v1182
      %1184 = vmatprep.mubr.bf16.mxu0 %v563
      %1185 = vmatmul.mubr.bf16.gmra.mxu0 %v562
      %v1186 = vpop.f32.mrf.mxu0
      %v1187 = vadd.f32 %v379, %v1186
      %v1188 = vpop.f32.mrf.mxu0
      %v1189 = vadd.f32 %v383, %v1188
      %v1190 = vpop.f32.mrf.mxu0
      %v1191 = vadd.f32 %v379, %v1190
      %v1192 = vpop.f32.mrf.mxu0
      %v1193 = vadd.f32 %v383, %v1192
      %1194 = vmatprep.mubr.bf16.mxu0 %v566
      %1195 = vmatmul.mubr.bf16.gmra.mxu0 %v565
      %v1196 = vpop.f32.mrf.mxu0
      %v1197 = vadd.f32 %v379, %v1196
      %v1198 = vpop.f32.mrf.mxu0
      %v1199 = vadd.f32 %v383, %v1198
      %v1200 = vpop.f32.mrf.mxu0
      %v1201 = vadd.f32 %v379, %v1200
      %v1202 = vpop.f32.mrf.mxu0
      %v1203 = vadd.f32 %v383, %v1202
      %1204 = vmatprep.mubr.bf16.mxu0 %v569
      %1205 = vmatmul.mubr.bf16.gmra.mxu0 %v568
      %v1206 = vpop.f32.mrf.mxu0
      %v1207 = vadd.f32 %v379, %v1206
      %v1208 = vpop.f32.mrf.mxu0
      %v1209 = vadd.f32 %v383, %v1208
      %v1210 = vpop.f32.mrf.mxu0
      %v1211 = vadd.f32 %v379, %v1210
      %v1212 = vpop.f32.mrf.mxu0
      %v1213 = vadd.f32 %v383, %v1212
      %1214 = vmatprep.mubr.bf16.mxu0 %v572
      %1215 = vmatmul.mubr.bf16.gmra.mxu0 %v571
      %v1216 = vpop.f32.mrf.mxu0
      %v1217 = vadd.f32 %v379, %v1216
      %v1218 = vpop.f32.mrf.mxu0
      %v1219 = vadd.f32 %v383, %v1218
      %v1220 = vpop.f32.mrf.mxu0
      %v1221 = vadd.f32 %v379, %v1220
      %v1222 = vpop.f32.mrf.mxu0
      %v1223 = vadd.f32 %v383, %v1222
      %1224 = vmatprep.mubr.bf16.mxu0 %v575
      %1225 = vmatmul.mubr.bf16.gmra.mxu0 %v574
      %v1226 = vpop.f32.mrf.mxu0
      %v1227 = vadd.f32 %v379, %v1226
      %v1228 = vpop.f32.mrf.mxu0
      %v1229 = vadd.f32 %v383, %v1228
      %v1230 = vpop.f32.mrf.mxu0
      %v1231 = vadd.f32 %v379, %v1230
      %v1232 = vpop.f32.mrf.mxu0
      %v1233 = vadd.f32 %v383, %v1232
      %1234 = vmatprep.mubr.bf16.mxu0 %v578
      %1235 = vmatmul.mubr.bf16.gmra.mxu0 %v577
      %v1236 = vpop.f32.mrf.mxu0
      %v1237 = vadd.f32 %v379, %v1236
      %v1238 = vpop.f32.mrf.mxu0
      %v1239 = vadd.f32 %v383, %v1238
      %v1240 = vpop.f32.mrf.mxu0
      %v1241 = vadd.f32 %v379, %v1240
      %v1242 = vpop.f32.mrf.mxu0
      %v1243 = vadd.f32 %v383, %v1242
      %1244 = vmatprep.mubr.bf16.mxu0 %v581
      %1245 = vmatmul.mubr.bf16.gmra.mxu0 %v580
      %v1246 = vpop.f32.mrf.mxu0
      %v1247 = vadd.f32 %v379, %v1246
      %v1248 = vpop.f32.mrf.mxu0
      %v1249 = vadd.f32 %v383, %v1248
      %v1250 = vpop.f32.mrf.mxu0
      %v1251 = vadd.f32 %v379, %v1250
      %v1252 = vpop.f32.mrf.mxu0
      %v1253 = vadd.f32 %v383, %v1252
      %1254 = vmatprep.mubr.bf16.mxu0 %v584
      %1255 = vmatmul.mubr.bf16.gmra.mxu0 %v583
      %v1256 = vpop.f32.mrf.mxu0
      %v1257 = vadd.f32 %v379, %v1256
      %v1258 = vpop.f32.mrf.mxu0
      %v1259 = vadd.f32 %v383, %v1258
      %v1260 = vpop.f32.mrf.mxu0
      %v1261 = vadd.f32 %v379, %v1260
      %v1262 = vpop.f32.mrf.mxu0
      %v1263 = vadd.f32 %v383, %v1262
      %1264 = vmatprep.mubr.bf16.mxu0 %v587
      %1265 = vmatmul.mubr.bf16.gmra.mxu0 %v586
      %v1266 = vpop.f32.mrf.mxu0
      %v1267 = vadd.f32 %v379, %v1266
      %v1268 = vpop.f32.mrf.mxu0
      %v1269 = vadd.f32 %v383, %v1268
      %v1270 = vpop.f32.mrf.mxu0
      %v1271 = vadd.f32 %v379, %v1270
      %v1272 = vpop.f32.mrf.mxu0
      %v1273 = vadd.f32 %v383, %v1272
      %1274 = vmatprep.mubr.bf16.mxu0 %v590
      %1275 = vmatmul.mubr.bf16.gmra.mxu0 %v589
      %v1276 = vpop.f32.mrf.mxu0
      %v1277 = vadd.f32 %v379, %v1276
      %v1278 = vpop.f32.mrf.mxu0
      %v1279 = vadd.f32 %v383, %v1278
      %v1280 = vpop.f32.mrf.mxu0
      %v1281 = vadd.f32 %v379, %v1280
      %v1282 = vpop.f32.mrf.mxu0
      %v1283 = vadd.f32 %v383, %v1282
      %1284 = vmatprep.mubr.bf16.mxu0 %v593
      %1285 = vmatmul.mubr.bf16.gmra.mxu0 %v592
      %v1286 = vpop.f32.mrf.mxu0
      %v1287 = vadd.f32 %v379, %v1286
      %v1288 = vpop.f32.mrf.mxu0
      %v1289 = vadd.f32 %v383, %v1288
      %v1290 = vpop.f32.mrf.mxu0
      %v1291 = vadd.f32 %v379, %v1290
      %v1292 = vpop.f32.mrf.mxu0
      %v1293 = vadd.f32 %v383, %v1292
      %1294 = vmatprep.mubr.bf16.mxu0 %v596
      %1295 = vmatmul.mubr.bf16.gmra.mxu0 %v595
      %v1296 = vpop.f32.mrf.mxu0
      %v1297 = vadd.f32 %v379, %v1296
      %v1298 = vpop.f32.mrf.mxu0
      %v1299 = vadd.f32 %v383, %v1298
      %v1300 = vpop.f32.mrf.mxu0
      %v1301 = vadd.f32 %v379, %v1300
      %v1302 = vpop.f32.mrf.mxu0
      %v1303 = vadd.f32 %v383, %v1302
      %1304 = vmatprep.mubr.bf16.mxu0 %v599
      %1305 = vmatmul.mubr.bf16.gmra.mxu0 %v598
      %v1306 = vpop.f32.mrf.mxu0
      %v1307 = vadd.f32 %v379, %v1306
      %v1308 = vpop.f32.mrf.mxu0
      %v1309 = vadd.f32 %v383, %v1308
      %v1310 = vpop.f32.mrf.mxu0
      %v1311 = vadd.f32 %v379, %v1310
      %v1312 = vpop.f32.mrf.mxu0
      %v1313 = vadd.f32 %v383, %v1312
      %1314 = vmatprep.mubr.bf16.mxu0 %v602
      %1315 = vmatmul.mubr.bf16.gmra.mxu0 %v601
      %v1316 = vpop.f32.mrf.mxu0
      %v1317 = vadd.f32 %v379, %v1316
      %v1318 = vpop.f32.mrf.mxu0
      %v1319 = vadd.f32 %v383, %v1318
      %v1320 = vpop.f32.mrf.mxu0
      %v1321 = vadd.f32 %v379, %v1320
      %v1322 = vpop.f32.mrf.mxu0
      %v1323 = vadd.f32 %v383, %v1322
      %1324 = vdwg.mxu0
      %1325 = vmatprep.subr.bf16.mxu0 %v1033
      %1326 = vmatpush1.bf16.msra.mxu0 %v1032
      %1327 = vmatprep.subr.bf16.mxu0 %v1029
      %1328 = vmatpush1.bf16.msra.mxu0 %v1028
      %1329 = vmatprep.subr.bf16.mxu0 %v1025
      %1330 = vmatpush1.bf16.msra.mxu0 %v1024
      %1331 = vmatprep.subr.bf16.mxu0 %v1021
      %1332 = vmatpush1.bf16.msra.mxu0 %v1020
      %1333 = vmatprep.subr.bf16.mxu0 %v1017
      %1334 = vmatpush1.bf16.msra.mxu0 %v1016
      %1335 = vmatprep.subr.bf16.mxu0 %v1013
      %1336 = vmatpush1.bf16.msra.mxu0 %v1012
      %1337 = vmatprep.subr.bf16.mxu0 %v1009
      %1338 = vmatpush1.bf16.msra.mxu0 %v1008
      %1339 = vmatprep.subr.bf16.mxu0 %v1005
      %1340 = vmatpush1.bf16.msra.mxu0 %v1004
      %1341 = vmatprep.subr.bf16.mxu0 0
      %1342 = vmatpush2.bf16.msra.mxu0 0
      %1343 = vmatprep.subr.bf16.mxu0 0
      %1344 = vmatpush2.bf16.msra.mxu0 0
      %1345 = vmatprep.subr.bf16.mxu0 0
      %1346 = vmatpush2.bf16.msra.mxu0 0
      %1347 = vmatprep.subr.bf16.mxu0 0
      %1348 = vmatpush2.bf16.msra.mxu0 0
      %1349 = vmatprep.subr.bf16.mxu0 0
      %1350 = vmatpush2.bf16.msra.mxu0 0
      %1351 = vmatprep.subr.bf16.mxu0 0
      %1352 = vmatpush2.bf16.msra.mxu0 0
      %1353 = vmatprep.subr.bf16.mxu0 0
      %1354 = vmatpush2.bf16.msra.mxu0 0
      %1355 = vmatprep.subr.bf16.mxu0 0
      %1356 = vmatpush2.bf16.msra.mxu0 0
      %1357 = vmatprep.mubr.bf16.mxu0 0
      %1358 = vmatmul.mubr.bf16.gmra.mxu0 %v558
      %v1359 = vpop.f32.mrf.mxu0
      %v1360 = vadd.f32 %v1167, %v1359
      %v1361 = vpop.f32.mrf.mxu0
      %v1362 = vadd.f32 %v1169, %v1361
      %v1363 = vpop.f32.mrf.mxu0
      %v1364 = vadd.f32 %v1171, %v1363
      %v1365 = vpop.f32.mrf.mxu0
      %v1366 = vadd.f32 %v1173, %v1365
      %1367 = vmatprep.mubr.bf16.mxu0 0
      %1368 = vmatmul.mubr.bf16.gmra.mxu0 %v561
      %v1369 = vpop.f32.mrf.mxu0
      %v1370 = vadd.f32 %v1177, %v1369
      %v1371 = vpop.f32.mrf.mxu0
      %v1372 = vadd.f32 %v1179, %v1371
      %v1373 = vpop.f32.mrf.mxu0
      %v1374 = vadd.f32 %v1181, %v1373
      %v1375 = vpop.f32.mrf.mxu0
      %v1376 = vadd.f32 %v1183, %v1375
      %1377 = vmatprep.mubr.bf16.mxu0 0
      %1378 = vmatmul.mubr.bf16.gmra.mxu0 %v564
      %v1379 = vpop.f32.mrf.mxu0
      %v1380 = vadd.f32 %v1187, %v1379
      %v1381 = vpop.f32.mrf.mxu0
      %v1382 = vadd.f32 %v1189, %v1381
      %v1383 = vpop.f32.mrf.mxu0
      %v1384 = vadd.f32 %v1191, %v1383
      %v1385 = vpop.f32.mrf.mxu0
      %v1386 = vadd.f32 %v1193, %v1385
      %1387 = vmatprep.mubr.bf16.mxu0 0
      %1388 = vmatmul.mubr.bf16.gmra.mxu0 %v567
      %v1389 = vpop.f32.mrf.mxu0
      %v1390 = vadd.f32 %v1197, %v1389
      %v1391 = vpop.f32.mrf.mxu0
      %v1392 = vadd.f32 %v1199, %v1391
      %v1393 = vpop.f32.mrf.mxu0
      %v1394 = vadd.f32 %v1201, %v1393
      %v1395 = vpop.f32.mrf.mxu0
      %v1396 = vadd.f32 %v1203, %v1395
      %1397 = vmatprep.mubr.bf16.mxu0 0
      %1398 = vmatmul.mubr.bf16.gmra.mxu0 %v570
      %v1399 = vpop.f32.mrf.mxu0
      %v1400 = vadd.f32 %v1207, %v1399
      %v1401 = vpop.f32.mrf.mxu0
      %v1402 = vadd.f32 %v1209, %v1401
      %v1403 = vpop.f32.mrf.mxu0
      %v1404 = vadd.f32 %v1211, %v1403
      %v1405 = vpop.f32.mrf.mxu0
      %v1406 = vadd.f32 %v1213, %v1405
      %1407 = vmatprep.mubr.bf16.mxu0 0
      %1408 = vmatmul.mubr.bf16.gmra.mxu0 %v573
      %v1409 = vpop.f32.mrf.mxu0
      %v1410 = vadd.f32 %v1217, %v1409
      %v1411 = vpop.f32.mrf.mxu0
      %v1412 = vadd.f32 %v1219, %v1411
      %v1413 = vpop.f32.mrf.mxu0
      %v1414 = vadd.f32 %v1221, %v1413
      %v1415 = vpop.f32.mrf.mxu0
      %v1416 = vadd.f32 %v1223, %v1415
      %1417 = vmatprep.mubr.bf16.mxu0 0
      %1418 = vmatmul.mubr.bf16.gmra.mxu0 %v576
      %v1419 = vpop.f32.mrf.mxu0
      %v1420 = vadd.f32 %v1227, %v1419
      %v1421 = vpop.f32.mrf.mxu0
      %v1422 = vadd.f32 %v1229, %v1421
      %v1423 = vpop.f32.mrf.mxu0
      %v1424 = vadd.f32 %v1231, %v1423
      %v1425 = vpop.f32.mrf.mxu0
      %v1426 = vadd.f32 %v1233, %v1425
      %1427 = vmatprep.mubr.bf16.mxu0 0
      %1428 = vmatmul.mubr.bf16.gmra.mxu0 %v579
      %v1429 = vpop.f32.mrf.mxu0
      %v1430 = vadd.f32 %v1237, %v1429
      %v1431 = vpop.f32.mrf.mxu0
      %v1432 = vadd.f32 %v1239, %v1431
      %v1433 = vpop.f32.mrf.mxu0
      %v1434 = vadd.f32 %v1241, %v1433
      %v1435 = vpop.f32.mrf.mxu0
      %v1436 = vadd.f32 %v1243, %v1435
      %1437 = vmatprep.mubr.bf16.mxu0 0
      %1438 = vmatmul.mubr.bf16.gmra.mxu0 %v582
      %v1439 = vpop.f32.mrf.mxu0
      %v1440 = vadd.f32 %v1247, %v1439
      %v1441 = vpop.f32.mrf.mxu0
      %v1442 = vadd.f32 %v1249, %v1441
      %v1443 = vpop.f32.mrf.mxu0
      %v1444 = vadd.f32 %v1251, %v1443
      %v1445 = vpop.f32.mrf.mxu0
      %v1446 = vadd.f32 %v1253, %v1445
      %1447 = vmatprep.mubr.bf16.mxu0 0
      %1448 = vmatmul.mubr.bf16.gmra.mxu0 %v585
      %v1449 = vpop.f32.mrf.mxu0
      %v1450 = vadd.f32 %v1257, %v1449
      %v1451 = vpop.f32.mrf.mxu0
      %v1452 = vadd.f32 %v1259, %v1451
      %v1453 = vpop.f32.mrf.mxu0
      %v1454 = vadd.f32 %v1261, %v1453
      %v1455 = vpop.f32.mrf.mxu0
      %v1456 = vadd.f32 %v1263, %v1455
      %1457 = vmatprep.mubr.bf16.mxu0 0
      %1458 = vmatmul.mubr.bf16.gmra.mxu0 %v588
      %v1459 = vpop.f32.mrf.mxu0
      %v1460 = vadd.f32 %v1267, %v1459
      %v1461 = vpop.f32.mrf.mxu0
      %v1462 = vadd.f32 %v1269, %v1461
      %v1463 = vpop.f32.mrf.mxu0
      %v1464 = vadd.f32 %v1271, %v1463
      %v1465 = vpop.f32.mrf.mxu0
      %v1466 = vadd.f32 %v1273, %v1465
      %1467 = vmatprep.mubr.bf16.mxu0 0
      %1468 = vmatmul.mubr.bf16.gmra.mxu0 %v591
      %v1469 = vpop.f32.mrf.mxu0
      %v1470 = vadd.f32 %v1277, %v1469
      %v1471 = vpop.f32.mrf.mxu0
      %v1472 = vadd.f32 %v1279, %v1471
      %v1473 = vpop.f32.mrf.mxu0
      %v1474 = vadd.f32 %v1281, %v1473
      %v1475 = vpop.f32.mrf.mxu0
      %v1476 = vadd.f32 %v1283, %v1475
      %1477 = vmatprep.mubr.bf16.mxu0 0
      %1478 = vmatmul.mubr.bf16.gmra.mxu0 %v594
      %v1479 = vpop.f32.mrf.mxu0
      %v1480 = vadd.f32 %v1287, %v1479
      %v1481 = vpop.f32.mrf.mxu0
      %v1482 = vadd.f32 %v1289, %v1481
      %v1483 = vpop.f32.mrf.mxu0
      %v1484 = vadd.f32 %v1291, %v1483
      %v1485 = vpop.f32.mrf.mxu0
      %v1486 = vadd.f32 %v1293, %v1485
      %1487 = vmatprep.mubr.bf16.mxu0 0
      %1488 = vmatmul.mubr.bf16.gmra.mxu0 %v597
      %v1489 = vpop.f32.mrf.mxu0
      %v1490 = vadd.f32 %v1297, %v1489
      %v1491 = vpop.f32.mrf.mxu0
      %v1492 = vadd.f32 %v1299, %v1491
      %v1493 = vpop.f32.mrf.mxu0
      %v1494 = vadd.f32 %v1301, %v1493
      %v1495 = vpop.f32.mrf.mxu0
      %v1496 = vadd.f32 %v1303, %v1495
      %1497 = vmatprep.mubr.bf16.mxu0 0
      %1498 = vmatmul.mubr.bf16.gmra.mxu0 %v600
      %v1499 = vpop.f32.mrf.mxu0
      %v1500 = vadd.f32 %v1307, %v1499
      %v1501 = vpop.f32.mrf.mxu0
      %v1502 = vadd.f32 %v1309, %v1501
      %v1503 = vpop.f32.mrf.mxu0
      %v1504 = vadd.f32 %v1311, %v1503
      %v1505 = vpop.f32.mrf.mxu0
      %v1506 = vadd.f32 %v1313, %v1505
      %1507 = vmatprep.mubr.bf16.mxu0 0
      %1508 = vmatmul.mubr.bf16.gmra.mxu0 %v603
      %v1509 = vpop.f32.mrf.mxu0
      %v1510 = vadd.f32 %v1317, %v1509
      %v1511 = vpop.f32.mrf.mxu0
      %v1512 = vadd.f32 %v1319, %v1511
      %v1513 = vpop.f32.mrf.mxu0
      %v1514 = vadd.f32 %v1321, %v1513
      %v1515 = vpop.f32.mrf.mxu0
      %v1516 = vadd.f32 %v1323, %v1515
      %1517 = vdwg.mxu0
      %1518 = vmatprep.subr.bf16.mxu0 %v971
      %1519 = vmatpush1.bf16.msra.mxu0 %v970
      %1520 = vmatprep.subr.bf16.mxu0 %v967
      %1521 = vmatpush1.bf16.msra.mxu0 %v966
      %1522 = vmatprep.subr.bf16.mxu0 %v963
      %1523 = vmatpush1.bf16.msra.mxu0 %v962
      %1524 = vmatprep.subr.bf16.mxu0 %v959
      %1525 = vmatpush1.bf16.msra.mxu0 %v958
      %1526 = vmatprep.subr.bf16.mxu0 %v955
      %1527 = vmatpush1.bf16.msra.mxu0 %v954
      %1528 = vmatprep.subr.bf16.mxu0 %v951
      %1529 = vmatpush1.bf16.msra.mxu0 %v950
      %1530 = vmatprep.subr.bf16.mxu0 %v947
      %1531 = vmatpush1.bf16.msra.mxu0 %v946
      %1532 = vmatprep.subr.bf16.mxu0 %v943
      %1533 = vmatpush1.bf16.msra.mxu0 %v942
      %1534 = vmatprep.subr.bf16.mxu0 %v1003
      %1535 = vmatpush2.bf16.msra.mxu0 %v1002
      %1536 = vmatprep.subr.bf16.mxu0 %v999
      %1537 = vmatpush2.bf16.msra.mxu0 %v998
      %1538 = vmatprep.subr.bf16.mxu0 %v995
      %1539 = vmatpush2.bf16.msra.mxu0 %v994
      %1540 = vmatprep.subr.bf16.mxu0 %v991
      %1541 = vmatpush2.bf16.msra.mxu0 %v990
      %1542 = vmatprep.subr.bf16.mxu0 %v987
      %1543 = vmatpush2.bf16.msra.mxu0 %v986
      %1544 = vmatprep.subr.bf16.mxu0 %v983
      %1545 = vmatpush2.bf16.msra.mxu0 %v982
      %1546 = vmatprep.subr.bf16.mxu0 %v979
      %1547 = vmatpush2.bf16.msra.mxu0 %v978
      %1548 = vmatprep.subr.bf16.mxu0 %v975
      %1549 = vmatpush2.bf16.msra.mxu0 %v974
      %1550 = vmatprep.mubr.bf16.mxu0 %v557
      %1551 = vmatmul.mubr.bf16.gmra.mxu0 %v556
      %v1552 = vpop.f32.mrf.mxu0
      %v1553 = vadd.f32 %v387, %v1552
      %v1554 = vpop.f32.mrf.mxu0
      %v1555 = vadd.f32 %v391, %v1554
      %v1556 = vpop.f32.mrf.mxu0
      %v1557 = vadd.f32 %v387, %v1556
      %v1558 = vpop.f32.mrf.mxu0
      %v1559 = vadd.f32 %v391, %v1558
      %1560 = vmatprep.mubr.bf16.mxu0 %v560
      %1561 = vmatmul.mubr.bf16.gmra.mxu0 %v559
      %v1562 = vpop.f32.mrf.mxu0
      %v1563 = vadd.f32 %v387, %v1562
      %v1564 = vpop.f32.mrf.mxu0
      %v1565 = vadd.f32 %v391, %v1564
      %v1566 = vpop.f32.mrf.mxu0
      %v1567 = vadd.f32 %v387, %v1566
      %v1568 = vpop.f32.mrf.mxu0
      %v1569 = vadd.f32 %v391, %v1568
      %1570 = vmatprep.mubr.bf16.mxu0 %v563
      %1571 = vmatmul.mubr.bf16.gmra.mxu0 %v562
      %v1572 = vpop.f32.mrf.mxu0
      %v1573 = vadd.f32 %v387, %v1572
      %v1574 = vpop.f32.mrf.mxu0
      %v1575 = vadd.f32 %v391, %v1574
      %v1576 = vpop.f32.mrf.mxu0
      %v1577 = vadd.f32 %v387, %v1576
      %v1578 = vpop.f32.mrf.mxu0
      %v1579 = vadd.f32 %v391, %v1578
      %1580 = vmatprep.mubr.bf16.mxu0 %v566
      %1581 = vmatmul.mubr.bf16.gmra.mxu0 %v565
      %v1582 = vpop.f32.mrf.mxu0
      %v1583 = vadd.f32 %v387, %v1582
      %v1584 = vpop.f32.mrf.mxu0
      %v1585 = vadd.f32 %v391, %v1584
      %v1586 = vpop.f32.mrf.mxu0
      %v1587 = vadd.f32 %v387, %v1586
      %v1588 = vpop.f32.mrf.mxu0
      %v1589 = vadd.f32 %v391, %v1588
      %1590 = vmatprep.mubr.bf16.mxu0 %v569
      %1591 = vmatmul.mubr.bf16.gmra.mxu0 %v568
      %v1592 = vpop.f32.mrf.mxu0
      %v1593 = vadd.f32 %v387, %v1592
      %v1594 = vpop.f32.mrf.mxu0
      %v1595 = vadd.f32 %v391, %v1594
      %v1596 = vpop.f32.mrf.mxu0
      %v1597 = vadd.f32 %v387, %v1596
      %v1598 = vpop.f32.mrf.mxu0
      %v1599 = vadd.f32 %v391, %v1598
      %1600 = vmatprep.mubr.bf16.mxu0 %v572
      %1601 = vmatmul.mubr.bf16.gmra.mxu0 %v571
      %v1602 = vpop.f32.mrf.mxu0
      %v1603 = vadd.f32 %v387, %v1602
      %v1604 = vpop.f32.mrf.mxu0
      %v1605 = vadd.f32 %v391, %v1604
      %v1606 = vpop.f32.mrf.mxu0
      %v1607 = vadd.f32 %v387, %v1606
      %v1608 = vpop.f32.mrf.mxu0
      %v1609 = vadd.f32 %v391, %v1608
      %1610 = vmatprep.mubr.bf16.mxu0 %v575
      %1611 = vmatmul.mubr.bf16.gmra.mxu0 %v574
      %v1612 = vpop.f32.mrf.mxu0
      %v1613 = vadd.f32 %v387, %v1612
      %v1614 = vpop.f32.mrf.mxu0
      %v1615 = vadd.f32 %v391, %v1614
      %v1616 = vpop.f32.mrf.mxu0
      %v1617 = vadd.f32 %v387, %v1616
      %v1618 = vpop.f32.mrf.mxu0
      %v1619 = vadd.f32 %v391, %v1618
      %1620 = vmatprep.mubr.bf16.mxu0 %v578
      %1621 = vmatmul.mubr.bf16.gmra.mxu0 %v577
      %v1622 = vpop.f32.mrf.mxu0
      %v1623 = vadd.f32 %v387, %v1622
      %v1624 = vpop.f32.mrf.mxu0
      %v1625 = vadd.f32 %v391, %v1624
      %v1626 = vpop.f32.mrf.mxu0
      %v1627 = vadd.f32 %v387, %v1626
      %v1628 = vpop.f32.mrf.mxu0
      %v1629 = vadd.f32 %v391, %v1628
      %1630 = vmatprep.mubr.bf16.mxu0 %v581
      %1631 = vmatmul.mubr.bf16.gmra.mxu0 %v580
      %v1632 = vpop.f32.mrf.mxu0
      %v1633 = vadd.f32 %v387, %v1632
      %v1634 = vpop.f32.mrf.mxu0
      %v1635 = vadd.f32 %v391, %v1634
      %v1636 = vpop.f32.mrf.mxu0
      %v1637 = vadd.f32 %v387, %v1636
      %v1638 = vpop.f32.mrf.mxu0
      %v1639 = vadd.f32 %v391, %v1638
      %1640 = vmatprep.mubr.bf16.mxu0 %v584
      %1641 = vmatmul.mubr.bf16.gmra.mxu0 %v583
      %v1642 = vpop.f32.mrf.mxu0
      %v1643 = vadd.f32 %v387, %v1642
      %v1644 = vpop.f32.mrf.mxu0
      %v1645 = vadd.f32 %v391, %v1644
      %v1646 = vpop.f32.mrf.mxu0
      %v1647 = vadd.f32 %v387, %v1646
      %v1648 = vpop.f32.mrf.mxu0
      %v1649 = vadd.f32 %v391, %v1648
      %1650 = vmatprep.mubr.bf16.mxu0 %v587
      %1651 = vmatmul.mubr.bf16.gmra.mxu0 %v586
      %v1652 = vpop.f32.mrf.mxu0
      %v1653 = vadd.f32 %v387, %v1652
      %v1654 = vpop.f32.mrf.mxu0
      %v1655 = vadd.f32 %v391, %v1654
      %v1656 = vpop.f32.mrf.mxu0
      %v1657 = vadd.f32 %v387, %v1656
      %v1658 = vpop.f32.mrf.mxu0
      %v1659 = vadd.f32 %v391, %v1658
      %1660 = vmatprep.mubr.bf16.mxu0 %v590
      %1661 = vmatmul.mubr.bf16.gmra.mxu0 %v589
      %v1662 = vpop.f32.mrf.mxu0
      %v1663 = vadd.f32 %v387, %v1662
      %v1664 = vpop.f32.mrf.mxu0
      %v1665 = vadd.f32 %v391, %v1664
      %v1666 = vpop.f32.mrf.mxu0
      %v1667 = vadd.f32 %v387, %v1666
      %v1668 = vpop.f32.mrf.mxu0
      %v1669 = vadd.f32 %v391, %v1668
      %1670 = vmatprep.mubr.bf16.mxu0 %v593
      %1671 = vmatmul.mubr.bf16.gmra.mxu0 %v592
      %v1672 = vpop.f32.mrf.mxu0
      %v1673 = vadd.f32 %v387, %v1672
      %v1674 = vpop.f32.mrf.mxu0
      %v1675 = vadd.f32 %v391, %v1674
      %v1676 = vpop.f32.mrf.mxu0
      %v1677 = vadd.f32 %v387, %v1676
      %v1678 = vpop.f32.mrf.mxu0
      %v1679 = vadd.f32 %v391, %v1678
      %1680 = vmatprep.mubr.bf16.mxu0 %v596
      %1681 = vmatmul.mubr.bf16.gmra.mxu0 %v595
      %v1682 = vpop.f32.mrf.mxu0
      %v1683 = vadd.f32 %v387, %v1682
      %v1684 = vpop.f32.mrf.mxu0
      %v1685 = vadd.f32 %v391, %v1684
      %v1686 = vpop.f32.mrf.mxu0
      %v1687 = vadd.f32 %v387, %v1686
      %v1688 = vpop.f32.mrf.mxu0
      %v1689 = vadd.f32 %v391, %v1688
      %1690 = vmatprep.mubr.bf16.mxu0 %v599
      %1691 = vmatmul.mubr.bf16.gmra.mxu0 %v598
      %v1692 = vpop.f32.mrf.mxu0
      %v1693 = vadd.f32 %v387, %v1692
      %v1694 = vpop.f32.mrf.mxu0
      %v1695 = vadd.f32 %v391, %v1694
      %v1696 = vpop.f32.mrf.mxu0
      %v1697 = vadd.f32 %v387, %v1696
      %v1698 = vpop.f32.mrf.mxu0
      %v1699 = vadd.f32 %v391, %v1698
      %1700 = vmatprep.mubr.bf16.mxu0 %v602
      %1701 = vmatmul.mubr.bf16.gmra.mxu0 %v601
      %v1702 = vpop.f32.mrf.mxu0
      %v1703 = vadd.f32 %v387, %v1702
      %v1704 = vpop.f32.mrf.mxu0
      %v1705 = vadd.f32 %v391, %v1704
      %v1706 = vpop.f32.mrf.mxu0
      %v1707 = vadd.f32 %v387, %v1706
      %v1708 = vpop.f32.mrf.mxu0
      %v1709 = vadd.f32 %v391, %v1708
      %1710 = vdwg.mxu0
      %1711 = vmatprep.subr.bf16.mxu0 %v1035
      %1712 = vmatpush1.bf16.msra.mxu0 %v1034
      %1713 = vmatprep.subr.bf16.mxu0 %v1031
      %1714 = vmatpush1.bf16.msra.mxu0 %v1030
      %1715 = vmatprep.subr.bf16.mxu0 %v1027
      %1716 = vmatpush1.bf16.msra.mxu0 %v1026
      %1717 = vmatprep.subr.bf16.mxu0 %v1023
      %1718 = vmatpush1.bf16.msra.mxu0 %v1022
      %1719 = vmatprep.subr.bf16.mxu0 %v1019
      %1720 = vmatpush1.bf16.msra.mxu0 %v1018
      %1721 = vmatprep.subr.bf16.mxu0 %v1015
      %1722 = vmatpush1.bf16.msra.mxu0 %v1014
      %1723 = vmatprep.subr.bf16.mxu0 %v1011
      %1724 = vmatpush1.bf16.msra.mxu0 %v1010
      %1725 = vmatprep.subr.bf16.mxu0 %v1007
      %1726 = vmatpush1.bf16.msra.mxu0 %v1006
      %1727 = vmatprep.subr.bf16.mxu0 0
      %1728 = vmatpush2.bf16.msra.mxu0 0
      %1729 = vmatprep.subr.bf16.mxu0 0
      %1730 = vmatpush2.bf16.msra.mxu0 0
      %1731 = vmatprep.subr.bf16.mxu0 0
      %1732 = vmatpush2.bf16.msra.mxu0 0
      %1733 = vmatprep.subr.bf16.mxu0 0
      %1734 = vmatpush2.bf16.msra.mxu0 0
      %1735 = vmatprep.subr.bf16.mxu0 0
      %1736 = vmatpush2.bf16.msra.mxu0 0
      %1737 = vmatprep.subr.bf16.mxu0 0
      %1738 = vmatpush2.bf16.msra.mxu0 0
      %1739 = vmatprep.subr.bf16.mxu0 0
      %1740 = vmatpush2.bf16.msra.mxu0 0
      %1741 = vmatprep.subr.bf16.mxu0 0
      %1742 = vmatpush2.bf16.msra.mxu0 0
      %1743 = vmatprep.mubr.bf16.mxu0 0
      %1744 = vmatmul.mubr.bf16.gmra.mxu0 %v558
      %v1745 = vpop.f32.mrf.mxu0
      %v1746 = vadd.f32 %v1553, %v1745
      %v1747 = vpop.f32.mrf.mxu0
      %v1748 = vadd.f32 %v1555, %v1747
      %v1749 = vpop.f32.mrf.mxu0
      %v1750 = vadd.f32 %v1557, %v1749
      %v1751 = vpop.f32.mrf.mxu0
      %v1752 = vadd.f32 %v1559, %v1751
      %1753 = vmatprep.mubr.bf16.mxu0 0
      %1754 = vmatmul.mubr.bf16.gmra.mxu0 %v561
      %v1755 = vpop.f32.mrf.mxu0
      %v1756 = vadd.f32 %v1563, %v1755
      %v1757 = vpop.f32.mrf.mxu0
      %v1758 = vadd.f32 %v1565, %v1757
      %v1759 = vpop.f32.mrf.mxu0
      %v1760 = vadd.f32 %v1567, %v1759
      %v1761 = vpop.f32.mrf.mxu0
      %v1762 = vadd.f32 %v1569, %v1761
      %1763 = vmatprep.mubr.bf16.mxu0 0
      %1764 = vmatmul.mubr.bf16.gmra.mxu0 %v564
      %v1765 = vpop.f32.mrf.mxu0
      %v1766 = vadd.f32 %v1573, %v1765
      %v1767 = vpop.f32.mrf.mxu0
      %v1768 = vadd.f32 %v1575, %v1767
      %v1769 = vpop.f32.mrf.mxu0
      %v1770 = vadd.f32 %v1577, %v1769
      %v1771 = vpop.f32.mrf.mxu0
      %v1772 = vadd.f32 %v1579, %v1771
      %1773 = vmatprep.mubr.bf16.mxu0 0
      %1774 = vmatmul.mubr.bf16.gmra.mxu0 %v567
      %v1775 = vpop.f32.mrf.mxu0
      %v1776 = vadd.f32 %v1583, %v1775
      %v1777 = vpop.f32.mrf.mxu0
      %v1778 = vadd.f32 %v1585, %v1777
      %v1779 = vpop.f32.mrf.mxu0
      %v1780 = vadd.f32 %v1587, %v1779
      %v1781 = vpop.f32.mrf.mxu0
      %v1782 = vadd.f32 %v1589, %v1781
      %1783 = vmatprep.mubr.bf16.mxu0 0
      %1784 = vmatmul.mubr.bf16.gmra.mxu0 %v570
      %v1785 = vpop.f32.mrf.mxu0
      %v1786 = vadd.f32 %v1593, %v1785
      %v1787 = vpop.f32.mrf.mxu0
      %v1788 = vadd.f32 %v1595, %v1787
      %v1789 = vpop.f32.mrf.mxu0
      %v1790 = vadd.f32 %v1597, %v1789
      %v1791 = vpop.f32.mrf.mxu0
      %v1792 = vadd.f32 %v1599, %v1791
      %1793 = vmatprep.mubr.bf16.mxu0 0
      %1794 = vmatmul.mubr.bf16.gmra.mxu0 %v573
      %v1795 = vpop.f32.mrf.mxu0
      %v1796 = vadd.f32 %v1603, %v1795
      %v1797 = vpop.f32.mrf.mxu0
      %v1798 = vadd.f32 %v1605, %v1797
      %v1799 = vpop.f32.mrf.mxu0
      %v1800 = vadd.f32 %v1607, %v1799
      %v1801 = vpop.f32.mrf.mxu0
      %v1802 = vadd.f32 %v1609, %v1801
      %1803 = vmatprep.mubr.bf16.mxu0 0
      %1804 = vmatmul.mubr.bf16.gmra.mxu0 %v576
      %v1805 = vpop.f32.mrf.mxu0
      %v1806 = vadd.f32 %v1613, %v1805
      %v1807 = vpop.f32.mrf.mxu0
      %v1808 = vadd.f32 %v1615, %v1807
      %v1809 = vpop.f32.mrf.mxu0
      %v1810 = vadd.f32 %v1617, %v1809
      %v1811 = vpop.f32.mrf.mxu0
      %v1812 = vadd.f32 %v1619, %v1811
      %1813 = vmatprep.mubr.bf16.mxu0 0
      %1814 = vmatmul.mubr.bf16.gmra.mxu0 %v579
      %v1815 = vpop.f32.mrf.mxu0
      %v1816 = vadd.f32 %v1623, %v1815
      %v1817 = vpop.f32.mrf.mxu0
      %v1818 = vadd.f32 %v1625, %v1817
      %v1819 = vpop.f32.mrf.mxu0
      %v1820 = vadd.f32 %v1627, %v1819
      %v1821 = vpop.f32.mrf.mxu0
      %v1822 = vadd.f32 %v1629, %v1821
      %1823 = vmatprep.mubr.bf16.mxu0 0
      %1824 = vmatmul.mubr.bf16.gmra.mxu0 %v582
      %v1825 = vpop.f32.mrf.mxu0
      %v1826 = vadd.f32 %v1633, %v1825
      %v1827 = vpop.f32.mrf.mxu0
      %v1828 = vadd.f32 %v1635, %v1827
      %v1829 = vpop.f32.mrf.mxu0
      %v1830 = vadd.f32 %v1637, %v1829
      %v1831 = vpop.f32.mrf.mxu0
      %v1832 = vadd.f32 %v1639, %v1831
      %1833 = vmatprep.mubr.bf16.mxu0 0
      %1834 = vmatmul.mubr.bf16.gmra.mxu0 %v585
      %v1835 = vpop.f32.mrf.mxu0
      %v1836 = vadd.f32 %v1643, %v1835
      %v1837 = vpop.f32.mrf.mxu0
      %v1838 = vadd.f32 %v1645, %v1837
      %v1839 = vpop.f32.mrf.mxu0
      %v1840 = vadd.f32 %v1647, %v1839
      %v1841 = vpop.f32.mrf.mxu0
      %v1842 = vadd.f32 %v1649, %v1841
      %1843 = vmatprep.mubr.bf16.mxu0 0
      %1844 = vmatmul.mubr.bf16.gmra.mxu0 %v588
      %v1845 = vpop.f32.mrf.mxu0
      %v1846 = vadd.f32 %v1653, %v1845
      %v1847 = vpop.f32.mrf.mxu0
      %v1848 = vadd.f32 %v1655, %v1847
      %v1849 = vpop.f32.mrf.mxu0
      %v1850 = vadd.f32 %v1657, %v1849
      %v1851 = vpop.f32.mrf.mxu0
      %v1852 = vadd.f32 %v1659, %v1851
      %1853 = vmatprep.mubr.bf16.mxu0 0
      %1854 = vmatmul.mubr.bf16.gmra.mxu0 %v591
      %v1855 = vpop.f32.mrf.mxu0
      %v1856 = vadd.f32 %v1663, %v1855
      %v1857 = vpop.f32.mrf.mxu0
      %v1858 = vadd.f32 %v1665, %v1857
      %v1859 = vpop.f32.mrf.mxu0
      %v1860 = vadd.f32 %v1667, %v1859
      %v1861 = vpop.f32.mrf.mxu0
      %v1862 = vadd.f32 %v1669, %v1861
      %1863 = vmatprep.mubr.bf16.mxu0 0
      %1864 = vmatmul.mubr.bf16.gmra.mxu0 %v594
      %v1865 = vpop.f32.mrf.mxu0
      %v1866 = vadd.f32 %v1673, %v1865
      %v1867 = vpop.f32.mrf.mxu0
      %v1868 = vadd.f32 %v1675, %v1867
      %v1869 = vpop.f32.mrf.mxu0
      %v1870 = vadd.f32 %v1677, %v1869
      %v1871 = vpop.f32.mrf.mxu0
      %v1872 = vadd.f32 %v1679, %v1871
      %1873 = vmatprep.mubr.bf16.mxu0 0
      %1874 = vmatmul.mubr.bf16.gmra.mxu0 %v597
      %v1875 = vpop.f32.mrf.mxu0
      %v1876 = vadd.f32 %v1683, %v1875
      %v1877 = vpop.f32.mrf.mxu0
      %v1878 = vadd.f32 %v1685, %v1877
      %v1879 = vpop.f32.mrf.mxu0
      %v1880 = vadd.f32 %v1687, %v1879
      %v1881 = vpop.f32.mrf.mxu0
      %v1882 = vadd.f32 %v1689, %v1881
      %1883 = vmatprep.mubr.bf16.mxu0 0
      %1884 = vmatmul.mubr.bf16.gmra.mxu0 %v600
      %v1885 = vpop.f32.mrf.mxu0
      %v1886 = vadd.f32 %v1693, %v1885
      %v1887 = vpop.f32.mrf.mxu0
      %v1888 = vadd.f32 %v1695, %v1887
      %v1889 = vpop.f32.mrf.mxu0
      %v1890 = vadd.f32 %v1697, %v1889
      %v1891 = vpop.f32.mrf.mxu0
      %v1892 = vadd.f32 %v1699, %v1891
      %1893 = vmatprep.mubr.bf16.mxu0 0
      %1894 = vmatmul.mubr.bf16.gmra.mxu0 %v603
      %v1895 = vpop.f32.mrf.mxu0
      %v1896 = vadd.f32 %v1703, %v1895
      %v1897 = vpop.f32.mrf.mxu0
      %v1898 = vadd.f32 %v1705, %v1897
      %v1899 = vpop.f32.mrf.mxu0
      %v1900 = vadd.f32 %v1707, %v1899
      %v1901 = vpop.f32.mrf.mxu0
      %v1902 = vadd.f32 %v1709, %v1901
      %1903 = vdwg.mxu0
      %v1904 = vmax.f32 %v1360, 0.0
      %v1905 = vmax.f32 %v1362, 0.0
      %v1906 = vmax.f32 %v1746, 0.0
      %v1907 = vmax.f32 %v1748, 0.0
      %v1908 = vmax.f32 %v1364, 0.0
      %v1909 = vmax.f32 %v1366, 0.0
      %v1910 = vmax.f32 %v1750, 0.0
      %v1911 = vmax.f32 %v1752, 0.0
      %v1912 = vmax.f32 %v1370, 0.0
      %v1913 = vmax.f32 %v1372, 0.0
      %v1914 = vmax.f32 %v1756, 0.0
      %v1915 = vmax.f32 %v1758, 0.0
      %v1916 = vmax.f32 %v1374, 0.0
      %v1917 = vmax.f32 %v1376, 0.0
      %v1918 = vmax.f32 %v1760, 0.0
      %v1919 = vmax.f32 %v1762, 0.0
      %v1920 = vmax.f32 %v1380, 0.0
      %v1921 = vmax.f32 %v1382, 0.0
      %v1922 = vmax.f32 %v1766, 0.0
      %v1923 = vmax.f32 %v1768, 0.0
      %v1924 = vmax.f32 %v1384, 0.0
      %v1925 = vmax.f32 %v1386, 0.0
      %v1926 = vmax.f32 %v1770, 0.0
      %v1927 = vmax.f32 %v1772, 0.0
      %v1928 = vmax.f32 %v1390, 0.0
      %v1929 = vmax.f32 %v1392, 0.0
      %v1930 = vmax.f32 %v1776, 0.0
      %v1931 = vmax.f32 %v1778, 0.0
      %v1932 = vmax.f32 %v1394, 0.0
      %v1933 = vmax.f32 %v1396, 0.0
      %v1934 = vmax.f32 %v1780, 0.0
      %v1935 = vmax.f32 %v1782, 0.0
      %v1936 = vmax.f32 %v1400, 0.0
      %v1937 = vmax.f32 %v1402, 0.0
      %v1938 = vmax.f32 %v1786, 0.0
      %v1939 = vmax.f32 %v1788, 0.0
      %v1940 = vmax.f32 %v1404, 0.0
      %v1941 = vmax.f32 %v1406, 0.0
      %v1942 = vmax.f32 %v1790, 0.0
      %v1943 = vmax.f32 %v1792, 0.0
      %v1944 = vmax.f32 %v1410, 0.0
      %v1945 = vmax.f32 %v1412, 0.0
      %v1946 = vmax.f32 %v1796, 0.0
      %v1947 = vmax.f32 %v1798, 0.0
      %v1948 = vmax.f32 %v1414, 0.0
      %v1949 = vmax.f32 %v1416, 0.0
      %v1950 = vmax.f32 %v1800, 0.0
      %v1951 = vmax.f32 %v1802, 0.0
      %v1952 = vmax.f32 %v1420, 0.0
      %v1953 = vmax.f32 %v1422, 0.0
      %v1954 = vmax.f32 %v1806, 0.0
      %v1955 = vmax.f32 %v1808, 0.0
      %v1956 = vmax.f32 %v1424, 0.0
      %v1957 = vmax.f32 %v1426, 0.0
      %v1958 = vmax.f32 %v1810, 0.0
      %v1959 = vmax.f32 %v1812, 0.0
      %v1960 = vmax.f32 %v1430, 0.0
      %v1961 = vmax.f32 %v1432, 0.0
      %v1962 = vmax.f32 %v1816, 0.0
      %v1963 = vmax.f32 %v1818, 0.0
      %v1964 = vmax.f32 %v1434, 0.0
      %v1965 = vmax.f32 %v1436, 0.0
      %v1966 = vmax.f32 %v1820, 0.0
      %v1967 = vmax.f32 %v1822, 0.0
      %v1968 = vmax.f32 %v1440, 0.0
      %v1969 = vmax.f32 %v1442, 0.0
      %v1970 = vmax.f32 %v1826, 0.0
      %v1971 = vmax.f32 %v1828, 0.0
      %v1972 = vmax.f32 %v1444, 0.0
      %v1973 = vmax.f32 %v1446, 0.0
      %v1974 = vmax.f32 %v1830, 0.0
      %v1975 = vmax.f32 %v1832, 0.0
      %v1976 = vmax.f32 %v1450, 0.0
      %v1977 = vmax.f32 %v1452, 0.0
      %v1978 = vmax.f32 %v1836, 0.0
      %v1979 = vmax.f32 %v1838, 0.0
      %v1980 = vmax.f32 %v1454, 0.0
      %v1981 = vmax.f32 %v1456, 0.0
      %v1982 = vmax.f32 %v1840, 0.0
      %v1983 = vmax.f32 %v1842, 0.0
      %v1984 = vmax.f32 %v1460, 0.0
      %v1985 = vmax.f32 %v1462, 0.0
      %v1986 = vmax.f32 %v1846, 0.0
      %v1987 = vmax.f32 %v1848, 0.0
      %v1988 = vmax.f32 %v1464, 0.0
      %v1989 = vmax.f32 %v1466, 0.0
      %v1990 = vmax.f32 %v1850, 0.0
      %v1991 = vmax.f32 %v1852, 0.0
      %v1992 = vmax.f32 %v1470, 0.0
      %v1993 = vmax.f32 %v1472, 0.0
      %v1994 = vmax.f32 %v1856, 0.0
      %v1995 = vmax.f32 %v1858, 0.0
      %v1996 = vmax.f32 %v1474, 0.0
      %v1997 = vmax.f32 %v1476, 0.0
      %v1998 = vmax.f32 %v1860, 0.0
      %v1999 = vmax.f32 %v1862, 0.0
      %v2000 = vmax.f32 %v1480, 0.0
      %v2001 = vmax.f32 %v1482, 0.0
      %v2002 = vmax.f32 %v1866, 0.0
      %v2003 = vmax.f32 %v1868, 0.0
      %v2004 = vmax.f32 %v1484, 0.0
      %v2005 = vmax.f32 %v1486, 0.0
      %v2006 = vmax.f32 %v1870, 0.0
      %v2007 = vmax.f32 %v1872, 0.0
      %v2008 = vmax.f32 %v1490, 0.0
      %v2009 = vmax.f32 %v1492, 0.0
      %v2010 = vmax.f32 %v1876, 0.0
      %v2011 = vmax.f32 %v1878, 0.0
      %v2012 = vmax.f32 %v1494, 0.0
      %v2013 = vmax.f32 %v1496, 0.0
      %v2014 = vmax.f32 %v1880, 0.0
      %v2015 = vmax.f32 %v1882, 0.0
      %v2016 = vmax.f32 %v1500, 0.0
      %v2017 = vmax.f32 %v1502, 0.0
      %v2018 = vmax.f32 %v1886, 0.0
      %v2019 = vmax.f32 %v1888, 0.0
      %v2020 = vmax.f32 %v1504, 0.0
      %v2021 = vmax.f32 %v1506, 0.0
      %v2022 = vmax.f32 %v1890, 0.0
      %v2023 = vmax.f32 %v1892, 0.0
      %v2024 = vmax.f32 %v1510, 0.0
      %v2025 = vmax.f32 %v1512, 0.0
      %v2026 = vmax.f32 %v1896, 0.0
      %v2027 = vmax.f32 %v1898, 0.0
      %v2028 = vmax.f32 %v1514, 0.0
      %v2029 = vmax.f32 %v1516, 0.0
      %v2030 = vmax.f32 %v1900, 0.0
      %v2031 = vmax.f32 %v1902, 0.0
      %v2032 = vmax.f32 %v1904, %v1905
      %v2033 = vmax.f32 %v1908, %v1909
      %v2034 = vmax.f32 %v1912, %v1913
      %v2035 = vmax.f32 %v1916, %v1917
      %v2036 = vmax.f32 %v1920, %v1921
      %v2037 = vmax.f32 %v1924, %v1925
      %v2038 = vmax.f32 %v1928, %v1929
      %v2039 = vmax.f32 %v1932, %v1933
      %v2040 = vmax.f32 %v1936, %v1937
      %v2041 = vmax.f32 %v1940, %v1941
      %v2042 = vmax.f32 %v1944, %v1945
      %v2043 = vmax.f32 %v1948, %v1949
      %v2044 = vmax.f32 %v1952, %v1953
      %v2045 = vmax.f32 %v1956, %v1957
      %v2046 = vmax.f32 %v1960, %v1961
      %v2047 = vmax.f32 %v1964, %v1965
      %v2048 = vmax.f32 %v1968, %v1969
      %v2049 = vmax.f32 %v1972, %v1973
      %v2050 = vmax.f32 %v1976, %v1977
      %v2051 = vmax.f32 %v1980, %v1981
      %v2052 = vmax.f32 %v1984, %v1985
      %v2053 = vmax.f32 %v1988, %v1989
      %v2054 = vmax.f32 %v1992, %v1993
      %v2055 = vmax.f32 %v1996, %v1997
      %v2056 = vmax.f32 %v2000, %v2001
      %v2057 = vmax.f32 %v2004, %v2005
      %v2058 = vmax.f32 %v2008, %v2009
      %v2059 = vmax.f32 %v2012, %v2013
      %v2060 = vmax.f32 %v2016, %v2017
      %v2061 = vmax.f32 %v2020, %v2021
      %v2062 = vmax.f32 %v2024, %v2025
      %v2063 = vmax.f32 %v2028, %v2029
      %v2064 = vmax.f32 %v1906, %v1907
      %v2065 = vmax.f32 %v1910, %v1911
      %v2066 = vmax.f32 %v1914, %v1915
      %v2067 = vmax.f32 %v1918, %v1919
      %v2068 = vmax.f32 %v1922, %v1923
      %v2069 = vmax.f32 %v1926, %v1927
      %v2070 = vmax.f32 %v1930, %v1931
      %v2071 = vmax.f32 %v1934, %v1935
      %v2072 = vmax.f32 %v1938, %v1939
      %v2073 = vmax.f32 %v1942, %v1943
      %v2074 = vmax.f32 %v1946, %v1947
      %v2075 = vmax.f32 %v1950, %v1951
      %v2076 = vmax.f32 %v1954, %v1955
      %v2077 = vmax.f32 %v1958, %v1959
      %v2078 = vmax.f32 %v1962, %v1963
      %v2079 = vmax.f32 %v1966, %v1967
      %v2080 = vmax.f32 %v1970, %v1971
      %v2081 = vmax.f32 %v1974, %v1975
      %v2082 = vmax.f32 %v1978, %v1979
      %v2083 = vmax.f32 %v1982, %v1983
      %v2084 = vmax.f32 %v1986, %v1987
      %v2085 = vmax.f32 %v1990, %v1991
      %v2086 = vmax.f32 %v1994, %v1995
      %v2087 = vmax.f32 %v1998, %v1999
      %v2088 = vmax.f32 %v2002, %v2003
      %v2089 = vmax.f32 %v2006, %v2007
      %v2090 = vmax.f32 %v2010, %v2011
      %v2091 = vmax.f32 %v2014, %v2015
      %v2092 = vmax.f32 %v2018, %v2019
      %v2093 = vmax.f32 %v2022, %v2023
      %v2094 = vmax.f32 %v2026, %v2027
      %v2095 = vmax.f32 %v2030, %v2031
      %v2096 = vmax.f32 %v2032, %v2064
      %v2097 = vmax.f32 %v2033, %v2065
      %v2098 = vmax.f32 %v2034, %v2066
      %v2099 = vmax.f32 %v2035, %v2067
      %v2100 = vmax.f32 %v2036, %v2068
      %v2101 = vmax.f32 %v2037, %v2069
      %v2102 = vmax.f32 %v2038, %v2070
      %v2103 = vmax.f32 %v2039, %v2071
      %v2104 = vmax.f32 %v2040, %v2072
      %v2105 = vmax.f32 %v2041, %v2073
      %v2106 = vmax.f32 %v2042, %v2074
      %v2107 = vmax.f32 %v2043, %v2075
      %v2108 = vmax.f32 %v2044, %v2076
      %v2109 = vmax.f32 %v2045, %v2077
      %v2110 = vmax.f32 %v2046, %v2078
      %v2111 = vmax.f32 %v2047, %v2079
      %v2112 = vmax.f32 %v2048, %v2080
      %v2113 = vmax.f32 %v2049, %v2081
      %v2114 = vmax.f32 %v2050, %v2082
      %v2115 = vmax.f32 %v2051, %v2083
      %v2116 = vmax.f32 %v2052, %v2084
      %v2117 = vmax.f32 %v2053, %v2085
      %v2118 = vmax.f32 %v2054, %v2086
      %v2119 = vmax.f32 %v2055, %v2087
      %v2120 = vmax.f32 %v2056, %v2088
      %v2121 = vmax.f32 %v2057, %v2089
      %v2122 = vmax.f32 %v2058, %v2090
      %v2123 = vmax.f32 %v2059, %v2091
      %v2124 = vmax.f32 %v2060, %v2092
      %v2125 = vmax.f32 %v2061, %v2093
      %v2126 = vmax.f32 %v2062, %v2094
      %v2127 = vmax.f32 %v2063, %v2095
      %v2128 = vpack.c.bf16 %v2097, %v2096
      %v2129 = vpack.c.bf16 %v2099, %v2098
      %v2130 = vpack.c.bf16 %v2101, %v2100
      %v2131 = vpack.c.bf16 %v2103, %v2102
      %v2132 = vpack.c.bf16 %v2105, %v2104
      %v2133 = vpack.c.bf16 %v2107, %v2106
      %v2134 = vpack.c.bf16 %v2109, %v2108
      %v2135 = vpack.c.bf16 %v2111, %v2110
      %v2136 = vpack.c.bf16 %v2113, %v2112
      %v2137 = vpack.c.bf16 %v2115, %v2114
      %v2138 = vpack.c.bf16 %v2117, %v2116
      %v2139 = vpack.c.bf16 %v2119, %v2118
      %v2140 = vpack.c.bf16 %v2121, %v2120
      %v2141 = vpack.c.bf16 %v2123, %v2122
      %v2142 = vpack.c.bf16 %v2125, %v2124
      %v2143 = vpack.c.bf16 %v2127, %v2126
      %v2160 = vunpack.c.l.b16 %v2128
      %v2161 = vunpack.c.h.b16 %v2128
      %v2162 = vunpack.c.l.b16 %v2129
      %v2163 = vunpack.c.h.b16 %v2129
      %v2164 = vunpack.c.l.b16 %v2130
      %v2165 = vunpack.c.h.b16 %v2130
      %v2166 = vunpack.c.l.b16 %v2131
      %v2167 = vunpack.c.h.b16 %v2131
      %v2168 = vunpack.c.l.b16 %v2132
      %v2169 = vunpack.c.h.b16 %v2132
      %v2170 = vunpack.c.l.b16 %v2133
      %v2171 = vunpack.c.h.b16 %v2133
      %v2172 = vunpack.c.l.b16 %v2134
      %v2173 = vunpack.c.h.b16 %v2134
      %v2174 = vunpack.c.l.b16 %v2135
      %v2175 = vunpack.c.h.b16 %v2135
      %v2176 = vunpack.c.l.b16 %v2136
      %v2177 = vunpack.c.h.b16 %v2136
      %v2178 = vunpack.c.l.b16 %v2137
      %v2179 = vunpack.c.h.b16 %v2137
      %v2180 = vunpack.c.l.b16 %v2138
      %v2181 = vunpack.c.h.b16 %v2138
      %v2182 = vunpack.c.l.b16 %v2139
      %v2183 = vunpack.c.h.b16 %v2139
      %v2184 = vunpack.c.l.b16 %v2140
      %v2185 = vunpack.c.h.b16 %v2140
      %v2186 = vunpack.c.l.b16 %v2141
      %v2187 = vunpack.c.h.b16 %v2141
      %v2188 = vunpack.c.l.b16 %v2142
      %v2189 = vunpack.c.h.b16 %v2142
      %v2190 = vunpack.c.l.b16 %v2143
      %v2191 = vunpack.c.h.b16 %v2143
      %v2192 = vpack.c.b16 %v2160, %v2160
      %v2193 = vpack.c.b16 %v2161, %v2161
      %v2194 = vpack.c.b16 %v2162, %v2162
      %v2195 = vpack.c.b16 %v2163, %v2163
      %v2196 = vpack.c.b16 %v2164, %v2164
      %v2197 = vpack.c.b16 %v2165, %v2165
      %v2198 = vpack.c.b16 %v2166, %v2166
      %v2199 = vpack.c.b16 %v2167, %v2167
      %v2200 = vpack.c.b16 %v2168, %v2168
      %v2201 = vpack.c.b16 %v2169, %v2169
      %v2202 = vpack.c.b16 %v2170, %v2170
      %v2203 = vpack.c.b16 %v2171, %v2171
      %v2204 = vpack.c.b16 %v2172, %v2172
      %v2205 = vpack.c.b16 %v2173, %v2173
      %v2206 = vpack.c.b16 %v2174, %v2174
      %v2207 = vpack.c.b16 %v2175, %v2175
      %v2208 = vpack.c.b16 %v2176, %v2176
      %v2209 = vpack.c.b16 %v2177, %v2177
      %v2210 = vpack.c.b16 %v2178, %v2178
      %v2211 = vpack.c.b16 %v2179, %v2179
      %v2212 = vpack.c.b16 %v2180, %v2180
      %v2213 = vpack.c.b16 %v2181, %v2181
      %v2214 = vpack.c.b16 %v2182, %v2182
      %v2215 = vpack.c.b16 %v2183, %v2183
      %v2216 = vpack.c.b16 %v2184, %v2184
      %v2217 = vpack.c.b16 %v2185, %v2185
      %v2218 = vpack.c.b16 %v2186, %v2186
      %v2219 = vpack.c.b16 %v2187, %v2187
      %v2220 = vpack.c.b16 %v2188, %v2188
      %v2221 = vpack.c.b16 %v2189, %v2189
      %v2222 = vpack.c.b16 %v2190, %v2190
      %v2223 = vpack.c.b16 %v2191, %v2191
      %2256 = vst [vmem:[%s211] sm:$0xf] %v2192
      %2257 = vst [vmem:[%s211 + $0x4] sm:$0xf] %v2193
      %2258 = vst [vmem:[%s211 + $0x8] sm:$0xf] %v2194
      %2259 = vst [vmem:[%s211 + $0xc] sm:$0xf] %v2195
      %2260 = vst [vmem:[%s211 + $0x10] sm:$0xf] %v2196
      %2261 = vst [vmem:[%s211 + $0x14] sm:$0xf] %v2197
      %2262 = vst [vmem:[%s211 + $0x18] sm:$0xf] %v2198
      %2263 = vst [vmem:[%s211 + $0x1c] sm:$0xf] %v2199
      %2264 = vst [vmem:[%s211 + $0x20] sm:$0xf] %v2200
      %2265 = vst [vmem:[%s211 + $0x24] sm:$0xf] %v2201
      %2266 = vst [vmem:[%s211 + $0x28] sm:$0xf] %v2202
      %2267 = vst [vmem:[%s211 + $0x2c] sm:$0xf] %v2203
      %2268 = vst [vmem:[%s211 + $0x30] sm:$0xf] %v2204
      %2269 = vst [vmem:[%s211 + $0x34] sm:$0xf] %v2205
      %2270 = vst [vmem:[%s211 + $0x38] sm:$0xf] %v2206
      %2271 = vst [vmem:[%s211 + $0x3c] sm:$0xf] %v2207
      %2272 = vst [vmem:[%s211 + $0x40] sm:$0xf] %v2208
      %2273 = vst [vmem:[%s211 + $0x44] sm:$0xf] %v2209
      %2274 = vst [vmem:[%s211 + $0x48] sm:$0xf] %v2210
      %2275 = vst [vmem:[%s211 + $0x4c] sm:$0xf] %v2211
      %2276 = vst [vmem:[%s211 + $0x50] sm:$0xf] %v2212
      %2277 = vst [vmem:[%s211 + $0x54] sm:$0xf] %v2213
      %2278 = vst [vmem:[%s211 + $0x58] sm:$0xf] %v2214
      %2279 = vst [vmem:[%s211 + $0x5c] sm:$0xf] %v2215
      %2280 = vst [vmem:[%s211 + $0x60] sm:$0xf] %v2216
      %2281 = vst [vmem:[%s211 + $0x64] sm:$0xf] %v2217
      %2282 = vst [vmem:[%s211 + $0x68] sm:$0xf] %v2218
      %2283 = vst [vmem:[%s211 + $0x6c] sm:$0xf] %v2219
      %2284 = vst [vmem:[%s211 + $0x70] sm:$0xf] %v2220
      %2285 = vst [vmem:[%s211 + $0x74] sm:$0xf] %v2221
      %2286 = vst [vmem:[%s211 + $0x78] sm:$0xf] %v2222
      %2287 = vst [vmem:[%s211 + $0x7c] sm:$0xf] %v2223
      %s2288 = smul.u32 32, %s19
      %p2289 = scmp.lt.s32.totalorder %s18, 1
      %s2290 = scalar_select %p2289, %s18, 1
      %p2291 = scmp.lt.s32.totalorder %s2288, 159
      %s2292 = scalar_select %p2291, %s2288, 159
      %s2293 = smul.addr %s2290, 160
      %s2294 = sadd.s32 %s2292, %s2293
      %s2295 = smul.addr %s2294, 4
      %s2296 = scalar_lea.vmem %s3, %s2295
      // Predicated region
      $region33: #{net_forward.3} parent=31 // pred_check
        %p2297 = pneg %p116
      $region34: #{net_forward.3} parent=31 // pred_check_branch
        %2299 = sbr.rel (%p2297) target = $region36
      $region35: #{net_forward.3} parent=31 // pred_region
        %s2300 = smul.u32 32, %s19
      $region36: #{net_forward.3} parent=31 // pred_fallthru
        _
    $region32: #{net_forward.3} parent=5 // pred_fallthru
      _
    %p2301 = scmp.le.s32.totalorder 2, %s9
    // Predicated region
    $region37: #{net_forward.3} parent=5 // pred_check
      %p2302 = pneg %p2301
    $region38: #{net_forward.3} parent=5 // pred_check_branch
      %2304 = sbr.rel (%p2302) target = $region40
    $region39: #{net_forward.3} parent=5 // pred_region
      %s2305 = ssub.s32 %s9, 2
      // Predicated region
      $region41: #{net_forward.3} parent=39 // pred_check
        %p2306 = pneg %p122
      $region42: #{net_forward.3} parent=39 // pred_check_branch
        %2308 = sbr.rel (%p2306) target = $region44
      $region43: #{net_forward.3} parent=39 // pred_region
        %s2309 = smul.u32 32, %s21
        %p2310 = scmp.lt.s32.totalorder %s20, 1
        %s2311 = scalar_select %p2310, %s20, 1
        %p2312 = scmp.lt.s32.totalorder %s2309, 159
        %s2313 = scalar_select %p2312, %s2309, 159
        %s2314 = smul.addr %s2311, 160
        %s2315 = sadd.s32 %s2313, %s2314
        %s2316 = smul.addr %s2315, 4
        %s2317 = scalar_lea.vmem %s3, %s2316
      $region44: #{net_forward.3} parent=39 // pred_fallthru
        _
    $region40: #{net_forward.3} parent=5 // pred_fallthru
      _
  $region6: #{net_forward.3} parent=0 // loop_footer
    %s13 = sadd.s32 1, %s9
  $region7: #{net_forward.3} parent=0 // loop_footer_branch
    %8 = sbr.rel target = $region3
  $region8: #{net_forward.3} parent=0 // loop_exit
    _

// kernel: net_forward.4
$region0: #{net_forward.4}
  #allocation0 [shape = 'u32[]', space=smem, size = 0x4, offset = 0x4, fixed_abs, tag = 'smem constant byte address 0x4 - core index']
  #allocation1 [shape = 'u32[144,128]{1,0:T(1,128)}', space=vmem, size = 0x12000, scoped, tag = 'internal scratch']
  %s0 = inlined_call_operand.vmem [shape: bf16[2,320,2048], index: 0, kind: input, shape index: {}]
  %s1 = inlined_call_operand.vmem [shape: bf16[2048,512], index: 1, kind: input, shape index: {}]
  %s2 = inlined_call_operand.vmem [shape: f32[1,512], index: 2, kind: input, shape index: {}]
  %s3 = inlined_call_operand.vmem [shape: bf16[2,320,128], index: 3, kind: output, shape index: {}]
  %s4 = sld [smem:[#allocation0]]
  $region45: #{net_forward.4} parent=0
    _
  %s6 = ssub.s32 1, %s4
  %s7 = scalar_select 0, %s6, %s4
  loop: start=0, step=1, limit=12
  $region2: #{net_forward.4} parent=0 // loop_pre_header
    _
  $region3: #{net_forward.4} parent=0 // loop_header
    %s9 = sphi 0, %s13
    %p10 = scmp.ge.s32.totalorder %s9, 12
    %s16 = sphi 0, %s28
    %s17 = sphi 0, %s24
    %s18 = sphi 0, %s16
    %s19 = sphi 0, %s17
    %s20 = sphi 0, %s18
    %s21 = sphi 0, %s19
    %s33 = sphi 0, %s35
    %s36 = sphi 0, %s33
    %s37 = sphi 0, %s36
    %s53 = sphi 0, %s37
    %s57 = sphi 0, %s57
    %s59 = sphi 0, %s57
    %s60 = sphi 0, %s59
    %s74 = sphi 0, %s60
    %s78 = sphi 0, %s78
    %s80 = sphi 0, %s78
    %s81 = sphi 0, %s80
    %s95 = sphi 0, %s81
    %s103 = sphi 0, %s105
    %s106 = sphi 0, %s103
    %s107 = sphi 0, %s106
    %s123 = sphi 0, %s107
  $region4: #{net_forward.4} parent=0 // loop_header_branch
    %12 = sbr.rel (%p10) target = $region8
  $region5: #{net_forward.4} parent=0 // loop_body
    %s14 = ssub.s32 %s9, 1
    %s15 = ssub.s32 %s9, 2
    %s22 = sadd.s32 1, %s17
    %p23 = scmp.ge.s32.totalorder %s22, 5
    %s24 = scalar_select %p23, 0, %s22
    %s25 = sadd.s32 1, %s16
    %s26 = scalar_select %p23, %s25, %s16
    %p27 = scmp.ge.s32.totalorder %s26, 2
    %s28 = scalar_select %p27, 0, %s26
    %s29 = ssub.s32 %s16, %s28
    %s30 = ssub.s32 %s17, %s24
    %s31 = sor.u32 %s29, %s30
    %p32 = scmp.eq.s32.totalorder %s31, 0
    %s34 = sadd.s32 %s33, 1
    %s35 = scalar_select %p32, %s33, %s34
    %p38 = pneg %p32
    %p39 = scmp.eq.s32.totalorder %s9, 9
    %p40 = por %p38, %p39
    %p41 = scmp.ne.s32.totalorder %s33, %s36
    %p42 = scmp.eq.s32.totalorder %s9, 0
    %p43 = por %p41, %p42
    %p44 = scmp.ne.s32.totalorder %s33, %s36
    %p45 = scmp.eq.s32.totalorder %s14, 9
    %p46 = por %p44, %p45
    %p47 = scmp.ne.s32.totalorder %s36, %s37
    %p48 = scmp.eq.s32.totalorder %s14, 0
    %p49 = por %p47, %p48
    %p50 = scmp.ne.s32.totalorder %s36, %s37
    %p51 = scmp.eq.s32.totalorder %s15, 9
    %p52 = por %p50, %p51
    %p54 = scmp.ne.s32.totalorder %s37, %s53
    %p55 = scmp.eq.s32.totalorder %s15, 0
    %p56 = por %p54, %p55
    %s58 = sadd.s32 %s57, 1
    %p61 = scmp.eq.s32.totalorder %s9, 9
    %p62 = scmp.ne.s32.totalorder %s57, %s59
    %p63 = scmp.eq.s32.totalorder %s9, 0
    %p64 = por %p62, %p63
    %p65 = scmp.ne.s32.totalorder %s57, %s59
    %p66 = scmp.eq.s32.totalorder %s14, 9
    %p67 = por %p65, %p66
    %p68 = scmp.ne.s32.totalorder %s59, %s60
    %p69 = scmp.eq.s32.totalorder %s14, 0
    %p70 = por %p68, %p69
    %p71 = scmp.ne.s32.totalorder %s59, %s60
    %p72 = scmp.eq.s32.totalorder %s15, 9
    %p73 = por %p71, %p72
    %p75 = scmp.ne.s32.totalorder %s60, %s74
    %p76 = scmp.eq.s32.totalorder %s15, 0
    %p77 = por %p75, %p76
    %s79 = sadd.s32 %s78, 1
    %p82 = scmp.eq.s32.totalorder %s9, 9
    %p83 = scmp.ne.s32.totalorder %s78, %s80
    %p84 = scmp.eq.s32.totalorder %s9, 0
    %p85 = por %p83, %p84
    %p86 = scmp.ne.s32.totalorder %s78, %s80
    %p87 = scmp.eq.s32.totalorder %s14, 9
    %p88 = por %p86, %p87
    %p89 = scmp.ne.s32.totalorder %s80, %s81
    %p90 = scmp.eq.s32.totalorder %s14, 0
    %p91 = por %p89, %p90
    %p92 = scmp.ne.s32.totalorder %s80, %s81
    %p93 = scmp.eq.s32.totalorder %s15, 9
    %p94 = por %p92, %p93
    %p96 = scmp.ne.s32.totalorder %s81, %s95
    %p97 = scmp.eq.s32.totalorder %s15, 0
    %p98 = por %p96, %p97
    %s99 = ssub.s32 %s16, %s28
    %s100 = ssub.s32 %s17, %s24
    %s101 = sor.u32 %s99, %s100
    %p102 = scmp.eq.s32.totalorder %s101, 0
    %s104 = sadd.s32 %s103, 1
    %s105 = scalar_select %p102, %s103, %s104
    %p108 = pneg %p102
    %p109 = scmp.eq.s32.totalorder %s9, 9
    %p110 = por %p108, %p109
    %p111 = scmp.ne.s32.totalorder %s103, %s106
    %p112 = scmp.eq.s32.totalorder %s9, 0
    %p113 = por %p111, %p112
    %p114 = scmp.ne.s32.totalorder %s103, %s106
    %p115 = scmp.eq.s32.totalorder %s14, 9
    %p116 = por %p114, %p115
    %p117 = scmp.ne.s32.totalorder %s106, %s107
    %p118 = scmp.eq.s32.totalorder %s14, 0
    %p119 = por %p117, %p118
    %p120 = scmp.ne.s32.totalorder %s106, %s107
    %p121 = scmp.eq.s32.totalorder %s15, 9
    %p122 = por %p120, %p121
    %p124 = scmp.ne.s32.totalorder %s107, %s123
    %p125 = scmp.eq.s32.totalorder %s15, 0
    %p126 = por %p124, %p125
    %p127 = scmp.le.s32.totalorder 1, %s9
    %p128 = scmp.lt.s32.totalorder %s9, 11
    %p129 = pnand %p127, %p128
    %p130 = pneg %p129
    // Predicated region
    $region9: #{net_forward.4} parent=5 // pred_check
      _
    $region10: #{net_forward.4} parent=5 // pred_check_branch
      %132 = sbr.rel (%p129) target = $region12
    $region11: #{net_forward.4} parent=5 // pred_region
      %s133 = ssub.s32 %s9, 1
      // Predicated region
      $region13: #{net_forward.4} parent=11 // pred_check
        %p134 = pneg %p70
      $region14: #{net_forward.4} parent=11 // pred_check_branch
        %136 = sbr.rel (%p134) target = $region16
      $region15: #{net_forward.4} parent=11 // pred_region
        _
      $region16: #{net_forward.4} parent=11 // pred_fallthru
        _
      // Predicated region
      $region17: #{net_forward.4} parent=11 // pred_check
        %p137 = pneg %p91
      $region18: #{net_forward.4} parent=11 // pred_check_branch
        %139 = sbr.rel (%p137) target = $region20
      $region19: #{net_forward.4} parent=11 // pred_region
        _
      $region20: #{net_forward.4} parent=11 // pred_fallthru
        _
    $region12: #{net_forward.4} parent=5 // pred_fallthru
      _
    %p140 = scmp.lt.s32.totalorder %s9, 10
    // Predicated region
    $region21: #{net_forward.4} parent=5 // pred_check
      %p141 = pneg %p140
    $region22: #{net_forward.4} parent=5 // pred_check_branch
      %143 = sbr.rel (%p141) target = $region24
    $region23: #{net_forward.4} parent=5 // pred_region
      // Predicated region
      $region25: #{net_forward.4} parent=23 // pred_check
        %p144 = pneg %p43
      $region26: #{net_forward.4} parent=23 // pred_check_branch
        %146 = sbr.rel (%p144) target = $region28
      $region27: #{net_forward.4} parent=23 // pred_region
        %s147 = smul.u32 8, %s17
        %p148 = scmp.lt.s32.totalorder %s16, 1
        %s149 = scalar_select %p148, %s16, 1
        %p150 = scmp.lt.s32.totalorder %s147, 39
        %s151 = scalar_select %p150, %s147, 39
        %s152 = smul.addr %s151, 16
        %s153 = smul.addr %s149, 640
        %s154 = sadd.s32 %s152, %s153
        %s155 = smul.addr %s154, 4
        %s156 = scalar_lea.vmem %s0, %s155
        %s157 = smul.u32 8, %s17
      $region28: #{net_forward.4} parent=23 // pred_fallthru
        _
    $region24: #{net_forward.4} parent=5 // pred_fallthru
      _
    %p158 = scmp.le.s32.totalorder 1, %s9
    %p159 = scmp.lt.s32.totalorder %s9, 11
    %p160 = pnand %p158, %p159
    %p161 = pneg %p160
    // Predicated region
    $region29: #{net_forward.4} parent=5 // pred_check
      _
    $region30: #{net_forward.4} parent=5 // pred_check_branch
      %163 = sbr.rel (%p160) target = $region32
    $region31: #{net_forward.4} parent=5 // pred_region
      %s164 = ssub.s32 %s9, 1
      %s165 = smul.u32 8, %s19
      %p166 = scmp.lt.s32.totalorder %s18, 1
      %s167 = scalar_select %p166, %s18, 1
      %p168 = scmp.lt.s32.totalorder %s165, 39
      %s169 = scalar_select %p168, %s165, 39
      %s170 = smul.addr %s169, 16
      %s171 = smul.addr %s167, 640
      %s172 = sadd.s32 %s170, %s171
      %s173 = smul.addr %s172, 4
      %s174 = scalar_lea.vmem %s0, %s173
      %p175 = pneg %p49
      %p176 = pneg %p46
      %p177 = pneg %p70
      %p178 = pneg %p67
      %p179 = pneg %p91
      %p180 = pneg %p88
      %p181 = pneg %p119
      %p182 = pneg %p116
      %s183 = smul.u32 8, %s19
      %p184 = scmp.lt.s32.totalorder %s18, 1
      %s185 = scalar_select %p184, %s18, 1
      %p186 = scmp.lt.s32.totalorder %s183, 39
      %s187 = scalar_select %p186, %s183, 39
      %s188 = smul.addr %s185, 40
      %s189 = sadd.s32 %s187, %s188
      %s190 = smul.addr %s189, 4
      %s191 = scalar_lea.vmem %s3, %s190
      %s192 = smul.u32 8, %s19
      %p193 = scmp.lt.s32.totalorder %s18, 1
      %s194 = scalar_select %p193, %s18, 1
      %p195 = scmp.lt.s32.totalorder %s192, 39
      %s196 = scalar_select %p195, %s192, 39
      %s197 = smul.addr %s196, 16
      %s198 = smul.addr %s194, 640
      %s199 = sadd.s32 %s197, %s198
      %s200 = smul.addr %s199, 4
      %s201 = scalar_lea.vmem %s0, %s200
      %s202 = smul.u32 8, %s19
      %s203 = smul.u32 8, %s19
      %p204 = scmp.lt.s32.totalorder %s18, 1
      %s205 = scalar_select %p204, %s18, 1
      %p206 = scmp.lt.s32.totalorder %s203, 39
      %s207 = scalar_select %p206, %s203, 39
      %s208 = smul.addr %s205, 40
      %s209 = sadd.s32 %s207, %s208
      %s210 = smul.addr %s209, 4
      %s211 = scalar_lea.vmem %s3, %s210
      %s212 = smul.u32 8, %s19
      %v213 = vld [vmem:[%s201] sm:$0xff]
      %v214 = vld [vmem:[%s201 + $0x8] sm:$0xff]
      %v215 = vld [vmem:[%s201 + $0x10] sm:$0xff]
      %v216 = vld [vmem:[%s201 + $0x18] sm:$0xff]
      %v217 = vld [vmem:[%s201 + $0x20] sm:$0xff]
      %v218 = vld [vmem:[%s201 + $0x28] sm:$0xff]
      %v219 = vld [vmem:[%s201 + $0x30] sm:$0xff]
      %v220 = vld [vmem:[%s201 + $0x38] sm:$0xff]
      %v221 = vld [vmem:[%s201 + $0x40] sm:$0xff]
      %v222 = vld [vmem:[%s201 + $0x48] sm:$0xff]
      %v223 = vld [vmem:[%s201 + $0x50] sm:$0xff]
      %v224 = vld [vmem:[%s201 + $0x58] sm:$0xff]
      %v225 = vld [vmem:[%s201 + $0x60] sm:$0xff]
      %v226 = vld [vmem:[%s201 + $0x68] sm:$0xff]
      %v227 = vld [vmem:[%s201 + $0x70] sm:$0xff]
      %v228 = vld [vmem:[%s201 + $0x78] sm:$0xff]
      %v229 = vld [vmem:[%s201 + $0x80] sm:$0xff]
      %v230 = vld [vmem:[%s201 + $0x88] sm:$0xff]
      %v231 = vld [vmem:[%s201 + $0x90] sm:$0xff]
      %v232 = vld [vmem:[%s201 + $0x98] sm:$0xff]
      %v233 = vld [vmem:[%s201 + $0xa0] sm:$0xff]
      %v234 = vld [vmem:[%s201 + $0xa8] sm:$0xff]
      %v235 = vld [vmem:[%s201 + $0xb0] sm:$0xff]
      %v236 = vld [vmem:[%s201 + $0xb8] sm:$0xff]
      %v237 = vld [vmem:[%s201 + $0xc0] sm:$0xff]
      %v238 = vld [vmem:[%s201 + $0xc8] sm:$0xff]
      %v239 = vld [vmem:[%s201 + $0xd0] sm:$0xff]
      %v240 = vld [vmem:[%s201 + $0xd8] sm:$0xff]
      %v241 = vld [vmem:[%s201 + $0xe0] sm:$0xff]
      %v242 = vld [vmem:[%s201 + $0xe8] sm:$0xff]
      %v243 = vld [vmem:[%s201 + $0xf0] sm:$0xff]
      %v244 = vld [vmem:[%s201 + $0xf8] sm:$0xff]
      %v245 = vld [vmem:[%s201 + $0x100] sm:$0xff]
      %v246 = vld [vmem:[%s201 + $0x108] sm:$0xff]
      %v247 = vld [vmem:[%s201 + $0x110] sm:$0xff]
      %v248 = vld [vmem:[%s201 + $0x118] sm:$0xff]
      %v249 = vld [vmem:[%s201 + $0x120] sm:$0xff]
      %v250 = vld [vmem:[%s201 + $0x128] sm:$0xff]
      %v251 = vld [vmem:[%s201 + $0x130] sm:$0xff]
      %v252 = vld [vmem:[%s201 + $0x138] sm:$0xff]
      %v253 = vld [vmem:[%s201 + $0x140] sm:$0xff]
      %v254 = vld [vmem:[%s201 + $0x148] sm:$0xff]
      %v255 = vld [vmem:[%s201 + $0x150] sm:$0xff]
      %v256 = vld [vmem:[%s201 + $0x158] sm:$0xff]
      %v257 = vld [vmem:[%s201 + $0x160] sm:$0xff]
      %v258 = vld [vmem:[%s201 + $0x168] sm:$0xff]
      %v259 = vld [vmem:[%s201 + $0x170] sm:$0xff]
      %v260 = vld [vmem:[%s201 + $0x178] sm:$0xff]
      %v261 = vld [vmem:[%s201 + $0x180] sm:$0xff]
      %v262 = vld [vmem:[%s201 + $0x188] sm:$0xff]
      %v263 = vld [vmem:[%s201 + $0x190] sm:$0xff]
      %v264 = vld [vmem:[%s201 + $0x198] sm:$0xff]
      %v265 = vld [vmem:[%s201 + $0x1a0] sm:$0xff]
      %v266 = vld [vmem:[%s201 + $0x1a8] sm:$0xff]
      %v267 = vld [vmem:[%s201 + $0x1b0] sm:$0xff]
      %v268 = vld [vmem:[%s201 + $0x1b8] sm:$0xff]
      %v269 = vld [vmem:[%s201 + $0x1c0] sm:$0xff]
      %v270 = vld [vmem:[%s201 + $0x1c8] sm:$0xff]
      %v271 = vld [vmem:[%s201 + $0x1d0] sm:$0xff]
      %v272 = vld [vmem:[%s201 + $0x1d8] sm:$0xff]
      %v273 = vld [vmem:[%s201 + $0x1e0] sm:$0xff]
      %v274 = vld [vmem:[%s201 + $0x1e8] sm:$0xff]
      %v275 = vld [vmem:[%s201 + $0x1f0] sm:$0xff]
      %v276 = vld [vmem:[%s201 + $0x1f8] sm:$0xff]
      %v277 = vld [vmem:[%s1] sm:$0xff]
      %v278 = vld [vmem:[%s1 + $0x8] sm:$0xff]
      %v279 = vld [vmem:[%s1 + $0x10] sm:$0xff]
      %v280 = vld [vmem:[%s1 + $0x18] sm:$0xff]
      %v281 = vld [vmem:[%s1 + $0x20] sm:$0xff]
      %v282 = vld [vmem:[%s1 + $0x28] sm:$0xff]
      %v283 = vld [vmem:[%s1 + $0x30] sm:$0xff]
      %v284 = vld [vmem:[%s1 + $0x38] sm:$0xff]
      %v285 = vld [vmem:[%s1 + $0x40] sm:$0xff]
      %v286 = vld [vmem:[%s1 + $0x48] sm:$0xff]
      %v287 = vld [vmem:[%s1 + $0x50] sm:$0xff]
      %v288 = vld [vmem:[%s1 + $0x58] sm:$0xff]
      %v289 = vld [vmem:[%s1 + $0x60] sm:$0xff]
      %v290 = vld [vmem:[%s1 + $0x68] sm:$0xff]
      %v291 = vld [vmem:[%s1 + $0x70] sm:$0xff]
      %v292 = vld [vmem:[%s1 + $0x78] sm:$0xff]
      %v293 = vld [vmem:[%s1 + $0x80] sm:$0xff]
      %v294 = vld [vmem:[%s1 + $0x88] sm:$0xff]
      %v295 = vld [vmem:[%s1 + $0x90] sm:$0xff]
      %v296 = vld [vmem:[%s1 + $0x98] sm:$0xff]
      %v297 = vld [vmem:[%s1 + $0xa0] sm:$0xff]
      %v298 = vld [vmem:[%s1 + $0xa8] sm:$0xff]
      %v299 = vld [vmem:[%s1 + $0xb0] sm:$0xff]
      %v300 = vld [vmem:[%s1 + $0xb8] sm:$0xff]
      %v301 = vld [vmem:[%s1 + $0xc0] sm:$0xff]
      %v302 = vld [vmem:[%s1 + $0xc8] sm:$0xff]
      %v303 = vld [vmem:[%s1 + $0xd0] sm:$0xff]
      %v304 = vld [vmem:[%s1 + $0xd8] sm:$0xff]
      %v305 = vld [vmem:[%s1 + $0xe0] sm:$0xff]
      %v306 = vld [vmem:[%s1 + $0xe8] sm:$0xff]
      %v307 = vld [vmem:[%s1 + $0xf0] sm:$0xff]
      %v308 = vld [vmem:[%s1 + $0xf8] sm:$0xff]
      %v309 = vld [vmem:[%s1 + $0x100] sm:$0xff]
      %v310 = vld [vmem:[%s1 + $0x108] sm:$0xff]
      %v311 = vld [vmem:[%s1 + $0x110] sm:$0xff]
      %v312 = vld [vmem:[%s1 + $0x118] sm:$0xff]
      %v313 = vld [vmem:[%s1 + $0x120] sm:$0xff]
      %v314 = vld [vmem:[%s1 + $0x128] sm:$0xff]
      %v315 = vld [vmem:[%s1 + $0x130] sm:$0xff]
      %v316 = vld [vmem:[%s1 + $0x138] sm:$0xff]
      %v317 = vld [vmem:[%s1 + $0x140] sm:$0xff]
      %v318 = vld [vmem:[%s1 + $0x148] sm:$0xff]
      %v319 = vld [vmem:[%s1 + $0x150] sm:$0xff]
      %v320 = vld [vmem:[%s1 + $0x158] sm:$0xff]
      %v321 = vld [vmem:[%s1 + $0x160] sm:$0xff]
      %v322 = vld [vmem:[%s1 + $0x168] sm:$0xff]
      %v323 = vld [vmem:[%s1 + $0x170] sm:$0xff]
      %v324 = vld [vmem:[%s1 + $0x178] sm:$0xff]
      %v325 = vld [vmem:[%s1 + $0x180] sm:$0xff]
      %v326 = vld [vmem:[%s1 + $0x188] sm:$0xff]
      %v327 = vld [vmem:[%s1 + $0x190] sm:$0xff]
      %v328 = vld [vmem:[%s1 + $0x198] sm:$0xff]
      %v329 = vld [vmem:[%s1 + $0x1a0] sm:$0xff]
      %v330 = vld [vmem:[%s1 + $0x1a8] sm:$0xff]
      %v331 = vld [vmem:[%s1 + $0x1b0] sm:$0xff]
      %v332 = vld [vmem:[%s1 + $0x1b8] sm:$0xff]
      %v333 = vld [vmem:[%s1 + $0x1c0] sm:$0xff]
      %v334 = vld [vmem:[%s1 + $0x1c8] sm:$0xff]
      %v335 = vld [vmem:[%s1 + $0x1d0] sm:$0xff]
      %v336 = vld [vmem:[%s1 + $0x1d8] sm:$0xff]
      %v337 = vld [vmem:[%s1 + $0x1e0] sm:$0xff]
      %v338 = vld [vmem:[%s1 + $0x1e8] sm:$0xff]
      %v339 = vld [vmem:[%s1 + $0x1f0] sm:$0xff]
      %v340 = vld [vmem:[%s1 + $0x1f8] sm:$0xff]
      %v341 = vld [vmem:[%s1 + $0x200] sm:$0xff]
      %v342 = vld [vmem:[%s1 + $0x208] sm:$0xff]
      %v343 = vld [vmem:[%s1 + $0x210] sm:$0xff]
      %v344 = vld [vmem:[%s1 + $0x218] sm:$0xff]
      %v345 = vld [vmem:[%s1 + $0x220] sm:$0xff]
      %v346 = vld [vmem:[%s1 + $0x228] sm:$0xff]
      %v347 = vld [vmem:[%s1 + $0x230] sm:$0xff]
      %v348 = vld [vmem:[%s1 + $0x238] sm:$0xff]
      %v349 = vld [vmem:[%s1 + $0x240] sm:$0xff]
      %v350 = vld [vmem:[%s1 + $0x248] sm:$0xff]
      %v351 = vld [vmem:[%s1 + $0x250] sm:$0xff]
      %v352 = vld [vmem:[%s1 + $0x258] sm:$0xff]
      %v353 = vld [vmem:[%s1 + $0x260] sm:$0xff]
      %v354 = vld [vmem:[%s1 + $0x268] sm:$0xff]
      %v355 = vld [vmem:[%s1 + $0x270] sm:$0xff]
      %v356 = vld [vmem:[%s1 + $0x278] sm:$0xff]
      %v357 = vld [vmem:[%s1 + $0x280] sm:$0xff]
      %v358 = vld [vmem:[%s1 + $0x288] sm:$0xff]
      %v359 = vld [vmem:[%s1 + $0x290] sm:$0xff]
      %v360 = vld [vmem:[%s1 + $0x298] sm:$0xff]
      %v361 = vld [vmem:[%s1 + $0x2a0] sm:$0xff]
      %v362 = vld [vmem:[%s1 + $0x2a8] sm:$0xff]
      %v363 = vld [vmem:[%s1 + $0x2b0] sm:$0xff]
      %v364 = vld [vmem:[%s1 + $0x2b8] sm:$0xff]
      %v365 = vld [vmem:[%s1 + $0x2c0] sm:$0xff]
      %v366 = vld [vmem:[%s1 + $0x2c8] sm:$0xff]
      %v367 = vld [vmem:[%s1 + $0x2d0] sm:$0xff]
      %v368 = vld [vmem:[%s1 + $0x2d8] sm:$0xff]
      %v369 = vld [vmem:[%s1 + $0x2e0] sm:$0xff]
      %v370 = vld [vmem:[%s1 + $0x2e8] sm:$0xff]
      %v371 = vld [vmem:[%s1 + $0x2f0] sm:$0xff]
      %v372 = vld [vmem:[%s1 + $0x2f8] sm:$0xff]
      %v373 = vld [vmem:[%s1 + $0x300] sm:$0xff]
      %v374 = vld [vmem:[%s1 + $0x308] sm:$0xff]
      %v375 = vld [vmem:[%s1 + $0x310] sm:$0xff]
      %v376 = vld [vmem:[%s1 + $0x318] sm:$0xff]
      %v377 = vld [vmem:[%s1 + $0x320] sm:$0xff]
      %v378 = vld [vmem:[%s1 + $0x328] sm:$0xff]
      %v379 = vld [vmem:[%s1 + $0x330] sm:$0xff]
      %v380 = vld [vmem:[%s1 + $0x338] sm:$0xff]
      %v381 = vld [vmem:[%s1 + $0x340] sm:$0xff]
      %v382 = vld [vmem:[%s1 + $0x348] sm:$0xff]
      %v383 = vld [vmem:[%s1 + $0x350] sm:$0xff]
      %v384 = vld [vmem:[%s1 + $0x358] sm:$0xff]
      %v385 = vld [vmem:[%s1 + $0x360] sm:$0xff]
      %v386 = vld [vmem:[%s1 + $0x368] sm:$0xff]
      %v387 = vld [vmem:[%s1 + $0x370] sm:$0xff]
      %v388 = vld [vmem:[%s1 + $0x378] sm:$0xff]
      %v389 = vld [vmem:[%s1 + $0x380] sm:$0xff]
      %v390 = vld [vmem:[%s1 + $0x388] sm:$0xff]
      %v391 = vld [vmem:[%s1 + $0x390] sm:$0xff]
      %v392 = vld [vmem:[%s1 + $0x398] sm:$0xff]
      %v393 = vld [vmem:[%s1 + $0x3a0] sm:$0xff]
      %v394 = vld [vmem:[%s1 + $0x3a8] sm:$0xff]
      %v395 = vld [vmem:[%s1 + $0x3b0] sm:$0xff]
      %v396 = vld [vmem:[%s1 + $0x3b8] sm:$0xff]
      %v397 = vld [vmem:[%s1 + $0x3c0] sm:$0xff]
      %v398 = vld [vmem:[%s1 + $0x3c8] sm:$0xff]
      %v399 = vld [vmem:[%s1 + $0x3d0] sm:$0xff]
      %v400 = vld [vmem:[%s1 + $0x3d8] sm:$0xff]
      %v401 = vld [vmem:[%s1 + $0x3e0] sm:$0xff]
      %v402 = vld [vmem:[%s1 + $0x3e8] sm:$0xff]
      %v403 = vld [vmem:[%s1 + $0x3f0] sm:$0xff]
      %v404 = vld [vmem:[%s1 + $0x3f8] sm:$0xff]
      %v405 = vld [vmem:[%s1 + $0x400] sm:$0xff]
      %v406 = vld [vmem:[%s1 + $0x408] sm:$0xff]
      %v407 = vld [vmem:[%s1 + $0x410] sm:$0xff]
      %v408 = vld [vmem:[%s1 + $0x418] sm:$0xff]
      %v409 = vld [vmem:[%s1 + $0x420] sm:$0xff]
      %v410 = vld [vmem:[%s1 + $0x428] sm:$0xff]
      %v411 = vld [vmem:[%s1 + $0x430] sm:$0xff]
      %v412 = vld [vmem:[%s1 + $0x438] sm:$0xff]
      %v413 = vld [vmem:[%s1 + $0x440] sm:$0xff]
      %v414 = vld [vmem:[%s1 + $0x448] sm:$0xff]
      %v415 = vld [vmem:[%s1 + $0x450] sm:$0xff]
      %v416 = vld [vmem:[%s1 + $0x458] sm:$0xff]
      %v417 = vld [vmem:[%s1 + $0x460] sm:$0xff]
      %v418 = vld [vmem:[%s1 + $0x468] sm:$0xff]
      %v419 = vld [vmem:[%s1 + $0x470] sm:$0xff]
      %v420 = vld [vmem:[%s1 + $0x478] sm:$0xff]
      %v421 = vld [vmem:[%s1 + $0x480] sm:$0xff]
      %v422 = vld [vmem:[%s1 + $0x488] sm:$0xff]
      %v423 = vld [vmem:[%s1 + $0x490] sm:$0xff]
      %v424 = vld [vmem:[%s1 + $0x498] sm:$0xff]
      %v425 = vld [vmem:[%s1 + $0x4a0] sm:$0xff]
      %v426 = vld [vmem:[%s1 + $0x4a8] sm:$0xff]
      %v427 = vld [vmem:[%s1 + $0x4b0] sm:$0xff]
      %v428 = vld [vmem:[%s1 + $0x4b8] sm:$0xff]
      %v429 = vld [vmem:[%s1 + $0x4c0] sm:$0xff]
      %v430 = vld [vmem:[%s1 + $0x4c8] sm:$0xff]
      %v431 = vld [vmem:[%s1 + $0x4d0] sm:$0xff]
      %v432 = vld [vmem:[%s1 + $0x4d8] sm:$0xff]
      %v433 = vld [vmem:[%s1 + $0x4e0] sm:$0xff]
      %v434 = vld [vmem:[%s1 + $0x4e8] sm:$0xff]
      %v435 = vld [vmem:[%s1 + $0x4f0] sm:$0xff]
      %v436 = vld [vmem:[%s1 + $0x4f8] sm:$0xff]
      %v437 = vld [vmem:[%s1 + $0x500] sm:$0xff]
      %v438 = vld [vmem:[%s1 + $0x508] sm:$0xff]
      %v439 = vld [vmem:[%s1 + $0x510] sm:$0xff]
      %v440 = vld [vmem:[%s1 + $0x518] sm:$0xff]
      %v441 = vld [vmem:[%s1 + $0x520] sm:$0xff]
      %v442 = vld [vmem:[%s1 + $0x528] sm:$0xff]
      %v443 = vld [vmem:[%s1 + $0x530] sm:$0xff]
      %v444 = vld [vmem:[%s1 + $0x538] sm:$0xff]
      %v445 = vld [vmem:[%s1 + $0x540] sm:$0xff]
      %v446 = vld [vmem:[%s1 + $0x548] sm:$0xff]
      %v447 = vld [vmem:[%s1 + $0x550] sm:$0xff]
      %v448 = vld [vmem:[%s1 + $0x558] sm:$0xff]
      %v449 = vld [vmem:[%s1 + $0x560] sm:$0xff]
      %v450 = vld [vmem:[%s1 + $0x568] sm:$0xff]
      %v451 = vld [vmem:[%s1 + $0x570] sm:$0xff]
      %v452 = vld [vmem:[%s1 + $0x578] sm:$0xff]
      %v453 = vld [vmem:[%s1 + $0x580] sm:$0xff]
      %v454 = vld [vmem:[%s1 + $0x588] sm:$0xff]
      %v455 = vld [vmem:[%s1 + $0x590] sm:$0xff]
      %v456 = vld [vmem:[%s1 + $0x598] sm:$0xff]
      %v457 = vld [vmem:[%s1 + $0x5a0] sm:$0xff]
      %v458 = vld [vmem:[%s1 + $0x5a8] sm:$0xff]
      %v459 = vld [vmem:[%s1 + $0x5b0] sm:$0xff]
      %v460 = vld [vmem:[%s1 + $0x5b8] sm:$0xff]
      %v461 = vld [vmem:[%s1 + $0x5c0] sm:$0xff]
      %v462 = vld [vmem:[%s1 + $0x5c8] sm:$0xff]
      %v463 = vld [vmem:[%s1 + $0x5d0] sm:$0xff]
      %v464 = vld [vmem:[%s1 + $0x5d8] sm:$0xff]
      %v465 = vld [vmem:[%s1 + $0x5e0] sm:$0xff]
      %v466 = vld [vmem:[%s1 + $0x5e8] sm:$0xff]
      %v467 = vld [vmem:[%s1 + $0x5f0] sm:$0xff]
      %v468 = vld [vmem:[%s1 + $0x5f8] sm:$0xff]
      %v469 = vld [vmem:[%s1 + $0x600] sm:$0xff]
      %v470 = vld [vmem:[%s1 + $0x608] sm:$0xff]
      %v471 = vld [vmem:[%s1 + $0x610] sm:$0xff]
      %v472 = vld [vmem:[%s1 + $0x618] sm:$0xff]
      %v473 = vld [vmem:[%s1 + $0x620] sm:$0xff]
      %v474 = vld [vmem:[%s1 + $0x628] sm:$0xff]
      %v475 = vld [vmem:[%s1 + $0x630] sm:$0xff]
      %v476 = vld [vmem:[%s1 + $0x638] sm:$0xff]
      %v477 = vld [vmem:[%s1 + $0x640] sm:$0xff]
      %v478 = vld [vmem:[%s1 + $0x648] sm:$0xff]
      %v479 = vld [vmem:[%s1 + $0x650] sm:$0xff]
      %v480 = vld [vmem:[%s1 + $0x658] sm:$0xff]
      %v481 = vld [vmem:[%s1 + $0x660] sm:$0xff]
      %v482 = vld [vmem:[%s1 + $0x668] sm:$0xff]
      %v483 = vld [vmem:[%s1 + $0x670] sm:$0xff]
      %v484 = vld [vmem:[%s1 + $0x678] sm:$0xff]
      %v485 = vld [vmem:[%s1 + $0x680] sm:$0xff]
      %v486 = vld [vmem:[%s1 + $0x688] sm:$0xff]
      %v487 = vld [vmem:[%s1 + $0x690] sm:$0xff]
      %v488 = vld [vmem:[%s1 + $0x698] sm:$0xff]
      %v489 = vld [vmem:[%s1 + $0x6a0] sm:$0xff]
      %v490 = vld [vmem:[%s1 + $0x6a8] sm:$0xff]
      %v491 = vld [vmem:[%s1 + $0x6b0] sm:$0xff]
      %v492 = vld [vmem:[%s1 + $0x6b8] sm:$0xff]
      %v493 = vld [vmem:[%s1 + $0x6c0] sm:$0xff]
      %v494 = vld [vmem:[%s1 + $0x6c8] sm:$0xff]
      %v495 = vld [vmem:[%s1 + $0x6d0] sm:$0xff]
      %v496 = vld [vmem:[%s1 + $0x6d8] sm:$0xff]
      %v497 = vld [vmem:[%s1 + $0x6e0] sm:$0xff]
      %v498 = vld [vmem:[%s1 + $0x6e8] sm:$0xff]
      %v499 = vld [vmem:[%s1 + $0x6f0] sm:$0xff]
      %v500 = vld [vmem:[%s1 + $0x6f8] sm:$0xff]
      %v501 = vld [vmem:[%s1 + $0x700] sm:$0xff]
      %v502 = vld [vmem:[%s1 + $0x708] sm:$0xff]
      %v503 = vld [vmem:[%s1 + $0x710] sm:$0xff]
      %v504 = vld [vmem:[%s1 + $0x718] sm:$0xff]
      %v505 = vld [vmem:[%s1 + $0x720] sm:$0xff]
      %v506 = vld [vmem:[%s1 + $0x728] sm:$0xff]
      %v507 = vld [vmem:[%s1 + $0x730] sm:$0xff]
      %v508 = vld [vmem:[%s1 + $0x738] sm:$0xff]
      %v509 = vld [vmem:[%s1 + $0x740] sm:$0xff]
      %v510 = vld [vmem:[%s1 + $0x748] sm:$0xff]
      %v511 = vld [vmem:[%s1 + $0x750] sm:$0xff]
      %v512 = vld [vmem:[%s1 + $0x758] sm:$0xff]
      %v513 = vld [vmem:[%s1 + $0x760] sm:$0xff]
      %v514 = vld [vmem:[%s1 + $0x768] sm:$0xff]
      %v515 = vld [vmem:[%s1 + $0x770] sm:$0xff]
      %v516 = vld [vmem:[%s1 + $0x778] sm:$0xff]
      %v517 = vld [vmem:[%s1 + $0x780] sm:$0xff]
      %v518 = vld [vmem:[%s1 + $0x788] sm:$0xff]
      %v519 = vld [vmem:[%s1 + $0x790] sm:$0xff]
      %v520 = vld [vmem:[%s1 + $0x798] sm:$0xff]
      %v521 = vld [vmem:[%s1 + $0x7a0] sm:$0xff]
      %v522 = vld [vmem:[%s1 + $0x7a8] sm:$0xff]
      %v523 = vld [vmem:[%s1 + $0x7b0] sm:$0xff]
      %v524 = vld [vmem:[%s1 + $0x7b8] sm:$0xff]
      %v525 = vld [vmem:[%s1 + $0x7c0] sm:$0xff]
      %v526 = vld [vmem:[%s1 + $0x7c8] sm:$0xff]
      %v527 = vld [vmem:[%s1 + $0x7d0] sm:$0xff]
      %v528 = vld [vmem:[%s1 + $0x7d8] sm:$0xff]
      %v529 = vld [vmem:[%s1 + $0x7e0] sm:$0xff]
      %v530 = vld [vmem:[%s1 + $0x7e8] sm:$0xff]
      %v531 = vld [vmem:[%s1 + $0x7f0] sm:$0xff]
      %v532 = vld [vmem:[%s1 + $0x7f8] sm:$0xff]
      %v533 = vld [vmem:[%s1 + $0x800] sm:$0xff]
      %v534 = vld [vmem:[%s1 + $0x808] sm:$0xff]
      %v535 = vld [vmem:[%s1 + $0x810] sm:$0xff]
      %v536 = vld [vmem:[%s1 + $0x818] sm:$0xff]
      %v537 = vld [vmem:[%s1 + $0x820] sm:$0xff]
      %v538 = vld [vmem:[%s1 + $0x828] sm:$0xff]
      %v539 = vld [vmem:[%s1 + $0x830] sm:$0xff]
      %v540 = vld [vmem:[%s1 + $0x838] sm:$0xff]
      %v541 = vld [vmem:[%s1 + $0x840] sm:$0xff]
      %v542 = vld [vmem:[%s1 + $0x848] sm:$0xff]
      %v543 = vld [vmem:[%s1 + $0x850] sm:$0xff]
      %v544 = vld [vmem:[%s1 + $0x858] sm:$0xff]
      %v545 = vld [vmem:[%s1 + $0x860] sm:$0xff]
      %v546 = vld [vmem:[%s1 + $0x868] sm:$0xff]
      %v547 = vld [vmem:[%s1 + $0x870] sm:$0xff]
      %v548 = vld [vmem:[%s1 + $0x878] sm:$0xff]
      %v549 = vld [vmem:[%s1 + $0x880] sm:$0xff]
      %v550 = vld [vmem:[%s1 + $0x888] sm:$0xff]
      %v551 = vld [vmem:[%s1 + $0x890] sm:$0xff]
      %v552 = vld [vmem:[%s1 + $0x898] sm:$0xff]
      %v553 = vld [vmem:[%s1 + $0x8a0] sm:$0xff]
      %v554 = vld [vmem:[%s1 + $0x8a8] sm:$0xff]
      %v555 = vld [vmem:[%s1 + $0x8b0] sm:$0xff]
      %v556 = vld [vmem:[%s1 + $0x8b8] sm:$0xff]
      %v557 = vld [vmem:[%s1 + $0x8c0] sm:$0xff]
      %v558 = vld [vmem:[%s1 + $0x8c8] sm:$0xff]
      %v559 = vld [vmem:[%s1 + $0x8d0] sm:$0xff]
      %v560 = vld [vmem:[%s1 + $0x8d8] sm:$0xff]
      %v561 = vld [vmem:[%s1 + $0x8e0] sm:$0xff]
      %v562 = vld [vmem:[%s1 + $0x8e8] sm:$0xff]
      %v563 = vld [vmem:[%s1 + $0x8f0] sm:$0xff]
      %v564 = vld [vmem:[%s1 + $0x8f8] sm:$0xff]
      %v565 = vld [vmem:[%s1 + $0x900] sm:$0xff]
      %v566 = vld [vmem:[%s1 + $0x908] sm:$0xff]
      %v567 = vld [vmem:[%s1 + $0x910] sm:$0xff]
      %v568 = vld [vmem:[%s1 + $0x918] sm:$0xff]
      %v569 = vld [vmem:[%s1 + $0x920] sm:$0xff]
      %v570 = vld [vmem:[%s1 + $0x928] sm:$0xff]
      %v571 = vld [vmem:[%s1 + $0x930] sm:$0xff]
      %v572 = vld [vmem:[%s1 + $0x938] sm:$0xff]
      %v573 = vld [vmem:[%s1 + $0x940] sm:$0xff]
      %v574 = vld [vmem:[%s1 + $0x948] sm:$0xff]
      %v575 = vld [vmem:[%s1 + $0x950] sm:$0xff]
      %v576 = vld [vmem:[%s1 + $0x958] sm:$0xff]
      %v577 = vld [vmem:[%s1 + $0x960] sm:$0xff]
      %v578 = vld [vmem:[%s1 + $0x968] sm:$0xff]
      %v579 = vld [vmem:[%s1 + $0x970] sm:$0xff]
      %v580 = vld [vmem:[%s1 + $0x978] sm:$0xff]
      %v581 = vld [vmem:[%s1 + $0x980] sm:$0xff]
      %v582 = vld [vmem:[%s1 + $0x988] sm:$0xff]
      %v583 = vld [vmem:[%s1 + $0x990] sm:$0xff]
      %v584 = vld [vmem:[%s1 + $0x998] sm:$0xff]
      %v585 = vld [vmem:[%s1 + $0x9a0] sm:$0xff]
      %v586 = vld [vmem:[%s1 + $0x9a8] sm:$0xff]
      %v587 = vld [vmem:[%s1 + $0x9b0] sm:$0xff]
      %v588 = vld [vmem:[%s1 + $0x9b8] sm:$0xff]
      %v589 = vld [vmem:[%s1 + $0x9c0] sm:$0xff]
      %v590 = vld [vmem:[%s1 + $0x9c8] sm:$0xff]
      %v591 = vld [vmem:[%s1 + $0x9d0] sm:$0xff]
      %v592 = vld [vmem:[%s1 + $0x9d8] sm:$0xff]
      %v593 = vld [vmem:[%s1 + $0x9e0] sm:$0xff]
      %v594 = vld [vmem:[%s1 + $0x9e8] sm:$0xff]
      %v595 = vld [vmem:[%s1 + $0x9f0] sm:$0xff]
      %v596 = vld [vmem:[%s1 + $0x9f8] sm:$0xff]
      %v597 = vld [vmem:[%s1 + $0xa00] sm:$0xff]
      %v598 = vld [vmem:[%s1 + $0xa08] sm:$0xff]
      %v599 = vld [vmem:[%s1 + $0xa10] sm:$0xff]
      %v600 = vld [vmem:[%s1 + $0xa18] sm:$0xff]
      %v601 = vld [vmem:[%s1 + $0xa20] sm:$0xff]
      %v602 = vld [vmem:[%s1 + $0xa28] sm:$0xff]
      %v603 = vld [vmem:[%s1 + $0xa30] sm:$0xff]
      %v604 = vld [vmem:[%s1 + $0xa38] sm:$0xff]
      %v605 = vld [vmem:[%s1 + $0xa40] sm:$0xff]
      %v606 = vld [vmem:[%s1 + $0xa48] sm:$0xff]
      %v607 = vld [vmem:[%s1 + $0xa50] sm:$0xff]
      %v608 = vld [vmem:[%s1 + $0xa58] sm:$0xff]
      %v609 = vld [vmem:[%s1 + $0xa60] sm:$0xff]
      %v610 = vld [vmem:[%s1 + $0xa68] sm:$0xff]
      %v611 = vld [vmem:[%s1 + $0xa70] sm:$0xff]
      %v612 = vld [vmem:[%s1 + $0xa78] sm:$0xff]
      %v613 = vld [vmem:[%s1 + $0xa80] sm:$0xff]
      %v614 = vld [vmem:[%s1 + $0xa88] sm:$0xff]
      %v615 = vld [vmem:[%s1 + $0xa90] sm:$0xff]
      %v616 = vld [vmem:[%s1 + $0xa98] sm:$0xff]
      %v617 = vld [vmem:[%s1 + $0xaa0] sm:$0xff]
      %v618 = vld [vmem:[%s1 + $0xaa8] sm:$0xff]
      %v619 = vld [vmem:[%s1 + $0xab0] sm:$0xff]
      %v620 = vld [vmem:[%s1 + $0xab8] sm:$0xff]
      %v621 = vld [vmem:[%s1 + $0xac0] sm:$0xff]
      %v622 = vld [vmem:[%s1 + $0xac8] sm:$0xff]
      %v623 = vld [vmem:[%s1 + $0xad0] sm:$0xff]
      %v624 = vld [vmem:[%s1 + $0xad8] sm:$0xff]
      %v625 = vld [vmem:[%s1 + $0xae0] sm:$0xff]
      %v626 = vld [vmem:[%s1 + $0xae8] sm:$0xff]
      %v627 = vld [vmem:[%s1 + $0xaf0] sm:$0xff]
      %v628 = vld [vmem:[%s1 + $0xaf8] sm:$0xff]
      %v629 = vld [vmem:[%s1 + $0xb00] sm:$0xff]
      %v630 = vld [vmem:[%s1 + $0xb08] sm:$0xff]
      %v631 = vld [vmem:[%s1 + $0xb10] sm:$0xff]
      %v632 = vld [vmem:[%s1 + $0xb18] sm:$0xff]
      %v633 = vld [vmem:[%s1 + $0xb20] sm:$0xff]
      %v634 = vld [vmem:[%s1 + $0xb28] sm:$0xff]
      %v635 = vld [vmem:[%s1 + $0xb30] sm:$0xff]
      %v636 = vld [vmem:[%s1 + $0xb38] sm:$0xff]
      %v637 = vld [vmem:[%s1 + $0xb40] sm:$0xff]
      %v638 = vld [vmem:[%s1 + $0xb48] sm:$0xff]
      %v639 = vld [vmem:[%s1 + $0xb50] sm:$0xff]
      %v640 = vld [vmem:[%s1 + $0xb58] sm:$0xff]
      %v641 = vld [vmem:[%s1 + $0xb60] sm:$0xff]
      %v642 = vld [vmem:[%s1 + $0xb68] sm:$0xff]
      %v643 = vld [vmem:[%s1 + $0xb70] sm:$0xff]
      %v644 = vld [vmem:[%s1 + $0xb78] sm:$0xff]
      %v645 = vld [vmem:[%s1 + $0xb80] sm:$0xff]
      %v646 = vld [vmem:[%s1 + $0xb88] sm:$0xff]
      %v647 = vld [vmem:[%s1 + $0xb90] sm:$0xff]
      %v648 = vld [vmem:[%s1 + $0xb98] sm:$0xff]
      %v649 = vld [vmem:[%s1 + $0xba0] sm:$0xff]
      %v650 = vld [vmem:[%s1 + $0xba8] sm:$0xff]
      %v651 = vld [vmem:[%s1 + $0xbb0] sm:$0xff]
      %v652 = vld [vmem:[%s1 + $0xbb8] sm:$0xff]
      %v653 = vld [vmem:[%s1 + $0xbc0] sm:$0xff]
      %v654 = vld [vmem:[%s1 + $0xbc8] sm:$0xff]
      %v655 = vld [vmem:[%s1 + $0xbd0] sm:$0xff]
      %v656 = vld [vmem:[%s1 + $0xbd8] sm:$0xff]
      %v657 = vld [vmem:[%s1 + $0xbe0] sm:$0xff]
      %v658 = vld [vmem:[%s1 + $0xbe8] sm:$0xff]
      %v659 = vld [vmem:[%s1 + $0xbf0] sm:$0xff]
      %v660 = vld [vmem:[%s1 + $0xbf8] sm:$0xff]
      %v661 = vld [vmem:[%s1 + $0xc00] sm:$0xff]
      %v662 = vld [vmem:[%s1 + $0xc08] sm:$0xff]
      %v663 = vld [vmem:[%s1 + $0xc10] sm:$0xff]
      %v664 = vld [vmem:[%s1 + $0xc18] sm:$0xff]
      %v665 = vld [vmem:[%s1 + $0xc20] sm:$0xff]
      %v666 = vld [vmem:[%s1 + $0xc28] sm:$0xff]
      %v667 = vld [vmem:[%s1 + $0xc30] sm:$0xff]
      %v668 = vld [vmem:[%s1 + $0xc38] sm:$0xff]
      %v669 = vld [vmem:[%s1 + $0xc40] sm:$0xff]
      %v670 = vld [vmem:[%s1 + $0xc48] sm:$0xff]
      %v671 = vld [vmem:[%s1 + $0xc50] sm:$0xff]
      %v672 = vld [vmem:[%s1 + $0xc58] sm:$0xff]
      %v673 = vld [vmem:[%s1 + $0xc60] sm:$0xff]
      %v674 = vld [vmem:[%s1 + $0xc68] sm:$0xff]
      %v675 = vld [vmem:[%s1 + $0xc70] sm:$0xff]
      %v676 = vld [vmem:[%s1 + $0xc78] sm:$0xff]
      %v677 = vld [vmem:[%s1 + $0xc80] sm:$0xff]
      %v678 = vld [vmem:[%s1 + $0xc88] sm:$0xff]
      %v679 = vld [vmem:[%s1 + $0xc90] sm:$0xff]
      %v680 = vld [vmem:[%s1 + $0xc98] sm:$0xff]
      %v681 = vld [vmem:[%s1 + $0xca0] sm:$0xff]
      %v682 = vld [vmem:[%s1 + $0xca8] sm:$0xff]
      %v683 = vld [vmem:[%s1 + $0xcb0] sm:$0xff]
      %v684 = vld [vmem:[%s1 + $0xcb8] sm:$0xff]
      %v685 = vld [vmem:[%s1 + $0xcc0] sm:$0xff]
      %v686 = vld [vmem:[%s1 + $0xcc8] sm:$0xff]
      %v687 = vld [vmem:[%s1 + $0xcd0] sm:$0xff]
      %v688 = vld [vmem:[%s1 + $0xcd8] sm:$0xff]
      %v689 = vld [vmem:[%s1 + $0xce0] sm:$0xff]
      %v690 = vld [vmem:[%s1 + $0xce8] sm:$0xff]
      %v691 = vld [vmem:[%s1 + $0xcf0] sm:$0xff]
      %v692 = vld [vmem:[%s1 + $0xcf8] sm:$0xff]
      %v693 = vld [vmem:[%s1 + $0xd00] sm:$0xff]
      %v694 = vld [vmem:[%s1 + $0xd08] sm:$0xff]
      %v695 = vld [vmem:[%s1 + $0xd10] sm:$0xff]
      %v696 = vld [vmem:[%s1 + $0xd18] sm:$0xff]
      %v697 = vld [vmem:[%s1 + $0xd20] sm:$0xff]
      %v698 = vld [vmem:[%s1 + $0xd28] sm:$0xff]
      %v699 = vld [vmem:[%s1 + $0xd30] sm:$0xff]
      %v700 = vld [vmem:[%s1 + $0xd38] sm:$0xff]
      %v701 = vld [vmem:[%s1 + $0xd40] sm:$0xff]
      %v702 = vld [vmem:[%s1 + $0xd48] sm:$0xff]
      %v703 = vld [vmem:[%s1 + $0xd50] sm:$0xff]
      %v704 = vld [vmem:[%s1 + $0xd58] sm:$0xff]
      %v705 = vld [vmem:[%s1 + $0xd60] sm:$0xff]
      %v706 = vld [vmem:[%s1 + $0xd68] sm:$0xff]
      %v707 = vld [vmem:[%s1 + $0xd70] sm:$0xff]
      %v708 = vld [vmem:[%s1 + $0xd78] sm:$0xff]
      %v709 = vld [vmem:[%s1 + $0xd80] sm:$0xff]
      %v710 = vld [vmem:[%s1 + $0xd88] sm:$0xff]
      %v711 = vld [vmem:[%s1 + $0xd90] sm:$0xff]
      %v712 = vld [vmem:[%s1 + $0xd98] sm:$0xff]
      %v713 = vld [vmem:[%s1 + $0xda0] sm:$0xff]
      %v714 = vld [vmem:[%s1 + $0xda8] sm:$0xff]
      %v715 = vld [vmem:[%s1 + $0xdb0] sm:$0xff]
      %v716 = vld [vmem:[%s1 + $0xdb8] sm:$0xff]
      %v717 = vld [vmem:[%s1 + $0xdc0] sm:$0xff]
      %v718 = vld [vmem:[%s1 + $0xdc8] sm:$0xff]
      %v719 = vld [vmem:[%s1 + $0xdd0] sm:$0xff]
      %v720 = vld [vmem:[%s1 + $0xdd8] sm:$0xff]
      %v721 = vld [vmem:[%s1 + $0xde0] sm:$0xff]
      %v722 = vld [vmem:[%s1 + $0xde8] sm:$0xff]
      %v723 = vld [vmem:[%s1 + $0xdf0] sm:$0xff]
      %v724 = vld [vmem:[%s1 + $0xdf8] sm:$0xff]
      %v725 = vld [vmem:[%s1 + $0xe00] sm:$0xff]
      %v726 = vld [vmem:[%s1 + $0xe08] sm:$0xff]
      %v727 = vld [vmem:[%s1 + $0xe10] sm:$0xff]
      %v728 = vld [vmem:[%s1 + $0xe18] sm:$0xff]
      %v729 = vld [vmem:[%s1 + $0xe20] sm:$0xff]
      %v730 = vld [vmem:[%s1 + $0xe28] sm:$0xff]
      %v731 = vld [vmem:[%s1 + $0xe30] sm:$0xff]
      %v732 = vld [vmem:[%s1 + $0xe38] sm:$0xff]
      %v733 = vld [vmem:[%s1 + $0xe40] sm:$0xff]
      %v734 = vld [vmem:[%s1 + $0xe48] sm:$0xff]
      %v735 = vld [vmem:[%s1 + $0xe50] sm:$0xff]
      %v736 = vld [vmem:[%s1 + $0xe58] sm:$0xff]
      %v737 = vld [vmem:[%s1 + $0xe60] sm:$0xff]
      %v738 = vld [vmem:[%s1 + $0xe68] sm:$0xff]
      %v739 = vld [vmem:[%s1 + $0xe70] sm:$0xff]
      %v740 = vld [vmem:[%s1 + $0xe78] sm:$0xff]
      %v741 = vld [vmem:[%s1 + $0xe80] sm:$0xff]
      %v742 = vld [vmem:[%s1 + $0xe88] sm:$0xff]
      %v743 = vld [vmem:[%s1 + $0xe90] sm:$0xff]
      %v744 = vld [vmem:[%s1 + $0xe98] sm:$0xff]
      %v745 = vld [vmem:[%s1 + $0xea0] sm:$0xff]
      %v746 = vld [vmem:[%s1 + $0xea8] sm:$0xff]
      %v747 = vld [vmem:[%s1 + $0xeb0] sm:$0xff]
      %v748 = vld [vmem:[%s1 + $0xeb8] sm:$0xff]
      %v749 = vld [vmem:[%s1 + $0xec0] sm:$0xff]
      %v750 = vld [vmem:[%s1 + $0xec8] sm:$0xff]
      %v751 = vld [vmem:[%s1 + $0xed0] sm:$0xff]
      %v752 = vld [vmem:[%s1 + $0xed8] sm:$0xff]
      %v753 = vld [vmem:[%s1 + $0xee0] sm:$0xff]
      %v754 = vld [vmem:[%s1 + $0xee8] sm:$0xff]
      %v755 = vld [vmem:[%s1 + $0xef0] sm:$0xff]
      %v756 = vld [vmem:[%s1 + $0xef8] sm:$0xff]
      %v757 = vld [vmem:[%s1 + $0xf00] sm:$0xff]
      %v758 = vld [vmem:[%s1 + $0xf08] sm:$0xff]
      %v759 = vld [vmem:[%s1 + $0xf10] sm:$0xff]
      %v760 = vld [vmem:[%s1 + $0xf18] sm:$0xff]
      %v761 = vld [vmem:[%s1 + $0xf20] sm:$0xff]
      %v762 = vld [vmem:[%s1 + $0xf28] sm:$0xff]
      %v763 = vld [vmem:[%s1 + $0xf30] sm:$0xff]
      %v764 = vld [vmem:[%s1 + $0xf38] sm:$0xff]
      %v765 = vld [vmem:[%s1 + $0xf40] sm:$0xff]
      %v766 = vld [vmem:[%s1 + $0xf48] sm:$0xff]
      %v767 = vld [vmem:[%s1 + $0xf50] sm:$0xff]
      %v768 = vld [vmem:[%s1 + $0xf58] sm:$0xff]
      %v769 = vld [vmem:[%s1 + $0xf60] sm:$0xff]
      %v770 = vld [vmem:[%s1 + $0xf68] sm:$0xff]
      %v771 = vld [vmem:[%s1 + $0xf70] sm:$0xff]
      %v772 = vld [vmem:[%s1 + $0xf78] sm:$0xff]
      %v773 = vld [vmem:[%s1 + $0xf80] sm:$0xff]
      %v774 = vld [vmem:[%s1 + $0xf88] sm:$0xff]
      %v775 = vld [vmem:[%s1 + $0xf90] sm:$0xff]
      %v776 = vld [vmem:[%s1 + $0xf98] sm:$0xff]
      %v777 = vld [vmem:[%s1 + $0xfa0] sm:$0xff]
      %v778 = vld [vmem:[%s1 + $0xfa8] sm:$0xff]
      %v779 = vld [vmem:[%s1 + $0xfb0] sm:$0xff]
      %v780 = vld [vmem:[%s1 + $0xfb8] sm:$0xff]
      %v781 = vld [vmem:[%s1 + $0xfc0] sm:$0xff]
      %v782 = vld [vmem:[%s1 + $0xfc8] sm:$0xff]
      %v783 = vld [vmem:[%s1 + $0xfd0] sm:$0xff]
      %v784 = vld [vmem:[%s1 + $0xfd8] sm:$0xff]
      %v785 = vld [vmem:[%s1 + $0xfe0] sm:$0xff]
      %v786 = vld [vmem:[%s1 + $0xfe8] sm:$0xff]
      %v787 = vld [vmem:[%s1 + $0xff0] sm:$0xff]
      %v788 = vld [vmem:[%s1 + $0xff8] sm:$0xff]
      %v789 = vld [vmem:[%s2] sm:$0xf]
      %v791 = vlaneseq
      %v792 = vshrl.u32 %v791, 7
      %v793 = vsub.s32 0, %v792
      %v794 = vrot.slane %v789, %v793
      %v795 = vlaneseq
      %v796 = vshrl.u32 %v795, 7
      %v797 = vsub.s32 1, %v796
      %v798 = vrot.slane %v789, %v797
      %v799 = vlaneseq
      %v800 = vshrl.u32 %v799, 7
      %v801 = vsub.s32 2, %v800
      %v802 = vrot.slane %v789, %v801
      %v803 = vlaneseq
      %v804 = vshrl.u32 %v803, 7
      %v805 = vsub.s32 3, %v804
      %v806 = vrot.slane %v789, %v805
      %v875 = vunpack.c.l.b16 %v213
      %v876 = vunpack.c.h.b16 %v213
      %v877 = vunpack.c.l.b16 %v214
      %v878 = vunpack.c.h.b16 %v214
      %v879 = vunpack.c.l.b16 %v215
      %v880 = vunpack.c.h.b16 %v215
      %v881 = vunpack.c.l.b16 %v216
      %v882 = vunpack.c.h.b16 %v216
      %v883 = vunpack.c.l.b16 %v217
      %v884 = vunpack.c.h.b16 %v217
      %v885 = vunpack.c.l.b16 %v218
      %v886 = vunpack.c.h.b16 %v218
      %v887 = vunpack.c.l.b16 %v219
      %v888 = vunpack.c.h.b16 %v219
      %v889 = vunpack.c.l.b16 %v220
      %v890 = vunpack.c.h.b16 %v220
      %v891 = vunpack.c.l.b16 %v221
      %v892 = vunpack.c.h.b16 %v221
      %v893 = vunpack.c.l.b16 %v222
      %v894 = vunpack.c.h.b16 %v222
      %v895 = vunpack.c.l.b16 %v223
      %v896 = vunpack.c.h.b16 %v223
      %v897 = vunpack.c.l.b16 %v224
      %v898 = vunpack.c.h.b16 %v224
      %v899 = vunpack.c.l.b16 %v225
      %v900 = vunpack.c.h.b16 %v225
      %v901 = vunpack.c.l.b16 %v226
      %v902 = vunpack.c.h.b16 %v226
      %v903 = vunpack.c.l.b16 %v227
      %v904 = vunpack.c.h.b16 %v227
      %v905 = vunpack.c.l.b16 %v228
      %v906 = vunpack.c.h.b16 %v228
      %v907 = vunpack.c.l.b16 %v229
      %v908 = vunpack.c.h.b16 %v229
      %v909 = vunpack.c.l.b16 %v230
      %v910 = vunpack.c.h.b16 %v230
      %v911 = vunpack.c.l.b16 %v231
      %v912 = vunpack.c.h.b16 %v231
      %v913 = vunpack.c.l.b16 %v232
      %v914 = vunpack.c.h.b16 %v232
      %v915 = vunpack.c.l.b16 %v233
      %v916 = vunpack.c.h.b16 %v233
      %v917 = vunpack.c.l.b16 %v234
      %v918 = vunpack.c.h.b16 %v234
      %v919 = vunpack.c.l.b16 %v235
      %v920 = vunpack.c.h.b16 %v235
      %v921 = vunpack.c.l.b16 %v236
      %v922 = vunpack.c.h.b16 %v236
      %v923 = vunpack.c.l.b16 %v237
      %v924 = vunpack.c.h.b16 %v237
      %v925 = vunpack.c.l.b16 %v238
      %v926 = vunpack.c.h.b16 %v238
      %v927 = vunpack.c.l.b16 %v239
      %v928 = vunpack.c.h.b16 %v239
      %v929 = vunpack.c.l.b16 %v240
      %v930 = vunpack.c.h.b16 %v240
      %v931 = vunpack.c.l.b16 %v241
      %v932 = vunpack.c.h.b16 %v241
      %v933 = vunpack.c.l.b16 %v242
      %v934 = vunpack.c.h.b16 %v242
      %v935 = vunpack.c.l.b16 %v243
      %v936 = vunpack.c.h.b16 %v243
      %v937 = vunpack.c.l.b16 %v244
      %v938 = vunpack.c.h.b16 %v244
      %v939 = vunpack.c.l.b16 %v245
      %v940 = vunpack.c.h.b16 %v245
      %v941 = vunpack.c.l.b16 %v246
      %v942 = vunpack.c.h.b16 %v246
      %v943 = vunpack.c.l.b16 %v247
      %v944 = vunpack.c.h.b16 %v247
      %v945 = vunpack.c.l.b16 %v248
      %v946 = vunpack.c.h.b16 %v248
      %v947 = vunpack.c.l.b16 %v249
      %v948 = vunpack.c.h.b16 %v249
      %v949 = vunpack.c.l.b16 %v250
      %v950 = vunpack.c.h.b16 %v250
      %v951 = vunpack.c.l.b16 %v251
      %v952 = vunpack.c.h.b16 %v251
      %v953 = vunpack.c.l.b16 %v252
      %v954 = vunpack.c.h.b16 %v252
      %v955 = vunpack.c.l.b16 %v253
      %v956 = vunpack.c.h.b16 %v253
      %v957 = vunpack.c.l.b16 %v254
      %v958 = vunpack.c.h.b16 %v254
      %v959 = vunpack.c.l.b16 %v255
      %v960 = vunpack.c.h.b16 %v255
      %v961 = vunpack.c.l.b16 %v256
      %v962 = vunpack.c.h.b16 %v256
      %v963 = vunpack.c.l.b16 %v257
      %v964 = vunpack.c.h.b16 %v257
      %v965 = vunpack.c.l.b16 %v258
      %v966 = vunpack.c.h.b16 %v258
      %v967 = vunpack.c.l.b16 %v259
      %v968 = vunpack.c.h.b16 %v259
      %v969 = vunpack.c.l.b16 %v260
      %v970 = vunpack.c.h.b16 %v260
      %v971 = vunpack.c.l.b16 %v261
      %v972 = vunpack.c.h.b16 %v261
      %v973 = vunpack.c.l.b16 %v262
      %v974 = vunpack.c.h.b16 %v262
      %v975 = vunpack.c.l.b16 %v263
      %v976 = vunpack.c.h.b16 %v263
      %v977 = vunpack.c.l.b16 %v264
      %v978 = vunpack.c.h.b16 %v264
      %v979 = vunpack.c.l.b16 %v265
      %v980 = vunpack.c.h.b16 %v265
      %v981 = vunpack.c.l.b16 %v266
      %v982 = vunpack.c.h.b16 %v266
      %v983 = vunpack.c.l.b16 %v267
      %v984 = vunpack.c.h.b16 %v267
      %v985 = vunpack.c.l.b16 %v268
      %v986 = vunpack.c.h.b16 %v268
      %v987 = vunpack.c.l.b16 %v269
      %v988 = vunpack.c.h.b16 %v269
      %v989 = vunpack.c.l.b16 %v270
      %v990 = vunpack.c.h.b16 %v270
      %v991 = vunpack.c.l.b16 %v271
      %v992 = vunpack.c.h.b16 %v271
      %v993 = vunpack.c.l.b16 %v272
      %v994 = vunpack.c.h.b16 %v272
      %v995 = vunpack.c.l.b16 %v273
      %v996 = vunpack.c.h.b16 %v273
      %v997 = vunpack.c.l.b16 %v274
      %v998 = vunpack.c.h.b16 %v274
      %v999 = vunpack.c.l.b16 %v275
      %v1000 = vunpack.c.h.b16 %v275
      %v1001 = vunpack.c.l.b16 %v276
      %v1002 = vunpack.c.h.b16 %v276
      %v1003 = vpack.c.b16 %v891, %v875
      %v1004 = vpack.c.b16 %v892, %v876
      %v1005 = vpack.c.b16 %v893, %v877
      %v1006 = vpack.c.b16 %v894, %v878
      %v1007 = vpack.c.b16 %v895, %v879
      %v1008 = vpack.c.b16 %v896, %v880
      %v1009 = vpack.c.b16 %v897, %v881
      %v1010 = vpack.c.b16 %v898, %v882
      %v1011 = vpack.c.b16 %v899, %v883
      %v1012 = vpack.c.b16 %v900, %v884
      %v1013 = vpack.c.b16 %v901, %v885
      %v1014 = vpack.c.b16 %v902, %v886
      %v1015 = vpack.c.b16 %v903, %v887
      %v1016 = vpack.c.b16 %v904, %v888
      %v1017 = vpack.c.b16 %v905, %v889
      %v1018 = vpack.c.b16 %v906, %v890
      %v1019 = vpack.c.b16 %v923, %v907
      %v1020 = vpack.c.b16 %v924, %v908
      %v1021 = vpack.c.b16 %v925, %v909
      %v1022 = vpack.c.b16 %v926, %v910
      %v1023 = vpack.c.b16 %v927, %v911
      %v1024 = vpack.c.b16 %v928, %v912
      %v1025 = vpack.c.b16 %v929, %v913
      %v1026 = vpack.c.b16 %v930, %v914
      %v1027 = vpack.c.b16 %v931, %v915
      %v1028 = vpack.c.b16 %v932, %v916
      %v1029 = vpack.c.b16 %v933, %v917
      %v1030 = vpack.c.b16 %v934, %v918
      %v1031 = vpack.c.b16 %v935, %v919
      %v1032 = vpack.c.b16 %v936, %v920
      %v1033 = vpack.c.b16 %v937, %v921
      %v1034 = vpack.c.b16 %v938, %v922
      %v1035 = vpack.c.b16 %v955, %v939
      %v1036 = vpack.c.b16 %v956, %v940
      %v1037 = vpack.c.b16 %v957, %v941
      %v1038 = vpack.c.b16 %v958, %v942
      %v1039 = vpack.c.b16 %v959, %v943
      %v1040 = vpack.c.b16 %v960, %v944
      %v1041 = vpack.c.b16 %v961, %v945
      %v1042 = vpack.c.b16 %v962, %v946
      %v1043 = vpack.c.b16 %v963, %v947
      %v1044 = vpack.c.b16 %v964, %v948
      %v1045 = vpack.c.b16 %v965, %v949
      %v1046 = vpack.c.b16 %v966, %v950
      %v1047 = vpack.c.b16 %v967, %v951
      %v1048 = vpack.c.b16 %v968, %v952
      %v1049 = vpack.c.b16 %v969, %v953
      %v1050 = vpack.c.b16 %v970, %v954
      %v1051 = vpack.c.b16 %v987, %v971
      %v1052 = vpack.c.b16 %v988, %v972
      %v1053 = vpack.c.b16 %v989, %v973
      %v1054 = vpack.c.b16 %v990, %v974
      %v1055 = vpack.c.b16 %v991, %v975
      %v1056 = vpack.c.b16 %v992, %v976
      %v1057 = vpack.c.b16 %v993, %v977
      %v1058 = vpack.c.b16 %v994, %v978
      %v1059 = vpack.c.b16 %v995, %v979
      %v1060 = vpack.c.b16 %v996, %v980
      %v1061 = vpack.c.b16 %v997, %v981
      %v1062 = vpack.c.b16 %v998, %v982
      %v1063 = vpack.c.b16 %v999, %v983
      %v1064 = vpack.c.b16 %v1000, %v984
      %v1065 = vpack.c.b16 %v1001, %v985
      %v1066 = vpack.c.b16 %v1002, %v986
      %v1643 = vunpack.c.l.b16 %v277
      %v1644 = vunpack.c.h.b16 %v277
      %v1645 = vunpack.c.l.b16 %v278
      %v1646 = vunpack.c.h.b16 %v278
      %v1647 = vunpack.c.l.b16 %v279
      %v1648 = vunpack.c.h.b16 %v279
      %v1649 = vunpack.c.l.b16 %v280
      %v1650 = vunpack.c.h.b16 %v280
      %v1651 = vunpack.c.l.b16 %v281
      %v1652 = vunpack.c.h.b16 %v281
      %v1653 = vunpack.c.l.b16 %v282
      %v1654 = vunpack.c.h.b16 %v282
      %v1655 = vunpack.c.l.b16 %v283
      %v1656 = vunpack.c.h.b16 %v283
      %v1657 = vunpack.c.l.b16 %v284
      %v1658 = vunpack.c.h.b16 %v284
      %v1659 = vunpack.c.l.b16 %v285
      %v1660 = vunpack.c.h.b16 %v285
      %v1661 = vunpack.c.l.b16 %v286
      %v1662 = vunpack.c.h.b16 %v286
      %v1663 = vunpack.c.l.b16 %v287
      %v1664 = vunpack.c.h.b16 %v287
      %v1665 = vunpack.c.l.b16 %v288
      %v1666 = vunpack.c.h.b16 %v288
      %v1667 = vunpack.c.l.b16 %v289
      %v1668 = vunpack.c.h.b16 %v289
      %v1669 = vunpack.c.l.b16 %v290
      %v1670 = vunpack.c.h.b16 %v290
      %v1671 = vunpack.c.l.b16 %v291
      %v1672 = vunpack.c.h.b16 %v291
      %v1673 = vunpack.c.l.b16 %v292
      %v1674 = vunpack.c.h.b16 %v292
      %v1675 = vunpack.c.l.b16 %v293
      %v1676 = vunpack.c.h.b16 %v293
      %v1677 = vunpack.c.l.b16 %v294
      %v1678 = vunpack.c.h.b16 %v294
      %v1679 = vunpack.c.l.b16 %v295
      %v1680 = vunpack.c.h.b16 %v295
      %v1681 = vunpack.c.l.b16 %v296
      %v1682 = vunpack.c.h.b16 %v296
      %v1683 = vunpack.c.l.b16 %v297
      %v1684 = vunpack.c.h.b16 %v297
      %v1685 = vunpack.c.l.b16 %v298
      %v1686 = vunpack.c.h.b16 %v298
      %v1687 = vunpack.c.l.b16 %v299
      %v1688 = vunpack.c.h.b16 %v299
      %v1689 = vunpack.c.l.b16 %v300
      %v1690 = vunpack.c.h.b16 %v300
      %v1691 = vunpack.c.l.b16 %v301
      %v1692 = vunpack.c.h.b16 %v301
      %v1693 = vunpack.c.l.b16 %v302
      %v1694 = vunpack.c.h.b16 %v302
      %v1695 = vunpack.c.l.b16 %v303
      %v1696 = vunpack.c.h.b16 %v303
      %v1697 = vunpack.c.l.b16 %v304
      %v1698 = vunpack.c.h.b16 %v304
      %v1699 = vunpack.c.l.b16 %v305
      %v1700 = vunpack.c.h.b16 %v305
      %v1701 = vunpack.c.l.b16 %v306
      %v1702 = vunpack.c.h.b16 %v306
      %v1703 = vunpack.c.l.b16 %v307
      %v1704 = vunpack.c.h.b16 %v307
      %v1705 = vunpack.c.l.b16 %v308
      %v1706 = vunpack.c.h.b16 %v308
      %v1707 = vunpack.c.l.b16 %v309
      %v1708 = vunpack.c.h.b16 %v309
      %v1709 = vunpack.c.l.b16 %v310
      %v1710 = vunpack.c.h.b16 %v310
      %v1711 = vunpack.c.l.b16 %v311
      %v1712 = vunpack.c.h.b16 %v311
      %v1713 = vunpack.c.l.b16 %v312
      %v1714 = vunpack.c.h.b16 %v312
      %v1715 = vunpack.c.l.b16 %v313
      %v1716 = vunpack.c.h.b16 %v313
      %v1717 = vunpack.c.l.b16 %v314
      %v1718 = vunpack.c.h.b16 %v314
      %v1719 = vunpack.c.l.b16 %v315
      %v1720 = vunpack.c.h.b16 %v315
      %v1721 = vunpack.c.l.b16 %v316
      %v1722 = vunpack.c.h.b16 %v316
      %v1723 = vunpack.c.l.b16 %v317
      %v1724 = vunpack.c.h.b16 %v317
      %v1725 = vunpack.c.l.b16 %v318
      %v1726 = vunpack.c.h.b16 %v318
      %v1727 = vunpack.c.l.b16 %v319
      %v1728 = vunpack.c.h.b16 %v319
      %v1729 = vunpack.c.l.b16 %v320
      %v1730 = vunpack.c.h.b16 %v320
      %v1731 = vunpack.c.l.b16 %v321
      %v1732 = vunpack.c.h.b16 %v321
      %v1733 = vunpack.c.l.b16 %v322
      %v1734 = vunpack.c.h.b16 %v322
      %v1735 = vunpack.c.l.b16 %v323
      %v1736 = vunpack.c.h.b16 %v323
      %v1737 = vunpack.c.l.b16 %v324
      %v1738 = vunpack.c.h.b16 %v324
      %v1739 = vunpack.c.l.b16 %v325
      %v1740 = vunpack.c.h.b16 %v325
      %v1741 = vunpack.c.l.b16 %v326
      %v1742 = vunpack.c.h.b16 %v326
      %v1743 = vunpack.c.l.b16 %v327
      %v1744 = vunpack.c.h.b16 %v327
      %v1745 = vunpack.c.l.b16 %v328
      %v1746 = vunpack.c.h.b16 %v328
      %v1747 = vunpack.c.l.b16 %v329
      %v1748 = vunpack.c.h.b16 %v329
      %v1749 = vunpack.c.l.b16 %v330
      %v1750 = vunpack.c.h.b16 %v330
      %v1751 = vunpack.c.l.b16 %v331
      %v1752 = vunpack.c.h.b16 %v331
      %v1753 = vunpack.c.l.b16 %v332
      %v1754 = vunpack.c.h.b16 %v332
      %v1755 = vunpack.c.l.b16 %v333
      %v1756 = vunpack.c.h.b16 %v333
      %v1757 = vunpack.c.l.b16 %v334
      %v1758 = vunpack.c.h.b16 %v334
      %v1759 = vunpack.c.l.b16 %v335
      %v1760 = vunpack.c.h.b16 %v335
      %v1761 = vunpack.c.l.b16 %v336
      %v1762 = vunpack.c.h.b16 %v336
      %v1763 = vunpack.c.l.b16 %v337
      %v1764 = vunpack.c.h.b16 %v337
      %v1765 = vunpack.c.l.b16 %v338
      %v1766 = vunpack.c.h.b16 %v338
      %v1767 = vunpack.c.l.b16 %v339
      %v1768 = vunpack.c.h.b16 %v339
      %v1769 = vunpack.c.l.b16 %v340
      %v1770 = vunpack.c.h.b16 %v340
      %v1771 = vunpack.c.l.b16 %v341
      %v1772 = vunpack.c.h.b16 %v341
      %v1773 = vunpack.c.l.b16 %v342
      %v1774 = vunpack.c.h.b16 %v342
      %v1775 = vunpack.c.l.b16 %v343
      %v1776 = vunpack.c.h.b16 %v343
      %v1777 = vunpack.c.l.b16 %v344
      %v1778 = vunpack.c.h.b16 %v344
      %v1779 = vunpack.c.l.b16 %v345
      %v1780 = vunpack.c.h.b16 %v345
      %v1781 = vunpack.c.l.b16 %v346
      %v1782 = vunpack.c.h.b16 %v346
      %v1783 = vunpack.c.l.b16 %v347
      %v1784 = vunpack.c.h.b16 %v347
      %v1785 = vunpack.c.l.b16 %v348
      %v1786 = vunpack.c.h.b16 %v348
      %v1787 = vunpack.c.l.b16 %v349
      %v1788 = vunpack.c.h.b16 %v349
      %v1789 = vunpack.c.l.b16 %v350
      %v1790 = vunpack.c.h.b16 %v350
      %v1791 = vunpack.c.l.b16 %v351
      %v1792 = vunpack.c.h.b16 %v351
      %v1793 = vunpack.c.l.b16 %v352
      %v1794 = vunpack.c.h.b16 %v352
      %v1795 = vunpack.c.l.b16 %v353
      %v1796 = vunpack.c.h.b16 %v353
      %v1797 = vunpack.c.l.b16 %v354
      %v1798 = vunpack.c.h.b16 %v354
      %v1799 = vunpack.c.l.b16 %v355
      %v1800 = vunpack.c.h.b16 %v355
      %v1801 = vunpack.c.l.b16 %v356
      %v1802 = vunpack.c.h.b16 %v356
      %v1803 = vunpack.c.l.b16 %v357
      %v1804 = vunpack.c.h.b16 %v357
      %v1805 = vunpack.c.l.b16 %v358
      %v1806 = vunpack.c.h.b16 %v358
      %v1807 = vunpack.c.l.b16 %v359
      %v1808 = vunpack.c.h.b16 %v359
      %v1809 = vunpack.c.l.b16 %v360
      %v1810 = vunpack.c.h.b16 %v360
      %v1811 = vunpack.c.l.b16 %v361
      %v1812 = vunpack.c.h.b16 %v361
      %v1813 = vunpack.c.l.b16 %v362
      %v1814 = vunpack.c.h.b16 %v362
      %v1815 = vunpack.c.l.b16 %v363
      %v1816 = vunpack.c.h.b16 %v363
      %v1817 = vunpack.c.l.b16 %v364
      %v1818 = vunpack.c.h.b16 %v364
      %v1819 = vunpack.c.l.b16 %v365
      %v1820 = vunpack.c.h.b16 %v365
      %v1821 = vunpack.c.l.b16 %v366
      %v1822 = vunpack.c.h.b16 %v366
      %v1823 = vunpack.c.l.b16 %v367
      %v1824 = vunpack.c.h.b16 %v367
      %v1825 = vunpack.c.l.b16 %v368
      %v1826 = vunpack.c.h.b16 %v368
      %v1827 = vunpack.c.l.b16 %v369
      %v1828 = vunpack.c.h.b16 %v369
      %v1829 = vunpack.c.l.b16 %v370
      %v1830 = vunpack.c.h.b16 %v370
      %v1831 = vunpack.c.l.b16 %v371
      %v1832 = vunpack.c.h.b16 %v371
      %v1833 = vunpack.c.l.b16 %v372
      %v1834 = vunpack.c.h.b16 %v372
      %v1835 = vunpack.c.l.b16 %v373
      %v1836 = vunpack.c.h.b16 %v373
      %v1837 = vunpack.c.l.b16 %v374
      %v1838 = vunpack.c.h.b16 %v374
      %v1839 = vunpack.c.l.b16 %v375
      %v1840 = vunpack.c.h.b16 %v375
      %v1841 = vunpack.c.l.b16 %v376
      %v1842 = vunpack.c.h.b16 %v376
      %v1843 = vunpack.c.l.b16 %v377
      %v1844 = vunpack.c.h.b16 %v377
      %v1845 = vunpack.c.l.b16 %v378
      %v1846 = vunpack.c.h.b16 %v378
      %v1847 = vunpack.c.l.b16 %v379
      %v1848 = vunpack.c.h.b16 %v379
      %v1849 = vunpack.c.l.b16 %v380
      %v1850 = vunpack.c.h.b16 %v380
      %v1851 = vunpack.c.l.b16 %v381
      %v1852 = vunpack.c.h.b16 %v381
      %v1853 = vunpack.c.l.b16 %v382
      %v1854 = vunpack.c.h.b16 %v382
      %v1855 = vunpack.c.l.b16 %v383
      %v1856 = vunpack.c.h.b16 %v383
      %v1857 = vunpack.c.l.b16 %v384
      %v1858 = vunpack.c.h.b16 %v384
      %v1859 = vunpack.c.l.b16 %v385
      %v1860 = vunpack.c.h.b16 %v385
      %v1861 = vunpack.c.l.b16 %v386
      %v1862 = vunpack.c.h.b16 %v386
      %v1863 = vunpack.c.l.b16 %v387
      %v1864 = vunpack.c.h.b16 %v387
      %v1865 = vunpack.c.l.b16 %v388
      %v1866 = vunpack.c.h.b16 %v388
      %v1867 = vunpack.c.l.b16 %v389
      %v1868 = vunpack.c.h.b16 %v389
      %v1869 = vunpack.c.l.b16 %v390
      %v1870 = vunpack.c.h.b16 %v390
      %v1871 = vunpack.c.l.b16 %v391
      %v1872 = vunpack.c.h.b16 %v391
      %v1873 = vunpack.c.l.b16 %v392
      %v1874 = vunpack.c.h.b16 %v392
      %v1875 = vunpack.c.l.b16 %v393
      %v1876 = vunpack.c.h.b16 %v393
      %v1877 = vunpack.c.l.b16 %v394
      %v1878 = vunpack.c.h.b16 %v394
      %v1879 = vunpack.c.l.b16 %v395
      %v1880 = vunpack.c.h.b16 %v395
      %v1881 = vunpack.c.l.b16 %v396
      %v1882 = vunpack.c.h.b16 %v396
      %v1883 = vunpack.c.l.b16 %v397
      %v1884 = vunpack.c.h.b16 %v397
      %v1885 = vunpack.c.l.b16 %v398
      %v1886 = vunpack.c.h.b16 %v398
      %v1887 = vunpack.c.l.b16 %v399
      %v1888 = vunpack.c.h.b16 %v399
      %v1889 = vunpack.c.l.b16 %v400
      %v1890 = vunpack.c.h.b16 %v400
      %v1891 = vunpack.c.l.b16 %v401
      %v1892 = vunpack.c.h.b16 %v401
      %v1893 = vunpack.c.l.b16 %v402
      %v1894 = vunpack.c.h.b16 %v402
      %v1895 = vunpack.c.l.b16 %v403
      %v1896 = vunpack.c.h.b16 %v403
      %v1897 = vunpack.c.l.b16 %v404
      %v1898 = vunpack.c.h.b16 %v404
      %v1899 = vunpack.c.l.b16 %v405
      %v1900 = vunpack.c.h.b16 %v405
      %v1901 = vunpack.c.l.b16 %v406
      %v1902 = vunpack.c.h.b16 %v406
      %v1903 = vunpack.c.l.b16 %v407
      %v1904 = vunpack.c.h.b16 %v407
      %v1905 = vunpack.c.l.b16 %v408
      %v1906 = vunpack.c.h.b16 %v408
      %v1907 = vunpack.c.l.b16 %v409
      %v1908 = vunpack.c.h.b16 %v409
      %v1909 = vunpack.c.l.b16 %v410
      %v1910 = vunpack.c.h.b16 %v410
      %v1911 = vunpack.c.l.b16 %v411
      %v1912 = vunpack.c.h.b16 %v411
      %v1913 = vunpack.c.l.b16 %v412
      %v1914 = vunpack.c.h.b16 %v412
      %v1915 = vunpack.c.l.b16 %v413
      %v1916 = vunpack.c.h.b16 %v413
      %v1917 = vunpack.c.l.b16 %v414
      %v1918 = vunpack.c.h.b16 %v414
      %v1919 = vunpack.c.l.b16 %v415
      %v1920 = vunpack.c.h.b16 %v415
      %v1921 = vunpack.c.l.b16 %v416
      %v1922 = vunpack.c.h.b16 %v416
      %v1923 = vunpack.c.l.b16 %v417
      %v1924 = vunpack.c.h.b16 %v417
      %v1925 = vunpack.c.l.b16 %v418
      %v1926 = vunpack.c.h.b16 %v418
      %v1927 = vunpack.c.l.b16 %v419
      %v1928 = vunpack.c.h.b16 %v419
      %v1929 = vunpack.c.l.b16 %v420
      %v1930 = vunpack.c.h.b16 %v420
      %v1931 = vunpack.c.l.b16 %v421
      %v1932 = vunpack.c.h.b16 %v421
      %v1933 = vunpack.c.l.b16 %v422
      %v1934 = vunpack.c.h.b16 %v422
      %v1935 = vunpack.c.l.b16 %v423
      %v1936 = vunpack.c.h.b16 %v423
      %v1937 = vunpack.c.l.b16 %v424
      %v1938 = vunpack.c.h.b16 %v424
      %v1939 = vunpack.c.l.b16 %v425
      %v1940 = vunpack.c.h.b16 %v425
      %v1941 = vunpack.c.l.b16 %v426
      %v1942 = vunpack.c.h.b16 %v426
      %v1943 = vunpack.c.l.b16 %v427
      %v1944 = vunpack.c.h.b16 %v427
      %v1945 = vunpack.c.l.b16 %v428
      %v1946 = vunpack.c.h.b16 %v428
      %v1947 = vunpack.c.l.b16 %v429
      %v1948 = vunpack.c.h.b16 %v429
      %v1949 = vunpack.c.l.b16 %v430
      %v1950 = vunpack.c.h.b16 %v430
      %v1951 = vunpack.c.l.b16 %v431
      %v1952 = vunpack.c.h.b16 %v431
      %v1953 = vunpack.c.l.b16 %v432
      %v1954 = vunpack.c.h.b16 %v432
      %v1955 = vunpack.c.l.b16 %v433
      %v1956 = vunpack.c.h.b16 %v433
      %v1957 = vunpack.c.l.b16 %v434
      %v1958 = vunpack.c.h.b16 %v434
      %v1959 = vunpack.c.l.b16 %v435
      %v1960 = vunpack.c.h.b16 %v435
      %v1961 = vunpack.c.l.b16 %v436
      %v1962 = vunpack.c.h.b16 %v436
      %v1963 = vunpack.c.l.b16 %v437
      %v1964 = vunpack.c.h.b16 %v437
      %v1965 = vunpack.c.l.b16 %v438
      %v1966 = vunpack.c.h.b16 %v438
      %v1967 = vunpack.c.l.b16 %v439
      %v1968 = vunpack.c.h.b16 %v439
      %v1969 = vunpack.c.l.b16 %v440
      %v1970 = vunpack.c.h.b16 %v440
      %v1971 = vunpack.c.l.b16 %v441
      %v1972 = vunpack.c.h.b16 %v441
      %v1973 = vunpack.c.l.b16 %v442
      %v1974 = vunpack.c.h.b16 %v442
      %v1975 = vunpack.c.l.b16 %v443
      %v1976 = vunpack.c.h.b16 %v443
      %v1977 = vunpack.c.l.b16 %v444
      %v1978 = vunpack.c.h.b16 %v444
      %v1979 = vunpack.c.l.b16 %v445
      %v1980 = vunpack.c.h.b16 %v445
      %v1981 = vunpack.c.l.b16 %v446
      %v1982 = vunpack.c.h.b16 %v446
      %v1983 = vunpack.c.l.b16 %v447
      %v1984 = vunpack.c.h.b16 %v447
      %v1985 = vunpack.c.l.b16 %v448
      %v1986 = vunpack.c.h.b16 %v448
      %v1987 = vunpack.c.l.b16 %v449
      %v1988 = vunpack.c.h.b16 %v449
      %v1989 = vunpack.c.l.b16 %v450
      %v1990 = vunpack.c.h.b16 %v450
      %v1991 = vunpack.c.l.b16 %v451
      %v1992 = vunpack.c.h.b16 %v451
      %v1993 = vunpack.c.l.b16 %v452
      %v1994 = vunpack.c.h.b16 %v452
      %v1995 = vunpack.c.l.b16 %v453
      %v1996 = vunpack.c.h.b16 %v453
      %v1997 = vunpack.c.l.b16 %v454
      %v1998 = vunpack.c.h.b16 %v454
      %v1999 = vunpack.c.l.b16 %v455
      %v2000 = vunpack.c.h.b16 %v455
      %v2001 = vunpack.c.l.b16 %v456
      %v2002 = vunpack.c.h.b16 %v456
      %v2003 = vunpack.c.l.b16 %v457
      %v2004 = vunpack.c.h.b16 %v457
      %v2005 = vunpack.c.l.b16 %v458
      %v2006 = vunpack.c.h.b16 %v458
      %v2007 = vunpack.c.l.b16 %v459
      %v2008 = vunpack.c.h.b16 %v459
      %v2009 = vunpack.c.l.b16 %v460
      %v2010 = vunpack.c.h.b16 %v460
      %v2011 = vunpack.c.l.b16 %v461
      %v2012 = vunpack.c.h.b16 %v461
      %v2013 = vunpack.c.l.b16 %v462
      %v2014 = vunpack.c.h.b16 %v462
      %v2015 = vunpack.c.l.b16 %v463
      %v2016 = vunpack.c.h.b16 %v463
      %v2017 = vunpack.c.l.b16 %v464
      %v2018 = vunpack.c.h.b16 %v464
      %v2019 = vunpack.c.l.b16 %v465
      %v2020 = vunpack.c.h.b16 %v465
      %v2021 = vunpack.c.l.b16 %v466
      %v2022 = vunpack.c.h.b16 %v466
      %v2023 = vunpack.c.l.b16 %v467
      %v2024 = vunpack.c.h.b16 %v467
      %v2025 = vunpack.c.l.b16 %v468
      %v2026 = vunpack.c.h.b16 %v468
      %v2027 = vunpack.c.l.b16 %v469
      %v2028 = vunpack.c.h.b16 %v469
      %v2029 = vunpack.c.l.b16 %v470
      %v2030 = vunpack.c.h.b16 %v470
      %v2031 = vunpack.c.l.b16 %v471
      %v2032 = vunpack.c.h.b16 %v471
      %v2033 = vunpack.c.l.b16 %v472
      %v2034 = vunpack.c.h.b16 %v472
      %v2035 = vunpack.c.l.b16 %v473
      %v2036 = vunpack.c.h.b16 %v473
      %v2037 = vunpack.c.l.b16 %v474
      %v2038 = vunpack.c.h.b16 %v474
      %v2039 = vunpack.c.l.b16 %v475
      %v2040 = vunpack.c.h.b16 %v475
      %v2041 = vunpack.c.l.b16 %v476
      %v2042 = vunpack.c.h.b16 %v476
      %v2043 = vunpack.c.l.b16 %v477
      %v2044 = vunpack.c.h.b16 %v477
      %v2045 = vunpack.c.l.b16 %v478
      %v2046 = vunpack.c.h.b16 %v478
      %v2047 = vunpack.c.l.b16 %v479
      %v2048 = vunpack.c.h.b16 %v479
      %v2049 = vunpack.c.l.b16 %v480
      %v2050 = vunpack.c.h.b16 %v480
      %v2051 = vunpack.c.l.b16 %v481
      %v2052 = vunpack.c.h.b16 %v481
      %v2053 = vunpack.c.l.b16 %v482
      %v2054 = vunpack.c.h.b16 %v482
      %v2055 = vunpack.c.l.b16 %v483
      %v2056 = vunpack.c.h.b16 %v483
      %v2057 = vunpack.c.l.b16 %v484
      %v2058 = vunpack.c.h.b16 %v484
      %v2059 = vunpack.c.l.b16 %v485
      %v2060 = vunpack.c.h.b16 %v485
      %v2061 = vunpack.c.l.b16 %v486
      %v2062 = vunpack.c.h.b16 %v486
      %v2063 = vunpack.c.l.b16 %v487
      %v2064 = vunpack.c.h.b16 %v487
      %v2065 = vunpack.c.l.b16 %v488
      %v2066 = vunpack.c.h.b16 %v488
      %v2067 = vunpack.c.l.b16 %v489
      %v2068 = vunpack.c.h.b16 %v489
      %v2069 = vunpack.c.l.b16 %v490
      %v2070 = vunpack.c.h.b16 %v490
      %v2071 = vunpack.c.l.b16 %v491
      %v2072 = vunpack.c.h.b16 %v491
      %v2073 = vunpack.c.l.b16 %v492
      %v2074 = vunpack.c.h.b16 %v492
      %v2075 = vunpack.c.l.b16 %v493
      %v2076 = vunpack.c.h.b16 %v493
      %v2077 = vunpack.c.l.b16 %v494
      %v2078 = vunpack.c.h.b16 %v494
      %v2079 = vunpack.c.l.b16 %v495
      %v2080 = vunpack.c.h.b16 %v495
      %v2081 = vunpack.c.l.b16 %v496
      %v2082 = vunpack.c.h.b16 %v496
      %v2083 = vunpack.c.l.b16 %v497
      %v2084 = vunpack.c.h.b16 %v497
      %v2085 = vunpack.c.l.b16 %v498
      %v2086 = vunpack.c.h.b16 %v498
      %v2087 = vunpack.c.l.b16 %v499
      %v2088 = vunpack.c.h.b16 %v499
      %v2089 = vunpack.c.l.b16 %v500
      %v2090 = vunpack.c.h.b16 %v500
      %v2091 = vunpack.c.l.b16 %v501
      %v2092 = vunpack.c.h.b16 %v501
      %v2093 = vunpack.c.l.b16 %v502
      %v2094 = vunpack.c.h.b16 %v502
      %v2095 = vunpack.c.l.b16 %v503
      %v2096 = vunpack.c.h.b16 %v503
      %v2097 = vunpack.c.l.b16 %v504
      %v2098 = vunpack.c.h.b16 %v504
      %v2099 = vunpack.c.l.b16 %v505
      %v2100 = vunpack.c.h.b16 %v505
      %v2101 = vunpack.c.l.b16 %v506
      %v2102 = vunpack.c.h.b16 %v506
      %v2103 = vunpack.c.l.b16 %v507
      %v2104 = vunpack.c.h.b16 %v507
      %v2105 = vunpack.c.l.b16 %v508
      %v2106 = vunpack.c.h.b16 %v508
      %v2107 = vunpack.c.l.b16 %v509
      %v2108 = vunpack.c.h.b16 %v509
      %v2109 = vunpack.c.l.b16 %v510
      %v2110 = vunpack.c.h.b16 %v510
      %v2111 = vunpack.c.l.b16 %v511
      %v2112 = vunpack.c.h.b16 %v511
      %v2113 = vunpack.c.l.b16 %v512
      %v2114 = vunpack.c.h.b16 %v512
      %v2115 = vunpack.c.l.b16 %v513
      %v2116 = vunpack.c.h.b16 %v513
      %v2117 = vunpack.c.l.b16 %v514
      %v2118 = vunpack.c.h.b16 %v514
      %v2119 = vunpack.c.l.b16 %v515
      %v2120 = vunpack.c.h.b16 %v515
      %v2121 = vunpack.c.l.b16 %v516
      %v2122 = vunpack.c.h.b16 %v516
      %v2123 = vunpack.c.l.b16 %v517
      %v2124 = vunpack.c.h.b16 %v517
      %v2125 = vunpack.c.l.b16 %v518
      %v2126 = vunpack.c.h.b16 %v518
      %v2127 = vunpack.c.l.b16 %v519
      %v2128 = vunpack.c.h.b16 %v519
      %v2129 = vunpack.c.l.b16 %v520
      %v2130 = vunpack.c.h.b16 %v520
      %v2131 = vunpack.c.l.b16 %v521
      %v2132 = vunpack.c.h.b16 %v521
      %v2133 = vunpack.c.l.b16 %v522
      %v2134 = vunpack.c.h.b16 %v522
      %v2135 = vunpack.c.l.b16 %v523
      %v2136 = vunpack.c.h.b16 %v523
      %v2137 = vunpack.c.l.b16 %v524
      %v2138 = vunpack.c.h.b16 %v524
      %v2139 = vunpack.c.l.b16 %v525
      %v2140 = vunpack.c.h.b16 %v525
      %v2141 = vunpack.c.l.b16 %v526
      %v2142 = vunpack.c.h.b16 %v526
      %v2143 = vunpack.c.l.b16 %v527
      %v2144 = vunpack.c.h.b16 %v527
      %v2145 = vunpack.c.l.b16 %v528
      %v2146 = vunpack.c.h.b16 %v528
      %v2147 = vunpack.c.l.b16 %v529
      %v2148 = vunpack.c.h.b16 %v529
      %v2149 = vunpack.c.l.b16 %v530
      %v2150 = vunpack.c.h.b16 %v530
      %v2151 = vunpack.c.l.b16 %v531
      %v2152 = vunpack.c.h.b16 %v531
      %v2153 = vunpack.c.l.b16 %v532
      %v2154 = vunpack.c.h.b16 %v532
      %v2155 = vunpack.c.l.b16 %v533
      %v2156 = vunpack.c.h.b16 %v533
      %v2157 = vunpack.c.l.b16 %v534
      %v2158 = vunpack.c.h.b16 %v534
      %v2159 = vunpack.c.l.b16 %v535
      %v2160 = vunpack.c.h.b16 %v535
      %v2161 = vunpack.c.l.b16 %v536
      %v2162 = vunpack.c.h.b16 %v536
      %v2163 = vunpack.c.l.b16 %v537
      %v2164 = vunpack.c.h.b16 %v537
      %v2165 = vunpack.c.l.b16 %v538
      %v2166 = vunpack.c.h.b16 %v538
      %v2167 = vunpack.c.l.b16 %v539
      %v2168 = vunpack.c.h.b16 %v539
      %v2169 = vunpack.c.l.b16 %v540
      %v2170 = vunpack.c.h.b16 %v540
      %v2171 = vunpack.c.l.b16 %v541
      %v2172 = vunpack.c.h.b16 %v541
      %v2173 = vunpack.c.l.b16 %v542
      %v2174 = vunpack.c.h.b16 %v542
      %v2175 = vunpack.c.l.b16 %v543
      %v2176 = vunpack.c.h.b16 %v543
      %v2177 = vunpack.c.l.b16 %v544
      %v2178 = vunpack.c.h.b16 %v544
      %v2179 = vunpack.c.l.b16 %v545
      %v2180 = vunpack.c.h.b16 %v545
      %v2181 = vunpack.c.l.b16 %v546
      %v2182 = vunpack.c.h.b16 %v546
      %v2183 = vunpack.c.l.b16 %v547
      %v2184 = vunpack.c.h.b16 %v547
      %v2185 = vunpack.c.l.b16 %v548
      %v2186 = vunpack.c.h.b16 %v548
      %v2187 = vunpack.c.l.b16 %v549
      %v2188 = vunpack.c.h.b16 %v549
      %v2189 = vunpack.c.l.b16 %v550
      %v2190 = vunpack.c.h.b16 %v550
      %v2191 = vunpack.c.l.b16 %v551
      %v2192 = vunpack.c.h.b16 %v551
      %v2193 = vunpack.c.l.b16 %v552
      %v2194 = vunpack.c.h.b16 %v552
      %v2195 = vunpack.c.l.b16 %v553
      %v2196 = vunpack.c.h.b16 %v553
      %v2197 = vunpack.c.l.b16 %v554
      %v2198 = vunpack.c.h.b16 %v554
      %v2199 = vunpack.c.l.b16 %v555
      %v2200 = vunpack.c.h.b16 %v555
      %v2201 = vunpack.c.l.b16 %v556
      %v2202 = vunpack.c.h.b16 %v556
      %v2203 = vunpack.c.l.b16 %v557
      %v2204 = vunpack.c.h.b16 %v557
      %v2205 = vunpack.c.l.b16 %v558
      %v2206 = vunpack.c.h.b16 %v558
      %v2207 = vunpack.c.l.b16 %v559
      %v2208 = vunpack.c.h.b16 %v559
      %v2209 = vunpack.c.l.b16 %v560
      %v2210 = vunpack.c.h.b16 %v560
      %v2211 = vunpack.c.l.b16 %v561
      %v2212 = vunpack.c.h.b16 %v561
      %v2213 = vunpack.c.l.b16 %v562
      %v2214 = vunpack.c.h.b16 %v562
      %v2215 = vunpack.c.l.b16 %v563
      %v2216 = vunpack.c.h.b16 %v563
      %v2217 = vunpack.c.l.b16 %v564
      %v2218 = vunpack.c.h.b16 %v564
      %v2219 = vunpack.c.l.b16 %v565
      %v2220 = vunpack.c.h.b16 %v565
      %v2221 = vunpack.c.l.b16 %v566
      %v2222 = vunpack.c.h.b16 %v566
      %v2223 = vunpack.c.l.b16 %v567
      %v2224 = vunpack.c.h.b16 %v567
      %v2225 = vunpack.c.l.b16 %v568
      %v2226 = vunpack.c.h.b16 %v568
      %v2227 = vunpack.c.l.b16 %v569
      %v2228 = vunpack.c.h.b16 %v569
      %v2229 = vunpack.c.l.b16 %v570
      %v2230 = vunpack.c.h.b16 %v570
      %v2231 = vunpack.c.l.b16 %v571
      %v2232 = vunpack.c.h.b16 %v571
      %v2233 = vunpack.c.l.b16 %v572
      %v2234 = vunpack.c.h.b16 %v572
      %v2235 = vunpack.c.l.b16 %v573
      %v2236 = vunpack.c.h.b16 %v573
      %v2237 = vunpack.c.l.b16 %v574
      %v2238 = vunpack.c.h.b16 %v574
      %v2239 = vunpack.c.l.b16 %v575
      %v2240 = vunpack.c.h.b16 %v575
      %v2241 = vunpack.c.l.b16 %v576
      %v2242 = vunpack.c.h.b16 %v576
      %v2243 = vunpack.c.l.b16 %v577
      %v2244 = vunpack.c.h.b16 %v577
      %v2245 = vunpack.c.l.b16 %v578
      %v2246 = vunpack.c.h.b16 %v578
      %v2247 = vunpack.c.l.b16 %v579
      %v2248 = vunpack.c.h.b16 %v579
      %v2249 = vunpack.c.l.b16 %v580
      %v2250 = vunpack.c.h.b16 %v580
      %v2251 = vunpack.c.l.b16 %v581
      %v2252 = vunpack.c.h.b16 %v581
      %v2253 = vunpack.c.l.b16 %v582
      %v2254 = vunpack.c.h.b16 %v582
      %v2255 = vunpack.c.l.b16 %v583
      %v2256 = vunpack.c.h.b16 %v583
      %v2257 = vunpack.c.l.b16 %v584
      %v2258 = vunpack.c.h.b16 %v584
      %v2259 = vunpack.c.l.b16 %v585
      %v2260 = vunpack.c.h.b16 %v585
      %v2261 = vunpack.c.l.b16 %v586
      %v2262 = vunpack.c.h.b16 %v586
      %v2263 = vunpack.c.l.b16 %v587
      %v2264 = vunpack.c.h.b16 %v587
      %v2265 = vunpack.c.l.b16 %v588
      %v2266 = vunpack.c.h.b16 %v588
      %v2267 = vunpack.c.l.b16 %v589
      %v2268 = vunpack.c.h.b16 %v589
      %v2269 = vunpack.c.l.b16 %v590
      %v2270 = vunpack.c.h.b16 %v590
      %v2271 = vunpack.c.l.b16 %v591
      %v2272 = vunpack.c.h.b16 %v591
      %v2273 = vunpack.c.l.b16 %v592
      %v2274 = vunpack.c.h.b16 %v592
      %v2275 = vunpack.c.l.b16 %v593
      %v2276 = vunpack.c.h.b16 %v593
      %v2277 = vunpack.c.l.b16 %v594
      %v2278 = vunpack.c.h.b16 %v594
      %v2279 = vunpack.c.l.b16 %v595
      %v2280 = vunpack.c.h.b16 %v595
      %v2281 = vunpack.c.l.b16 %v596
      %v2282 = vunpack.c.h.b16 %v596
      %v2283 = vunpack.c.l.b16 %v597
      %v2284 = vunpack.c.h.b16 %v597
      %v2285 = vunpack.c.l.b16 %v598
      %v2286 = vunpack.c.h.b16 %v598
      %v2287 = vunpack.c.l.b16 %v599
      %v2288 = vunpack.c.h.b16 %v599
      %v2289 = vunpack.c.l.b16 %v600
      %v2290 = vunpack.c.h.b16 %v600
      %v2291 = vunpack.c.l.b16 %v601
      %v2292 = vunpack.c.h.b16 %v601
      %v2293 = vunpack.c.l.b16 %v602
      %v2294 = vunpack.c.h.b16 %v602
      %v2295 = vunpack.c.l.b16 %v603
      %v2296 = vunpack.c.h.b16 %v603
      %v2297 = vunpack.c.l.b16 %v604
      %v2298 = vunpack.c.h.b16 %v604
      %v2299 = vunpack.c.l.b16 %v605
      %v2300 = vunpack.c.h.b16 %v605
      %v2301 = vunpack.c.l.b16 %v606
      %v2302 = vunpack.c.h.b16 %v606
      %v2303 = vunpack.c.l.b16 %v607
      %v2304 = vunpack.c.h.b16 %v607
      %v2305 = vunpack.c.l.b16 %v608
      %v2306 = vunpack.c.h.b16 %v608
      %v2307 = vunpack.c.l.b16 %v609
      %v2308 = vunpack.c.h.b16 %v609
      %v2309 = vunpack.c.l.b16 %v610
      %v2310 = vunpack.c.h.b16 %v610
      %v2311 = vunpack.c.l.b16 %v611
      %v2312 = vunpack.c.h.b16 %v611
      %v2313 = vunpack.c.l.b16 %v612
      %v2314 = vunpack.c.h.b16 %v612
      %v2315 = vunpack.c.l.b16 %v613
      %v2316 = vunpack.c.h.b16 %v613
      %v2317 = vunpack.c.l.b16 %v614
      %v2318 = vunpack.c.h.b16 %v614
      %v2319 = vunpack.c.l.b16 %v615
      %v2320 = vunpack.c.h.b16 %v615
      %v2321 = vunpack.c.l.b16 %v616
      %v2322 = vunpack.c.h.b16 %v616
      %v2323 = vunpack.c.l.b16 %v617
      %v2324 = vunpack.c.h.b16 %v617
      %v2325 = vunpack.c.l.b16 %v618
      %v2326 = vunpack.c.h.b16 %v618
      %v2327 = vunpack.c.l.b16 %v619
      %v2328 = vunpack.c.h.b16 %v619
      %v2329 = vunpack.c.l.b16 %v620
      %v2330 = vunpack.c.h.b16 %v620
      %v2331 = vunpack.c.l.b16 %v621
      %v2332 = vunpack.c.h.b16 %v621
      %v2333 = vunpack.c.l.b16 %v622
      %v2334 = vunpack.c.h.b16 %v622
      %v2335 = vunpack.c.l.b16 %v623
      %v2336 = vunpack.c.h.b16 %v623
      %v2337 = vunpack.c.l.b16 %v624
      %v2338 = vunpack.c.h.b16 %v624
      %v2339 = vunpack.c.l.b16 %v625
      %v2340 = vunpack.c.h.b16 %v625
      %v2341 = vunpack.c.l.b16 %v626
      %v2342 = vunpack.c.h.b16 %v626
      %v2343 = vunpack.c.l.b16 %v627
      %v2344 = vunpack.c.h.b16 %v627
      %v2345 = vunpack.c.l.b16 %v628
      %v2346 = vunpack.c.h.b16 %v628
      %v2347 = vunpack.c.l.b16 %v629
      %v2348 = vunpack.c.h.b16 %v629
      %v2349 = vunpack.c.l.b16 %v630
      %v2350 = vunpack.c.h.b16 %v630
      %v2351 = vunpack.c.l.b16 %v631
      %v2352 = vunpack.c.h.b16 %v631
      %v2353 = vunpack.c.l.b16 %v632
      %v2354 = vunpack.c.h.b16 %v632
      %v2355 = vunpack.c.l.b16 %v633
      %v2356 = vunpack.c.h.b16 %v633
      %v2357 = vunpack.c.l.b16 %v634
      %v2358 = vunpack.c.h.b16 %v634
      %v2359 = vunpack.c.l.b16 %v635
      %v2360 = vunpack.c.h.b16 %v635
      %v2361 = vunpack.c.l.b16 %v636
      %v2362 = vunpack.c.h.b16 %v636
      %v2363 = vunpack.c.l.b16 %v637
      %v2364 = vunpack.c.h.b16 %v637
      %v2365 = vunpack.c.l.b16 %v638
      %v2366 = vunpack.c.h.b16 %v638
      %v2367 = vunpack.c.l.b16 %v639
      %v2368 = vunpack.c.h.b16 %v639
      %v2369 = vunpack.c.l.b16 %v640
      %v2370 = vunpack.c.h.b16 %v640
      %v2371 = vunpack.c.l.b16 %v641
      %v2372 = vunpack.c.h.b16 %v641
      %v2373 = vunpack.c.l.b16 %v642
      %v2374 = vunpack.c.h.b16 %v642
      %v2375 = vunpack.c.l.b16 %v643
      %v2376 = vunpack.c.h.b16 %v643
      %v2377 = vunpack.c.l.b16 %v644
      %v2378 = vunpack.c.h.b16 %v644
      %v2379 = vunpack.c.l.b16 %v645
      %v2380 = vunpack.c.h.b16 %v645
      %v2381 = vunpack.c.l.b16 %v646
      %v2382 = vunpack.c.h.b16 %v646
      %v2383 = vunpack.c.l.b16 %v647
      %v2384 = vunpack.c.h.b16 %v647
      %v2385 = vunpack.c.l.b16 %v648
      %v2386 = vunpack.c.h.b16 %v648
      %v2387 = vunpack.c.l.b16 %v649
      %v2388 = vunpack.c.h.b16 %v649
      %v2389 = vunpack.c.l.b16 %v650
      %v2390 = vunpack.c.h.b16 %v650
      %v2391 = vunpack.c.l.b16 %v651
      %v2392 = vunpack.c.h.b16 %v651
      %v2393 = vunpack.c.l.b16 %v652
      %v2394 = vunpack.c.h.b16 %v652
      %v2395 = vunpack.c.l.b16 %v653
      %v2396 = vunpack.c.h.b16 %v653
      %v2397 = vunpack.c.l.b16 %v654
      %v2398 = vunpack.c.h.b16 %v654
      %v2399 = vunpack.c.l.b16 %v655
      %v2400 = vunpack.c.h.b16 %v655
      %v2401 = vunpack.c.l.b16 %v656
      %v2402 = vunpack.c.h.b16 %v656
      %v2403 = vunpack.c.l.b16 %v657
      %v2404 = vunpack.c.h.b16 %v657
      %v2405 = vunpack.c.l.b16 %v658
      %v2406 = vunpack.c.h.b16 %v658
      %v2407 = vunpack.c.l.b16 %v659
      %v2408 = vunpack.c.h.b16 %v659
      %v2409 = vunpack.c.l.b16 %v660
      %v2410 = vunpack.c.h.b16 %v660
      %v2411 = vunpack.c.l.b16 %v661
      %v2412 = vunpack.c.h.b16 %v661
      %v2413 = vunpack.c.l.b16 %v662
      %v2414 = vunpack.c.h.b16 %v662
      %v2415 = vunpack.c.l.b16 %v663
      %v2416 = vunpack.c.h.b16 %v663
      %v2417 = vunpack.c.l.b16 %v664
      %v2418 = vunpack.c.h.b16 %v664
      %v2419 = vunpack.c.l.b16 %v665
      %v2420 = vunpack.c.h.b16 %v665
      %v2421 = vunpack.c.l.b16 %v666
      %v2422 = vunpack.c.h.b16 %v666
      %v2423 = vunpack.c.l.b16 %v667
      %v2424 = vunpack.c.h.b16 %v667
      %v2425 = vunpack.c.l.b16 %v668
      %v2426 = vunpack.c.h.b16 %v668
      %v2427 = vunpack.c.l.b16 %v669
      %v2428 = vunpack.c.h.b16 %v669
      %v2429 = vunpack.c.l.b16 %v670
      %v2430 = vunpack.c.h.b16 %v670
      %v2431 = vunpack.c.l.b16 %v671
      %v2432 = vunpack.c.h.b16 %v671
      %v2433 = vunpack.c.l.b16 %v672
      %v2434 = vunpack.c.h.b16 %v672
      %v2435 = vunpack.c.l.b16 %v673
      %v2436 = vunpack.c.h.b16 %v673
      %v2437 = vunpack.c.l.b16 %v674
      %v2438 = vunpack.c.h.b16 %v674
      %v2439 = vunpack.c.l.b16 %v675
      %v2440 = vunpack.c.h.b16 %v675
      %v2441 = vunpack.c.l.b16 %v676
      %v2442 = vunpack.c.h.b16 %v676
      %v2443 = vunpack.c.l.b16 %v677
      %v2444 = vunpack.c.h.b16 %v677
      %v2445 = vunpack.c.l.b16 %v678
      %v2446 = vunpack.c.h.b16 %v678
      %v2447 = vunpack.c.l.b16 %v679
      %v2448 = vunpack.c.h.b16 %v679
      %v2449 = vunpack.c.l.b16 %v680
      %v2450 = vunpack.c.h.b16 %v680
      %v2451 = vunpack.c.l.b16 %v681
      %v2452 = vunpack.c.h.b16 %v681
      %v2453 = vunpack.c.l.b16 %v682
      %v2454 = vunpack.c.h.b16 %v682
      %v2455 = vunpack.c.l.b16 %v683
      %v2456 = vunpack.c.h.b16 %v683
      %v2457 = vunpack.c.l.b16 %v684
      %v2458 = vunpack.c.h.b16 %v684
      %v2459 = vunpack.c.l.b16 %v685
      %v2460 = vunpack.c.h.b16 %v685
      %v2461 = vunpack.c.l.b16 %v686
      %v2462 = vunpack.c.h.b16 %v686
      %v2463 = vunpack.c.l.b16 %v687
      %v2464 = vunpack.c.h.b16 %v687
      %v2465 = vunpack.c.l.b16 %v688
      %v2466 = vunpack.c.h.b16 %v688
      %v2467 = vunpack.c.l.b16 %v689
      %v2468 = vunpack.c.h.b16 %v689
      %v2469 = vunpack.c.l.b16 %v690
      %v2470 = vunpack.c.h.b16 %v690
      %v2471 = vunpack.c.l.b16 %v691
      %v2472 = vunpack.c.h.b16 %v691
      %v2473 = vunpack.c.l.b16 %v692
      %v2474 = vunpack.c.h.b16 %v692
      %v2475 = vunpack.c.l.b16 %v693
      %v2476 = vunpack.c.h.b16 %v693
      %v2477 = vunpack.c.l.b16 %v694
      %v2478 = vunpack.c.h.b16 %v694
      %v2479 = vunpack.c.l.b16 %v695
      %v2480 = vunpack.c.h.b16 %v695
      %v2481 = vunpack.c.l.b16 %v696
      %v2482 = vunpack.c.h.b16 %v696
      %v2483 = vunpack.c.l.b16 %v697
      %v2484 = vunpack.c.h.b16 %v697
      %v2485 = vunpack.c.l.b16 %v698
      %v2486 = vunpack.c.h.b16 %v698
      %v2487 = vunpack.c.l.b16 %v699
      %v2488 = vunpack.c.h.b16 %v699
      %v2489 = vunpack.c.l.b16 %v700
      %v2490 = vunpack.c.h.b16 %v700
      %v2491 = vunpack.c.l.b16 %v701
      %v2492 = vunpack.c.h.b16 %v701
      %v2493 = vunpack.c.l.b16 %v702
      %v2494 = vunpack.c.h.b16 %v702
      %v2495 = vunpack.c.l.b16 %v703
      %v2496 = vunpack.c.h.b16 %v703
      %v2497 = vunpack.c.l.b16 %v704
      %v2498 = vunpack.c.h.b16 %v704
      %v2499 = vunpack.c.l.b16 %v705
      %v2500 = vunpack.c.h.b16 %v705
      %v2501 = vunpack.c.l.b16 %v706
      %v2502 = vunpack.c.h.b16 %v706
      %v2503 = vunpack.c.l.b16 %v707
      %v2504 = vunpack.c.h.b16 %v707
      %v2505 = vunpack.c.l.b16 %v708
      %v2506 = vunpack.c.h.b16 %v708
      %v2507 = vunpack.c.l.b16 %v709
      %v2508 = vunpack.c.h.b16 %v709
      %v2509 = vunpack.c.l.b16 %v710
      %v2510 = vunpack.c.h.b16 %v710
      %v2511 = vunpack.c.l.b16 %v711
      %v2512 = vunpack.c.h.b16 %v711
      %v2513 = vunpack.c.l.b16 %v712
      %v2514 = vunpack.c.h.b16 %v712
      %v2515 = vunpack.c.l.b16 %v713
      %v2516 = vunpack.c.h.b16 %v713
      %v2517 = vunpack.c.l.b16 %v714
      %v2518 = vunpack.c.h.b16 %v714
      %v2519 = vunpack.c.l.b16 %v715
      %v2520 = vunpack.c.h.b16 %v715
      %v2521 = vunpack.c.l.b16 %v716
      %v2522 = vunpack.c.h.b16 %v716
      %v2523 = vunpack.c.l.b16 %v717
      %v2524 = vunpack.c.h.b16 %v717
      %v2525 = vunpack.c.l.b16 %v718
      %v2526 = vunpack.c.h.b16 %v718
      %v2527 = vunpack.c.l.b16 %v719
      %v2528 = vunpack.c.h.b16 %v719
      %v2529 = vunpack.c.l.b16 %v720
      %v2530 = vunpack.c.h.b16 %v720
      %v2531 = vunpack.c.l.b16 %v721
      %v2532 = vunpack.c.h.b16 %v721
      %v2533 = vunpack.c.l.b16 %v722
      %v2534 = vunpack.c.h.b16 %v722
      %v2535 = vunpack.c.l.b16 %v723
      %v2536 = vunpack.c.h.b16 %v723
      %v2537 = vunpack.c.l.b16 %v724
      %v2538 = vunpack.c.h.b16 %v724
      %v2539 = vunpack.c.l.b16 %v725
      %v2540 = vunpack.c.h.b16 %v725
      %v2541 = vunpack.c.l.b16 %v726
      %v2542 = vunpack.c.h.b16 %v726
      %v2543 = vunpack.c.l.b16 %v727
      %v2544 = vunpack.c.h.b16 %v727
      %v2545 = vunpack.c.l.b16 %v728
      %v2546 = vunpack.c.h.b16 %v728
      %v2547 = vunpack.c.l.b16 %v729
      %v2548 = vunpack.c.h.b16 %v729
      %v2549 = vunpack.c.l.b16 %v730
      %v2550 = vunpack.c.h.b16 %v730
      %v2551 = vunpack.c.l.b16 %v731
      %v2552 = vunpack.c.h.b16 %v731
      %v2553 = vunpack.c.l.b16 %v732
      %v2554 = vunpack.c.h.b16 %v732
      %v2555 = vunpack.c.l.b16 %v733
      %v2556 = vunpack.c.h.b16 %v733
      %v2557 = vunpack.c.l.b16 %v734
      %v2558 = vunpack.c.h.b16 %v734
      %v2559 = vunpack.c.l.b16 %v735
      %v2560 = vunpack.c.h.b16 %v735
      %v2561 = vunpack.c.l.b16 %v736
      %v2562 = vunpack.c.h.b16 %v736
      %v2563 = vunpack.c.l.b16 %v737
      %v2564 = vunpack.c.h.b16 %v737
      %v2565 = vunpack.c.l.b16 %v738
      %v2566 = vunpack.c.h.b16 %v738
      %v2567 = vunpack.c.l.b16 %v739
      %v2568 = vunpack.c.h.b16 %v739
      %v2569 = vunpack.c.l.b16 %v740
      %v2570 = vunpack.c.h.b16 %v740
      %v2571 = vunpack.c.l.b16 %v741
      %v2572 = vunpack.c.h.b16 %v741
      %v2573 = vunpack.c.l.b16 %v742
      %v2574 = vunpack.c.h.b16 %v742
      %v2575 = vunpack.c.l.b16 %v743
      %v2576 = vunpack.c.h.b16 %v743
      %v2577 = vunpack.c.l.b16 %v744
      %v2578 = vunpack.c.h.b16 %v744
      %v2579 = vunpack.c.l.b16 %v745
      %v2580 = vunpack.c.h.b16 %v745
      %v2581 = vunpack.c.l.b16 %v746
      %v2582 = vunpack.c.h.b16 %v746
      %v2583 = vunpack.c.l.b16 %v747
      %v2584 = vunpack.c.h.b16 %v747
      %v2585 = vunpack.c.l.b16 %v748
      %v2586 = vunpack.c.h.b16 %v748
      %v2587 = vunpack.c.l.b16 %v749
      %v2588 = vunpack.c.h.b16 %v749
      %v2589 = vunpack.c.l.b16 %v750
      %v2590 = vunpack.c.h.b16 %v750
      %v2591 = vunpack.c.l.b16 %v751
      %v2592 = vunpack.c.h.b16 %v751
      %v2593 = vunpack.c.l.b16 %v752
      %v2594 = vunpack.c.h.b16 %v752
      %v2595 = vunpack.c.l.b16 %v753
      %v2596 = vunpack.c.h.b16 %v753
      %v2597 = vunpack.c.l.b16 %v754
      %v2598 = vunpack.c.h.b16 %v754
      %v2599 = vunpack.c.l.b16 %v755
      %v2600 = vunpack.c.h.b16 %v755
      %v2601 = vunpack.c.l.b16 %v756
      %v2602 = vunpack.c.h.b16 %v756
      %v2603 = vunpack.c.l.b16 %v757
      %v2604 = vunpack.c.h.b16 %v757
      %v2605 = vunpack.c.l.b16 %v758
      %v2606 = vunpack.c.h.b16 %v758
      %v2607 = vunpack.c.l.b16 %v759
      %v2608 = vunpack.c.h.b16 %v759
      %v2609 = vunpack.c.l.b16 %v760
      %v2610 = vunpack.c.h.b16 %v760
      %v2611 = vunpack.c.l.b16 %v761
      %v2612 = vunpack.c.h.b16 %v761
      %v2613 = vunpack.c.l.b16 %v762
      %v2614 = vunpack.c.h.b16 %v762
      %v2615 = vunpack.c.l.b16 %v763
      %v2616 = vunpack.c.h.b16 %v763
      %v2617 = vunpack.c.l.b16 %v764
      %v2618 = vunpack.c.h.b16 %v764
      %v2619 = vunpack.c.l.b16 %v765
      %v2620 = vunpack.c.h.b16 %v765
      %v2621 = vunpack.c.l.b16 %v766
      %v2622 = vunpack.c.h.b16 %v766
      %v2623 = vunpack.c.l.b16 %v767
      %v2624 = vunpack.c.h.b16 %v767
      %v2625 = vunpack.c.l.b16 %v768
      %v2626 = vunpack.c.h.b16 %v768
      %v2627 = vunpack.c.l.b16 %v769
      %v2628 = vunpack.c.h.b16 %v769
      %v2629 = vunpack.c.l.b16 %v770
      %v2630 = vunpack.c.h.b16 %v770
      %v2631 = vunpack.c.l.b16 %v771
      %v2632 = vunpack.c.h.b16 %v771
      %v2633 = vunpack.c.l.b16 %v772
      %v2634 = vunpack.c.h.b16 %v772
      %v2635 = vunpack.c.l.b16 %v773
      %v2636 = vunpack.c.h.b16 %v773
      %v2637 = vunpack.c.l.b16 %v774
      %v2638 = vunpack.c.h.b16 %v774
      %v2639 = vunpack.c.l.b16 %v775
      %v2640 = vunpack.c.h.b16 %v775
      %v2641 = vunpack.c.l.b16 %v776
      %v2642 = vunpack.c.h.b16 %v776
      %v2643 = vunpack.c.l.b16 %v777
      %v2644 = vunpack.c.h.b16 %v777
      %v2645 = vunpack.c.l.b16 %v778
      %v2646 = vunpack.c.h.b16 %v778
      %v2647 = vunpack.c.l.b16 %v779
      %v2648 = vunpack.c.h.b16 %v779
      %v2649 = vunpack.c.l.b16 %v780
      %v2650 = vunpack.c.h.b16 %v780
      %v2651 = vunpack.c.l.b16 %v781
      %v2652 = vunpack.c.h.b16 %v781
      %v2653 = vunpack.c.l.b16 %v782
      %v2654 = vunpack.c.h.b16 %v782
      %v2655 = vunpack.c.l.b16 %v783
      %v2656 = vunpack.c.h.b16 %v783
      %v2657 = vunpack.c.l.b16 %v784
      %v2658 = vunpack.c.h.b16 %v784
      %v2659 = vunpack.c.l.b16 %v785
      %v2660 = vunpack.c.h.b16 %v785
      %v2661 = vunpack.c.l.b16 %v786
      %v2662 = vunpack.c.h.b16 %v786
      %v2663 = vunpack.c.l.b16 %v787
      %v2664 = vunpack.c.h.b16 %v787
      %v2665 = vunpack.c.l.b16 %v788
      %v2666 = vunpack.c.h.b16 %v788
      %v2667 = vpack.c.b16 %v1647, %v1643
      %v2668 = vpack.c.b16 %v1648, %v1644
      %v2669 = vpack.c.b16 %v1649, %v1645
      %v2670 = vpack.c.b16 %v1650, %v1646
      %v2671 = vpack.c.b16 %v1655, %v1651
      %v2672 = vpack.c.b16 %v1656, %v1652
      %v2673 = vpack.c.b16 %v1657, %v1653
      %v2674 = vpack.c.b16 %v1658, %v1654
      %v2675 = vpack.c.b16 %v1663, %v1659
      %v2676 = vpack.c.b16 %v1664, %v1660
      %v2677 = vpack.c.b16 %v1665, %v1661
      %v2678 = vpack.c.b16 %v1666, %v1662
      %v2679 = vpack.c.b16 %v1671, %v1667
      %v2680 = vpack.c.b16 %v1672, %v1668
      %v2681 = vpack.c.b16 %v1673, %v1669
      %v2682 = vpack.c.b16 %v1674, %v1670
      %v2683 = vpack.c.b16 %v1679, %v1675
      %v2684 = vpack.c.b16 %v1680, %v1676
      %v2685 = vpack.c.b16 %v1681, %v1677
      %v2686 = vpack.c.b16 %v1682, %v1678
      %v2687 = vpack.c.b16 %v1687, %v1683
      %v2688 = vpack.c.b16 %v1688, %v1684
      %v2689 = vpack.c.b16 %v1689, %v1685
      %v2690 = vpack.c.b16 %v1690, %v1686
      %v2691 = vpack.c.b16 %v1695, %v1691
      %v2692 = vpack.c.b16 %v1696, %v1692
      %v2693 = vpack.c.b16 %v1697, %v1693
      %v2694 = vpack.c.b16 %v1698, %v1694
      %v2695 = vpack.c.b16 %v1703, %v1699
      %v2696 = vpack.c.b16 %v1704, %v1700
      %v2697 = vpack.c.b16 %v1705, %v1701
      %v2698 = vpack.c.b16 %v1706, %v1702
      %v2699 = vpack.c.b16 %v1711, %v1707
      %v2700 = vpack.c.b16 %v1712, %v1708
      %v2701 = vpack.c.b16 %v1713, %v1709
      %v2702 = vpack.c.b16 %v1714, %v1710
      %v2703 = vpack.c.b16 %v1719, %v1715
      %v2704 = vpack.c.b16 %v1720, %v1716
      %v2705 = vpack.c.b16 %v1721, %v1717
      %v2706 = vpack.c.b16 %v1722, %v1718
      %v2707 = vpack.c.b16 %v1727, %v1723
      %v2708 = vpack.c.b16 %v1728, %v1724
      %v2709 = vpack.c.b16 %v1729, %v1725
      %v2710 = vpack.c.b16 %v1730, %v1726
      %v2711 = vpack.c.b16 %v1735, %v1731
      %v2712 = vpack.c.b16 %v1736, %v1732
      %v2713 = vpack.c.b16 %v1737, %v1733
      %v2714 = vpack.c.b16 %v1738, %v1734
      %v2715 = vpack.c.b16 %v1743, %v1739
      %v2716 = vpack.c.b16 %v1744, %v1740
      %v2717 = vpack.c.b16 %v1745, %v1741
      %v2718 = vpack.c.b16 %v1746, %v1742
      %v2719 = vpack.c.b16 %v1751, %v1747
      %v2720 = vpack.c.b16 %v1752, %v1748
      %v2721 = vpack.c.b16 %v1753, %v1749
      %v2722 = vpack.c.b16 %v1754, %v1750
      %v2723 = vpack.c.b16 %v1759, %v1755
      %v2724 = vpack.c.b16 %v1760, %v1756
      %v2725 = vpack.c.b16 %v1761, %v1757
      %v2726 = vpack.c.b16 %v1762, %v1758
      %v2727 = vpack.c.b16 %v1767, %v1763
      %v2728 = vpack.c.b16 %v1768, %v1764
      %v2729 = vpack.c.b16 %v1769, %v1765
      %v2730 = vpack.c.b16 %v1770, %v1766
      %v2731 = vpack.c.b16 %v1775, %v1771
      %v2732 = vpack.c.b16 %v1776, %v1772
      %v2733 = vpack.c.b16 %v1777, %v1773
      %v2734 = vpack.c.b16 %v1778, %v1774
      %v2735 = vpack.c.b16 %v1783, %v1779
      %v2736 = vpack.c.b16 %v1784, %v1780
      %v2737 = vpack.c.b16 %v1785, %v1781
      %v2738 = vpack.c.b16 %v1786, %v1782
      %v2739 = vpack.c.b16 %v1791, %v1787
      %v2740 = vpack.c.b16 %v1792, %v1788
      %v2741 = vpack.c.b16 %v1793, %v1789
      %v2742 = vpack.c.b16 %v1794, %v1790
      %v2743 = vpack.c.b16 %v1799, %v1795
      %v2744 = vpack.c.b16 %v1800, %v1796
      %v2745 = vpack.c.b16 %v1801, %v1797
      %v2746 = vpack.c.b16 %v1802, %v1798
      %v2747 = vpack.c.b16 %v1807, %v1803
      %v2748 = vpack.c.b16 %v1808, %v1804
      %v2749 = vpack.c.b16 %v1809, %v1805
      %v2750 = vpack.c.b16 %v1810, %v1806
      %v2751 = vpack.c.b16 %v1815, %v1811
      %v2752 = vpack.c.b16 %v1816, %v1812
      %v2753 = vpack.c.b16 %v1817, %v1813
      %v2754 = vpack.c.b16 %v1818, %v1814
      %v2755 = vpack.c.b16 %v1823, %v1819
      %v2756 = vpack.c.b16 %v1824, %v1820
      %v2757 = vpack.c.b16 %v1825, %v1821
      %v2758 = vpack.c.b16 %v1826, %v1822
      %v2759 = vpack.c.b16 %v1831, %v1827
      %v2760 = vpack.c.b16 %v1832, %v1828
      %v2761 = vpack.c.b16 %v1833, %v1829
      %v2762 = vpack.c.b16 %v1834, %v1830
      %v2763 = vpack.c.b16 %v1839, %v1835
      %v2764 = vpack.c.b16 %v1840, %v1836
      %v2765 = vpack.c.b16 %v1841, %v1837
      %v2766 = vpack.c.b16 %v1842, %v1838
      %v2767 = vpack.c.b16 %v1847, %v1843
      %v2768 = vpack.c.b16 %v1848, %v1844
      %v2769 = vpack.c.b16 %v1849, %v1845
      %v2770 = vpack.c.b16 %v1850, %v1846
      %v2771 = vpack.c.b16 %v1855, %v1851
      %v2772 = vpack.c.b16 %v1856, %v1852
      %v2773 = vpack.c.b16 %v1857, %v1853
      %v2774 = vpack.c.b16 %v1858, %v1854
      %v2775 = vpack.c.b16 %v1863, %v1859
      %v2776 = vpack.c.b16 %v1864, %v1860
      %v2777 = vpack.c.b16 %v1865, %v1861
      %v2778 = vpack.c.b16 %v1866, %v1862
      %v2779 = vpack.c.b16 %v1871, %v1867
      %v2780 = vpack.c.b16 %v1872, %v1868
      %v2781 = vpack.c.b16 %v1873, %v1869
      %v2782 = vpack.c.b16 %v1874, %v1870
      %v2783 = vpack.c.b16 %v1879, %v1875
      %v2784 = vpack.c.b16 %v1880, %v1876
      %v2785 = vpack.c.b16 %v1881, %v1877
      %v2786 = vpack.c.b16 %v1882, %v1878
      %v2787 = vpack.c.b16 %v1887, %v1883
      %v2788 = vpack.c.b16 %v1888, %v1884
      %v2789 = vpack.c.b16 %v1889, %v1885
      %v2790 = vpack.c.b16 %v1890, %v1886
      %v2791 = vpack.c.b16 %v1895, %v1891
      %v2792 = vpack.c.b16 %v1896, %v1892
      %v2793 = vpack.c.b16 %v1897, %v1893
      %v2794 = vpack.c.b16 %v1898, %v1894
      %v2795 = vpack.c.b16 %v1903, %v1899
      %v2796 = vpack.c.b16 %v1904, %v1900
      %v2797 = vpack.c.b16 %v1905, %v1901
      %v2798 = vpack.c.b16 %v1906, %v1902
      %v2799 = vpack.c.b16 %v1911, %v1907
      %v2800 = vpack.c.b16 %v1912, %v1908
      %v2801 = vpack.c.b16 %v1913, %v1909
      %v2802 = vpack.c.b16 %v1914, %v1910
      %v2803 = vpack.c.b16 %v1919, %v1915
      %v2804 = vpack.c.b16 %v1920, %v1916
      %v2805 = vpack.c.b16 %v1921, %v1917
      %v2806 = vpack.c.b16 %v1922, %v1918
      %v2807 = vpack.c.b16 %v1927, %v1923
      %v2808 = vpack.c.b16 %v1928, %v1924
      %v2809 = vpack.c.b16 %v1929, %v1925
      %v2810 = vpack.c.b16 %v1930, %v1926
      %v2811 = vpack.c.b16 %v1935, %v1931
      %v2812 = vpack.c.b16 %v1936, %v1932
      %v2813 = vpack.c.b16 %v1937, %v1933
      %v2814 = vpack.c.b16 %v1938, %v1934
      %v2815 = vpack.c.b16 %v1943, %v1939
      %v2816 = vpack.c.b16 %v1944, %v1940
      %v2817 = vpack.c.b16 %v1945, %v1941
      %v2818 = vpack.c.b16 %v1946, %v1942
      %v2819 = vpack.c.b16 %v1951, %v1947
      %v2820 = vpack.c.b16 %v1952, %v1948
      %v2821 = vpack.c.b16 %v1953, %v1949
      %v2822 = vpack.c.b16 %v1954, %v1950
      %v2823 = vpack.c.b16 %v1959, %v1955
      %v2824 = vpack.c.b16 %v1960, %v1956
      %v2825 = vpack.c.b16 %v1961, %v1957
      %v2826 = vpack.c.b16 %v1962, %v1958
      %v2827 = vpack.c.b16 %v1967, %v1963
      %v2828 = vpack.c.b16 %v1968, %v1964
      %v2829 = vpack.c.b16 %v1969, %v1965
      %v2830 = vpack.c.b16 %v1970, %v1966
      %v2831 = vpack.c.b16 %v1975, %v1971
      %v2832 = vpack.c.b16 %v1976, %v1972
      %v2833 = vpack.c.b16 %v1977, %v1973
      %v2834 = vpack.c.b16 %v1978, %v1974
      %v2835 = vpack.c.b16 %v1983, %v1979
      %v2836 = vpack.c.b16 %v1984, %v1980
      %v2837 = vpack.c.b16 %v1985, %v1981
      %v2838 = vpack.c.b16 %v1986, %v1982
      %v2839 = vpack.c.b16 %v1991, %v1987
      %v2840 = vpack.c.b16 %v1992, %v1988
      %v2841 = vpack.c.b16 %v1993, %v1989
      %v2842 = vpack.c.b16 %v1994, %v1990
      %v2843 = vpack.c.b16 %v1999, %v1995
      %v2844 = vpack.c.b16 %v2000, %v1996
      %v2845 = vpack.c.b16 %v2001, %v1997
      %v2846 = vpack.c.b16 %v2002, %v1998
      %v2847 = vpack.c.b16 %v2007, %v2003
      %v2848 = vpack.c.b16 %v2008, %v2004
      %v2849 = vpack.c.b16 %v2009, %v2005
      %v2850 = vpack.c.b16 %v2010, %v2006
      %v2851 = vpack.c.b16 %v2015, %v2011
      %v2852 = vpack.c.b16 %v2016, %v2012
      %v2853 = vpack.c.b16 %v2017, %v2013
      %v2854 = vpack.c.b16 %v2018, %v2014
      %v2855 = vpack.c.b16 %v2023, %v2019
      %v2856 = vpack.c.b16 %v2024, %v2020
      %v2857 = vpack.c.b16 %v2025, %v2021
      %v2858 = vpack.c.b16 %v2026, %v2022
      %v2859 = vpack.c.b16 %v2031, %v2027
      %v2860 = vpack.c.b16 %v2032, %v2028
      %v2861 = vpack.c.b16 %v2033, %v2029
      %v2862 = vpack.c.b16 %v2034, %v2030
      %v2863 = vpack.c.b16 %v2039, %v2035
      %v2864 = vpack.c.b16 %v2040, %v2036
      %v2865 = vpack.c.b16 %v2041, %v2037
      %v2866 = vpack.c.b16 %v2042, %v2038
      %v2867 = vpack.c.b16 %v2047, %v2043
      %v2868 = vpack.c.b16 %v2048, %v2044
      %v2869 = vpack.c.b16 %v2049, %v2045
      %v2870 = vpack.c.b16 %v2050, %v2046
      %v2871 = vpack.c.b16 %v2055, %v2051
      %v2872 = vpack.c.b16 %v2056, %v2052
      %v2873 = vpack.c.b16 %v2057, %v2053
      %v2874 = vpack.c.b16 %v2058, %v2054
      %v2875 = vpack.c.b16 %v2063, %v2059
      %v2876 = vpack.c.b16 %v2064, %v2060
      %v2877 = vpack.c.b16 %v2065, %v2061
      %v2878 = vpack.c.b16 %v2066, %v2062
      %v2879 = vpack.c.b16 %v2071, %v2067
      %v2880 = vpack.c.b16 %v2072, %v2068
      %v2881 = vpack.c.b16 %v2073, %v2069
      %v2882 = vpack.c.b16 %v2074, %v2070
      %v2883 = vpack.c.b16 %v2079, %v2075
      %v2884 = vpack.c.b16 %v2080, %v2076
      %v2885 = vpack.c.b16 %v2081, %v2077
      %v2886 = vpack.c.b16 %v2082, %v2078
      %v2887 = vpack.c.b16 %v2087, %v2083
      %v2888 = vpack.c.b16 %v2088, %v2084
      %v2889 = vpack.c.b16 %v2089, %v2085
      %v2890 = vpack.c.b16 %v2090, %v2086
      %v2891 = vpack.c.b16 %v2095, %v2091
      %v2892 = vpack.c.b16 %v2096, %v2092
      %v2893 = vpack.c.b16 %v2097, %v2093
      %v2894 = vpack.c.b16 %v2098, %v2094
      %v2895 = vpack.c.b16 %v2103, %v2099
      %v2896 = vpack.c.b16 %v2104, %v2100
      %v2897 = vpack.c.b16 %v2105, %v2101
      %v2898 = vpack.c.b16 %v2106, %v2102
      %v2899 = vpack.c.b16 %v2111, %v2107
      %v2900 = vpack.c.b16 %v2112, %v2108
      %v2901 = vpack.c.b16 %v2113, %v2109
      %v2902 = vpack.c.b16 %v2114, %v2110
      %v2903 = vpack.c.b16 %v2119, %v2115
      %v2904 = vpack.c.b16 %v2120, %v2116
      %v2905 = vpack.c.b16 %v2121, %v2117
      %v2906 = vpack.c.b16 %v2122, %v2118
      %v2907 = vpack.c.b16 %v2127, %v2123
      %v2908 = vpack.c.b16 %v2128, %v2124
      %v2909 = vpack.c.b16 %v2129, %v2125
      %v2910 = vpack.c.b16 %v2130, %v2126
      %v2911 = vpack.c.b16 %v2135, %v2131
      %v2912 = vpack.c.b16 %v2136, %v2132
      %v2913 = vpack.c.b16 %v2137, %v2133
      %v2914 = vpack.c.b16 %v2138, %v2134
      %v2915 = vpack.c.b16 %v2143, %v2139
      %v2916 = vpack.c.b16 %v2144, %v2140
      %v2917 = vpack.c.b16 %v2145, %v2141
      %v2918 = vpack.c.b16 %v2146, %v2142
      %v2919 = vpack.c.b16 %v2151, %v2147
      %v2920 = vpack.c.b16 %v2152, %v2148
      %v2921 = vpack.c.b16 %v2153, %v2149
      %v2922 = vpack.c.b16 %v2154, %v2150
      %v2923 = vpack.c.b16 %v2159, %v2155
      %v2924 = vpack.c.b16 %v2160, %v2156
      %v2925 = vpack.c.b16 %v2161, %v2157
      %v2926 = vpack.c.b16 %v2162, %v2158
      %v2927 = vpack.c.b16 %v2167, %v2163
      %v2928 = vpack.c.b16 %v2168, %v2164
      %v2929 = vpack.c.b16 %v2169, %v2165
      %v2930 = vpack.c.b16 %v2170, %v2166
      %v2931 = vpack.c.b16 %v2175, %v2171
      %v2932 = vpack.c.b16 %v2176, %v2172
      %v2933 = vpack.c.b16 %v2177, %v2173
      %v2934 = vpack.c.b16 %v2178, %v2174
      %v2935 = vpack.c.b16 %v2183, %v2179
      %v2936 = vpack.c.b16 %v2184, %v2180
      %v2937 = vpack.c.b16 %v2185, %v2181
      %v2938 = vpack.c.b16 %v2186, %v2182
      %v2939 = vpack.c.b16 %v2191, %v2187
      %v2940 = vpack.c.b16 %v2192, %v2188
      %v2941 = vpack.c.b16 %v2193, %v2189
      %v2942 = vpack.c.b16 %v2194, %v2190
      %v2943 = vpack.c.b16 %v2199, %v2195
      %v2944 = vpack.c.b16 %v2200, %v2196
      %v2945 = vpack.c.b16 %v2201, %v2197
      %v2946 = vpack.c.b16 %v2202, %v2198
      %v2947 = vpack.c.b16 %v2207, %v2203
      %v2948 = vpack.c.b16 %v2208, %v2204
      %v2949 = vpack.c.b16 %v2209, %v2205
      %v2950 = vpack.c.b16 %v2210, %v2206
      %v2951 = vpack.c.b16 %v2215, %v2211
      %v2952 = vpack.c.b16 %v2216, %v2212
      %v2953 = vpack.c.b16 %v2217, %v2213
      %v2954 = vpack.c.b16 %v2218, %v2214
      %v2955 = vpack.c.b16 %v2223, %v2219
      %v2956 = vpack.c.b16 %v2224, %v2220
      %v2957 = vpack.c.b16 %v2225, %v2221
      %v2958 = vpack.c.b16 %v2226, %v2222
      %v2959 = vpack.c.b16 %v2231, %v2227
      %v2960 = vpack.c.b16 %v2232, %v2228
      %v2961 = vpack.c.b16 %v2233, %v2229
      %v2962 = vpack.c.b16 %v2234, %v2230
      %v2963 = vpack.c.b16 %v2239, %v2235
      %v2964 = vpack.c.b16 %v2240, %v2236
      %v2965 = vpack.c.b16 %v2241, %v2237
      %v2966 = vpack.c.b16 %v2242, %v2238
      %v2967 = vpack.c.b16 %v2247, %v2243
      %v2968 = vpack.c.b16 %v2248, %v2244
      %v2969 = vpack.c.b16 %v2249, %v2245
      %v2970 = vpack.c.b16 %v2250, %v2246
      %v2971 = vpack.c.b16 %v2255, %v2251
      %v2972 = vpack.c.b16 %v2256, %v2252
      %v2973 = vpack.c.b16 %v2257, %v2253
      %v2974 = vpack.c.b16 %v2258, %v2254
      %v2975 = vpack.c.b16 %v2263, %v2259
      %v2976 = vpack.c.b16 %v2264, %v2260
      %v2977 = vpack.c.b16 %v2265, %v2261
      %v2978 = vpack.c.b16 %v2266, %v2262
      %v2979 = vpack.c.b16 %v2271, %v2267
      %v2980 = vpack.c.b16 %v2272, %v2268
      %v2981 = vpack.c.b16 %v2273, %v2269
      %v2982 = vpack.c.b16 %v2274, %v2270
      %v2983 = vpack.c.b16 %v2279, %v2275
      %v2984 = vpack.c.b16 %v2280, %v2276
      %v2985 = vpack.c.b16 %v2281, %v2277
      %v2986 = vpack.c.b16 %v2282, %v2278
      %v2987 = vpack.c.b16 %v2287, %v2283
      %v2988 = vpack.c.b16 %v2288, %v2284
      %v2989 = vpack.c.b16 %v2289, %v2285
      %v2990 = vpack.c.b16 %v2290, %v2286
      %v2991 = vpack.c.b16 %v2295, %v2291
      %v2992 = vpack.c.b16 %v2296, %v2292
      %v2993 = vpack.c.b16 %v2297, %v2293
      %v2994 = vpack.c.b16 %v2298, %v2294
      %v2995 = vpack.c.b16 %v2303, %v2299
      %v2996 = vpack.c.b16 %v2304, %v2300
      %v2997 = vpack.c.b16 %v2305, %v2301
      %v2998 = vpack.c.b16 %v2306, %v2302
      %v2999 = vpack.c.b16 %v2311, %v2307
      %v3000 = vpack.c.b16 %v2312, %v2308
      %v3001 = vpack.c.b16 %v2313, %v2309
      %v3002 = vpack.c.b16 %v2314, %v2310
      %v3003 = vpack.c.b16 %v2319, %v2315
      %v3004 = vpack.c.b16 %v2320, %v2316
      %v3005 = vpack.c.b16 %v2321, %v2317
      %v3006 = vpack.c.b16 %v2322, %v2318
      %v3007 = vpack.c.b16 %v2327, %v2323
      %v3008 = vpack.c.b16 %v2328, %v2324
      %v3009 = vpack.c.b16 %v2329, %v2325
      %v3010 = vpack.c.b16 %v2330, %v2326
      %v3011 = vpack.c.b16 %v2335, %v2331
      %v3012 = vpack.c.b16 %v2336, %v2332
      %v3013 = vpack.c.b16 %v2337, %v2333
      %v3014 = vpack.c.b16 %v2338, %v2334
      %v3015 = vpack.c.b16 %v2343, %v2339
      %v3016 = vpack.c.b16 %v2344, %v2340
      %v3017 = vpack.c.b16 %v2345, %v2341
      %v3018 = vpack.c.b16 %v2346, %v2342
      %v3019 = vpack.c.b16 %v2351, %v2347
      %v3020 = vpack.c.b16 %v2352, %v2348
      %v3021 = vpack.c.b16 %v2353, %v2349
      %v3022 = vpack.c.b16 %v2354, %v2350
      %v3023 = vpack.c.b16 %v2359, %v2355
      %v3024 = vpack.c.b16 %v2360, %v2356
      %v3025 = vpack.c.b16 %v2361, %v2357
      %v3026 = vpack.c.b16 %v2362, %v2358
      %v3027 = vpack.c.b16 %v2367, %v2363
      %v3028 = vpack.c.b16 %v2368, %v2364
      %v3029 = vpack.c.b16 %v2369, %v2365
      %v3030 = vpack.c.b16 %v2370, %v2366
      %v3031 = vpack.c.b16 %v2375, %v2371
      %v3032 = vpack.c.b16 %v2376, %v2372
      %v3033 = vpack.c.b16 %v2377, %v2373
      %v3034 = vpack.c.b16 %v2378, %v2374
      %v3035 = vpack.c.b16 %v2383, %v2379
      %v3036 = vpack.c.b16 %v2384, %v2380
      %v3037 = vpack.c.b16 %v2385, %v2381
      %v3038 = vpack.c.b16 %v2386, %v2382
      %v3039 = vpack.c.b16 %v2391, %v2387
      %v3040 = vpack.c.b16 %v2392, %v2388
      %v3041 = vpack.c.b16 %v2393, %v2389
      %v3042 = vpack.c.b16 %v2394, %v2390
      %v3043 = vpack.c.b16 %v2399, %v2395
      %v3044 = vpack.c.b16 %v2400, %v2396
      %v3045 = vpack.c.b16 %v2401, %v2397
      %v3046 = vpack.c.b16 %v2402, %v2398
      %v3047 = vpack.c.b16 %v2407, %v2403
      %v3048 = vpack.c.b16 %v2408, %v2404
      %v3049 = vpack.c.b16 %v2409, %v2405
      %v3050 = vpack.c.b16 %v2410, %v2406
      %v3051 = vpack.c.b16 %v2415, %v2411
      %v3052 = vpack.c.b16 %v2416, %v2412
      %v3053 = vpack.c.b16 %v2417, %v2413
      %v3054 = vpack.c.b16 %v2418, %v2414
      %v3055 = vpack.c.b16 %v2423, %v2419
      %v3056 = vpack.c.b16 %v2424, %v2420
      %v3057 = vpack.c.b16 %v2425, %v2421
      %v3058 = vpack.c.b16 %v2426, %v2422
      %v3059 = vpack.c.b16 %v2431, %v2427
      %v3060 = vpack.c.b16 %v2432, %v2428
      %v3061 = vpack.c.b16 %v2433, %v2429
      %v3062 = vpack.c.b16 %v2434, %v2430
      %v3063 = vpack.c.b16 %v2439, %v2435
      %v3064 = vpack.c.b16 %v2440, %v2436
      %v3065 = vpack.c.b16 %v2441, %v2437
      %v3066 = vpack.c.b16 %v2442, %v2438
      %v3067 = vpack.c.b16 %v2447, %v2443
      %v3068 = vpack.c.b16 %v2448, %v2444
      %v3069 = vpack.c.b16 %v2449, %v2445
      %v3070 = vpack.c.b16 %v2450, %v2446
      %v3071 = vpack.c.b16 %v2455, %v2451
      %v3072 = vpack.c.b16 %v2456, %v2452
      %v3073 = vpack.c.b16 %v2457, %v2453
      %v3074 = vpack.c.b16 %v2458, %v2454
      %v3075 = vpack.c.b16 %v2463, %v2459
      %v3076 = vpack.c.b16 %v2464, %v2460
      %v3077 = vpack.c.b16 %v2465, %v2461
      %v3078 = vpack.c.b16 %v2466, %v2462
      %v3079 = vpack.c.b16 %v2471, %v2467
      %v3080 = vpack.c.b16 %v2472, %v2468
      %v3081 = vpack.c.b16 %v2473, %v2469
      %v3082 = vpack.c.b16 %v2474, %v2470
      %v3083 = vpack.c.b16 %v2479, %v2475
      %v3084 = vpack.c.b16 %v2480, %v2476
      %v3085 = vpack.c.b16 %v2481, %v2477
      %v3086 = vpack.c.b16 %v2482, %v2478
      %v3087 = vpack.c.b16 %v2487, %v2483
      %v3088 = vpack.c.b16 %v2488, %v2484
      %v3089 = vpack.c.b16 %v2489, %v2485
      %v3090 = vpack.c.b16 %v2490, %v2486
      %v3091 = vpack.c.b16 %v2495, %v2491
      %v3092 = vpack.c.b16 %v2496, %v2492
      %v3093 = vpack.c.b16 %v2497, %v2493
      %v3094 = vpack.c.b16 %v2498, %v2494
      %v3095 = vpack.c.b16 %v2503, %v2499
      %v3096 = vpack.c.b16 %v2504, %v2500
      %v3097 = vpack.c.b16 %v2505, %v2501
      %v3098 = vpack.c.b16 %v2506, %v2502
      %v3099 = vpack.c.b16 %v2511, %v2507
      %v3100 = vpack.c.b16 %v2512, %v2508
      %v3101 = vpack.c.b16 %v2513, %v2509
      %v3102 = vpack.c.b16 %v2514, %v2510
      %v3103 = vpack.c.b16 %v2519, %v2515
      %v3104 = vpack.c.b16 %v2520, %v2516
      %v3105 = vpack.c.b16 %v2521, %v2517
      %v3106 = vpack.c.b16 %v2522, %v2518
      %v3107 = vpack.c.b16 %v2527, %v2523
      %v3108 = vpack.c.b16 %v2528, %v2524
      %v3109 = vpack.c.b16 %v2529, %v2525
      %v3110 = vpack.c.b16 %v2530, %v2526
      %v3111 = vpack.c.b16 %v2535, %v2531
      %v3112 = vpack.c.b16 %v2536, %v2532
      %v3113 = vpack.c.b16 %v2537, %v2533
      %v3114 = vpack.c.b16 %v2538, %v2534
      %v3115 = vpack.c.b16 %v2543, %v2539
      %v3116 = vpack.c.b16 %v2544, %v2540
      %v3117 = vpack.c.b16 %v2545, %v2541
      %v3118 = vpack.c.b16 %v2546, %v2542
      %v3119 = vpack.c.b16 %v2551, %v2547
      %v3120 = vpack.c.b16 %v2552, %v2548
      %v3121 = vpack.c.b16 %v2553, %v2549
      %v3122 = vpack.c.b16 %v2554, %v2550
      %v3123 = vpack.c.b16 %v2559, %v2555
      %v3124 = vpack.c.b16 %v2560, %v2556
      %v3125 = vpack.c.b16 %v2561, %v2557
      %v3126 = vpack.c.b16 %v2562, %v2558
      %v3127 = vpack.c.b16 %v2567, %v2563
      %v3128 = vpack.c.b16 %v2568, %v2564
      %v3129 = vpack.c.b16 %v2569, %v2565
      %v3130 = vpack.c.b16 %v2570, %v2566
      %v3131 = vpack.c.b16 %v2575, %v2571
      %v3132 = vpack.c.b16 %v2576, %v2572
      %v3133 = vpack.c.b16 %v2577, %v2573
      %v3134 = vpack.c.b16 %v2578, %v2574
      %v3135 = vpack.c.b16 %v2583, %v2579
      %v3136 = vpack.c.b16 %v2584, %v2580
      %v3137 = vpack.c.b16 %v2585, %v2581
      %v3138 = vpack.c.b16 %v2586, %v2582
      %v3139 = vpack.c.b16 %v2591, %v2587
      %v3140 = vpack.c.b16 %v2592, %v2588
      %v3141 = vpack.c.b16 %v2593, %v2589
      %v3142 = vpack.c.b16 %v2594, %v2590
      %v3143 = vpack.c.b16 %v2599, %v2595
      %v3144 = vpack.c.b16 %v2600, %v2596
      %v3145 = vpack.c.b16 %v2601, %v2597
      %v3146 = vpack.c.b16 %v2602, %v2598
      %v3147 = vpack.c.b16 %v2607, %v2603
      %v3148 = vpack.c.b16 %v2608, %v2604
      %v3149 = vpack.c.b16 %v2609, %v2605
      %v3150 = vpack.c.b16 %v2610, %v2606
      %v3151 = vpack.c.b16 %v2615, %v2611
      %v3152 = vpack.c.b16 %v2616, %v2612
      %v3153 = vpack.c.b16 %v2617, %v2613
      %v3154 = vpack.c.b16 %v2618, %v2614
      %v3155 = vpack.c.b16 %v2623, %v2619
      %v3156 = vpack.c.b16 %v2624, %v2620
      %v3157 = vpack.c.b16 %v2625, %v2621
      %v3158 = vpack.c.b16 %v2626, %v2622
      %v3159 = vpack.c.b16 %v2631, %v2627
      %v3160 = vpack.c.b16 %v2632, %v2628
      %v3161 = vpack.c.b16 %v2633, %v2629
      %v3162 = vpack.c.b16 %v2634, %v2630
      %v3163 = vpack.c.b16 %v2639, %v2635
      %v3164 = vpack.c.b16 %v2640, %v2636
      %v3165 = vpack.c.b16 %v2641, %v2637
      %v3166 = vpack.c.b16 %v2642, %v2638
      %v3167 = vpack.c.b16 %v2647, %v2643
      %v3168 = vpack.c.b16 %v2648, %v2644
      %v3169 = vpack.c.b16 %v2649, %v2645
      %v3170 = vpack.c.b16 %v2650, %v2646
      %v3171 = vpack.c.b16 %v2655, %v2651
      %v3172 = vpack.c.b16 %v2656, %v2652
      %v3173 = vpack.c.b16 %v2657, %v2653
      %v3174 = vpack.c.b16 %v2658, %v2654
      %v3175 = vpack.c.b16 %v2663, %v2659
      %v3176 = vpack.c.b16 %v2664, %v2660
      %v3177 = vpack.c.b16 %v2665, %v2661
      %v3178 = vpack.c.b16 %v2666, %v2662
      %3691 = vmatprep.subr.bf16.mxu0 %v2696
      %3692 = vmatpush1.bf16.msra.mxu0 %v2695
      %3693 = vmatprep.subr.bf16.mxu0 %v2692
      %3694 = vmatpush1.bf16.msra.mxu0 %v2691
      %3695 = vmatprep.subr.bf16.mxu0 %v2688
      %3696 = vmatpush1.bf16.msra.mxu0 %v2687
      %3697 = vmatprep.subr.bf16.mxu0 %v2684
      %3698 = vmatpush1.bf16.msra.mxu0 %v2683
      %3699 = vmatprep.subr.bf16.mxu0 %v2680
      %3700 = vmatpush1.bf16.msra.mxu0 %v2679
      %3701 = vmatprep.subr.bf16.mxu0 %v2676
      %3702 = vmatpush1.bf16.msra.mxu0 %v2675
      %3703 = vmatprep.subr.bf16.mxu0 %v2672
      %3704 = vmatpush1.bf16.msra.mxu0 %v2671
      %3705 = vmatprep.subr.bf16.mxu0 %v2668
      %3706 = vmatpush1.bf16.msra.mxu0 %v2667
      %3707 = vmatprep.subr.bf16.mxu0 %v2728
      %3708 = vmatpush2.bf16.msra.mxu0 %v2727
      %3709 = vmatprep.subr.bf16.mxu0 %v2724
      %3710 = vmatpush2.bf16.msra.mxu0 %v2723
      %3711 = vmatprep.subr.bf16.mxu0 %v2720
      %3712 = vmatpush2.bf16.msra.mxu0 %v2719
      %3713 = vmatprep.subr.bf16.mxu0 %v2716
      %3714 = vmatpush2.bf16.msra.mxu0 %v2715
      %3715 = vmatprep.subr.bf16.mxu0 %v2712
      %3716 = vmatpush2.bf16.msra.mxu0 %v2711
      %3717 = vmatprep.subr.bf16.mxu0 %v2708
      %3718 = vmatpush2.bf16.msra.mxu0 %v2707
      %3719 = vmatprep.subr.bf16.mxu0 %v2704
      %3720 = vmatpush2.bf16.msra.mxu0 %v2703
      %3721 = vmatprep.subr.bf16.mxu0 %v2700
      %3722 = vmatpush2.bf16.msra.mxu0 %v2699
      %3723 = vmatprep.mubr.bf16.mxu0 %v1004
      %3724 = vmatmul.mubr.bf16.gmra.mxu0 %v1003
      %v3725 = vpop.f32.mrf.mxu0
      %v3726 = vadd.f32 %v794, %v3725
      %v3727 = vpop.f32.mrf.mxu0
      %v3728 = vadd.f32 %v798, %v3727
      %v3729 = vpop.f32.mrf.mxu0
      %v3730 = vadd.f32 %v794, %v3729
      %v3731 = vpop.f32.mrf.mxu0
      %v3732 = vadd.f32 %v798, %v3731
      %3733 = vmatprep.mubr.bf16.mxu0 %v1020
      %3734 = vmatmul.mubr.bf16.gmra.mxu0 %v1019
      %v3735 = vpop.f32.mrf.mxu0
      %v3736 = vadd.f32 %v794, %v3735
      %v3737 = vpop.f32.mrf.mxu0
      %v3738 = vadd.f32 %v798, %v3737
      %v3739 = vpop.f32.mrf.mxu0
      %v3740 = vadd.f32 %v794, %v3739
      %v3741 = vpop.f32.mrf.mxu0
      %v3742 = vadd.f32 %v798, %v3741
      %3743 = vmatprep.mubr.bf16.mxu0 %v1036
      %3744 = vmatmul.mubr.bf16.gmra.mxu0 %v1035
      %v3745 = vpop.f32.mrf.mxu0
      %v3746 = vadd.f32 %v794, %v3745
      %v3747 = vpop.f32.mrf.mxu0
      %v3748 = vadd.f32 %v798, %v3747
      %v3749 = vpop.f32.mrf.mxu0
      %v3750 = vadd.f32 %v794, %v3749
      %v3751 = vpop.f32.mrf.mxu0
      %v3752 = vadd.f32 %v798, %v3751
      %3753 = vmatprep.mubr.bf16.mxu0 %v1052
      %3754 = vmatmul.mubr.bf16.gmra.mxu0 %v1051
      %v3755 = vpop.f32.mrf.mxu0
      %v3756 = vadd.f32 %v794, %v3755
      %v3757 = vpop.f32.mrf.mxu0
      %v3758 = vadd.f32 %v798, %v3757
      %v3759 = vpop.f32.mrf.mxu0
      %v3760 = vadd.f32 %v794, %v3759
      %v3761 = vpop.f32.mrf.mxu0
      %v3762 = vadd.f32 %v798, %v3761
      %3763 = vdwg.mxu0
      %3764 = vmatprep.subr.bf16.mxu0 %v2760
      %3765 = vmatpush1.bf16.msra.mxu0 %v2759
      %3766 = vmatprep.subr.bf16.mxu0 %v2756
      %3767 = vmatpush1.bf16.msra.mxu0 %v2755
      %3768 = vmatprep.subr.bf16.mxu0 %v2752
      %3769 = vmatpush1.bf16.msra.mxu0 %v2751
      %3770 = vmatprep.subr.bf16.mxu0 %v2748
      %3771 = vmatpush1.bf16.msra.mxu0 %v2747
      %3772 = vmatprep.subr.bf16.mxu0 %v2744
      %3773 = vmatpush1.bf16.msra.mxu0 %v2743
      %3774 = vmatprep.subr.bf16.mxu0 %v2740
      %3775 = vmatpush1.bf16.msra.mxu0 %v2739
      %3776 = vmatprep.subr.bf16.mxu0 %v2736
      %3777 = vmatpush1.bf16.msra.mxu0 %v2735
      %3778 = vmatprep.subr.bf16.mxu0 %v2732
      %3779 = vmatpush1.bf16.msra.mxu0 %v2731
      %3780 = vmatprep.subr.bf16.mxu0 %v2792
      %3781 = vmatpush2.bf16.msra.mxu0 %v2791
      %3782 = vmatprep.subr.bf16.mxu0 %v2788
      %3783 = vmatpush2.bf16.msra.mxu0 %v2787
      %3784 = vmatprep.subr.bf16.mxu0 %v2784
      %3785 = vmatpush2.bf16.msra.mxu0 %v2783
      %3786 = vmatprep.subr.bf16.mxu0 %v2780
      %3787 = vmatpush2.bf16.msra.mxu0 %v2779
      %3788 = vmatprep.subr.bf16.mxu0 %v2776
      %3789 = vmatpush2.bf16.msra.mxu0 %v2775
      %3790 = vmatprep.subr.bf16.mxu0 %v2772
      %3791 = vmatpush2.bf16.msra.mxu0 %v2771
      %3792 = vmatprep.subr.bf16.mxu0 %v2768
      %3793 = vmatpush2.bf16.msra.mxu0 %v2767
      %3794 = vmatprep.subr.bf16.mxu0 %v2764
      %3795 = vmatpush2.bf16.msra.mxu0 %v2763
      %3796 = vmatprep.mubr.bf16.mxu0 %v1006
      %3797 = vmatmul.mubr.bf16.gmra.mxu0 %v1005
      %v3798 = vpop.f32.mrf.mxu0
      %v3799 = vadd.f32 %v3726, %v3798
      %v3800 = vpop.f32.mrf.mxu0
      %v3801 = vadd.f32 %v3728, %v3800
      %v3802 = vpop.f32.mrf.mxu0
      %v3803 = vadd.f32 %v3730, %v3802
      %v3804 = vpop.f32.mrf.mxu0
      %v3805 = vadd.f32 %v3732, %v3804
      %3806 = vmatprep.mubr.bf16.mxu0 %v1022
      %3807 = vmatmul.mubr.bf16.gmra.mxu0 %v1021
      %v3808 = vpop.f32.mrf.mxu0
      %v3809 = vadd.f32 %v3736, %v3808
      %v3810 = vpop.f32.mrf.mxu0
      %v3811 = vadd.f32 %v3738, %v3810
      %v3812 = vpop.f32.mrf.mxu0
      %v3813 = vadd.f32 %v3740, %v3812
      %v3814 = vpop.f32.mrf.mxu0
      %v3815 = vadd.f32 %v3742, %v3814
      %3816 = vmatprep.mubr.bf16.mxu0 %v1038
      %3817 = vmatmul.mubr.bf16.gmra.mxu0 %v1037
      %v3818 = vpop.f32.mrf.mxu0
      %v3819 = vadd.f32 %v3746, %v3818
      %v3820 = vpop.f32.mrf.mxu0
      %v3821 = vadd.f32 %v3748, %v3820
      %v3822 = vpop.f32.mrf.mxu0
      %v3823 = vadd.f32 %v3750, %v3822
      %v3824 = vpop.f32.mrf.mxu0
      %v3825 = vadd.f32 %v3752, %v3824
      %3826 = vmatprep.mubr.bf16.mxu0 %v1054
      %3827 = vmatmul.mubr.bf16.gmra.mxu0 %v1053
      %v3828 = vpop.f32.mrf.mxu0
      %v3829 = vadd.f32 %v3756, %v3828
      %v3830 = vpop.f32.mrf.mxu0
      %v3831 = vadd.f32 %v3758, %v3830
      %v3832 = vpop.f32.mrf.mxu0
      %v3833 = vadd.f32 %v3760, %v3832
      %v3834 = vpop.f32.mrf.mxu0
      %v3835 = vadd.f32 %v3762, %v3834
      %3836 = vdwg.mxu0
      %3837 = vmatprep.subr.bf16.mxu0 %v2824
      %3838 = vmatpush1.bf16.msra.mxu0 %v2823
      %3839 = vmatprep.subr.bf16.mxu0 %v2820
      %3840 = vmatpush1.bf16.msra.mxu0 %v2819
      %3841 = vmatprep.subr.bf16.mxu0 %v2816
      %3842 = vmatpush1.bf16.msra.mxu0 %v2815
      %3843 = vmatprep.subr.bf16.mxu0 %v2812
      %3844 = vmatpush1.bf16.msra.mxu0 %v2811
      %3845 = vmatprep.subr.bf16.mxu0 %v2808
      %3846 = vmatpush1.bf16.msra.mxu0 %v2807
      %3847 = vmatprep.subr.bf16.mxu0 %v2804
      %3848 = vmatpush1.bf16.msra.mxu0 %v2803
      %3849 = vmatprep.subr.bf16.mxu0 %v2800
      %3850 = vmatpush1.bf16.msra.mxu0 %v2799
      %3851 = vmatprep.subr.bf16.mxu0 %v2796
      %3852 = vmatpush1.bf16.msra.mxu0 %v2795
      %3853 = vmatprep.subr.bf16.mxu0 %v2856
      %3854 = vmatpush2.bf16.msra.mxu0 %v2855
      %3855 = vmatprep.subr.bf16.mxu0 %v2852
      %3856 = vmatpush2.bf16.msra.mxu0 %v2851
      %3857 = vmatprep.subr.bf16.mxu0 %v2848
      %3858 = vmatpush2.bf16.msra.mxu0 %v2847
      %3859 = vmatprep.subr.bf16.mxu0 %v2844
      %3860 = vmatpush2.bf16.msra.mxu0 %v2843
      %3861 = vmatprep.subr.bf16.mxu0 %v2840
      %3862 = vmatpush2.bf16.msra.mxu0 %v2839
      %3863 = vmatprep.subr.bf16.mxu0 %v2836
      %3864 = vmatpush2.bf16.msra.mxu0 %v2835
      %3865 = vmatprep.subr.bf16.mxu0 %v2832
      %3866 = vmatpush2.bf16.msra.mxu0 %v2831
      %3867 = vmatprep.subr.bf16.mxu0 %v2828
      %3868 = vmatpush2.bf16.msra.mxu0 %v2827
      %3869 = vmatprep.mubr.bf16.mxu0 %v1008
      %3870 = vmatmul.mubr.bf16.gmra.mxu0 %v1007
      %v3871 = vpop.f32.mrf.mxu0
      %v3872 = vadd.f32 %v3799, %v3871
      %v3873 = vpop.f32.mrf.mxu0
      %v3874 = vadd.f32 %v3801, %v3873
      %v3875 = vpop.f32.mrf.mxu0
      %v3876 = vadd.f32 %v3803, %v3875
      %v3877 = vpop.f32.mrf.mxu0
      %v3878 = vadd.f32 %v3805, %v3877
      %3879 = vmatprep.mubr.bf16.mxu0 %v1024
      %3880 = vmatmul.mubr.bf16.gmra.mxu0 %v1023
      %v3881 = vpop.f32.mrf.mxu0
      %v3882 = vadd.f32 %v3809, %v3881
      %v3883 = vpop.f32.mrf.mxu0
      %v3884 = vadd.f32 %v3811, %v3883
      %v3885 = vpop.f32.mrf.mxu0
      %v3886 = vadd.f32 %v3813, %v3885
      %v3887 = vpop.f32.mrf.mxu0
      %v3888 = vadd.f32 %v3815, %v3887
      %3889 = vmatprep.mubr.bf16.mxu0 %v1040
      %3890 = vmatmul.mubr.bf16.gmra.mxu0 %v1039
      %v3891 = vpop.f32.mrf.mxu0
      %v3892 = vadd.f32 %v3819, %v3891
      %v3893 = vpop.f32.mrf.mxu0
      %v3894 = vadd.f32 %v3821, %v3893
      %v3895 = vpop.f32.mrf.mxu0
      %v3896 = vadd.f32 %v3823, %v3895
      %v3897 = vpop.f32.mrf.mxu0
      %v3898 = vadd.f32 %v3825, %v3897
      %3899 = vmatprep.mubr.bf16.mxu0 %v1056
      %3900 = vmatmul.mubr.bf16.gmra.mxu0 %v1055
      %v3901 = vpop.f32.mrf.mxu0
      %v3902 = vadd.f32 %v3829, %v3901
      %v3903 = vpop.f32.mrf.mxu0
      %v3904 = vadd.f32 %v3831, %v3903
      %v3905 = vpop.f32.mrf.mxu0
      %v3906 = vadd.f32 %v3833, %v3905
      %v3907 = vpop.f32.mrf.mxu0
      %v3908 = vadd.f32 %v3835, %v3907
      %3909 = vdwg.mxu0
      %3910 = vmatprep.subr.bf16.mxu0 %v2888
      %3911 = vmatpush1.bf16.msra.mxu0 %v2887
      %3912 = vmatprep.subr.bf16.mxu0 %v2884
      %3913 = vmatpush1.bf16.msra.mxu0 %v2883
      %3914 = vmatprep.subr.bf16.mxu0 %v2880
      %3915 = vmatpush1.bf16.msra.mxu0 %v2879
      %3916 = vmatprep.subr.bf16.mxu0 %v2876
      %3917 = vmatpush1.bf16.msra.mxu0 %v2875
      %3918 = vmatprep.subr.bf16.mxu0 %v2872
      %3919 = vmatpush1.bf16.msra.mxu0 %v2871
      %3920 = vmatprep.subr.bf16.mxu0 %v2868
      %3921 = vmatpush1.bf16.msra.mxu0 %v2867
      %3922 = vmatprep.subr.bf16.mxu0 %v2864
      %3923 = vmatpush1.bf16.msra.mxu0 %v2863
      %3924 = vmatprep.subr.bf16.mxu0 %v2860
      %3925 = vmatpush1.bf16.msra.mxu0 %v2859
      %3926 = vmatprep.subr.bf16.mxu0 %v2920
      %3927 = vmatpush2.bf16.msra.mxu0 %v2919
      %3928 = vmatprep.subr.bf16.mxu0 %v2916
      %3929 = vmatpush2.bf16.msra.mxu0 %v2915
      %3930 = vmatprep.subr.bf16.mxu0 %v2912
      %3931 = vmatpush2.bf16.msra.mxu0 %v2911
      %3932 = vmatprep.subr.bf16.mxu0 %v2908
      %3933 = vmatpush2.bf16.msra.mxu0 %v2907
      %3934 = vmatprep.subr.bf16.mxu0 %v2904
      %3935 = vmatpush2.bf16.msra.mxu0 %v2903
      %3936 = vmatprep.subr.bf16.mxu0 %v2900
      %3937 = vmatpush2.bf16.msra.mxu0 %v2899
      %3938 = vmatprep.subr.bf16.mxu0 %v2896
      %3939 = vmatpush2.bf16.msra.mxu0 %v2895
      %3940 = vmatprep.subr.bf16.mxu0 %v2892
      %3941 = vmatpush2.bf16.msra.mxu0 %v2891
      %3942 = vmatprep.mubr.bf16.mxu0 %v1010
      %3943 = vmatmul.mubr.bf16.gmra.mxu0 %v1009
      %v3944 = vpop.f32.mrf.mxu0
      %v3945 = vadd.f32 %v3872, %v3944
      %v3946 = vpop.f32.mrf.mxu0
      %v3947 = vadd.f32 %v3874, %v3946
      %v3948 = vpop.f32.mrf.mxu0
      %v3949 = vadd.f32 %v3876, %v3948
      %v3950 = vpop.f32.mrf.mxu0
      %v3951 = vadd.f32 %v3878, %v3950
      %3952 = vmatprep.mubr.bf16.mxu0 %v1026
      %3953 = vmatmul.mubr.bf16.gmra.mxu0 %v1025
      %v3954 = vpop.f32.mrf.mxu0
      %v3955 = vadd.f32 %v3882, %v3954
      %v3956 = vpop.f32.mrf.mxu0
      %v3957 = vadd.f32 %v3884, %v3956
      %v3958 = vpop.f32.mrf.mxu0
      %v3959 = vadd.f32 %v3886, %v3958
      %v3960 = vpop.f32.mrf.mxu0
      %v3961 = vadd.f32 %v3888, %v3960
      %3962 = vmatprep.mubr.bf16.mxu0 %v1042
      %3963 = vmatmul.mubr.bf16.gmra.mxu0 %v1041
      %v3964 = vpop.f32.mrf.mxu0
      %v3965 = vadd.f32 %v3892, %v3964
      %v3966 = vpop.f32.mrf.mxu0
      %v3967 = vadd.f32 %v3894, %v3966
      %v3968 = vpop.f32.mrf.mxu0
      %v3969 = vadd.f32 %v3896, %v3968
      %v3970 = vpop.f32.mrf.mxu0
      %v3971 = vadd.f32 %v3898, %v3970
      %3972 = vmatprep.mubr.bf16.mxu0 %v1058
      %3973 = vmatmul.mubr.bf16.gmra.mxu0 %v1057
      %v3974 = vpop.f32.mrf.mxu0
      %v3975 = vadd.f32 %v3902, %v3974
      %v3976 = vpop.f32.mrf.mxu0
      %v3977 = vadd.f32 %v3904, %v3976
      %v3978 = vpop.f32.mrf.mxu0
      %v3979 = vadd.f32 %v3906, %v3978
      %v3980 = vpop.f32.mrf.mxu0
      %v3981 = vadd.f32 %v3908, %v3980
      %3982 = vdwg.mxu0
      %3983 = vmatprep.subr.bf16.mxu0 %v2952
      %3984 = vmatpush1.bf16.msra.mxu0 %v2951
      %3985 = vmatprep.subr.bf16.mxu0 %v2948
      %3986 = vmatpush1.bf16.msra.mxu0 %v2947
      %3987 = vmatprep.subr.bf16.mxu0 %v2944
      %3988 = vmatpush1.bf16.msra.mxu0 %v2943
      %3989 = vmatprep.subr.bf16.mxu0 %v2940
      %3990 = vmatpush1.bf16.msra.mxu0 %v2939
      %3991 = vmatprep.subr.bf16.mxu0 %v2936
      %3992 = vmatpush1.bf16.msra.mxu0 %v2935
      %3993 = vmatprep.subr.bf16.mxu0 %v2932
      %3994 = vmatpush1.bf16.msra.mxu0 %v2931
      %3995 = vmatprep.subr.bf16.mxu0 %v2928
      %3996 = vmatpush1.bf16.msra.mxu0 %v2927
      %3997 = vmatprep.subr.bf16.mxu0 %v2924
      %3998 = vmatpush1.bf16.msra.mxu0 %v2923
      %3999 = vmatprep.subr.bf16.mxu0 %v2984
      %4000 = vmatpush2.bf16.msra.mxu0 %v2983
      %4001 = vmatprep.subr.bf16.mxu0 %v2980
      %4002 = vmatpush2.bf16.msra.mxu0 %v2979
      %4003 = vmatprep.subr.bf16.mxu0 %v2976
      %4004 = vmatpush2.bf16.msra.mxu0 %v2975
      %4005 = vmatprep.subr.bf16.mxu0 %v2972
      %4006 = vmatpush2.bf16.msra.mxu0 %v2971
      %4007 = vmatprep.subr.bf16.mxu0 %v2968
      %4008 = vmatpush2.bf16.msra.mxu0 %v2967
      %4009 = vmatprep.subr.bf16.mxu0 %v2964
      %4010 = vmatpush2.bf16.msra.mxu0 %v2963
      %4011 = vmatprep.subr.bf16.mxu0 %v2960
      %4012 = vmatpush2.bf16.msra.mxu0 %v2959
      %4013 = vmatprep.subr.bf16.mxu0 %v2956
      %4014 = vmatpush2.bf16.msra.mxu0 %v2955
      %4015 = vmatprep.mubr.bf16.mxu0 %v1012
      %4016 = vmatmul.mubr.bf16.gmra.mxu0 %v1011
      %v4017 = vpop.f32.mrf.mxu0
      %v4018 = vadd.f32 %v3945, %v4017
      %v4019 = vpop.f32.mrf.mxu0
      %v4020 = vadd.f32 %v3947, %v4019
      %v4021 = vpop.f32.mrf.mxu0
      %v4022 = vadd.f32 %v3949, %v4021
      %v4023 = vpop.f32.mrf.mxu0
      %v4024 = vadd.f32 %v3951, %v4023
      %4025 = vmatprep.mubr.bf16.mxu0 %v1028
      %4026 = vmatmul.mubr.bf16.gmra.mxu0 %v1027
      %v4027 = vpop.f32.mrf.mxu0
      %v4028 = vadd.f32 %v3955, %v4027
      %v4029 = vpop.f32.mrf.mxu0
      %v4030 = vadd.f32 %v3957, %v4029
      %v4031 = vpop.f32.mrf.mxu0
      %v4032 = vadd.f32 %v3959, %v4031
      %v4033 = vpop.f32.mrf.mxu0
      %v4034 = vadd.f32 %v3961, %v4033
      %4035 = vmatprep.mubr.bf16.mxu0 %v1044
      %4036 = vmatmul.mubr.bf16.gmra.mxu0 %v1043
      %v4037 = vpop.f32.mrf.mxu0
      %v4038 = vadd.f32 %v3965, %v4037
      %v4039 = vpop.f32.mrf.mxu0
      %v4040 = vadd.f32 %v3967, %v4039
      %v4041 = vpop.f32.mrf.mxu0
      %v4042 = vadd.f32 %v3969, %v4041
      %v4043 = vpop.f32.mrf.mxu0
      %v4044 = vadd.f32 %v3971, %v4043
      %4045 = vmatprep.mubr.bf16.mxu0 %v1060
      %4046 = vmatmul.mubr.bf16.gmra.mxu0 %v1059
      %v4047 = vpop.f32.mrf.mxu0
      %v4048 = vadd.f32 %v3975, %v4047
      %v4049 = vpop.f32.mrf.mxu0
      %v4050 = vadd.f32 %v3977, %v4049
      %v4051 = vpop.f32.mrf.mxu0
      %v4052 = vadd.f32 %v3979, %v4051
      %v4053 = vpop.f32.mrf.mxu0
      %v4054 = vadd.f32 %v3981, %v4053
      %4055 = vdwg.mxu0
      %4056 = vmatprep.subr.bf16.mxu0 %v3016
      %4057 = vmatpush1.bf16.msra.mxu0 %v3015
      %4058 = vmatprep.subr.bf16.mxu0 %v3012
      %4059 = vmatpush1.bf16.msra.mxu0 %v3011
      %4060 = vmatprep.subr.bf16.mxu0 %v3008
      %4061 = vmatpush1.bf16.msra.mxu0 %v3007
      %4062 = vmatprep.subr.bf16.mxu0 %v3004
      %4063 = vmatpush1.bf16.msra.mxu0 %v3003
      %4064 = vmatprep.subr.bf16.mxu0 %v3000
      %4065 = vmatpush1.bf16.msra.mxu0 %v2999
      %4066 = vmatprep.subr.bf16.mxu0 %v2996
      %4067 = vmatpush1.bf16.msra.mxu0 %v2995
      %4068 = vmatprep.subr.bf16.mxu0 %v2992
      %4069 = vmatpush1.bf16.msra.mxu0 %v2991
      %4070 = vmatprep.subr.bf16.mxu0 %v2988
      %4071 = vmatpush1.bf16.msra.mxu0 %v2987
      %4072 = vmatprep.subr.bf16.mxu0 %v3048
      %4073 = vmatpush2.bf16.msra.mxu0 %v3047
      %4074 = vmatprep.subr.bf16.mxu0 %v3044
      %4075 = vmatpush2.bf16.msra.mxu0 %v3043
      %4076 = vmatprep.subr.bf16.mxu0 %v3040
      %4077 = vmatpush2.bf16.msra.mxu0 %v3039
      %4078 = vmatprep.subr.bf16.mxu0 %v3036
      %4079 = vmatpush2.bf16.msra.mxu0 %v3035
      %4080 = vmatprep.subr.bf16.mxu0 %v3032
      %4081 = vmatpush2.bf16.msra.mxu0 %v3031
      %4082 = vmatprep.subr.bf16.mxu0 %v3028
      %4083 = vmatpush2.bf16.msra.mxu0 %v3027
      %4084 = vmatprep.subr.bf16.mxu0 %v3024
      %4085 = vmatpush2.bf16.msra.mxu0 %v3023
      %4086 = vmatprep.subr.bf16.mxu0 %v3020
      %4087 = vmatpush2.bf16.msra.mxu0 %v3019
      %4088 = vmatprep.mubr.bf16.mxu0 %v1014
      %4089 = vmatmul.mubr.bf16.gmra.mxu0 %v1013
      %v4090 = vpop.f32.mrf.mxu0
      %v4091 = vadd.f32 %v4018, %v4090
      %v4092 = vpop.f32.mrf.mxu0
      %v4093 = vadd.f32 %v4020, %v4092
      %v4094 = vpop.f32.mrf.mxu0
      %v4095 = vadd.f32 %v4022, %v4094
      %v4096 = vpop.f32.mrf.mxu0
      %v4097 = vadd.f32 %v4024, %v4096
      %4098 = vmatprep.mubr.bf16.mxu0 %v1030
      %4099 = vmatmul.mubr.bf16.gmra.mxu0 %v1029
      %v4100 = vpop.f32.mrf.mxu0
      %v4101 = vadd.f32 %v4028, %v4100
      %v4102 = vpop.f32.mrf.mxu0
      %v4103 = vadd.f32 %v4030, %v4102
      %v4104 = vpop.f32.mrf.mxu0
      %v4105 = vadd.f32 %v4032, %v4104
      %v4106 = vpop.f32.mrf.mxu0
      %v4107 = vadd.f32 %v4034, %v4106
      %4108 = vmatprep.mubr.bf16.mxu0 %v1046
      %4109 = vmatmul.mubr.bf16.gmra.mxu0 %v1045
      %v4110 = vpop.f32.mrf.mxu0
      %v4111 = vadd.f32 %v4038, %v4110
      %v4112 = vpop.f32.mrf.mxu0
      %v4113 = vadd.f32 %v4040, %v4112
      %v4114 = vpop.f32.mrf.mxu0
      %v4115 = vadd.f32 %v4042, %v4114
      %v4116 = vpop.f32.mrf.mxu0
      %v4117 = vadd.f32 %v4044, %v4116
      %4118 = vmatprep.mubr.bf16.mxu0 %v1062
      %4119 = vmatmul.mubr.bf16.gmra.mxu0 %v1061
      %v4120 = vpop.f32.mrf.mxu0
      %v4121 = vadd.f32 %v4048, %v4120
      %v4122 = vpop.f32.mrf.mxu0
      %v4123 = vadd.f32 %v4050, %v4122
      %v4124 = vpop.f32.mrf.mxu0
      %v4125 = vadd.f32 %v4052, %v4124
      %v4126 = vpop.f32.mrf.mxu0
      %v4127 = vadd.f32 %v4054, %v4126
      %4128 = vdwg.mxu0
      %4129 = vmatprep.subr.bf16.mxu0 %v3080
      %4130 = vmatpush1.bf16.msra.mxu0 %v3079
      %4131 = vmatprep.subr.bf16.mxu0 %v3076
      %4132 = vmatpush1.bf16.msra.mxu0 %v3075
      %4133 = vmatprep.subr.bf16.mxu0 %v3072
      %4134 = vmatpush1.bf16.msra.mxu0 %v3071
      %4135 = vmatprep.subr.bf16.mxu0 %v3068
      %4136 = vmatpush1.bf16.msra.mxu0 %v3067
      %4137 = vmatprep.subr.bf16.mxu0 %v3064
      %4138 = vmatpush1.bf16.msra.mxu0 %v3063
      %4139 = vmatprep.subr.bf16.mxu0 %v3060
      %4140 = vmatpush1.bf16.msra.mxu0 %v3059
      %4141 = vmatprep.subr.bf16.mxu0 %v3056
      %4142 = vmatpush1.bf16.msra.mxu0 %v3055
      %4143 = vmatprep.subr.bf16.mxu0 %v3052
      %4144 = vmatpush1.bf16.msra.mxu0 %v3051
      %4145 = vmatprep.subr.bf16.mxu0 %v3112
      %4146 = vmatpush2.bf16.msra.mxu0 %v3111
      %4147 = vmatprep.subr.bf16.mxu0 %v3108
      %4148 = vmatpush2.bf16.msra.mxu0 %v3107
      %4149 = vmatprep.subr.bf16.mxu0 %v3104
      %4150 = vmatpush2.bf16.msra.mxu0 %v3103
      %4151 = vmatprep.subr.bf16.mxu0 %v3100
      %4152 = vmatpush2.bf16.msra.mxu0 %v3099
      %4153 = vmatprep.subr.bf16.mxu0 %v3096
      %4154 = vmatpush2.bf16.msra.mxu0 %v3095
      %4155 = vmatprep.subr.bf16.mxu0 %v3092
      %4156 = vmatpush2.bf16.msra.mxu0 %v3091
      %4157 = vmatprep.subr.bf16.mxu0 %v3088
      %4158 = vmatpush2.bf16.msra.mxu0 %v3087
      %4159 = vmatprep.subr.bf16.mxu0 %v3084
      %4160 = vmatpush2.bf16.msra.mxu0 %v3083
      %4161 = vmatprep.mubr.bf16.mxu0 %v1016
      %4162 = vmatmul.mubr.bf16.gmra.mxu0 %v1015
      %v4163 = vpop.f32.mrf.mxu0
      %v4164 = vadd.f32 %v4091, %v4163
      %v4165 = vpop.f32.mrf.mxu0
      %v4166 = vadd.f32 %v4093, %v4165
      %v4167 = vpop.f32.mrf.mxu0
      %v4168 = vadd.f32 %v4095, %v4167
      %v4169 = vpop.f32.mrf.mxu0
      %v4170 = vadd.f32 %v4097, %v4169
      %4171 = vmatprep.mubr.bf16.mxu0 %v1032
      %4172 = vmatmul.mubr.bf16.gmra.mxu0 %v1031
      %v4173 = vpop.f32.mrf.mxu0
      %v4174 = vadd.f32 %v4101, %v4173
      %v4175 = vpop.f32.mrf.mxu0
      %v4176 = vadd.f32 %v4103, %v4175
      %v4177 = vpop.f32.mrf.mxu0
      %v4178 = vadd.f32 %v4105, %v4177
      %v4179 = vpop.f32.mrf.mxu0
      %v4180 = vadd.f32 %v4107, %v4179
      %4181 = vmatprep.mubr.bf16.mxu0 %v1048
      %4182 = vmatmul.mubr.bf16.gmra.mxu0 %v1047
      %v4183 = vpop.f32.mrf.mxu0
      %v4184 = vadd.f32 %v4111, %v4183
      %v4185 = vpop.f32.mrf.mxu0
      %v4186 = vadd.f32 %v4113, %v4185
      %v4187 = vpop.f32.mrf.mxu0
      %v4188 = vadd.f32 %v4115, %v4187
      %v4189 = vpop.f32.mrf.mxu0
      %v4190 = vadd.f32 %v4117, %v4189
      %4191 = vmatprep.mubr.bf16.mxu0 %v1064
      %4192 = vmatmul.mubr.bf16.gmra.mxu0 %v1063
      %v4193 = vpop.f32.mrf.mxu0
      %v4194 = vadd.f32 %v4121, %v4193
      %v4195 = vpop.f32.mrf.mxu0
      %v4196 = vadd.f32 %v4123, %v4195
      %v4197 = vpop.f32.mrf.mxu0
      %v4198 = vadd.f32 %v4125, %v4197
      %v4199 = vpop.f32.mrf.mxu0
      %v4200 = vadd.f32 %v4127, %v4199
      %4201 = vdwg.mxu0
      %4202 = vmatprep.subr.bf16.mxu0 %v3144
      %4203 = vmatpush1.bf16.msra.mxu0 %v3143
      %4204 = vmatprep.subr.bf16.mxu0 %v3140
      %4205 = vmatpush1.bf16.msra.mxu0 %v3139
      %4206 = vmatprep.subr.bf16.mxu0 %v3136
      %4207 = vmatpush1.bf16.msra.mxu0 %v3135
      %4208 = vmatprep.subr.bf16.mxu0 %v3132
      %4209 = vmatpush1.bf16.msra.mxu0 %v3131
      %4210 = vmatprep.subr.bf16.mxu0 %v3128
      %4211 = vmatpush1.bf16.msra.mxu0 %v3127
      %4212 = vmatprep.subr.bf16.mxu0 %v3124
      %4213 = vmatpush1.bf16.msra.mxu0 %v3123
      %4214 = vmatprep.subr.bf16.mxu0 %v3120
      %4215 = vmatpush1.bf16.msra.mxu0 %v3119
      %4216 = vmatprep.subr.bf16.mxu0 %v3116
      %4217 = vmatpush1.bf16.msra.mxu0 %v3115
      %4218 = vmatprep.subr.bf16.mxu0 %v3176
      %4219 = vmatpush2.bf16.msra.mxu0 %v3175
      %4220 = vmatprep.subr.bf16.mxu0 %v3172
      %4221 = vmatpush2.bf16.msra.mxu0 %v3171
      %4222 = vmatprep.subr.bf16.mxu0 %v3168
      %4223 = vmatpush2.bf16.msra.mxu0 %v3167
      %4224 = vmatprep.subr.bf16.mxu0 %v3164
      %4225 = vmatpush2.bf16.msra.mxu0 %v3163
      %4226 = vmatprep.subr.bf16.mxu0 %v3160
      %4227 = vmatpush2.bf16.msra.mxu0 %v3159
      %4228 = vmatprep.subr.bf16.mxu0 %v3156
      %4229 = vmatpush2.bf16.msra.mxu0 %v3155
      %4230 = vmatprep.subr.bf16.mxu0 %v3152
      %4231 = vmatpush2.bf16.msra.mxu0 %v3151
      %4232 = vmatprep.subr.bf16.mxu0 %v3148
      %4233 = vmatpush2.bf16.msra.mxu0 %v3147
      %4234 = vmatprep.mubr.bf16.mxu0 %v1018
      %4235 = vmatmul.mubr.bf16.gmra.mxu0 %v1017
      %v4236 = vpop.f32.mrf.mxu0
      %v4237 = vadd.f32 %v4164, %v4236
      %v4238 = vpop.f32.mrf.mxu0
      %v4239 = vadd.f32 %v4166, %v4238
      %v4240 = vpop.f32.mrf.mxu0
      %v4241 = vadd.f32 %v4168, %v4240
      %v4242 = vpop.f32.mrf.mxu0
      %v4243 = vadd.f32 %v4170, %v4242
      %4244 = vmatprep.mubr.bf16.mxu0 %v1034
      %4245 = vmatmul.mubr.bf16.gmra.mxu0 %v1033
      %v4246 = vpop.f32.mrf.mxu0
      %v4247 = vadd.f32 %v4174, %v4246
      %v4248 = vpop.f32.mrf.mxu0
      %v4249 = vadd.f32 %v4176, %v4248
      %v4250 = vpop.f32.mrf.mxu0
      %v4251 = vadd.f32 %v4178, %v4250
      %v4252 = vpop.f32.mrf.mxu0
      %v4253 = vadd.f32 %v4180, %v4252
      %4254 = vmatprep.mubr.bf16.mxu0 %v1050
      %4255 = vmatmul.mubr.bf16.gmra.mxu0 %v1049
      %v4256 = vpop.f32.mrf.mxu0
      %v4257 = vadd.f32 %v4184, %v4256
      %v4258 = vpop.f32.mrf.mxu0
      %v4259 = vadd.f32 %v4186, %v4258
      %v4260 = vpop.f32.mrf.mxu0
      %v4261 = vadd.f32 %v4188, %v4260
      %v4262 = vpop.f32.mrf.mxu0
      %v4263 = vadd.f32 %v4190, %v4262
      %4264 = vmatprep.mubr.bf16.mxu0 %v1066
      %4265 = vmatmul.mubr.bf16.gmra.mxu0 %v1065
      %v4266 = vpop.f32.mrf.mxu0
      %v4267 = vadd.f32 %v4194, %v4266
      %v4268 = vpop.f32.mrf.mxu0
      %v4269 = vadd.f32 %v4196, %v4268
      %v4270 = vpop.f32.mrf.mxu0
      %v4271 = vadd.f32 %v4198, %v4270
      %v4272 = vpop.f32.mrf.mxu0
      %v4273 = vadd.f32 %v4200, %v4272
      %4274 = vdwg.mxu0
      %4275 = vmatprep.subr.bf16.mxu0 %v2698
      %4276 = vmatpush1.bf16.msra.mxu0 %v2697
      %4277 = vmatprep.subr.bf16.mxu0 %v2694
      %4278 = vmatpush1.bf16.msra.mxu0 %v2693
      %4279 = vmatprep.subr.bf16.mxu0 %v2690
      %4280 = vmatpush1.bf16.msra.mxu0 %v2689
      %4281 = vmatprep.subr.bf16.mxu0 %v2686
      %4282 = vmatpush1.bf16.msra.mxu0 %v2685
      %4283 = vmatprep.subr.bf16.mxu0 %v2682
      %4284 = vmatpush1.bf16.msra.mxu0 %v2681
      %4285 = vmatprep.subr.bf16.mxu0 %v2678
      %4286 = vmatpush1.bf16.msra.mxu0 %v2677
      %4287 = vmatprep.subr.bf16.mxu0 %v2674
      %4288 = vmatpush1.bf16.msra.mxu0 %v2673
      %4289 = vmatprep.subr.bf16.mxu0 %v2670
      %4290 = vmatpush1.bf16.msra.mxu0 %v2669
      %4291 = vmatprep.subr.bf16.mxu0 %v2730
      %4292 = vmatpush2.bf16.msra.mxu0 %v2729
      %4293 = vmatprep.subr.bf16.mxu0 %v2726
      %4294 = vmatpush2.bf16.msra.mxu0 %v2725
      %4295 = vmatprep.subr.bf16.mxu0 %v2722
      %4296 = vmatpush2.bf16.msra.mxu0 %v2721
      %4297 = vmatprep.subr.bf16.mxu0 %v2718
      %4298 = vmatpush2.bf16.msra.mxu0 %v2717
      %4299 = vmatprep.subr.bf16.mxu0 %v2714
      %4300 = vmatpush2.bf16.msra.mxu0 %v2713
      %4301 = vmatprep.subr.bf16.mxu0 %v2710
      %4302 = vmatpush2.bf16.msra.mxu0 %v2709
      %4303 = vmatprep.subr.bf16.mxu0 %v2706
      %4304 = vmatpush2.bf16.msra.mxu0 %v2705
      %4305 = vmatprep.subr.bf16.mxu0 %v2702
      %4306 = vmatpush2.bf16.msra.mxu0 %v2701
      %4307 = vmatprep.mubr.bf16.mxu0 %v1004
      %4308 = vmatmul.mubr.bf16.gmra.mxu0 %v1003
      %v4309 = vpop.f32.mrf.mxu0
      %v4310 = vadd.f32 %v802, %v4309
      %v4311 = vpop.f32.mrf.mxu0
      %v4312 = vadd.f32 %v806, %v4311
      %v4313 = vpop.f32.mrf.mxu0
      %v4314 = vadd.f32 %v802, %v4313
      %v4315 = vpop.f32.mrf.mxu0
      %v4316 = vadd.f32 %v806, %v4315
      %4317 = vmatprep.mubr.bf16.mxu0 %v1020
      %4318 = vmatmul.mubr.bf16.gmra.mxu0 %v1019
      %v4319 = vpop.f32.mrf.mxu0
      %v4320 = vadd.f32 %v802, %v4319
      %v4321 = vpop.f32.mrf.mxu0
      %v4322 = vadd.f32 %v806, %v4321
      %v4323 = vpop.f32.mrf.mxu0
      %v4324 = vadd.f32 %v802, %v4323
      %v4325 = vpop.f32.mrf.mxu0
      %v4326 = vadd.f32 %v806, %v4325
      %4327 = vmatprep.mubr.bf16.mxu0 %v1036
      %4328 = vmatmul.mubr.bf16.gmra.mxu0 %v1035
      %v4329 = vpop.f32.mrf.mxu0
      %v4330 = vadd.f32 %v802, %v4329
      %v4331 = vpop.f32.mrf.mxu0
      %v4332 = vadd.f32 %v806, %v4331
      %v4333 = vpop.f32.mrf.mxu0
      %v4334 = vadd.f32 %v802, %v4333
      %v4335 = vpop.f32.mrf.mxu0
      %v4336 = vadd.f32 %v806, %v4335
      %4337 = vmatprep.mubr.bf16.mxu0 %v1052
      %4338 = vmatmul.mubr.bf16.gmra.mxu0 %v1051
      %v4339 = vpop.f32.mrf.mxu0
      %v4340 = vadd.f32 %v802, %v4339
      %v4341 = vpop.f32.mrf.mxu0
      %v4342 = vadd.f32 %v806, %v4341
      %v4343 = vpop.f32.mrf.mxu0
      %v4344 = vadd.f32 %v802, %v4343
      %v4345 = vpop.f32.mrf.mxu0
      %v4346 = vadd.f32 %v806, %v4345
      %4347 = vdwg.mxu0
      %4348 = vmatprep.subr.bf16.mxu0 %v2762
      %4349 = vmatpush1.bf16.msra.mxu0 %v2761
      %4350 = vmatprep.subr.bf16.mxu0 %v2758
      %4351 = vmatpush1.bf16.msra.mxu0 %v2757
      %4352 = vmatprep.subr.bf16.mxu0 %v2754
      %4353 = vmatpush1.bf16.msra.mxu0 %v2753
      %4354 = vmatprep.subr.bf16.mxu0 %v2750
      %4355 = vmatpush1.bf16.msra.mxu0 %v2749
      %4356 = vmatprep.subr.bf16.mxu0 %v2746
      %4357 = vmatpush1.bf16.msra.mxu0 %v2745
      %4358 = vmatprep.subr.bf16.mxu0 %v2742
      %4359 = vmatpush1.bf16.msra.mxu0 %v2741
      %4360 = vmatprep.subr.bf16.mxu0 %v2738
      %4361 = vmatpush1.bf16.msra.mxu0 %v2737
      %4362 = vmatprep.subr.bf16.mxu0 %v2734
      %4363 = vmatpush1.bf16.msra.mxu0 %v2733
      %4364 = vmatprep.subr.bf16.mxu0 %v2794
      %4365 = vmatpush2.bf16.msra.mxu0 %v2793
      %4366 = vmatprep.subr.bf16.mxu0 %v2790
      %4367 = vmatpush2.bf16.msra.mxu0 %v2789
      %4368 = vmatprep.subr.bf16.mxu0 %v2786
      %4369 = vmatpush2.bf16.msra.mxu0 %v2785
      %4370 = vmatprep.subr.bf16.mxu0 %v2782
      %4371 = vmatpush2.bf16.msra.mxu0 %v2781
      %4372 = vmatprep.subr.bf16.mxu0 %v2778
      %4373 = vmatpush2.bf16.msra.mxu0 %v2777
      %4374 = vmatprep.subr.bf16.mxu0 %v2774
      %4375 = vmatpush2.bf16.msra.mxu0 %v2773
      %4376 = vmatprep.subr.bf16.mxu0 %v2770
      %4377 = vmatpush2.bf16.msra.mxu0 %v2769
      %4378 = vmatprep.subr.bf16.mxu0 %v2766
      %4379 = vmatpush2.bf16.msra.mxu0 %v2765
      %4380 = vmatprep.mubr.bf16.mxu0 %v1006
      %4381 = vmatmul.mubr.bf16.gmra.mxu0 %v1005
      %v4382 = vpop.f32.mrf.mxu0
      %v4383 = vadd.f32 %v4310, %v4382
      %v4384 = vpop.f32.mrf.mxu0
      %v4385 = vadd.f32 %v4312, %v4384
      %v4386 = vpop.f32.mrf.mxu0
      %v4387 = vadd.f32 %v4314, %v4386
      %v4388 = vpop.f32.mrf.mxu0
      %v4389 = vadd.f32 %v4316, %v4388
      %4390 = vmatprep.mubr.bf16.mxu0 %v1022
      %4391 = vmatmul.mubr.bf16.gmra.mxu0 %v1021
      %v4392 = vpop.f32.mrf.mxu0
      %v4393 = vadd.f32 %v4320, %v4392
      %v4394 = vpop.f32.mrf.mxu0
      %v4395 = vadd.f32 %v4322, %v4394
      %v4396 = vpop.f32.mrf.mxu0
      %v4397 = vadd.f32 %v4324, %v4396
      %v4398 = vpop.f32.mrf.mxu0
      %v4399 = vadd.f32 %v4326, %v4398
      %4400 = vmatprep.mubr.bf16.mxu0 %v1038
      %4401 = vmatmul.mubr.bf16.gmra.mxu0 %v1037
      %v4402 = vpop.f32.mrf.mxu0
      %v4403 = vadd.f32 %v4330, %v4402
      %v4404 = vpop.f32.mrf.mxu0
      %v4405 = vadd.f32 %v4332, %v4404
      %v4406 = vpop.f32.mrf.mxu0
      %v4407 = vadd.f32 %v4334, %v4406
      %v4408 = vpop.f32.mrf.mxu0
      %v4409 = vadd.f32 %v4336, %v4408
      %4410 = vmatprep.mubr.bf16.mxu0 %v1054
      %4411 = vmatmul.mubr.bf16.gmra.mxu0 %v1053
      %v4412 = vpop.f32.mrf.mxu0
      %v4413 = vadd.f32 %v4340, %v4412
      %v4414 = vpop.f32.mrf.mxu0
      %v4415 = vadd.f32 %v4342, %v4414
      %v4416 = vpop.f32.mrf.mxu0
      %v4417 = vadd.f32 %v4344, %v4416
      %v4418 = vpop.f32.mrf.mxu0
      %v4419 = vadd.f32 %v4346, %v4418
      %4420 = vdwg.mxu0
      %4421 = vmatprep.subr.bf16.mxu0 %v2826
      %4422 = vmatpush1.bf16.msra.mxu0 %v2825
      %4423 = vmatprep.subr.bf16.mxu0 %v2822
      %4424 = vmatpush1.bf16.msra.mxu0 %v2821
      %4425 = vmatprep.subr.bf16.mxu0 %v2818
      %4426 = vmatpush1.bf16.msra.mxu0 %v2817
      %4427 = vmatprep.subr.bf16.mxu0 %v2814
      %4428 = vmatpush1.bf16.msra.mxu0 %v2813
      %4429 = vmatprep.subr.bf16.mxu0 %v2810
      %4430 = vmatpush1.bf16.msra.mxu0 %v2809
      %4431 = vmatprep.subr.bf16.mxu0 %v2806
      %4432 = vmatpush1.bf16.msra.mxu0 %v2805
      %4433 = vmatprep.subr.bf16.mxu0 %v2802
      %4434 = vmatpush1.bf16.msra.mxu0 %v2801
      %4435 = vmatprep.subr.bf16.mxu0 %v2798
      %4436 = vmatpush1.bf16.msra.mxu0 %v2797
      %4437 = vmatprep.subr.bf16.mxu0 %v2858
      %4438 = vmatpush2.bf16.msra.mxu0 %v2857
      %4439 = vmatprep.subr.bf16.mxu0 %v2854
      %4440 = vmatpush2.bf16.msra.mxu0 %v2853
      %4441 = vmatprep.subr.bf16.mxu0 %v2850
      %4442 = vmatpush2.bf16.msra.mxu0 %v2849
      %4443 = vmatprep.subr.bf16.mxu0 %v2846
      %4444 = vmatpush2.bf16.msra.mxu0 %v2845
      %4445 = vmatprep.subr.bf16.mxu0 %v2842
      %4446 = vmatpush2.bf16.msra.mxu0 %v2841
      %4447 = vmatprep.subr.bf16.mxu0 %v2838
      %4448 = vmatpush2.bf16.msra.mxu0 %v2837
      %4449 = vmatprep.subr.bf16.mxu0 %v2834
      %4450 = vmatpush2.bf16.msra.mxu0 %v2833
      %4451 = vmatprep.subr.bf16.mxu0 %v2830
      %4452 = vmatpush2.bf16.msra.mxu0 %v2829
      %4453 = vmatprep.mubr.bf16.mxu0 %v1008
      %4454 = vmatmul.mubr.bf16.gmra.mxu0 %v1007
      %v4455 = vpop.f32.mrf.mxu0
      %v4456 = vadd.f32 %v4383, %v4455
      %v4457 = vpop.f32.mrf.mxu0
      %v4458 = vadd.f32 %v4385, %v4457
      %v4459 = vpop.f32.mrf.mxu0
      %v4460 = vadd.f32 %v4387, %v4459
      %v4461 = vpop.f32.mrf.mxu0
      %v4462 = vadd.f32 %v4389, %v4461
      %4463 = vmatprep.mubr.bf16.mxu0 %v1024
      %4464 = vmatmul.mubr.bf16.gmra.mxu0 %v1023
      %v4465 = vpop.f32.mrf.mxu0
      %v4466 = vadd.f32 %v4393, %v4465
      %v4467 = vpop.f32.mrf.mxu0
      %v4468 = vadd.f32 %v4395, %v4467
      %v4469 = vpop.f32.mrf.mxu0
      %v4470 = vadd.f32 %v4397, %v4469
      %v4471 = vpop.f32.mrf.mxu0
      %v4472 = vadd.f32 %v4399, %v4471
      %4473 = vmatprep.mubr.bf16.mxu0 %v1040
      %4474 = vmatmul.mubr.bf16.gmra.mxu0 %v1039
      %v4475 = vpop.f32.mrf.mxu0
      %v4476 = vadd.f32 %v4403, %v4475
      %v4477 = vpop.f32.mrf.mxu0
      %v4478 = vadd.f32 %v4405, %v4477
      %v4479 = vpop.f32.mrf.mxu0
      %v4480 = vadd.f32 %v4407, %v4479
      %v4481 = vpop.f32.mrf.mxu0
      %v4482 = vadd.f32 %v4409, %v4481
      %4483 = vmatprep.mubr.bf16.mxu0 %v1056
      %4484 = vmatmul.mubr.bf16.gmra.mxu0 %v1055
      %v4485 = vpop.f32.mrf.mxu0
      %v4486 = vadd.f32 %v4413, %v4485
      %v4487 = vpop.f32.mrf.mxu0
      %v4488 = vadd.f32 %v4415, %v4487
      %v4489 = vpop.f32.mrf.mxu0
      %v4490 = vadd.f32 %v4417, %v4489
      %v4491 = vpop.f32.mrf.mxu0
      %v4492 = vadd.f32 %v4419, %v4491
      %4493 = vdwg.mxu0
      %4494 = vmatprep.subr.bf16.mxu0 %v2890
      %4495 = vmatpush1.bf16.msra.mxu0 %v2889
      %4496 = vmatprep.subr.bf16.mxu0 %v2886
      %4497 = vmatpush1.bf16.msra.mxu0 %v2885
      %4498 = vmatprep.subr.bf16.mxu0 %v2882
      %4499 = vmatpush1.bf16.msra.mxu0 %v2881
      %4500 = vmatprep.subr.bf16.mxu0 %v2878
      %4501 = vmatpush1.bf16.msra.mxu0 %v2877
      %4502 = vmatprep.subr.bf16.mxu0 %v2874
      %4503 = vmatpush1.bf16.msra.mxu0 %v2873
      %4504 = vmatprep.subr.bf16.mxu0 %v2870
      %4505 = vmatpush1.bf16.msra.mxu0 %v2869
      %4506 = vmatprep.subr.bf16.mxu0 %v2866
      %4507 = vmatpush1.bf16.msra.mxu0 %v2865
      %4508 = vmatprep.subr.bf16.mxu0 %v2862
      %4509 = vmatpush1.bf16.msra.mxu0 %v2861
      %4510 = vmatprep.subr.bf16.mxu0 %v2922
      %4511 = vmatpush2.bf16.msra.mxu0 %v2921
      %4512 = vmatprep.subr.bf16.mxu0 %v2918
      %4513 = vmatpush2.bf16.msra.mxu0 %v2917
      %4514 = vmatprep.subr.bf16.mxu0 %v2914
      %4515 = vmatpush2.bf16.msra.mxu0 %v2913
      %4516 = vmatprep.subr.bf16.mxu0 %v2910
      %4517 = vmatpush2.bf16.msra.mxu0 %v2909
      %4518 = vmatprep.subr.bf16.mxu0 %v2906
      %4519 = vmatpush2.bf16.msra.mxu0 %v2905
      %4520 = vmatprep.subr.bf16.mxu0 %v2902
      %4521 = vmatpush2.bf16.msra.mxu0 %v2901
      %4522 = vmatprep.subr.bf16.mxu0 %v2898
      %4523 = vmatpush2.bf16.msra.mxu0 %v2897
      %4524 = vmatprep.subr.bf16.mxu0 %v2894
      %4525 = vmatpush2.bf16.msra.mxu0 %v2893
      %4526 = vmatprep.mubr.bf16.mxu0 %v1010
      %4527 = vmatmul.mubr.bf16.gmra.mxu0 %v1009
      %v4528 = vpop.f32.mrf.mxu0
      %v4529 = vadd.f32 %v4456, %v4528
      %v4530 = vpop.f32.mrf.mxu0
      %v4531 = vadd.f32 %v4458, %v4530
      %v4532 = vpop.f32.mrf.mxu0
      %v4533 = vadd.f32 %v4460, %v4532
      %v4534 = vpop.f32.mrf.mxu0
      %v4535 = vadd.f32 %v4462, %v4534
      %4536 = vmatprep.mubr.bf16.mxu0 %v1026
      %4537 = vmatmul.mubr.bf16.gmra.mxu0 %v1025
      %v4538 = vpop.f32.mrf.mxu0
      %v4539 = vadd.f32 %v4466, %v4538
      %v4540 = vpop.f32.mrf.mxu0
      %v4541 = vadd.f32 %v4468, %v4540
      %v4542 = vpop.f32.mrf.mxu0
      %v4543 = vadd.f32 %v4470, %v4542
      %v4544 = vpop.f32.mrf.mxu0
      %v4545 = vadd.f32 %v4472, %v4544
      %4546 = vmatprep.mubr.bf16.mxu0 %v1042
      %4547 = vmatmul.mubr.bf16.gmra.mxu0 %v1041
      %v4548 = vpop.f32.mrf.mxu0
      %v4549 = vadd.f32 %v4476, %v4548
      %v4550 = vpop.f32.mrf.mxu0
      %v4551 = vadd.f32 %v4478, %v4550
      %v4552 = vpop.f32.mrf.mxu0
      %v4553 = vadd.f32 %v4480, %v4552
      %v4554 = vpop.f32.mrf.mxu0
      %v4555 = vadd.f32 %v4482, %v4554
      %4556 = vmatprep.mubr.bf16.mxu0 %v1058
      %4557 = vmatmul.mubr.bf16.gmra.mxu0 %v1057
      %v4558 = vpop.f32.mrf.mxu0
      %v4559 = vadd.f32 %v4486, %v4558
      %v4560 = vpop.f32.mrf.mxu0
      %v4561 = vadd.f32 %v4488, %v4560
      %v4562 = vpop.f32.mrf.mxu0
      %v4563 = vadd.f32 %v4490, %v4562
      %v4564 = vpop.f32.mrf.mxu0
      %v4565 = vadd.f32 %v4492, %v4564
      %4566 = vdwg.mxu0
      %4567 = vmatprep.subr.bf16.mxu0 %v2954
      %4568 = vmatpush1.bf16.msra.mxu0 %v2953
      %4569 = vmatprep.subr.bf16.mxu0 %v2950
      %4570 = vmatpush1.bf16.msra.mxu0 %v2949
      %4571 = vmatprep.subr.bf16.mxu0 %v2946
      %4572 = vmatpush1.bf16.msra.mxu0 %v2945
      %4573 = vmatprep.subr.bf16.mxu0 %v2942
      %4574 = vmatpush1.bf16.msra.mxu0 %v2941
      %4575 = vmatprep.subr.bf16.mxu0 %v2938
      %4576 = vmatpush1.bf16.msra.mxu0 %v2937
      %4577 = vmatprep.subr.bf16.mxu0 %v2934
      %4578 = vmatpush1.bf16.msra.mxu0 %v2933
      %4579 = vmatprep.subr.bf16.mxu0 %v2930
      %4580 = vmatpush1.bf16.msra.mxu0 %v2929
      %4581 = vmatprep.subr.bf16.mxu0 %v2926
      %4582 = vmatpush1.bf16.msra.mxu0 %v2925
      %4583 = vmatprep.subr.bf16.mxu0 %v2986
      %4584 = vmatpush2.bf16.msra.mxu0 %v2985
      %4585 = vmatprep.subr.bf16.mxu0 %v2982
      %4586 = vmatpush2.bf16.msra.mxu0 %v2981
      %4587 = vmatprep.subr.bf16.mxu0 %v2978
      %4588 = vmatpush2.bf16.msra.mxu0 %v2977
      %4589 = vmatprep.subr.bf16.mxu0 %v2974
      %4590 = vmatpush2.bf16.msra.mxu0 %v2973
      %4591 = vmatprep.subr.bf16.mxu0 %v2970
      %4592 = vmatpush2.bf16.msra.mxu0 %v2969
      %4593 = vmatprep.subr.bf16.mxu0 %v2966
      %4594 = vmatpush2.bf16.msra.mxu0 %v2965
      %4595 = vmatprep.subr.bf16.mxu0 %v2962
      %4596 = vmatpush2.bf16.msra.mxu0 %v2961
      %4597 = vmatprep.subr.bf16.mxu0 %v2958
      %4598 = vmatpush2.bf16.msra.mxu0 %v2957
      %4599 = vmatprep.mubr.bf16.mxu0 %v1012
      %4600 = vmatmul.mubr.bf16.gmra.mxu0 %v1011
      %v4601 = vpop.f32.mrf.mxu0
      %v4602 = vadd.f32 %v4529, %v4601
      %v4603 = vpop.f32.mrf.mxu0
      %v4604 = vadd.f32 %v4531, %v4603
      %v4605 = vpop.f32.mrf.mxu0
      %v4606 = vadd.f32 %v4533, %v4605
      %v4607 = vpop.f32.mrf.mxu0
      %v4608 = vadd.f32 %v4535, %v4607
      %4609 = vmatprep.mubr.bf16.mxu0 %v1028
      %4610 = vmatmul.mubr.bf16.gmra.mxu0 %v1027
      %v4611 = vpop.f32.mrf.mxu0
      %v4612 = vadd.f32 %v4539, %v4611
      %v4613 = vpop.f32.mrf.mxu0
      %v4614 = vadd.f32 %v4541, %v4613
      %v4615 = vpop.f32.mrf.mxu0
      %v4616 = vadd.f32 %v4543, %v4615
      %v4617 = vpop.f32.mrf.mxu0
      %v4618 = vadd.f32 %v4545, %v4617
      %4619 = vmatprep.mubr.bf16.mxu0 %v1044
      %4620 = vmatmul.mubr.bf16.gmra.mxu0 %v1043
      %v4621 = vpop.f32.mrf.mxu0
      %v4622 = vadd.f32 %v4549, %v4621
      %v4623 = vpop.f32.mrf.mxu0
      %v4624 = vadd.f32 %v4551, %v4623
      %v4625 = vpop.f32.mrf.mxu0
      %v4626 = vadd.f32 %v4553, %v4625
      %v4627 = vpop.f32.mrf.mxu0
      %v4628 = vadd.f32 %v4555, %v4627
      %4629 = vmatprep.mubr.bf16.mxu0 %v1060
      %4630 = vmatmul.mubr.bf16.gmra.mxu0 %v1059
      %v4631 = vpop.f32.mrf.mxu0
      %v4632 = vadd.f32 %v4559, %v4631
      %v4633 = vpop.f32.mrf.mxu0
      %v4634 = vadd.f32 %v4561, %v4633
      %v4635 = vpop.f32.mrf.mxu0
      %v4636 = vadd.f32 %v4563, %v4635
      %v4637 = vpop.f32.mrf.mxu0
      %v4638 = vadd.f32 %v4565, %v4637
      %4639 = vdwg.mxu0
      %4640 = vmatprep.subr.bf16.mxu0 %v3018
      %4641 = vmatpush1.bf16.msra.mxu0 %v3017
      %4642 = vmatprep.subr.bf16.mxu0 %v3014
      %4643 = vmatpush1.bf16.msra.mxu0 %v3013
      %4644 = vmatprep.subr.bf16.mxu0 %v3010
      %4645 = vmatpush1.bf16.msra.mxu0 %v3009
      %4646 = vmatprep.subr.bf16.mxu0 %v3006
      %4647 = vmatpush1.bf16.msra.mxu0 %v3005
      %4648 = vmatprep.subr.bf16.mxu0 %v3002
      %4649 = vmatpush1.bf16.msra.mxu0 %v3001
      %4650 = vmatprep.subr.bf16.mxu0 %v2998
      %4651 = vmatpush1.bf16.msra.mxu0 %v2997
      %4652 = vmatprep.subr.bf16.mxu0 %v2994
      %4653 = vmatpush1.bf16.msra.mxu0 %v2993
      %4654 = vmatprep.subr.bf16.mxu0 %v2990
      %4655 = vmatpush1.bf16.msra.mxu0 %v2989
      %4656 = vmatprep.subr.bf16.mxu0 %v3050
      %4657 = vmatpush2.bf16.msra.mxu0 %v3049
      %4658 = vmatprep.subr.bf16.mxu0 %v3046
      %4659 = vmatpush2.bf16.msra.mxu0 %v3045
      %4660 = vmatprep.subr.bf16.mxu0 %v3042
      %4661 = vmatpush2.bf16.msra.mxu0 %v3041
      %4662 = vmatprep.subr.bf16.mxu0 %v3038
      %4663 = vmatpush2.bf16.msra.mxu0 %v3037
      %4664 = vmatprep.subr.bf16.mxu0 %v3034
      %4665 = vmatpush2.bf16.msra.mxu0 %v3033
      %4666 = vmatprep.subr.bf16.mxu0 %v3030
      %4667 = vmatpush2.bf16.msra.mxu0 %v3029
      %4668 = vmatprep.subr.bf16.mxu0 %v3026
      %4669 = vmatpush2.bf16.msra.mxu0 %v3025
      %4670 = vmatprep.subr.bf16.mxu0 %v3022
      %4671 = vmatpush2.bf16.msra.mxu0 %v3021
      %4672 = vmatprep.mubr.bf16.mxu0 %v1014
      %4673 = vmatmul.mubr.bf16.gmra.mxu0 %v1013
      %v4674 = vpop.f32.mrf.mxu0
      %v4675 = vadd.f32 %v4602, %v4674
      %v4676 = vpop.f32.mrf.mxu0
      %v4677 = vadd.f32 %v4604, %v4676
      %v4678 = vpop.f32.mrf.mxu0
      %v4679 = vadd.f32 %v4606, %v4678
      %v4680 = vpop.f32.mrf.mxu0
      %v4681 = vadd.f32 %v4608, %v4680
      %4682 = vmatprep.mubr.bf16.mxu0 %v1030
      %4683 = vmatmul.mubr.bf16.gmra.mxu0 %v1029
      %v4684 = vpop.f32.mrf.mxu0
      %v4685 = vadd.f32 %v4612, %v4684
      %v4686 = vpop.f32.mrf.mxu0
      %v4687 = vadd.f32 %v4614, %v4686
      %v4688 = vpop.f32.mrf.mxu0
      %v4689 = vadd.f32 %v4616, %v4688
      %v4690 = vpop.f32.mrf.mxu0
      %v4691 = vadd.f32 %v4618, %v4690
      %4692 = vmatprep.mubr.bf16.mxu0 %v1046
      %4693 = vmatmul.mubr.bf16.gmra.mxu0 %v1045
      %v4694 = vpop.f32.mrf.mxu0
      %v4695 = vadd.f32 %v4622, %v4694
      %v4696 = vpop.f32.mrf.mxu0
      %v4697 = vadd.f32 %v4624, %v4696
      %v4698 = vpop.f32.mrf.mxu0
      %v4699 = vadd.f32 %v4626, %v4698
      %v4700 = vpop.f32.mrf.mxu0
      %v4701 = vadd.f32 %v4628, %v4700
      %4702 = vmatprep.mubr.bf16.mxu0 %v1062
      %4703 = vmatmul.mubr.bf16.gmra.mxu0 %v1061
      %v4704 = vpop.f32.mrf.mxu0
      %v4705 = vadd.f32 %v4632, %v4704
      %v4706 = vpop.f32.mrf.mxu0
      %v4707 = vadd.f32 %v4634, %v4706
      %v4708 = vpop.f32.mrf.mxu0
      %v4709 = vadd.f32 %v4636, %v4708
      %v4710 = vpop.f32.mrf.mxu0
      %v4711 = vadd.f32 %v4638, %v4710
      %4712 = vdwg.mxu0
      %4713 = vmatprep.subr.bf16.mxu0 %v3082
      %4714 = vmatpush1.bf16.msra.mxu0 %v3081
      %4715 = vmatprep.subr.bf16.mxu0 %v3078
      %4716 = vmatpush1.bf16.msra.mxu0 %v3077
      %4717 = vmatprep.subr.bf16.mxu0 %v3074
      %4718 = vmatpush1.bf16.msra.mxu0 %v3073
      %4719 = vmatprep.subr.bf16.mxu0 %v3070
      %4720 = vmatpush1.bf16.msra.mxu0 %v3069
      %4721 = vmatprep.subr.bf16.mxu0 %v3066
      %4722 = vmatpush1.bf16.msra.mxu0 %v3065
      %4723 = vmatprep.subr.bf16.mxu0 %v3062
      %4724 = vmatpush1.bf16.msra.mxu0 %v3061
      %4725 = vmatprep.subr.bf16.mxu0 %v3058
      %4726 = vmatpush1.bf16.msra.mxu0 %v3057
      %4727 = vmatprep.subr.bf16.mxu0 %v3054
      %4728 = vmatpush1.bf16.msra.mxu0 %v3053
      %4729 = vmatprep.subr.bf16.mxu0 %v3114
      %4730 = vmatpush2.bf16.msra.mxu0 %v3113
      %4731 = vmatprep.subr.bf16.mxu0 %v3110
      %4732 = vmatpush2.bf16.msra.mxu0 %v3109
      %4733 = vmatprep.subr.bf16.mxu0 %v3106
      %4734 = vmatpush2.bf16.msra.mxu0 %v3105
      %4735 = vmatprep.subr.bf16.mxu0 %v3102
      %4736 = vmatpush2.bf16.msra.mxu0 %v3101
      %4737 = vmatprep.subr.bf16.mxu0 %v3098
      %4738 = vmatpush2.bf16.msra.mxu0 %v3097
      %4739 = vmatprep.subr.bf16.mxu0 %v3094
      %4740 = vmatpush2.bf16.msra.mxu0 %v3093
      %4741 = vmatprep.subr.bf16.mxu0 %v3090
      %4742 = vmatpush2.bf16.msra.mxu0 %v3089
      %4743 = vmatprep.subr.bf16.mxu0 %v3086
      %4744 = vmatpush2.bf16.msra.mxu0 %v3085
      %4745 = vmatprep.mubr.bf16.mxu0 %v1016
      %4746 = vmatmul.mubr.bf16.gmra.mxu0 %v1015
      %v4747 = vpop.f32.mrf.mxu0
      %v4748 = vadd.f32 %v4675, %v4747
      %v4749 = vpop.f32.mrf.mxu0
      %v4750 = vadd.f32 %v4677, %v4749
      %v4751 = vpop.f32.mrf.mxu0
      %v4752 = vadd.f32 %v4679, %v4751
      %v4753 = vpop.f32.mrf.mxu0
      %v4754 = vadd.f32 %v4681, %v4753
      %4755 = vmatprep.mubr.bf16.mxu0 %v1032
      %4756 = vmatmul.mubr.bf16.gmra.mxu0 %v1031
      %v4757 = vpop.f32.mrf.mxu0
      %v4758 = vadd.f32 %v4685, %v4757
      %v4759 = vpop.f32.mrf.mxu0
      %v4760 = vadd.f32 %v4687, %v4759
      %v4761 = vpop.f32.mrf.mxu0
      %v4762 = vadd.f32 %v4689, %v4761
      %v4763 = vpop.f32.mrf.mxu0
      %v4764 = vadd.f32 %v4691, %v4763
      %4765 = vmatprep.mubr.bf16.mxu0 %v1048
      %4766 = vmatmul.mubr.bf16.gmra.mxu0 %v1047
      %v4767 = vpop.f32.mrf.mxu0
      %v4768 = vadd.f32 %v4695, %v4767
      %v4769 = vpop.f32.mrf.mxu0
      %v4770 = vadd.f32 %v4697, %v4769
      %v4771 = vpop.f32.mrf.mxu0
      %v4772 = vadd.f32 %v4699, %v4771
      %v4773 = vpop.f32.mrf.mxu0
      %v4774 = vadd.f32 %v4701, %v4773
      %4775 = vmatprep.mubr.bf16.mxu0 %v1064
      %4776 = vmatmul.mubr.bf16.gmra.mxu0 %v1063
      %v4777 = vpop.f32.mrf.mxu0
      %v4778 = vadd.f32 %v4705, %v4777
      %v4779 = vpop.f32.mrf.mxu0
      %v4780 = vadd.f32 %v4707, %v4779
      %v4781 = vpop.f32.mrf.mxu0
      %v4782 = vadd.f32 %v4709, %v4781
      %v4783 = vpop.f32.mrf.mxu0
      %v4784 = vadd.f32 %v4711, %v4783
      %4785 = vdwg.mxu0
      %4786 = vmatprep.subr.bf16.mxu0 %v3146
      %4787 = vmatpush1.bf16.msra.mxu0 %v3145
      %4788 = vmatprep.subr.bf16.mxu0 %v3142
      %4789 = vmatpush1.bf16.msra.mxu0 %v3141
      %4790 = vmatprep.subr.bf16.mxu0 %v3138
      %4791 = vmatpush1.bf16.msra.mxu0 %v3137
      %4792 = vmatprep.subr.bf16.mxu0 %v3134
      %4793 = vmatpush1.bf16.msra.mxu0 %v3133
      %4794 = vmatprep.subr.bf16.mxu0 %v3130
      %4795 = vmatpush1.bf16.msra.mxu0 %v3129
      %4796 = vmatprep.subr.bf16.mxu0 %v3126
      %4797 = vmatpush1.bf16.msra.mxu0 %v3125
      %4798 = vmatprep.subr.bf16.mxu0 %v3122
      %4799 = vmatpush1.bf16.msra.mxu0 %v3121
      %4800 = vmatprep.subr.bf16.mxu0 %v3118
      %4801 = vmatpush1.bf16.msra.mxu0 %v3117
      %4802 = vmatprep.subr.bf16.mxu0 %v3178
      %4803 = vmatpush2.bf16.msra.mxu0 %v3177
      %4804 = vmatprep.subr.bf16.mxu0 %v3174
      %4805 = vmatpush2.bf16.msra.mxu0 %v3173
      %4806 = vmatprep.subr.bf16.mxu0 %v3170
      %4807 = vmatpush2.bf16.msra.mxu0 %v3169
      %4808 = vmatprep.subr.bf16.mxu0 %v3166
      %4809 = vmatpush2.bf16.msra.mxu0 %v3165
      %4810 = vmatprep.subr.bf16.mxu0 %v3162
      %4811 = vmatpush2.bf16.msra.mxu0 %v3161
      %4812 = vmatprep.subr.bf16.mxu0 %v3158
      %4813 = vmatpush2.bf16.msra.mxu0 %v3157
      %4814 = vmatprep.subr.bf16.mxu0 %v3154
      %4815 = vmatpush2.bf16.msra.mxu0 %v3153
      %4816 = vmatprep.subr.bf16.mxu0 %v3150
      %4817 = vmatpush2.bf16.msra.mxu0 %v3149
      %4818 = vmatprep.mubr.bf16.mxu0 %v1018
      %4819 = vmatmul.mubr.bf16.gmra.mxu0 %v1017
      %v4820 = vpop.f32.mrf.mxu0
      %v4821 = vadd.f32 %v4748, %v4820
      %v4822 = vpop.f32.mrf.mxu0
      %v4823 = vadd.f32 %v4750, %v4822
      %v4824 = vpop.f32.mrf.mxu0
      %v4825 = vadd.f32 %v4752, %v4824
      %v4826 = vpop.f32.mrf.mxu0
      %v4827 = vadd.f32 %v4754, %v4826
      %4828 = vmatprep.mubr.bf16.mxu0 %v1034
      %4829 = vmatmul.mubr.bf16.gmra.mxu0 %v1033
      %v4830 = vpop.f32.mrf.mxu0
      %v4831 = vadd.f32 %v4758, %v4830
      %v4832 = vpop.f32.mrf.mxu0
      %v4833 = vadd.f32 %v4760, %v4832
      %v4834 = vpop.f32.mrf.mxu0
      %v4835 = vadd.f32 %v4762, %v4834
      %v4836 = vpop.f32.mrf.mxu0
      %v4837 = vadd.f32 %v4764, %v4836
      %4838 = vmatprep.mubr.bf16.mxu0 %v1050
      %4839 = vmatmul.mubr.bf16.gmra.mxu0 %v1049
      %v4840 = vpop.f32.mrf.mxu0
      %v4841 = vadd.f32 %v4768, %v4840
      %v4842 = vpop.f32.mrf.mxu0
      %v4843 = vadd.f32 %v4770, %v4842
      %v4844 = vpop.f32.mrf.mxu0
      %v4845 = vadd.f32 %v4772, %v4844
      %v4846 = vpop.f32.mrf.mxu0
      %v4847 = vadd.f32 %v4774, %v4846
      %4848 = vmatprep.mubr.bf16.mxu0 %v1066
      %4849 = vmatmul.mubr.bf16.gmra.mxu0 %v1065
      %v4850 = vpop.f32.mrf.mxu0
      %v4851 = vadd.f32 %v4778, %v4850
      %v4852 = vpop.f32.mrf.mxu0
      %v4853 = vadd.f32 %v4780, %v4852
      %v4854 = vpop.f32.mrf.mxu0
      %v4855 = vadd.f32 %v4782, %v4854
      %v4856 = vpop.f32.mrf.mxu0
      %v4857 = vadd.f32 %v4784, %v4856
      %4858 = vdwg.mxu0
      %v4859 = vmax.f32 %v4237, 0.0
      %v4860 = vmax.f32 %v4239, 0.0
      %v4861 = vmax.f32 %v4821, 0.0
      %v4862 = vmax.f32 %v4823, 0.0
      %v4863 = vmax.f32 %v4241, 0.0
      %v4864 = vmax.f32 %v4243, 0.0
      %v4865 = vmax.f32 %v4825, 0.0
      %v4866 = vmax.f32 %v4827, 0.0
      %v4867 = vmax.f32 %v4247, 0.0
      %v4868 = vmax.f32 %v4249, 0.0
      %v4869 = vmax.f32 %v4831, 0.0
      %v4870 = vmax.f32 %v4833, 0.0
      %v4871 = vmax.f32 %v4251, 0.0
      %v4872 = vmax.f32 %v4253, 0.0
      %v4873 = vmax.f32 %v4835, 0.0
      %v4874 = vmax.f32 %v4837, 0.0
      %v4875 = vmax.f32 %v4257, 0.0
      %v4876 = vmax.f32 %v4259, 0.0
      %v4877 = vmax.f32 %v4841, 0.0
      %v4878 = vmax.f32 %v4843, 0.0
      %v4879 = vmax.f32 %v4261, 0.0
      %v4880 = vmax.f32 %v4263, 0.0
      %v4881 = vmax.f32 %v4845, 0.0
      %v4882 = vmax.f32 %v4847, 0.0
      %v4883 = vmax.f32 %v4267, 0.0
      %v4884 = vmax.f32 %v4269, 0.0
      %v4885 = vmax.f32 %v4851, 0.0
      %v4886 = vmax.f32 %v4853, 0.0
      %v4887 = vmax.f32 %v4271, 0.0
      %v4888 = vmax.f32 %v4273, 0.0
      %v4889 = vmax.f32 %v4855, 0.0
      %v4890 = vmax.f32 %v4857, 0.0
      %v4891 = vmax.f32 %v4859, %v4860
      %v4892 = vmax.f32 %v4863, %v4864
      %v4893 = vmax.f32 %v4867, %v4868
      %v4894 = vmax.f32 %v4871, %v4872
      %v4895 = vmax.f32 %v4875, %v4876
      %v4896 = vmax.f32 %v4879, %v4880
      %v4897 = vmax.f32 %v4883, %v4884
      %v4898 = vmax.f32 %v4887, %v4888
      %v4899 = vmax.f32 %v4861, %v4862
      %v4900 = vmax.f32 %v4865, %v4866
      %v4901 = vmax.f32 %v4869, %v4870
      %v4902 = vmax.f32 %v4873, %v4874
      %v4903 = vmax.f32 %v4877, %v4878
      %v4904 = vmax.f32 %v4881, %v4882
      %v4905 = vmax.f32 %v4885, %v4886
      %v4906 = vmax.f32 %v4889, %v4890
      %v4907 = vmax.f32 %v4891, %v4899
      %v4908 = vmax.f32 %v4892, %v4900
      %v4909 = vmax.f32 %v4893, %v4901
      %v4910 = vmax.f32 %v4894, %v4902
      %v4911 = vmax.f32 %v4895, %v4903
      %v4912 = vmax.f32 %v4896, %v4904
      %v4913 = vmax.f32 %v4897, %v4905
      %v4914 = vmax.f32 %v4898, %v4906
      %v4915 = vpack.c.bf16 %v4908, %v4907
      %v4916 = vpack.c.bf16 %v4910, %v4909
      %v4917 = vpack.c.bf16 %v4912, %v4911
      %v4918 = vpack.c.bf16 %v4914, %v4913
      %v4923 = vunpack.c.l.b16 %v4915
      %v4924 = vunpack.c.h.b16 %v4915
      %v4925 = vunpack.c.l.b16 %v4916
      %v4926 = vunpack.c.h.b16 %v4916
      %v4927 = vunpack.c.l.b16 %v4917
      %v4928 = vunpack.c.h.b16 %v4917
      %v4929 = vunpack.c.l.b16 %v4918
      %v4930 = vunpack.c.h.b16 %v4918
      %v4931 = vpack.c.b16 %v4923, %v4923
      %v4932 = vpack.c.b16 %v4924, %v4924
      %v4933 = vpack.c.b16 %v4925, %v4925
      %v4934 = vpack.c.b16 %v4926, %v4926
      %v4935 = vpack.c.b16 %v4927, %v4927
      %v4936 = vpack.c.b16 %v4928, %v4928
      %v4937 = vpack.c.b16 %v4929, %v4929
      %v4938 = vpack.c.b16 %v4930, %v4930
      %4947 = vst [vmem:[%s211] sm:$0xf] %v4931
      %4948 = vst [vmem:[%s211 + $0x4] sm:$0xf] %v4932
      %4949 = vst [vmem:[%s211 + $0x8] sm:$0xf] %v4933
      %4950 = vst [vmem:[%s211 + $0xc] sm:$0xf] %v4934
      %4951 = vst [vmem:[%s211 + $0x10] sm:$0xf] %v4935
      %4952 = vst [vmem:[%s211 + $0x14] sm:$0xf] %v4936
      %4953 = vst [vmem:[%s211 + $0x18] sm:$0xf] %v4937
      %4954 = vst [vmem:[%s211 + $0x1c] sm:$0xf] %v4938
      %s4955 = smul.u32 8, %s19
      %p4956 = scmp.lt.s32.totalorder %s18, 1
      %s4957 = scalar_select %p4956, %s18, 1
      %p4958 = scmp.lt.s32.totalorder %s4955, 39
      %s4959 = scalar_select %p4958, %s4955, 39
      %s4960 = smul.addr %s4957, 40
      %s4961 = sadd.s32 %s4959, %s4960
      %s4962 = smul.addr %s4961, 4
      %s4963 = scalar_lea.vmem %s3, %s4962
      // Predicated region
      $region33: #{net_forward.4} parent=31 // pred_check
        %p4964 = pneg %p116
      $region34: #{net_forward.4} parent=31 // pred_check_branch
        %4966 = sbr.rel (%p4964) target = $region36
      $region35: #{net_forward.4} parent=31 // pred_region
        %s4967 = smul.u32 8, %s19
      $region36: #{net_forward.4} parent=31 // pred_fallthru
        _
    $region32: #{net_forward.4} parent=5 // pred_fallthru
      _
    %p4968 = scmp.le.s32.totalorder 2, %s9
    // Predicated region
    $region37: #{net_forward.4} parent=5 // pred_check
      %p4969 = pneg %p4968
    $region38: #{net_forward.4} parent=5 // pred_check_branch
      %4971 = sbr.rel (%p4969) target = $region40
    $region39: #{net_forward.4} parent=5 // pred_region
      %s4972 = ssub.s32 %s9, 2
      // Predicated region
      $region41: #{net_forward.4} parent=39 // pred_check
        %p4973 = pneg %p122
      $region42: #{net_forward.4} parent=39 // pred_check_branch
        %4975 = sbr.rel (%p4973) target = $region44
      $region43: #{net_forward.4} parent=39 // pred_region
        %s4976 = smul.u32 8, %s21
        %p4977 = scmp.lt.s32.totalorder %s20, 1
        %s4978 = scalar_select %p4977, %s20, 1
        %p4979 = scmp.lt.s32.totalorder %s4976, 39
        %s4980 = scalar_select %p4979, %s4976, 39
        %s4981 = smul.addr %s4978, 40
        %s4982 = sadd.s32 %s4980, %s4981
        %s4983 = smul.addr %s4982, 4
        %s4984 = scalar_lea.vmem %s3, %s4983
      $region44: #{net_forward.4} parent=39 // pred_fallthru
        _
    $region40: #{net_forward.4} parent=5 // pred_fallthru
      _
  $region6: #{net_forward.4} parent=0 // loop_footer
    %s13 = sadd.s32 1, %s9
  $region7: #{net_forward.4} parent=0 // loop_footer_branch
    %8 = sbr.rel target = $region3
  $region8: #{net_forward.4} parent=0 // loop_exit
    _

// kernel: net_forward.5
$region0: #{net_forward.5}
  #allocation0 [shape = 'u32[]', space=smem, size = 0x4, offset = 0x4, fixed_abs, tag = 'smem constant byte address 0x4 - core index']
  #allocation1 [shape = 'u32[144,128]{1,0:T(1,128)}', space=vmem, size = 0x12000, scoped, tag = 'internal scratch']
  #allocation2 [shape = 'f32[2,128]{1,0:T(2,128)}', space=vmem, size = 0x400, scoped, tag = 'scratch operand']
  %s0 = inlined_call_operand.vmem [shape: bf16[2,40960], index: 0, kind: input, shape index: {}]
  %s1 = inlined_call_operand.vmem [shape: bf16[40960,128], index: 1, kind: input, shape index: {}]
  %s2 = inlined_call_operand.vmem [shape: f32[1,128], index: 2, kind: input, shape index: {}]
  %s3 = inlined_call_operand.vmem [shape: f32[128,64], index: 3, kind: input, shape index: {}]
  %s4 = inlined_call_operand.vmem [shape: f32[1,64], index: 4, kind: input, shape index: {}]
  %s5 = inlined_call_operand.vmem [shape: f32[64,2], index: 5, kind: input, shape index: {}]
  %s6 = inlined_call_operand.vmem [shape: f32[1,2], index: 6, kind: input, shape index: {}]
  %s7 = inlined_call_operand.hbm [shape: f32[2,2], index: 7, kind: output, shape index: {}]
  %s8 = sld [smem:[#allocation0]]
  $region69: #{net_forward.5} parent=0
    _
  %s10 = ssub.s32 1, %s8
  %s11 = scalar_select 0, %s10, %s8
  $region1: #{net_forward.5} parent=0
    #allocation3 [shape = 'u8[1024]{0}', space=vmem, size = 0x400, scoped, tag = 'output window, operand 0, single buffered']
    #allocation4 [shape = 's32[2]{0}', space=sflag, size = 0x8, scoped, tag = 'scoped memory for net_forward.5']
    %12 = vsyncpa [#allocation4], 0
    loop: start=0, step=1, limit=7
    $region2: #{net_forward.5} parent=1 // loop_pre_header
      _
    $region3: #{net_forward.5} parent=1 // loop_header
      %s14 = sphi 0, %s18
      %p15 = scmp.ge.s32.totalorder %s14, 7
      %s24 = sphi 0, %s26
      %s27 = sphi 0, %s24
      %s28 = sphi 0, %s27
      %s44 = sphi 0, %s28
      %s50 = sphi 0, %s52
      %s53 = sphi 0, %s50
      %s54 = sphi 0, %s53
      %s70 = sphi 0, %s54
      %s74 = sphi 0, %s74
      %s76 = sphi 0, %s74
      %s77 = sphi 0, %s76
      %s91 = sphi 0, %s77
      %s95 = sphi 0, %s95
      %s97 = sphi 0, %s95
      %s98 = sphi 0, %s97
      %s112 = sphi 0, %s98
      %s116 = sphi 0, %s116
      %s118 = sphi 0, %s116
      %s119 = sphi 0, %s118
      %s133 = sphi 0, %s119
      %s137 = sphi 0, %s137
      %s139 = sphi 0, %s137
      %s140 = sphi 0, %s139
      %s154 = sphi 0, %s140
      %s158 = sphi 0, %s158
      %s160 = sphi 0, %s158
      %s161 = sphi 0, %s160
      %s175 = sphi 0, %s161
      %s179 = sphi 0, %s179
      %s181 = sphi 0, %s179
      %s182 = sphi 0, %s181
      %s196 = sphi 0, %s182
    $region4: #{net_forward.5} parent=1 // loop_header_branch
      %17 = sbr.rel (%p15) target = $region8
    $region5: #{net_forward.5} parent=1 // loop_body
      %s19 = ssub.s32 %s14, 1
      %s20 = ssub.s32 %s14, 2
      %s21 = sadd.s32 %s14, 1
      %s22 = ssub.s32 %s14, %s21
      %p23 = scmp.eq.s32.totalorder %s22, 0
      %s25 = sadd.s32 %s24, 1
      %s26 = scalar_select %p23, %s24, %s25
      %p29 = pneg %p23
      %p30 = scmp.eq.s32.totalorder %s14, 4
      %p31 = por %p29, %p30
      %p32 = scmp.ne.s32.totalorder %s24, %s27
      %p33 = scmp.eq.s32.totalorder %s14, 0
      %p34 = por %p32, %p33
      %p35 = scmp.ne.s32.totalorder %s24, %s27
      %p36 = scmp.eq.s32.totalorder %s19, 4
      %p37 = por %p35, %p36
      %p38 = scmp.ne.s32.totalorder %s27, %s28
      %p39 = scmp.eq.s32.totalorder %s19, 0
      %p40 = por %p38, %p39
      %p41 = scmp.ne.s32.totalorder %s27, %s28
      %p42 = scmp.eq.s32.totalorder %s20, 4
      %p43 = por %p41, %p42
      %p45 = scmp.ne.s32.totalorder %s28, %s44
      %p46 = scmp.eq.s32.totalorder %s20, 0
      %p47 = por %p45, %p46
      %s48 = ssub.s32 %s14, %s21
      %p49 = scmp.eq.s32.totalorder %s48, 0
      %s51 = sadd.s32 %s50, 1
      %s52 = scalar_select %p49, %s50, %s51
      %p55 = pneg %p49
      %p56 = scmp.eq.s32.totalorder %s14, 4
      %p57 = por %p55, %p56
      %p58 = scmp.ne.s32.totalorder %s50, %s53
      %p59 = scmp.eq.s32.totalorder %s14, 0
      %p60 = por %p58, %p59
      %p61 = scmp.ne.s32.totalorder %s50, %s53
      %p62 = scmp.eq.s32.totalorder %s19, 4
      %p63 = por %p61, %p62
      %p64 = scmp.ne.s32.totalorder %s53, %s54
      %p65 = scmp.eq.s32.totalorder %s19, 0
      %p66 = por %p64, %p65
      %p67 = scmp.ne.s32.totalorder %s53, %s54
      %p68 = scmp.eq.s32.totalorder %s20, 4
      %p69 = por %p67, %p68
      %p71 = scmp.ne.s32.totalorder %s54, %s70
      %p72 = scmp.eq.s32.totalorder %s20, 0
      %p73 = por %p71, %p72
      %s75 = sadd.s32 %s74, 1
      %p78 = scmp.eq.s32.totalorder %s14, 4
      %p79 = scmp.ne.s32.totalorder %s74, %s76
      %p80 = scmp.eq.s32.totalorder %s14, 0
      %p81 = por %p79, %p80
      %p82 = scmp.ne.s32.totalorder %s74, %s76
      %p83 = scmp.eq.s32.totalorder %s19, 4
      %p84 = por %p82, %p83
      %p85 = scmp.ne.s32.totalorder %s76, %s77
      %p86 = scmp.eq.s32.totalorder %s19, 0
      %p87 = por %p85, %p86
      %p88 = scmp.ne.s32.totalorder %s76, %s77
      %p89 = scmp.eq.s32.totalorder %s20, 4
      %p90 = por %p88, %p89
      %p92 = scmp.ne.s32.totalorder %s77, %s91
      %p93 = scmp.eq.s32.totalorder %s20, 0
      %p94 = por %p92, %p93
      %s96 = sadd.s32 %s95, 1
      %p99 = scmp.eq.s32.totalorder %s14, 4
      %p100 = scmp.ne.s32.totalorder %s95, %s97
      %p101 = scmp.eq.s32.totalorder %s14, 0
      %p102 = por %p100, %p101
      %p103 = scmp.ne.s32.totalorder %s95, %s97
      %p104 = scmp.eq.s32.totalorder %s19, 4
      %p105 = por %p103, %p104
      %p106 = scmp.ne.s32.totalorder %s97, %s98
      %p107 = scmp.eq.s32.totalorder %s19, 0
      %p108 = por %p106, %p107
      %p109 = scmp.ne.s32.totalorder %s97, %s98
      %p110 = scmp.eq.s32.totalorder %s20, 4
      %p111 = por %p109, %p110
      %p113 = scmp.ne.s32.totalorder %s98, %s112
      %p114 = scmp.eq.s32.totalorder %s20, 0
      %p115 = por %p113, %p114
      %s117 = sadd.s32 %s116, 1
      %p120 = scmp.eq.s32.totalorder %s14, 4
      %p121 = scmp.ne.s32.totalorder %s116, %s118
      %p122 = scmp.eq.s32.totalorder %s14, 0
      %p123 = por %p121, %p122
      %p124 = scmp.ne.s32.totalorder %s116, %s118
      %p125 = scmp.eq.s32.totalorder %s19, 4
      %p126 = por %p124, %p125
      %p127 = scmp.ne.s32.totalorder %s118, %s119
      %p128 = scmp.eq.s32.totalorder %s19, 0
      %p129 = por %p127, %p128
      %p130 = scmp.ne.s32.totalorder %s118, %s119
      %p131 = scmp.eq.s32.totalorder %s20, 4
      %p132 = por %p130, %p131
      %p134 = scmp.ne.s32.totalorder %s119, %s133
      %p135 = scmp.eq.s32.totalorder %s20, 0
      %p136 = por %p134, %p135
      %s138 = sadd.s32 %s137, 1
      %p141 = scmp.eq.s32.totalorder %s14, 4
      %p142 = scmp.ne.s32.totalorder %s137, %s139
      %p143 = scmp.eq.s32.totalorder %s14, 0
      %p144 = por %p142, %p143
      %p145 = scmp.ne.s32.totalorder %s137, %s139
      %p146 = scmp.eq.s32.totalorder %s19, 4
      %p147 = por %p145, %p146
      %p148 = scmp.ne.s32.totalorder %s139, %s140
      %p149 = scmp.eq.s32.totalorder %s19, 0
      %p150 = por %p148, %p149
      %p151 = scmp.ne.s32.totalorder %s139, %s140
      %p152 = scmp.eq.s32.totalorder %s20, 4
      %p153 = por %p151, %p152
      %p155 = scmp.ne.s32.totalorder %s140, %s154
      %p156 = scmp.eq.s32.totalorder %s20, 0
      %p157 = por %p155, %p156
      %s159 = sadd.s32 %s158, 1
      %p162 = scmp.eq.s32.totalorder %s14, 4
      %p163 = scmp.ne.s32.totalorder %s158, %s160
      %p164 = scmp.eq.s32.totalorder %s14, 0
      %p165 = por %p163, %p164
      %p166 = scmp.ne.s32.totalorder %s158, %s160
      %p167 = scmp.eq.s32.totalorder %s19, 4
      %p168 = por %p166, %p167
      %p169 = scmp.ne.s32.totalorder %s160, %s161
      %p170 = scmp.eq.s32.totalorder %s19, 0
      %p171 = por %p169, %p170
      %p172 = scmp.ne.s32.totalorder %s160, %s161
      %p173 = scmp.eq.s32.totalorder %s20, 4
      %p174 = por %p172, %p173
      %p176 = scmp.ne.s32.totalorder %s161, %s175
      %p177 = scmp.eq.s32.totalorder %s20, 0
      %p178 = por %p176, %p177
      %s180 = sadd.s32 %s179, 1
      %p183 = scmp.eq.s32.totalorder %s14, 4
      %p184 = scmp.ne.s32.totalorder %s179, %s181
      %p185 = scmp.eq.s32.totalorder %s14, 0
      %p186 = por %p184, %p185
      %p187 = scmp.ne.s32.totalorder %s179, %s181
      %p188 = scmp.eq.s32.totalorder %s19, 4
      %p189 = por %p187, %p188
      %p190 = scmp.ne.s32.totalorder %s181, %s182
      %p191 = scmp.eq.s32.totalorder %s19, 0
      %p192 = por %p190, %p191
      %p193 = scmp.ne.s32.totalorder %s181, %s182
      %p194 = scmp.eq.s32.totalorder %s20, 4
      %p195 = por %p193, %p194
      %p197 = scmp.ne.s32.totalorder %s182, %s196
      %p198 = scmp.eq.s32.totalorder %s20, 0
      %p199 = por %p197, %p198
      %p200 = scmp.le.s32.totalorder 1, %s14
      %p201 = scmp.lt.s32.totalorder %s14, 6
      %p202 = pnand %p200, %p201
      %p203 = pneg %p202
      // Predicated region
      $region9: #{net_forward.5} parent=5 // pred_check
        _
      $region10: #{net_forward.5} parent=5 // pred_check_branch
        %205 = sbr.rel (%p202) target = $region12
      $region11: #{net_forward.5} parent=5 // pred_region
        %s206 = ssub.s32 %s14, 1
        // Predicated region
        $region13: #{net_forward.5} parent=11 // pred_check
          %p207 = pneg %p87
        $region14: #{net_forward.5} parent=11 // pred_check_branch
          %209 = sbr.rel (%p207) target = $region16
        $region15: #{net_forward.5} parent=11 // pred_region
          _
        $region16: #{net_forward.5} parent=11 // pred_fallthru
          _
        // Predicated region
        $region17: #{net_forward.5} parent=11 // pred_check
          %p210 = pneg %p108
        $region18: #{net_forward.5} parent=11 // pred_check_branch
          %212 = sbr.rel (%p210) target = $region20
        $region19: #{net_forward.5} parent=11 // pred_region
          _
        $region20: #{net_forward.5} parent=11 // pred_fallthru
          _
        // Predicated region
        $region21: #{net_forward.5} parent=11 // pred_check
          %p213 = pneg %p129
        $region22: #{net_forward.5} parent=11 // pred_check_branch
          %215 = sbr.rel (%p213) target = $region24
        $region23: #{net_forward.5} parent=11 // pred_region
          _
        $region24: #{net_forward.5} parent=11 // pred_fallthru
          _
        // Predicated region
        $region25: #{net_forward.5} parent=11 // pred_check
          %p216 = pneg %p150
        $region26: #{net_forward.5} parent=11 // pred_check_branch
          %218 = sbr.rel (%p216) target = $region28
        $region27: #{net_forward.5} parent=11 // pred_region
          _
        $region28: #{net_forward.5} parent=11 // pred_fallthru
          _
        // Predicated region
        $region29: #{net_forward.5} parent=11 // pred_check
          %p219 = pneg %p171
        $region30: #{net_forward.5} parent=11 // pred_check_branch
          %221 = sbr.rel (%p219) target = $region32
        $region31: #{net_forward.5} parent=11 // pred_region
          _
        $region32: #{net_forward.5} parent=11 // pred_fallthru
          _
      $region12: #{net_forward.5} parent=5 // pred_fallthru
        _
      %p222 = scmp.lt.s32.totalorder %s14, 5
      // Predicated region
      $region33: #{net_forward.5} parent=5 // pred_check
        %p223 = pneg %p222
      $region34: #{net_forward.5} parent=5 // pred_check_branch
        %225 = sbr.rel (%p223) target = $region36
      $region35: #{net_forward.5} parent=5 // pred_region
        // Predicated region
        $region37: #{net_forward.5} parent=35 // pred_check
          %p226 = pneg %p34
        $region38: #{net_forward.5} parent=35 // pred_check_branch
          %228 = sbr.rel (%p226) target = $region40
        $region39: #{net_forward.5} parent=35 // pred_region
          %s229 = smul.u32 64, %s14
          %p230 = scmp.lt.s32.totalorder %s229, 319
          %s231 = scalar_select %p230, %s229, 319
          %s232 = scalar_lea.vmem %s0, %s231
          %s233 = smul.u32 64, %s14
        $region40: #{net_forward.5} parent=35 // pred_fallthru
          _
        // Predicated region
        $region41: #{net_forward.5} parent=35 // pred_check
          %p234 = pneg %p60
        $region42: #{net_forward.5} parent=35 // pred_check_branch
          %236 = sbr.rel (%p234) target = $region44
        $region43: #{net_forward.5} parent=35 // pred_region
          %s237 = smul.u32 1024, %s14
          %p238 = scmp.lt.s32.totalorder %s237, 5119
          %s239 = scalar_select %p238, %s237, 5119
          %s240 = smul.addr %s239, 4
          %s241 = scalar_lea.vmem %s1, %s240
          %s242 = smul.u32 1024, %s14
        $region44: #{net_forward.5} parent=35 // pred_fallthru
          _
      $region36: #{net_forward.5} parent=5 // pred_fallthru
        _
      %p243 = scmp.le.s32.totalorder 1, %s14
      %p244 = scmp.lt.s32.totalorder %s14, 6
      %p245 = pnand %p243, %p244
      %p246 = pneg %p245
      // Predicated region
      $region45: #{net_forward.5} parent=5 // pred_check
        _
      $region46: #{net_forward.5} parent=5 // pred_check_branch
        %248 = sbr.rel (%p245) target = $region48
      $region47: #{net_forward.5} parent=5 // pred_region
        %s249 = ssub.s32 %s14, 1
        %s250 = smul.u32 64, %s19
        %p251 = scmp.lt.s32.totalorder %s250, 319
        %s252 = scalar_select %p251, %s250, 319
        %s253 = scalar_lea.vmem %s0, %s252
        %p254 = pneg %p40
        %p255 = pneg %p37
        %s256 = smul.u32 1024, %s19
        %p257 = scmp.lt.s32.totalorder %s256, 5119
        %s258 = scalar_select %p257, %s256, 5119
        %s259 = smul.addr %s258, 4
        %s260 = scalar_lea.vmem %s1, %s259
        %p261 = pneg %p66
        %p262 = pneg %p63
        %p263 = pneg %p87
        %p264 = pneg %p84
        %p265 = pneg %p108
        %p266 = pneg %p105
        %p267 = pneg %p129
        %p268 = pneg %p126
        %p269 = pneg %p150
        %p270 = pneg %p147
        %p271 = pneg %p171
        %p272 = pneg %p168
        %p273 = pneg %p192
        %p274 = pneg %p189
        %s275 = smul.u32 64, %s19
        %p276 = scmp.lt.s32.totalorder %s275, 319
        %s277 = scalar_select %p276, %s275, 319
        %s278 = scalar_lea.vmem %s0, %s277
        %s279 = smul.u32 64, %s19
        %s280 = smul.u32 1024, %s19
        %p281 = scmp.lt.s32.totalorder %s280, 5119
        %s282 = scalar_select %p281, %s280, 5119
        %s283 = smul.addr %s282, 4
        %s284 = scalar_lea.vmem %s1, %s283
        %s285 = smul.u32 1024, %s19
        %p287 = scmp.eq.s32.totalorder %s19, 0
        // Predicated region
        $region49: #{net_forward.5} parent=47 // pred_check
          %p288 = pneg %p287
        $region50: #{net_forward.5} parent=47 // pred_check_branch
          %290 = sbr.rel (%p288) target = $region52
        $region51: #{net_forward.5} parent=47 // pred_region
          %291 = vst [vmem:[#allocation2] sm:$0x3] 0.0
        $region52: #{net_forward.5} parent=47 // pred_fallthru
          _
        %v292 = vld [vmem:[#allocation2] sm:$0x3]
        %v293 = vld [vmem:[%s278] sm:$0xff]
        %v294 = vld [vmem:[%s278 + $0x8] sm:$0xff]
        %v295 = vld [vmem:[%s278 + $0x10] sm:$0xff]
        %v296 = vld [vmem:[%s278 + $0x18] sm:$0xff]
        %v297 = vld [vmem:[%s278 + $0x20] sm:$0xff]
        %v298 = vld [vmem:[%s278 + $0x28] sm:$0xff]
        %v299 = vld [vmem:[%s278 + $0x30] sm:$0xff]
        %v300 = vld [vmem:[%s278 + $0x38] sm:$0xff]
        %v301 = vld [vmem:[%s284] sm:$0xf]
        %v302 = vld [vmem:[%s284 + $0x4] sm:$0xf]
        %v303 = vld [vmem:[%s284 + $0x8] sm:$0xf]
        %v304 = vld [vmem:[%s284 + $0xc] sm:$0xf]
        %v305 = vld [vmem:[%s284 + $0x10] sm:$0xf]
        %v306 = vld [vmem:[%s284 + $0x14] sm:$0xf]
        %v307 = vld [vmem:[%s284 + $0x18] sm:$0xf]
        %v308 = vld [vmem:[%s284 + $0x1c] sm:$0xf]
        %v309 = vld [vmem:[%s284 + $0x20] sm:$0xf]
        %v310 = vld [vmem:[%s284 + $0x24] sm:$0xf]
        %v311 = vld [vmem:[%s284 + $0x28] sm:$0xf]
        %v312 = vld [vmem:[%s284 + $0x2c] sm:$0xf]
        %v313 = vld [vmem:[%s284 + $0x30] sm:$0xf]
        %v314 = vld [vmem:[%s284 + $0x34] sm:$0xf]
        %v315 = vld [vmem:[%s284 + $0x38] sm:$0xf]
        %v316 = vld [vmem:[%s284 + $0x3c] sm:$0xf]
        %v317 = vld [vmem:[%s284 + $0x40] sm:$0xf]
        %v318 = vld [vmem:[%s284 + $0x44] sm:$0xf]
        %v319 = vld [vmem:[%s284 + $0x48] sm:$0xf]
        %v320 = vld [vmem:[%s284 + $0x4c] sm:$0xf]
        %v321 = vld [vmem:[%s284 + $0x50] sm:$0xf]
        %v322 = vld [vmem:[%s284 + $0x54] sm:$0xf]
        %v323 = vld [vmem:[%s284 + $0x58] sm:$0xf]
        %v324 = vld [vmem:[%s284 + $0x5c] sm:$0xf]
        %v325 = vld [vmem:[%s284 + $0x60] sm:$0xf]
        %v326 = vld [vmem:[%s284 + $0x64] sm:$0xf]
        %v327 = vld [vmem:[%s284 + $0x68] sm:$0xf]
        %v328 = vld [vmem:[%s284 + $0x6c] sm:$0xf]
        %v329 = vld [vmem:[%s284 + $0x70] sm:$0xf]
        %v330 = vld [vmem:[%s284 + $0x74] sm:$0xf]
        %v331 = vld [vmem:[%s284 + $0x78] sm:$0xf]
        %v332 = vld [vmem:[%s284 + $0x7c] sm:$0xf]
        %v333 = vld [vmem:[%s284 + $0x80] sm:$0xf]
        %v334 = vld [vmem:[%s284 + $0x84] sm:$0xf]
        %v335 = vld [vmem:[%s284 + $0x88] sm:$0xf]
        %v336 = vld [vmem:[%s284 + $0x8c] sm:$0xf]
        %v337 = vld [vmem:[%s284 + $0x90] sm:$0xf]
        %v338 = vld [vmem:[%s284 + $0x94] sm:$0xf]
        %v339 = vld [vmem:[%s284 + $0x98] sm:$0xf]
        %v340 = vld [vmem:[%s284 + $0x9c] sm:$0xf]
        %v341 = vld [vmem:[%s284 + $0xa0] sm:$0xf]
        %v342 = vld [vmem:[%s284 + $0xa4] sm:$0xf]
        %v343 = vld [vmem:[%s284 + $0xa8] sm:$0xf]
        %v344 = vld [vmem:[%s284 + $0xac] sm:$0xf]
        %v345 = vld [vmem:[%s284 + $0xb0] sm:$0xf]
        %v346 = vld [vmem:[%s284 + $0xb4] sm:$0xf]
        %v347 = vld [vmem:[%s284 + $0xb8] sm:$0xf]
        %v348 = vld [vmem:[%s284 + $0xbc] sm:$0xf]
        %v349 = vld [vmem:[%s284 + $0xc0] sm:$0xf]
        %v350 = vld [vmem:[%s284 + $0xc4] sm:$0xf]
        %v351 = vld [vmem:[%s284 + $0xc8] sm:$0xf]
        %v352 = vld [vmem:[%s284 + $0xcc] sm:$0xf]
        %v353 = vld [vmem:[%s284 + $0xd0] sm:$0xf]
        %v354 = vld [vmem:[%s284 + $0xd4] sm:$0xf]
        %v355 = vld [vmem:[%s284 + $0xd8] sm:$0xf]
        %v356 = vld [vmem:[%s284 + $0xdc] sm:$0xf]
        %v357 = vld [vmem:[%s284 + $0xe0] sm:$0xf]
        %v358 = vld [vmem:[%s284 + $0xe4] sm:$0xf]
        %v359 = vld [vmem:[%s284 + $0xe8] sm:$0xf]
        %v360 = vld [vmem:[%s284 + $0xec] sm:$0xf]
        %v361 = vld [vmem:[%s284 + $0xf0] sm:$0xf]
        %v362 = vld [vmem:[%s284 + $0xf4] sm:$0xf]
        %v363 = vld [vmem:[%s284 + $0xf8] sm:$0xf]
        %v364 = vld [vmem:[%s284 + $0xfc] sm:$0xf]
        %v365 = vld [vmem:[%s284 + $0x100] sm:$0xf]
        %v366 = vld [vmem:[%s284 + $0x104] sm:$0xf]
        %v367 = vld [vmem:[%s284 + $0x108] sm:$0xf]
        %v368 = vld [vmem:[%s284 + $0x10c] sm:$0xf]
        %v369 = vld [vmem:[%s284 + $0x110] sm:$0xf]
        %v370 = vld [vmem:[%s284 + $0x114] sm:$0xf]
        %v371 = vld [vmem:[%s284 + $0x118] sm:$0xf]
        %v372 = vld [vmem:[%s284 + $0x11c] sm:$0xf]
        %v373 = vld [vmem:[%s284 + $0x120] sm:$0xf]
        %v374 = vld [vmem:[%s284 + $0x124] sm:$0xf]
        %v375 = vld [vmem:[%s284 + $0x128] sm:$0xf]
        %v376 = vld [vmem:[%s284 + $0x12c] sm:$0xf]
        %v377 = vld [vmem:[%s284 + $0x130] sm:$0xf]
        %v378 = vld [vmem:[%s284 + $0x134] sm:$0xf]
        %v379 = vld [vmem:[%s284 + $0x138] sm:$0xf]
        %v380 = vld [vmem:[%s284 + $0x13c] sm:$0xf]
        %v381 = vld [vmem:[%s284 + $0x140] sm:$0xf]
        %v382 = vld [vmem:[%s284 + $0x144] sm:$0xf]
        %v383 = vld [vmem:[%s284 + $0x148] sm:$0xf]
        %v384 = vld [vmem:[%s284 + $0x14c] sm:$0xf]
        %v385 = vld [vmem:[%s284 + $0x150] sm:$0xf]
        %v386 = vld [vmem:[%s284 + $0x154] sm:$0xf]
        %v387 = vld [vmem:[%s284 + $0x158] sm:$0xf]
        %v388 = vld [vmem:[%s284 + $0x15c] sm:$0xf]
        %v389 = vld [vmem:[%s284 + $0x160] sm:$0xf]
        %v390 = vld [vmem:[%s284 + $0x164] sm:$0xf]
        %v391 = vld [vmem:[%s284 + $0x168] sm:$0xf]
        %v392 = vld [vmem:[%s284 + $0x16c] sm:$0xf]
        %v393 = vld [vmem:[%s284 + $0x170] sm:$0xf]
        %v394 = vld [vmem:[%s284 + $0x174] sm:$0xf]
        %v395 = vld [vmem:[%s284 + $0x178] sm:$0xf]
        %v396 = vld [vmem:[%s284 + $0x17c] sm:$0xf]
        %v397 = vld [vmem:[%s284 + $0x180] sm:$0xf]
        %v398 = vld [vmem:[%s284 + $0x184] sm:$0xf]
        %v399 = vld [vmem:[%s284 + $0x188] sm:$0xf]
        %v400 = vld [vmem:[%s284 + $0x18c] sm:$0xf]
        %v401 = vld [vmem:[%s284 + $0x190] sm:$0xf]
        %v402 = vld [vmem:[%s284 + $0x194] sm:$0xf]
        %v403 = vld [vmem:[%s284 + $0x198] sm:$0xf]
        %v404 = vld [vmem:[%s284 + $0x19c] sm:$0xf]
        %v405 = vld [vmem:[%s284 + $0x1a0] sm:$0xf]
        %v406 = vld [vmem:[%s284 + $0x1a4] sm:$0xf]
        %v407 = vld [vmem:[%s284 + $0x1a8] sm:$0xf]
        %v408 = vld [vmem:[%s284 + $0x1ac] sm:$0xf]
        %v409 = vld [vmem:[%s284 + $0x1b0] sm:$0xf]
        %v410 = vld [vmem:[%s284 + $0x1b4] sm:$0xf]
        %v411 = vld [vmem:[%s284 + $0x1b8] sm:$0xf]
        %v412 = vld [vmem:[%s284 + $0x1bc] sm:$0xf]
        %v413 = vld [vmem:[%s284 + $0x1c0] sm:$0xf]
        %v414 = vld [vmem:[%s284 + $0x1c4] sm:$0xf]
        %v415 = vld [vmem:[%s284 + $0x1c8] sm:$0xf]
        %v416 = vld [vmem:[%s284 + $0x1cc] sm:$0xf]
        %v417 = vld [vmem:[%s284 + $0x1d0] sm:$0xf]
        %v418 = vld [vmem:[%s284 + $0x1d4] sm:$0xf]
        %v419 = vld [vmem:[%s284 + $0x1d8] sm:$0xf]
        %v420 = vld [vmem:[%s284 + $0x1dc] sm:$0xf]
        %v421 = vld [vmem:[%s284 + $0x1e0] sm:$0xf]
        %v422 = vld [vmem:[%s284 + $0x1e4] sm:$0xf]
        %v423 = vld [vmem:[%s284 + $0x1e8] sm:$0xf]
        %v424 = vld [vmem:[%s284 + $0x1ec] sm:$0xf]
        %v425 = vld [vmem:[%s284 + $0x1f0] sm:$0xf]
        %v426 = vld [vmem:[%s284 + $0x1f4] sm:$0xf]
        %v427 = vld [vmem:[%s284 + $0x1f8] sm:$0xf]
        %v428 = vld [vmem:[%s284 + $0x1fc] sm:$0xf]
        %v429 = vld [vmem:[%s284 + $0x200] sm:$0xf]
        %v430 = vld [vmem:[%s284 + $0x204] sm:$0xf]
        %v431 = vld [vmem:[%s284 + $0x208] sm:$0xf]
        %v432 = vld [vmem:[%s284 + $0x20c] sm:$0xf]
        %v433 = vld [vmem:[%s284 + $0x210] sm:$0xf]
        %v434 = vld [vmem:[%s284 + $0x214] sm:$0xf]
        %v435 = vld [vmem:[%s284 + $0x218] sm:$0xf]
        %v436 = vld [vmem:[%s284 + $0x21c] sm:$0xf]
        %v437 = vld [vmem:[%s284 + $0x220] sm:$0xf]
        %v438 = vld [vmem:[%s284 + $0x224] sm:$0xf]
        %v439 = vld [vmem:[%s284 + $0x228] sm:$0xf]
        %v440 = vld [vmem:[%s284 + $0x22c] sm:$0xf]
        %v441 = vld [vmem:[%s284 + $0x230] sm:$0xf]
        %v442 = vld [vmem:[%s284 + $0x234] sm:$0xf]
        %v443 = vld [vmem:[%s284 + $0x238] sm:$0xf]
        %v444 = vld [vmem:[%s284 + $0x23c] sm:$0xf]
        %v445 = vld [vmem:[%s284 + $0x240] sm:$0xf]
        %v446 = vld [vmem:[%s284 + $0x244] sm:$0xf]
        %v447 = vld [vmem:[%s284 + $0x248] sm:$0xf]
        %v448 = vld [vmem:[%s284 + $0x24c] sm:$0xf]
        %v449 = vld [vmem:[%s284 + $0x250] sm:$0xf]
        %v450 = vld [vmem:[%s284 + $0x254] sm:$0xf]
        %v451 = vld [vmem:[%s284 + $0x258] sm:$0xf]
        %v452 = vld [vmem:[%s284 + $0x25c] sm:$0xf]
        %v453 = vld [vmem:[%s284 + $0x260] sm:$0xf]
        %v454 = vld [vmem:[%s284 + $0x264] sm:$0xf]
        %v455 = vld [vmem:[%s284 + $0x268] sm:$0xf]
        %v456 = vld [vmem:[%s284 + $0x26c] sm:$0xf]
        %v457 = vld [vmem:[%s284 + $0x270] sm:$0xf]
        %v458 = vld [vmem:[%s284 + $0x274] sm:$0xf]
        %v459 = vld [vmem:[%s284 + $0x278] sm:$0xf]
        %v460 = vld [vmem:[%s284 + $0x27c] sm:$0xf]
        %v461 = vld [vmem:[%s284 + $0x280] sm:$0xf]
        %v462 = vld [vmem:[%s284 + $0x284] sm:$0xf]
        %v463 = vld [vmem:[%s284 + $0x288] sm:$0xf]
        %v464 = vld [vmem:[%s284 + $0x28c] sm:$0xf]
        %v465 = vld [vmem:[%s284 + $0x290] sm:$0xf]
        %v466 = vld [vmem:[%s284 + $0x294] sm:$0xf]
        %v467 = vld [vmem:[%s284 + $0x298] sm:$0xf]
        %v468 = vld [vmem:[%s284 + $0x29c] sm:$0xf]
        %v469 = vld [vmem:[%s284 + $0x2a0] sm:$0xf]
        %v470 = vld [vmem:[%s284 + $0x2a4] sm:$0xf]
        %v471 = vld [vmem:[%s284 + $0x2a8] sm:$0xf]
        %v472 = vld [vmem:[%s284 + $0x2ac] sm:$0xf]
        %v473 = vld [vmem:[%s284 + $0x2b0] sm:$0xf]
        %v474 = vld [vmem:[%s284 + $0x2b4] sm:$0xf]
        %v475 = vld [vmem:[%s284 + $0x2b8] sm:$0xf]
        %v476 = vld [vmem:[%s284 + $0x2bc] sm:$0xf]
        %v477 = vld [vmem:[%s284 + $0x2c0] sm:$0xf]
        %v478 = vld [vmem:[%s284 + $0x2c4] sm:$0xf]
        %v479 = vld [vmem:[%s284 + $0x2c8] sm:$0xf]
        %v480 = vld [vmem:[%s284 + $0x2cc] sm:$0xf]
        %v481 = vld [vmem:[%s284 + $0x2d0] sm:$0xf]
        %v482 = vld [vmem:[%s284 + $0x2d4] sm:$0xf]
        %v483 = vld [vmem:[%s284 + $0x2d8] sm:$0xf]
        %v484 = vld [vmem:[%s284 + $0x2dc] sm:$0xf]
        %v485 = vld [vmem:[%s284 + $0x2e0] sm:$0xf]
        %v486 = vld [vmem:[%s284 + $0x2e4] sm:$0xf]
        %v487 = vld [vmem:[%s284 + $0x2e8] sm:$0xf]
        %v488 = vld [vmem:[%s284 + $0x2ec] sm:$0xf]
        %v489 = vld [vmem:[%s284 + $0x2f0] sm:$0xf]
        %v490 = vld [vmem:[%s284 + $0x2f4] sm:$0xf]
        %v491 = vld [vmem:[%s284 + $0x2f8] sm:$0xf]
        %v492 = vld [vmem:[%s284 + $0x2fc] sm:$0xf]
        %v493 = vld [vmem:[%s284 + $0x300] sm:$0xf]
        %v494 = vld [vmem:[%s284 + $0x304] sm:$0xf]
        %v495 = vld [vmem:[%s284 + $0x308] sm:$0xf]
        %v496 = vld [vmem:[%s284 + $0x30c] sm:$0xf]
        %v497 = vld [vmem:[%s284 + $0x310] sm:$0xf]
        %v498 = vld [vmem:[%s284 + $0x314] sm:$0xf]
        %v499 = vld [vmem:[%s284 + $0x318] sm:$0xf]
        %v500 = vld [vmem:[%s284 + $0x31c] sm:$0xf]
        %v501 = vld [vmem:[%s284 + $0x320] sm:$0xf]
        %v502 = vld [vmem:[%s284 + $0x324] sm:$0xf]
        %v503 = vld [vmem:[%s284 + $0x328] sm:$0xf]
        %v504 = vld [vmem:[%s284 + $0x32c] sm:$0xf]
        %v505 = vld [vmem:[%s284 + $0x330] sm:$0xf]
        %v506 = vld [vmem:[%s284 + $0x334] sm:$0xf]
        %v507 = vld [vmem:[%s284 + $0x338] sm:$0xf]
        %v508 = vld [vmem:[%s284 + $0x33c] sm:$0xf]
        %v509 = vld [vmem:[%s284 + $0x340] sm:$0xf]
        %v510 = vld [vmem:[%s284 + $0x344] sm:$0xf]
        %v511 = vld [vmem:[%s284 + $0x348] sm:$0xf]
        %v512 = vld [vmem:[%s284 + $0x34c] sm:$0xf]
        %v513 = vld [vmem:[%s284 + $0x350] sm:$0xf]
        %v514 = vld [vmem:[%s284 + $0x354] sm:$0xf]
        %v515 = vld [vmem:[%s284 + $0x358] sm:$0xf]
        %v516 = vld [vmem:[%s284 + $0x35c] sm:$0xf]
        %v517 = vld [vmem:[%s284 + $0x360] sm:$0xf]
        %v518 = vld [vmem:[%s284 + $0x364] sm:$0xf]
        %v519 = vld [vmem:[%s284 + $0x368] sm:$0xf]
        %v520 = vld [vmem:[%s284 + $0x36c] sm:$0xf]
        %v521 = vld [vmem:[%s284 + $0x370] sm:$0xf]
        %v522 = vld [vmem:[%s284 + $0x374] sm:$0xf]
        %v523 = vld [vmem:[%s284 + $0x378] sm:$0xf]
        %v524 = vld [vmem:[%s284 + $0x37c] sm:$0xf]
        %v525 = vld [vmem:[%s284 + $0x380] sm:$0xf]
        %v526 = vld [vmem:[%s284 + $0x384] sm:$0xf]
        %v527 = vld [vmem:[%s284 + $0x388] sm:$0xf]
        %v528 = vld [vmem:[%s284 + $0x38c] sm:$0xf]
        %v529 = vld [vmem:[%s284 + $0x390] sm:$0xf]
        %v530 = vld [vmem:[%s284 + $0x394] sm:$0xf]
        %v531 = vld [vmem:[%s284 + $0x398] sm:$0xf]
        %v532 = vld [vmem:[%s284 + $0x39c] sm:$0xf]
        %v533 = vld [vmem:[%s284 + $0x3a0] sm:$0xf]
        %v534 = vld [vmem:[%s284 + $0x3a4] sm:$0xf]
        %v535 = vld [vmem:[%s284 + $0x3a8] sm:$0xf]
        %v536 = vld [vmem:[%s284 + $0x3ac] sm:$0xf]
        %v537 = vld [vmem:[%s284 + $0x3b0] sm:$0xf]
        %v538 = vld [vmem:[%s284 + $0x3b4] sm:$0xf]
        %v539 = vld [vmem:[%s284 + $0x3b8] sm:$0xf]
        %v540 = vld [vmem:[%s284 + $0x3bc] sm:$0xf]
        %v541 = vld [vmem:[%s284 + $0x3c0] sm:$0xf]
        %v542 = vld [vmem:[%s284 + $0x3c4] sm:$0xf]
        %v543 = vld [vmem:[%s284 + $0x3c8] sm:$0xf]
        %v544 = vld [vmem:[%s284 + $0x3cc] sm:$0xf]
        %v545 = vld [vmem:[%s284 + $0x3d0] sm:$0xf]
        %v546 = vld [vmem:[%s284 + $0x3d4] sm:$0xf]
        %v547 = vld [vmem:[%s284 + $0x3d8] sm:$0xf]
        %v548 = vld [vmem:[%s284 + $0x3dc] sm:$0xf]
        %v549 = vld [vmem:[%s284 + $0x3e0] sm:$0xf]
        %v550 = vld [vmem:[%s284 + $0x3e4] sm:$0xf]
        %v551 = vld [vmem:[%s284 + $0x3e8] sm:$0xf]
        %v552 = vld [vmem:[%s284 + $0x3ec] sm:$0xf]
        %v553 = vld [vmem:[%s284 + $0x3f0] sm:$0xf]
        %v554 = vld [vmem:[%s284 + $0x3f4] sm:$0xf]
        %v555 = vld [vmem:[%s284 + $0x3f8] sm:$0xf]
        %v556 = vld [vmem:[%s284 + $0x3fc] sm:$0xf]
        %v557 = vld [vmem:[%s284 + $0x400] sm:$0xf]
        %v558 = vld [vmem:[%s284 + $0x404] sm:$0xf]
        %v559 = vld [vmem:[%s284 + $0x408] sm:$0xf]
        %v560 = vld [vmem:[%s284 + $0x40c] sm:$0xf]
        %v561 = vld [vmem:[%s284 + $0x410] sm:$0xf]
        %v562 = vld [vmem:[%s284 + $0x414] sm:$0xf]
        %v563 = vld [vmem:[%s284 + $0x418] sm:$0xf]
        %v564 = vld [vmem:[%s284 + $0x41c] sm:$0xf]
        %v565 = vld [vmem:[%s284 + $0x420] sm:$0xf]
        %v566 = vld [vmem:[%s284 + $0x424] sm:$0xf]
        %v567 = vld [vmem:[%s284 + $0x428] sm:$0xf]
        %v568 = vld [vmem:[%s284 + $0x42c] sm:$0xf]
        %v569 = vld [vmem:[%s284 + $0x430] sm:$0xf]
        %v570 = vld [vmem:[%s284 + $0x434] sm:$0xf]
        %v571 = vld [vmem:[%s284 + $0x438] sm:$0xf]
        %v572 = vld [vmem:[%s284 + $0x43c] sm:$0xf]
        %v573 = vld [vmem:[%s284 + $0x440] sm:$0xf]
        %v574 = vld [vmem:[%s284 + $0x444] sm:$0xf]
        %v575 = vld [vmem:[%s284 + $0x448] sm:$0xf]
        %v576 = vld [vmem:[%s284 + $0x44c] sm:$0xf]
        %v577 = vld [vmem:[%s284 + $0x450] sm:$0xf]
        %v578 = vld [vmem:[%s284 + $0x454] sm:$0xf]
        %v579 = vld [vmem:[%s284 + $0x458] sm:$0xf]
        %v580 = vld [vmem:[%s284 + $0x45c] sm:$0xf]
        %v581 = vld [vmem:[%s284 + $0x460] sm:$0xf]
        %v582 = vld [vmem:[%s284 + $0x464] sm:$0xf]
        %v583 = vld [vmem:[%s284 + $0x468] sm:$0xf]
        %v584 = vld [vmem:[%s284 + $0x46c] sm:$0xf]
        %v585 = vld [vmem:[%s284 + $0x470] sm:$0xf]
        %v586 = vld [vmem:[%s284 + $0x474] sm:$0xf]
        %v587 = vld [vmem:[%s284 + $0x478] sm:$0xf]
        %v588 = vld [vmem:[%s284 + $0x47c] sm:$0xf]
        %v589 = vld [vmem:[%s284 + $0x480] sm:$0xf]
        %v590 = vld [vmem:[%s284 + $0x484] sm:$0xf]
        %v591 = vld [vmem:[%s284 + $0x488] sm:$0xf]
        %v592 = vld [vmem:[%s284 + $0x48c] sm:$0xf]
        %v593 = vld [vmem:[%s284 + $0x490] sm:$0xf]
        %v594 = vld [vmem:[%s284 + $0x494] sm:$0xf]
        %v595 = vld [vmem:[%s284 + $0x498] sm:$0xf]
        %v596 = vld [vmem:[%s284 + $0x49c] sm:$0xf]
        %v597 = vld [vmem:[%s284 + $0x4a0] sm:$0xf]
        %v598 = vld [vmem:[%s284 + $0x4a4] sm:$0xf]
        %v599 = vld [vmem:[%s284 + $0x4a8] sm:$0xf]
        %v600 = vld [vmem:[%s284 + $0x4ac] sm:$0xf]
        %v601 = vld [vmem:[%s284 + $0x4b0] sm:$0xf]
        %v602 = vld [vmem:[%s284 + $0x4b4] sm:$0xf]
        %v603 = vld [vmem:[%s284 + $0x4b8] sm:$0xf]
        %v604 = vld [vmem:[%s284 + $0x4bc] sm:$0xf]
        %v605 = vld [vmem:[%s284 + $0x4c0] sm:$0xf]
        %v606 = vld [vmem:[%s284 + $0x4c4] sm:$0xf]
        %v607 = vld [vmem:[%s284 + $0x4c8] sm:$0xf]
        %v608 = vld [vmem:[%s284 + $0x4cc] sm:$0xf]
        %v609 = vld [vmem:[%s284 + $0x4d0] sm:$0xf]
        %v610 = vld [vmem:[%s284 + $0x4d4] sm:$0xf]
        %v611 = vld [vmem:[%s284 + $0x4d8] sm:$0xf]
        %v612 = vld [vmem:[%s284 + $0x4dc] sm:$0xf]
        %v613 = vld [vmem:[%s284 + $0x4e0] sm:$0xf]
        %v614 = vld [vmem:[%s284 + $0x4e4] sm:$0xf]
        %v615 = vld [vmem:[%s284 + $0x4e8] sm:$0xf]
        %v616 = vld [vmem:[%s284 + $0x4ec] sm:$0xf]
        %v617 = vld [vmem:[%s284 + $0x4f0] sm:$0xf]
        %v618 = vld [vmem:[%s284 + $0x4f4] sm:$0xf]
        %v619 = vld [vmem:[%s284 + $0x4f8] sm:$0xf]
        %v620 = vld [vmem:[%s284 + $0x4fc] sm:$0xf]
        %v621 = vld [vmem:[%s284 + $0x500] sm:$0xf]
        %v622 = vld [vmem:[%s284 + $0x504] sm:$0xf]
        %v623 = vld [vmem:[%s284 + $0x508] sm:$0xf]
        %v624 = vld [vmem:[%s284 + $0x50c] sm:$0xf]
        %v625 = vld [vmem:[%s284 + $0x510] sm:$0xf]
        %v626 = vld [vmem:[%s284 + $0x514] sm:$0xf]
        %v627 = vld [vmem:[%s284 + $0x518] sm:$0xf]
        %v628 = vld [vmem:[%s284 + $0x51c] sm:$0xf]
        %v629 = vld [vmem:[%s284 + $0x520] sm:$0xf]
        %v630 = vld [vmem:[%s284 + $0x524] sm:$0xf]
        %v631 = vld [vmem:[%s284 + $0x528] sm:$0xf]
        %v632 = vld [vmem:[%s284 + $0x52c] sm:$0xf]
        %v633 = vld [vmem:[%s284 + $0x530] sm:$0xf]
        %v634 = vld [vmem:[%s284 + $0x534] sm:$0xf]
        %v635 = vld [vmem:[%s284 + $0x538] sm:$0xf]
        %v636 = vld [vmem:[%s284 + $0x53c] sm:$0xf]
        %v637 = vld [vmem:[%s284 + $0x540] sm:$0xf]
        %v638 = vld [vmem:[%s284 + $0x544] sm:$0xf]
        %v639 = vld [vmem:[%s284 + $0x548] sm:$0xf]
        %v640 = vld [vmem:[%s284 + $0x54c] sm:$0xf]
        %v641 = vld [vmem:[%s284 + $0x550] sm:$0xf]
        %v642 = vld [vmem:[%s284 + $0x554] sm:$0xf]
        %v643 = vld [vmem:[%s284 + $0x558] sm:$0xf]
        %v644 = vld [vmem:[%s284 + $0x55c] sm:$0xf]
        %v645 = vld [vmem:[%s284 + $0x560] sm:$0xf]
        %v646 = vld [vmem:[%s284 + $0x564] sm:$0xf]
        %v647 = vld [vmem:[%s284 + $0x568] sm:$0xf]
        %v648 = vld [vmem:[%s284 + $0x56c] sm:$0xf]
        %v649 = vld [vmem:[%s284 + $0x570] sm:$0xf]
        %v650 = vld [vmem:[%s284 + $0x574] sm:$0xf]
        %v651 = vld [vmem:[%s284 + $0x578] sm:$0xf]
        %v652 = vld [vmem:[%s284 + $0x57c] sm:$0xf]
        %v653 = vld [vmem:[%s284 + $0x580] sm:$0xf]
        %v654 = vld [vmem:[%s284 + $0x584] sm:$0xf]
        %v655 = vld [vmem:[%s284 + $0x588] sm:$0xf]
        %v656 = vld [vmem:[%s284 + $0x58c] sm:$0xf]
        %v657 = vld [vmem:[%s284 + $0x590] sm:$0xf]
        %v658 = vld [vmem:[%s284 + $0x594] sm:$0xf]
        %v659 = vld [vmem:[%s284 + $0x598] sm:$0xf]
        %v660 = vld [vmem:[%s284 + $0x59c] sm:$0xf]
        %v661 = vld [vmem:[%s284 + $0x5a0] sm:$0xf]
        %v662 = vld [vmem:[%s284 + $0x5a4] sm:$0xf]
        %v663 = vld [vmem:[%s284 + $0x5a8] sm:$0xf]
        %v664 = vld [vmem:[%s284 + $0x5ac] sm:$0xf]
        %v665 = vld [vmem:[%s284 + $0x5b0] sm:$0xf]
        %v666 = vld [vmem:[%s284 + $0x5b4] sm:$0xf]
        %v667 = vld [vmem:[%s284 + $0x5b8] sm:$0xf]
        %v668 = vld [vmem:[%s284 + $0x5bc] sm:$0xf]
        %v669 = vld [vmem:[%s284 + $0x5c0] sm:$0xf]
        %v670 = vld [vmem:[%s284 + $0x5c4] sm:$0xf]
        %v671 = vld [vmem:[%s284 + $0x5c8] sm:$0xf]
        %v672 = vld [vmem:[%s284 + $0x5cc] sm:$0xf]
        %v673 = vld [vmem:[%s284 + $0x5d0] sm:$0xf]
        %v674 = vld [vmem:[%s284 + $0x5d4] sm:$0xf]
        %v675 = vld [vmem:[%s284 + $0x5d8] sm:$0xf]
        %v676 = vld [vmem:[%s284 + $0x5dc] sm:$0xf]
        %v677 = vld [vmem:[%s284 + $0x5e0] sm:$0xf]
        %v678 = vld [vmem:[%s284 + $0x5e4] sm:$0xf]
        %v679 = vld [vmem:[%s284 + $0x5e8] sm:$0xf]
        %v680 = vld [vmem:[%s284 + $0x5ec] sm:$0xf]
        %v681 = vld [vmem:[%s284 + $0x5f0] sm:$0xf]
        %v682 = vld [vmem:[%s284 + $0x5f4] sm:$0xf]
        %v683 = vld [vmem:[%s284 + $0x5f8] sm:$0xf]
        %v684 = vld [vmem:[%s284 + $0x5fc] sm:$0xf]
        %v685 = vld [vmem:[%s284 + $0x600] sm:$0xf]
        %v686 = vld [vmem:[%s284 + $0x604] sm:$0xf]
        %v687 = vld [vmem:[%s284 + $0x608] sm:$0xf]
        %v688 = vld [vmem:[%s284 + $0x60c] sm:$0xf]
        %v689 = vld [vmem:[%s284 + $0x610] sm:$0xf]
        %v690 = vld [vmem:[%s284 + $0x614] sm:$0xf]
        %v691 = vld [vmem:[%s284 + $0x618] sm:$0xf]
        %v692 = vld [vmem:[%s284 + $0x61c] sm:$0xf]
        %v693 = vld [vmem:[%s284 + $0x620] sm:$0xf]
        %v694 = vld [vmem:[%s284 + $0x624] sm:$0xf]
        %v695 = vld [vmem:[%s284 + $0x628] sm:$0xf]
        %v696 = vld [vmem:[%s284 + $0x62c] sm:$0xf]
        %v697 = vld [vmem:[%s284 + $0x630] sm:$0xf]
        %v698 = vld [vmem:[%s284 + $0x634] sm:$0xf]
        %v699 = vld [vmem:[%s284 + $0x638] sm:$0xf]
        %v700 = vld [vmem:[%s284 + $0x63c] sm:$0xf]
        %v701 = vld [vmem:[%s284 + $0x640] sm:$0xf]
        %v702 = vld [vmem:[%s284 + $0x644] sm:$0xf]
        %v703 = vld [vmem:[%s284 + $0x648] sm:$0xf]
        %v704 = vld [vmem:[%s284 + $0x64c] sm:$0xf]
        %v705 = vld [vmem:[%s284 + $0x650] sm:$0xf]
        %v706 = vld [vmem:[%s284 + $0x654] sm:$0xf]
        %v707 = vld [vmem:[%s284 + $0x658] sm:$0xf]
        %v708 = vld [vmem:[%s284 + $0x65c] sm:$0xf]
        %v709 = vld [vmem:[%s284 + $0x660] sm:$0xf]
        %v710 = vld [vmem:[%s284 + $0x664] sm:$0xf]
        %v711 = vld [vmem:[%s284 + $0x668] sm:$0xf]
        %v712 = vld [vmem:[%s284 + $0x66c] sm:$0xf]
        %v713 = vld [vmem:[%s284 + $0x670] sm:$0xf]
        %v714 = vld [vmem:[%s284 + $0x674] sm:$0xf]
        %v715 = vld [vmem:[%s284 + $0x678] sm:$0xf]
        %v716 = vld [vmem:[%s284 + $0x67c] sm:$0xf]
        %v717 = vld [vmem:[%s284 + $0x680] sm:$0xf]
        %v718 = vld [vmem:[%s284 + $0x684] sm:$0xf]
        %v719 = vld [vmem:[%s284 + $0x688] sm:$0xf]
        %v720 = vld [vmem:[%s284 + $0x68c] sm:$0xf]
        %v721 = vld [vmem:[%s284 + $0x690] sm:$0xf]
        %v722 = vld [vmem:[%s284 + $0x694] sm:$0xf]
        %v723 = vld [vmem:[%s284 + $0x698] sm:$0xf]
        %v724 = vld [vmem:[%s284 + $0x69c] sm:$0xf]
        %v725 = vld [vmem:[%s284 + $0x6a0] sm:$0xf]
        %v726 = vld [vmem:[%s284 + $0x6a4] sm:$0xf]
        %v727 = vld [vmem:[%s284 + $0x6a8] sm:$0xf]
        %v728 = vld [vmem:[%s284 + $0x6ac] sm:$0xf]
        %v729 = vld [vmem:[%s284 + $0x6b0] sm:$0xf]
        %v730 = vld [vmem:[%s284 + $0x6b4] sm:$0xf]
        %v731 = vld [vmem:[%s284 + $0x6b8] sm:$0xf]
        %v732 = vld [vmem:[%s284 + $0x6bc] sm:$0xf]
        %v733 = vld [vmem:[%s284 + $0x6c0] sm:$0xf]
        %v734 = vld [vmem:[%s284 + $0x6c4] sm:$0xf]
        %v735 = vld [vmem:[%s284 + $0x6c8] sm:$0xf]
        %v736 = vld [vmem:[%s284 + $0x6cc] sm:$0xf]
        %v737 = vld [vmem:[%s284 + $0x6d0] sm:$0xf]
        %v738 = vld [vmem:[%s284 + $0x6d4] sm:$0xf]
        %v739 = vld [vmem:[%s284 + $0x6d8] sm:$0xf]
        %v740 = vld [vmem:[%s284 + $0x6dc] sm:$0xf]
        %v741 = vld [vmem:[%s284 + $0x6e0] sm:$0xf]
        %v742 = vld [vmem:[%s284 + $0x6e4] sm:$0xf]
        %v743 = vld [vmem:[%s284 + $0x6e8] sm:$0xf]
        %v744 = vld [vmem:[%s284 + $0x6ec] sm:$0xf]
        %v745 = vld [vmem:[%s284 + $0x6f0] sm:$0xf]
        %v746 = vld [vmem:[%s284 + $0x6f4] sm:$0xf]
        %v747 = vld [vmem:[%s284 + $0x6f8] sm:$0xf]
        %v748 = vld [vmem:[%s284 + $0x6fc] sm:$0xf]
        %v749 = vld [vmem:[%s284 + $0x700] sm:$0xf]
        %v750 = vld [vmem:[%s284 + $0x704] sm:$0xf]
        %v751 = vld [vmem:[%s284 + $0x708] sm:$0xf]
        %v752 = vld [vmem:[%s284 + $0x70c] sm:$0xf]
        %v753 = vld [vmem:[%s284 + $0x710] sm:$0xf]
        %v754 = vld [vmem:[%s284 + $0x714] sm:$0xf]
        %v755 = vld [vmem:[%s284 + $0x718] sm:$0xf]
        %v756 = vld [vmem:[%s284 + $0x71c] sm:$0xf]
        %v757 = vld [vmem:[%s284 + $0x720] sm:$0xf]
        %v758 = vld [vmem:[%s284 + $0x724] sm:$0xf]
        %v759 = vld [vmem:[%s284 + $0x728] sm:$0xf]
        %v760 = vld [vmem:[%s284 + $0x72c] sm:$0xf]
        %v761 = vld [vmem:[%s284 + $0x730] sm:$0xf]
        %v762 = vld [vmem:[%s284 + $0x734] sm:$0xf]
        %v763 = vld [vmem:[%s284 + $0x738] sm:$0xf]
        %v764 = vld [vmem:[%s284 + $0x73c] sm:$0xf]
        %v765 = vld [vmem:[%s284 + $0x740] sm:$0xf]
        %v766 = vld [vmem:[%s284 + $0x744] sm:$0xf]
        %v767 = vld [vmem:[%s284 + $0x748] sm:$0xf]
        %v768 = vld [vmem:[%s284 + $0x74c] sm:$0xf]
        %v769 = vld [vmem:[%s284 + $0x750] sm:$0xf]
        %v770 = vld [vmem:[%s284 + $0x754] sm:$0xf]
        %v771 = vld [vmem:[%s284 + $0x758] sm:$0xf]
        %v772 = vld [vmem:[%s284 + $0x75c] sm:$0xf]
        %v773 = vld [vmem:[%s284 + $0x760] sm:$0xf]
        %v774 = vld [vmem:[%s284 + $0x764] sm:$0xf]
        %v775 = vld [vmem:[%s284 + $0x768] sm:$0xf]
        %v776 = vld [vmem:[%s284 + $0x76c] sm:$0xf]
        %v777 = vld [vmem:[%s284 + $0x770] sm:$0xf]
        %v778 = vld [vmem:[%s284 + $0x774] sm:$0xf]
        %v779 = vld [vmem:[%s284 + $0x778] sm:$0xf]
        %v780 = vld [vmem:[%s284 + $0x77c] sm:$0xf]
        %v781 = vld [vmem:[%s284 + $0x780] sm:$0xf]
        %v782 = vld [vmem:[%s284 + $0x784] sm:$0xf]
        %v783 = vld [vmem:[%s284 + $0x788] sm:$0xf]
        %v784 = vld [vmem:[%s284 + $0x78c] sm:$0xf]
        %v785 = vld [vmem:[%s284 + $0x790] sm:$0xf]
        %v786 = vld [vmem:[%s284 + $0x794] sm:$0xf]
        %v787 = vld [vmem:[%s284 + $0x798] sm:$0xf]
        %v788 = vld [vmem:[%s284 + $0x79c] sm:$0xf]
        %v789 = vld [vmem:[%s284 + $0x7a0] sm:$0xf]
        %v790 = vld [vmem:[%s284 + $0x7a4] sm:$0xf]
        %v791 = vld [vmem:[%s284 + $0x7a8] sm:$0xf]
        %v792 = vld [vmem:[%s284 + $0x7ac] sm:$0xf]
        %v793 = vld [vmem:[%s284 + $0x7b0] sm:$0xf]
        %v794 = vld [vmem:[%s284 + $0x7b4] sm:$0xf]
        %v795 = vld [vmem:[%s284 + $0x7b8] sm:$0xf]
        %v796 = vld [vmem:[%s284 + $0x7bc] sm:$0xf]
        %v797 = vld [vmem:[%s284 + $0x7c0] sm:$0xf]
        %v798 = vld [vmem:[%s284 + $0x7c4] sm:$0xf]
        %v799 = vld [vmem:[%s284 + $0x7c8] sm:$0xf]
        %v800 = vld [vmem:[%s284 + $0x7cc] sm:$0xf]
        %v801 = vld [vmem:[%s284 + $0x7d0] sm:$0xf]
        %v802 = vld [vmem:[%s284 + $0x7d4] sm:$0xf]
        %v803 = vld [vmem:[%s284 + $0x7d8] sm:$0xf]
        %v804 = vld [vmem:[%s284 + $0x7dc] sm:$0xf]
        %v805 = vld [vmem:[%s284 + $0x7e0] sm:$0xf]
        %v806 = vld [vmem:[%s284 + $0x7e4] sm:$0xf]
        %v807 = vld [vmem:[%s284 + $0x7e8] sm:$0xf]
        %v808 = vld [vmem:[%s284 + $0x7ec] sm:$0xf]
        %v809 = vld [vmem:[%s284 + $0x7f0] sm:$0xf]
        %v810 = vld [vmem:[%s284 + $0x7f4] sm:$0xf]
        %v811 = vld [vmem:[%s284 + $0x7f8] sm:$0xf]
        %v812 = vld [vmem:[%s284 + $0x7fc] sm:$0xf]
        %v813 = vld [vmem:[%s284 + $0x800] sm:$0xf]
        %v814 = vld [vmem:[%s284 + $0x804] sm:$0xf]
        %v815 = vld [vmem:[%s284 + $0x808] sm:$0xf]
        %v816 = vld [vmem:[%s284 + $0x80c] sm:$0xf]
        %v817 = vld [vmem:[%s284 + $0x810] sm:$0xf]
        %v818 = vld [vmem:[%s284 + $0x814] sm:$0xf]
        %v819 = vld [vmem:[%s284 + $0x818] sm:$0xf]
        %v820 = vld [vmem:[%s284 + $0x81c] sm:$0xf]
        %v821 = vld [vmem:[%s284 + $0x820] sm:$0xf]
        %v822 = vld [vmem:[%s284 + $0x824] sm:$0xf]
        %v823 = vld [vmem:[%s284 + $0x828] sm:$0xf]
        %v824 = vld [vmem:[%s284 + $0x82c] sm:$0xf]
        %v825 = vld [vmem:[%s284 + $0x830] sm:$0xf]
        %v826 = vld [vmem:[%s284 + $0x834] sm:$0xf]
        %v827 = vld [vmem:[%s284 + $0x838] sm:$0xf]
        %v828 = vld [vmem:[%s284 + $0x83c] sm:$0xf]
        %v829 = vld [vmem:[%s284 + $0x840] sm:$0xf]
        %v830 = vld [vmem:[%s284 + $0x844] sm:$0xf]
        %v831 = vld [vmem:[%s284 + $0x848] sm:$0xf]
        %v832 = vld [vmem:[%s284 + $0x84c] sm:$0xf]
        %v833 = vld [vmem:[%s284 + $0x850] sm:$0xf]
        %v834 = vld [vmem:[%s284 + $0x854] sm:$0xf]
        %v835 = vld [vmem:[%s284 + $0x858] sm:$0xf]
        %v836 = vld [vmem:[%s284 + $0x85c] sm:$0xf]
        %v837 = vld [vmem:[%s284 + $0x860] sm:$0xf]
        %v838 = vld [vmem:[%s284 + $0x864] sm:$0xf]
        %v839 = vld [vmem:[%s284 + $0x868] sm:$0xf]
        %v840 = vld [vmem:[%s284 + $0x86c] sm:$0xf]
        %v841 = vld [vmem:[%s284 + $0x870] sm:$0xf]
        %v842 = vld [vmem:[%s284 + $0x874] sm:$0xf]
        %v843 = vld [vmem:[%s284 + $0x878] sm:$0xf]
        %v844 = vld [vmem:[%s284 + $0x87c] sm:$0xf]
        %v845 = vld [vmem:[%s284 + $0x880] sm:$0xf]
        %v846 = vld [vmem:[%s284 + $0x884] sm:$0xf]
        %v847 = vld [vmem:[%s284 + $0x888] sm:$0xf]
        %v848 = vld [vmem:[%s284 + $0x88c] sm:$0xf]
        %v849 = vld [vmem:[%s284 + $0x890] sm:$0xf]
        %v850 = vld [vmem:[%s284 + $0x894] sm:$0xf]
        %v851 = vld [vmem:[%s284 + $0x898] sm:$0xf]
        %v852 = vld [vmem:[%s284 + $0x89c] sm:$0xf]
        %v853 = vld [vmem:[%s284 + $0x8a0] sm:$0xf]
        %v854 = vld [vmem:[%s284 + $0x8a4] sm:$0xf]
        %v855 = vld [vmem:[%s284 + $0x8a8] sm:$0xf]
        %v856 = vld [vmem:[%s284 + $0x8ac] sm:$0xf]
        %v857 = vld [vmem:[%s284 + $0x8b0] sm:$0xf]
        %v858 = vld [vmem:[%s284 + $0x8b4] sm:$0xf]
        %v859 = vld [vmem:[%s284 + $0x8b8] sm:$0xf]
        %v860 = vld [vmem:[%s284 + $0x8bc] sm:$0xf]
        %v861 = vld [vmem:[%s284 + $0x8c0] sm:$0xf]
        %v862 = vld [vmem:[%s284 + $0x8c4] sm:$0xf]
        %v863 = vld [vmem:[%s284 + $0x8c8] sm:$0xf]
        %v864 = vld [vmem:[%s284 + $0x8cc] sm:$0xf]
        %v865 = vld [vmem:[%s284 + $0x8d0] sm:$0xf]
        %v866 = vld [vmem:[%s284 + $0x8d4] sm:$0xf]
        %v867 = vld [vmem:[%s284 + $0x8d8] sm:$0xf]
        %v868 = vld [vmem:[%s284 + $0x8dc] sm:$0xf]
        %v869 = vld [vmem:[%s284 + $0x8e0] sm:$0xf]
        %v870 = vld [vmem:[%s284 + $0x8e4] sm:$0xf]
        %v871 = vld [vmem:[%s284 + $0x8e8] sm:$0xf]
        %v872 = vld [vmem:[%s284 + $0x8ec] sm:$0xf]
        %v873 = vld [vmem:[%s284 + $0x8f0] sm:$0xf]
        %v874 = vld [vmem:[%s284 + $0x8f4] sm:$0xf]
        %v875 = vld [vmem:[%s284 + $0x8f8] sm:$0xf]
        %v876 = vld [vmem:[%s284 + $0x8fc] sm:$0xf]
        %v877 = vld [vmem:[%s284 + $0x900] sm:$0xf]
        %v878 = vld [vmem:[%s284 + $0x904] sm:$0xf]
        %v879 = vld [vmem:[%s284 + $0x908] sm:$0xf]
        %v880 = vld [vmem:[%s284 + $0x90c] sm:$0xf]
        %v881 = vld [vmem:[%s284 + $0x910] sm:$0xf]
        %v882 = vld [vmem:[%s284 + $0x914] sm:$0xf]
        %v883 = vld [vmem:[%s284 + $0x918] sm:$0xf]
        %v884 = vld [vmem:[%s284 + $0x91c] sm:$0xf]
        %v885 = vld [vmem:[%s284 + $0x920] sm:$0xf]
        %v886 = vld [vmem:[%s284 + $0x924] sm:$0xf]
        %v887 = vld [vmem:[%s284 + $0x928] sm:$0xf]
        %v888 = vld [vmem:[%s284 + $0x92c] sm:$0xf]
        %v889 = vld [vmem:[%s284 + $0x930] sm:$0xf]
        %v890 = vld [vmem:[%s284 + $0x934] sm:$0xf]
        %v891 = vld [vmem:[%s284 + $0x938] sm:$0xf]
        %v892 = vld [vmem:[%s284 + $0x93c] sm:$0xf]
        %v893 = vld [vmem:[%s284 + $0x940] sm:$0xf]
        %v894 = vld [vmem:[%s284 + $0x944] sm:$0xf]
        %v895 = vld [vmem:[%s284 + $0x948] sm:$0xf]
        %v896 = vld [vmem:[%s284 + $0x94c] sm:$0xf]
        %v897 = vld [vmem:[%s284 + $0x950] sm:$0xf]
        %v898 = vld [vmem:[%s284 + $0x954] sm:$0xf]
        %v899 = vld [vmem:[%s284 + $0x958] sm:$0xf]
        %v900 = vld [vmem:[%s284 + $0x95c] sm:$0xf]
        %v901 = vld [vmem:[%s284 + $0x960] sm:$0xf]
        %v902 = vld [vmem:[%s284 + $0x964] sm:$0xf]
        %v903 = vld [vmem:[%s284 + $0x968] sm:$0xf]
        %v904 = vld [vmem:[%s284 + $0x96c] sm:$0xf]
        %v905 = vld [vmem:[%s284 + $0x970] sm:$0xf]
        %v906 = vld [vmem:[%s284 + $0x974] sm:$0xf]
        %v907 = vld [vmem:[%s284 + $0x978] sm:$0xf]
        %v908 = vld [vmem:[%s284 + $0x97c] sm:$0xf]
        %v909 = vld [vmem:[%s284 + $0x980] sm:$0xf]
        %v910 = vld [vmem:[%s284 + $0x984] sm:$0xf]
        %v911 = vld [vmem:[%s284 + $0x988] sm:$0xf]
        %v912 = vld [vmem:[%s284 + $0x98c] sm:$0xf]
        %v913 = vld [vmem:[%s284 + $0x990] sm:$0xf]
        %v914 = vld [vmem:[%s284 + $0x994] sm:$0xf]
        %v915 = vld [vmem:[%s284 + $0x998] sm:$0xf]
        %v916 = vld [vmem:[%s284 + $0x99c] sm:$0xf]
        %v917 = vld [vmem:[%s284 + $0x9a0] sm:$0xf]
        %v918 = vld [vmem:[%s284 + $0x9a4] sm:$0xf]
        %v919 = vld [vmem:[%s284 + $0x9a8] sm:$0xf]
        %v920 = vld [vmem:[%s284 + $0x9ac] sm:$0xf]
        %v921 = vld [vmem:[%s284 + $0x9b0] sm:$0xf]
        %v922 = vld [vmem:[%s284 + $0x9b4] sm:$0xf]
        %v923 = vld [vmem:[%s284 + $0x9b8] sm:$0xf]
        %v924 = vld [vmem:[%s284 + $0x9bc] sm:$0xf]
        %v925 = vld [vmem:[%s284 + $0x9c0] sm:$0xf]
        %v926 = vld [vmem:[%s284 + $0x9c4] sm:$0xf]
        %v927 = vld [vmem:[%s284 + $0x9c8] sm:$0xf]
        %v928 = vld [vmem:[%s284 + $0x9cc] sm:$0xf]
        %v929 = vld [vmem:[%s284 + $0x9d0] sm:$0xf]
        %v930 = vld [vmem:[%s284 + $0x9d4] sm:$0xf]
        %v931 = vld [vmem:[%s284 + $0x9d8] sm:$0xf]
        %v932 = vld [vmem:[%s284 + $0x9dc] sm:$0xf]
        %v933 = vld [vmem:[%s284 + $0x9e0] sm:$0xf]
        %v934 = vld [vmem:[%s284 + $0x9e4] sm:$0xf]
        %v935 = vld [vmem:[%s284 + $0x9e8] sm:$0xf]
        %v936 = vld [vmem:[%s284 + $0x9ec] sm:$0xf]
        %v937 = vld [vmem:[%s284 + $0x9f0] sm:$0xf]
        %v938 = vld [vmem:[%s284 + $0x9f4] sm:$0xf]
        %v939 = vld [vmem:[%s284 + $0x9f8] sm:$0xf]
        %v940 = vld [vmem:[%s284 + $0x9fc] sm:$0xf]
        %v941 = vld [vmem:[%s284 + $0xa00] sm:$0xf]
        %v942 = vld [vmem:[%s284 + $0xa04] sm:$0xf]
        %v943 = vld [vmem:[%s284 + $0xa08] sm:$0xf]
        %v944 = vld [vmem:[%s284 + $0xa0c] sm:$0xf]
        %v945 = vld [vmem:[%s284 + $0xa10] sm:$0xf]
        %v946 = vld [vmem:[%s284 + $0xa14] sm:$0xf]
        %v947 = vld [vmem:[%s284 + $0xa18] sm:$0xf]
        %v948 = vld [vmem:[%s284 + $0xa1c] sm:$0xf]
        %v949 = vld [vmem:[%s284 + $0xa20] sm:$0xf]
        %v950 = vld [vmem:[%s284 + $0xa24] sm:$0xf]
        %v951 = vld [vmem:[%s284 + $0xa28] sm:$0xf]
        %v952 = vld [vmem:[%s284 + $0xa2c] sm:$0xf]
        %v953 = vld [vmem:[%s284 + $0xa30] sm:$0xf]
        %v954 = vld [vmem:[%s284 + $0xa34] sm:$0xf]
        %v955 = vld [vmem:[%s284 + $0xa38] sm:$0xf]
        %v956 = vld [vmem:[%s284 + $0xa3c] sm:$0xf]
        %v957 = vld [vmem:[%s284 + $0xa40] sm:$0xf]
        %v958 = vld [vmem:[%s284 + $0xa44] sm:$0xf]
        %v959 = vld [vmem:[%s284 + $0xa48] sm:$0xf]
        %v960 = vld [vmem:[%s284 + $0xa4c] sm:$0xf]
        %v961 = vld [vmem:[%s284 + $0xa50] sm:$0xf]
        %v962 = vld [vmem:[%s284 + $0xa54] sm:$0xf]
        %v963 = vld [vmem:[%s284 + $0xa58] sm:$0xf]
        %v964 = vld [vmem:[%s284 + $0xa5c] sm:$0xf]
        %v965 = vld [vmem:[%s284 + $0xa60] sm:$0xf]
        %v966 = vld [vmem:[%s284 + $0xa64] sm:$0xf]
        %v967 = vld [vmem:[%s284 + $0xa68] sm:$0xf]
        %v968 = vld [vmem:[%s284 + $0xa6c] sm:$0xf]
        %v969 = vld [vmem:[%s284 + $0xa70] sm:$0xf]
        %v970 = vld [vmem:[%s284 + $0xa74] sm:$0xf]
        %v971 = vld [vmem:[%s284 + $0xa78] sm:$0xf]
        %v972 = vld [vmem:[%s284 + $0xa7c] sm:$0xf]
        %v973 = vld [vmem:[%s284 + $0xa80] sm:$0xf]
        %v974 = vld [vmem:[%s284 + $0xa84] sm:$0xf]
        %v975 = vld [vmem:[%s284 + $0xa88] sm:$0xf]
        %v976 = vld [vmem:[%s284 + $0xa8c] sm:$0xf]
        %v977 = vld [vmem:[%s284 + $0xa90] sm:$0xf]
        %v978 = vld [vmem:[%s284 + $0xa94] sm:$0xf]
        %v979 = vld [vmem:[%s284 + $0xa98] sm:$0xf]
        %v980 = vld [vmem:[%s284 + $0xa9c] sm:$0xf]
        %v981 = vld [vmem:[%s284 + $0xaa0] sm:$0xf]
        %v982 = vld [vmem:[%s284 + $0xaa4] sm:$0xf]
        %v983 = vld [vmem:[%s284 + $0xaa8] sm:$0xf]
        %v984 = vld [vmem:[%s284 + $0xaac] sm:$0xf]
        %v985 = vld [vmem:[%s284 + $0xab0] sm:$0xf]
        %v986 = vld [vmem:[%s284 + $0xab4] sm:$0xf]
        %v987 = vld [vmem:[%s284 + $0xab8] sm:$0xf]
        %v988 = vld [vmem:[%s284 + $0xabc] sm:$0xf]
        %v989 = vld [vmem:[%s284 + $0xac0] sm:$0xf]
        %v990 = vld [vmem:[%s284 + $0xac4] sm:$0xf]
        %v991 = vld [vmem:[%s284 + $0xac8] sm:$0xf]
        %v992 = vld [vmem:[%s284 + $0xacc] sm:$0xf]
        %v993 = vld [vmem:[%s284 + $0xad0] sm:$0xf]
        %v994 = vld [vmem:[%s284 + $0xad4] sm:$0xf]
        %v995 = vld [vmem:[%s284 + $0xad8] sm:$0xf]
        %v996 = vld [vmem:[%s284 + $0xadc] sm:$0xf]
        %v997 = vld [vmem:[%s284 + $0xae0] sm:$0xf]
        %v998 = vld [vmem:[%s284 + $0xae4] sm:$0xf]
        %v999 = vld [vmem:[%s284 + $0xae8] sm:$0xf]
        %v1000 = vld [vmem:[%s284 + $0xaec] sm:$0xf]
        %v1001 = vld [vmem:[%s284 + $0xaf0] sm:$0xf]
        %v1002 = vld [vmem:[%s284 + $0xaf4] sm:$0xf]
        %v1003 = vld [vmem:[%s284 + $0xaf8] sm:$0xf]
        %v1004 = vld [vmem:[%s284 + $0xafc] sm:$0xf]
        %v1005 = vld [vmem:[%s284 + $0xb00] sm:$0xf]
        %v1006 = vld [vmem:[%s284 + $0xb04] sm:$0xf]
        %v1007 = vld [vmem:[%s284 + $0xb08] sm:$0xf]
        %v1008 = vld [vmem:[%s284 + $0xb0c] sm:$0xf]
        %v1009 = vld [vmem:[%s284 + $0xb10] sm:$0xf]
        %v1010 = vld [vmem:[%s284 + $0xb14] sm:$0xf]
        %v1011 = vld [vmem:[%s284 + $0xb18] sm:$0xf]
        %v1012 = vld [vmem:[%s284 + $0xb1c] sm:$0xf]
        %v1013 = vld [vmem:[%s284 + $0xb20] sm:$0xf]
        %v1014 = vld [vmem:[%s284 + $0xb24] sm:$0xf]
        %v1015 = vld [vmem:[%s284 + $0xb28] sm:$0xf]
        %v1016 = vld [vmem:[%s284 + $0xb2c] sm:$0xf]
        %v1017 = vld [vmem:[%s284 + $0xb30] sm:$0xf]
        %v1018 = vld [vmem:[%s284 + $0xb34] sm:$0xf]
        %v1019 = vld [vmem:[%s284 + $0xb38] sm:$0xf]
        %v1020 = vld [vmem:[%s284 + $0xb3c] sm:$0xf]
        %v1021 = vld [vmem:[%s284 + $0xb40] sm:$0xf]
        %v1022 = vld [vmem:[%s284 + $0xb44] sm:$0xf]
        %v1023 = vld [vmem:[%s284 + $0xb48] sm:$0xf]
        %v1024 = vld [vmem:[%s284 + $0xb4c] sm:$0xf]
        %v1025 = vld [vmem:[%s284 + $0xb50] sm:$0xf]
        %v1026 = vld [vmem:[%s284 + $0xb54] sm:$0xf]
        %v1027 = vld [vmem:[%s284 + $0xb58] sm:$0xf]
        %v1028 = vld [vmem:[%s284 + $0xb5c] sm:$0xf]
        %v1029 = vld [vmem:[%s284 + $0xb60] sm:$0xf]
        %v1030 = vld [vmem:[%s284 + $0xb64] sm:$0xf]
        %v1031 = vld [vmem:[%s284 + $0xb68] sm:$0xf]
        %v1032 = vld [vmem:[%s284 + $0xb6c] sm:$0xf]
        %v1033 = vld [vmem:[%s284 + $0xb70] sm:$0xf]
        %v1034 = vld [vmem:[%s284 + $0xb74] sm:$0xf]
        %v1035 = vld [vmem:[%s284 + $0xb78] sm:$0xf]
        %v1036 = vld [vmem:[%s284 + $0xb7c] sm:$0xf]
        %v1037 = vld [vmem:[%s284 + $0xb80] sm:$0xf]
        %v1038 = vld [vmem:[%s284 + $0xb84] sm:$0xf]
        %v1039 = vld [vmem:[%s284 + $0xb88] sm:$0xf]
        %v1040 = vld [vmem:[%s284 + $0xb8c] sm:$0xf]
        %v1041 = vld [vmem:[%s284 + $0xb90] sm:$0xf]
        %v1042 = vld [vmem:[%s284 + $0xb94] sm:$0xf]
        %v1043 = vld [vmem:[%s284 + $0xb98] sm:$0xf]
        %v1044 = vld [vmem:[%s284 + $0xb9c] sm:$0xf]
        %v1045 = vld [vmem:[%s284 + $0xba0] sm:$0xf]
        %v1046 = vld [vmem:[%s284 + $0xba4] sm:$0xf]
        %v1047 = vld [vmem:[%s284 + $0xba8] sm:$0xf]
        %v1048 = vld [vmem:[%s284 + $0xbac] sm:$0xf]
        %v1049 = vld [vmem:[%s284 + $0xbb0] sm:$0xf]
        %v1050 = vld [vmem:[%s284 + $0xbb4] sm:$0xf]
        %v1051 = vld [vmem:[%s284 + $0xbb8] sm:$0xf]
        %v1052 = vld [vmem:[%s284 + $0xbbc] sm:$0xf]
        %v1053 = vld [vmem:[%s284 + $0xbc0] sm:$0xf]
        %v1054 = vld [vmem:[%s284 + $0xbc4] sm:$0xf]
        %v1055 = vld [vmem:[%s284 + $0xbc8] sm:$0xf]
        %v1056 = vld [vmem:[%s284 + $0xbcc] sm:$0xf]
        %v1057 = vld [vmem:[%s284 + $0xbd0] sm:$0xf]
        %v1058 = vld [vmem:[%s284 + $0xbd4] sm:$0xf]
        %v1059 = vld [vmem:[%s284 + $0xbd8] sm:$0xf]
        %v1060 = vld [vmem:[%s284 + $0xbdc] sm:$0xf]
        %v1061 = vld [vmem:[%s284 + $0xbe0] sm:$0xf]
        %v1062 = vld [vmem:[%s284 + $0xbe4] sm:$0xf]
        %v1063 = vld [vmem:[%s284 + $0xbe8] sm:$0xf]
        %v1064 = vld [vmem:[%s284 + $0xbec] sm:$0xf]
        %v1065 = vld [vmem:[%s284 + $0xbf0] sm:$0xf]
        %v1066 = vld [vmem:[%s284 + $0xbf4] sm:$0xf]
        %v1067 = vld [vmem:[%s284 + $0xbf8] sm:$0xf]
        %v1068 = vld [vmem:[%s284 + $0xbfc] sm:$0xf]
        %v1069 = vld [vmem:[%s284 + $0xc00] sm:$0xf]
        %v1070 = vld [vmem:[%s284 + $0xc04] sm:$0xf]
        %v1071 = vld [vmem:[%s284 + $0xc08] sm:$0xf]
        %v1072 = vld [vmem:[%s284 + $0xc0c] sm:$0xf]
        %v1073 = vld [vmem:[%s284 + $0xc10] sm:$0xf]
        %v1074 = vld [vmem:[%s284 + $0xc14] sm:$0xf]
        %v1075 = vld [vmem:[%s284 + $0xc18] sm:$0xf]
        %v1076 = vld [vmem:[%s284 + $0xc1c] sm:$0xf]
        %v1077 = vld [vmem:[%s284 + $0xc20] sm:$0xf]
        %v1078 = vld [vmem:[%s284 + $0xc24] sm:$0xf]
        %v1079 = vld [vmem:[%s284 + $0xc28] sm:$0xf]
        %v1080 = vld [vmem:[%s284 + $0xc2c] sm:$0xf]
        %v1081 = vld [vmem:[%s284 + $0xc30] sm:$0xf]
        %v1082 = vld [vmem:[%s284 + $0xc34] sm:$0xf]
        %v1083 = vld [vmem:[%s284 + $0xc38] sm:$0xf]
        %v1084 = vld [vmem:[%s284 + $0xc3c] sm:$0xf]
        %v1085 = vld [vmem:[%s284 + $0xc40] sm:$0xf]
        %v1086 = vld [vmem:[%s284 + $0xc44] sm:$0xf]
        %v1087 = vld [vmem:[%s284 + $0xc48] sm:$0xf]
        %v1088 = vld [vmem:[%s284 + $0xc4c] sm:$0xf]
        %v1089 = vld [vmem:[%s284 + $0xc50] sm:$0xf]
        %v1090 = vld [vmem:[%s284 + $0xc54] sm:$0xf]
        %v1091 = vld [vmem:[%s284 + $0xc58] sm:$0xf]
        %v1092 = vld [vmem:[%s284 + $0xc5c] sm:$0xf]
        %v1093 = vld [vmem:[%s284 + $0xc60] sm:$0xf]
        %v1094 = vld [vmem:[%s284 + $0xc64] sm:$0xf]
        %v1095 = vld [vmem:[%s284 + $0xc68] sm:$0xf]
        %v1096 = vld [vmem:[%s284 + $0xc6c] sm:$0xf]
        %v1097 = vld [vmem:[%s284 + $0xc70] sm:$0xf]
        %v1098 = vld [vmem:[%s284 + $0xc74] sm:$0xf]
        %v1099 = vld [vmem:[%s284 + $0xc78] sm:$0xf]
        %v1100 = vld [vmem:[%s284 + $0xc7c] sm:$0xf]
        %v1101 = vld [vmem:[%s284 + $0xc80] sm:$0xf]
        %v1102 = vld [vmem:[%s284 + $0xc84] sm:$0xf]
        %v1103 = vld [vmem:[%s284 + $0xc88] sm:$0xf]
        %v1104 = vld [vmem:[%s284 + $0xc8c] sm:$0xf]
        %v1105 = vld [vmem:[%s284 + $0xc90] sm:$0xf]
        %v1106 = vld [vmem:[%s284 + $0xc94] sm:$0xf]
        %v1107 = vld [vmem:[%s284 + $0xc98] sm:$0xf]
        %v1108 = vld [vmem:[%s284 + $0xc9c] sm:$0xf]
        %v1109 = vld [vmem:[%s284 + $0xca0] sm:$0xf]
        %v1110 = vld [vmem:[%s284 + $0xca4] sm:$0xf]
        %v1111 = vld [vmem:[%s284 + $0xca8] sm:$0xf]
        %v1112 = vld [vmem:[%s284 + $0xcac] sm:$0xf]
        %v1113 = vld [vmem:[%s284 + $0xcb0] sm:$0xf]
        %v1114 = vld [vmem:[%s284 + $0xcb4] sm:$0xf]
        %v1115 = vld [vmem:[%s284 + $0xcb8] sm:$0xf]
        %v1116 = vld [vmem:[%s284 + $0xcbc] sm:$0xf]
        %v1117 = vld [vmem:[%s284 + $0xcc0] sm:$0xf]
        %v1118 = vld [vmem:[%s284 + $0xcc4] sm:$0xf]
        %v1119 = vld [vmem:[%s284 + $0xcc8] sm:$0xf]
        %v1120 = vld [vmem:[%s284 + $0xccc] sm:$0xf]
        %v1121 = vld [vmem:[%s284 + $0xcd0] sm:$0xf]
        %v1122 = vld [vmem:[%s284 + $0xcd4] sm:$0xf]
        %v1123 = vld [vmem:[%s284 + $0xcd8] sm:$0xf]
        %v1124 = vld [vmem:[%s284 + $0xcdc] sm:$0xf]
        %v1125 = vld [vmem:[%s284 + $0xce0] sm:$0xf]
        %v1126 = vld [vmem:[%s284 + $0xce4] sm:$0xf]
        %v1127 = vld [vmem:[%s284 + $0xce8] sm:$0xf]
        %v1128 = vld [vmem:[%s284 + $0xcec] sm:$0xf]
        %v1129 = vld [vmem:[%s284 + $0xcf0] sm:$0xf]
        %v1130 = vld [vmem:[%s284 + $0xcf4] sm:$0xf]
        %v1131 = vld [vmem:[%s284 + $0xcf8] sm:$0xf]
        %v1132 = vld [vmem:[%s284 + $0xcfc] sm:$0xf]
        %v1133 = vld [vmem:[%s284 + $0xd00] sm:$0xf]
        %v1134 = vld [vmem:[%s284 + $0xd04] sm:$0xf]
        %v1135 = vld [vmem:[%s284 + $0xd08] sm:$0xf]
        %v1136 = vld [vmem:[%s284 + $0xd0c] sm:$0xf]
        %v1137 = vld [vmem:[%s284 + $0xd10] sm:$0xf]
        %v1138 = vld [vmem:[%s284 + $0xd14] sm:$0xf]
        %v1139 = vld [vmem:[%s284 + $0xd18] sm:$0xf]
        %v1140 = vld [vmem:[%s284 + $0xd1c] sm:$0xf]
        %v1141 = vld [vmem:[%s284 + $0xd20] sm:$0xf]
        %v1142 = vld [vmem:[%s284 + $0xd24] sm:$0xf]
        %v1143 = vld [vmem:[%s284 + $0xd28] sm:$0xf]
        %v1144 = vld [vmem:[%s284 + $0xd2c] sm:$0xf]
        %v1145 = vld [vmem:[%s284 + $0xd30] sm:$0xf]
        %v1146 = vld [vmem:[%s284 + $0xd34] sm:$0xf]
        %v1147 = vld [vmem:[%s284 + $0xd38] sm:$0xf]
        %v1148 = vld [vmem:[%s284 + $0xd3c] sm:$0xf]
        %v1149 = vld [vmem:[%s284 + $0xd40] sm:$0xf]
        %v1150 = vld [vmem:[%s284 + $0xd44] sm:$0xf]
        %v1151 = vld [vmem:[%s284 + $0xd48] sm:$0xf]
        %v1152 = vld [vmem:[%s284 + $0xd4c] sm:$0xf]
        %v1153 = vld [vmem:[%s284 + $0xd50] sm:$0xf]
        %v1154 = vld [vmem:[%s284 + $0xd54] sm:$0xf]
        %v1155 = vld [vmem:[%s284 + $0xd58] sm:$0xf]
        %v1156 = vld [vmem:[%s284 + $0xd5c] sm:$0xf]
        %v1157 = vld [vmem:[%s284 + $0xd60] sm:$0xf]
        %v1158 = vld [vmem:[%s284 + $0xd64] sm:$0xf]
        %v1159 = vld [vmem:[%s284 + $0xd68] sm:$0xf]
        %v1160 = vld [vmem:[%s284 + $0xd6c] sm:$0xf]
        %v1161 = vld [vmem:[%s284 + $0xd70] sm:$0xf]
        %v1162 = vld [vmem:[%s284 + $0xd74] sm:$0xf]
        %v1163 = vld [vmem:[%s284 + $0xd78] sm:$0xf]
        %v1164 = vld [vmem:[%s284 + $0xd7c] sm:$0xf]
        %v1165 = vld [vmem:[%s284 + $0xd80] sm:$0xf]
        %v1166 = vld [vmem:[%s284 + $0xd84] sm:$0xf]
        %v1167 = vld [vmem:[%s284 + $0xd88] sm:$0xf]
        %v1168 = vld [vmem:[%s284 + $0xd8c] sm:$0xf]
        %v1169 = vld [vmem:[%s284 + $0xd90] sm:$0xf]
        %v1170 = vld [vmem:[%s284 + $0xd94] sm:$0xf]
        %v1171 = vld [vmem:[%s284 + $0xd98] sm:$0xf]
        %v1172 = vld [vmem:[%s284 + $0xd9c] sm:$0xf]
        %v1173 = vld [vmem:[%s284 + $0xda0] sm:$0xf]
        %v1174 = vld [vmem:[%s284 + $0xda4] sm:$0xf]
        %v1175 = vld [vmem:[%s284 + $0xda8] sm:$0xf]
        %v1176 = vld [vmem:[%s284 + $0xdac] sm:$0xf]
        %v1177 = vld [vmem:[%s284 + $0xdb0] sm:$0xf]
        %v1178 = vld [vmem:[%s284 + $0xdb4] sm:$0xf]
        %v1179 = vld [vmem:[%s284 + $0xdb8] sm:$0xf]
        %v1180 = vld [vmem:[%s284 + $0xdbc] sm:$0xf]
        %v1181 = vld [vmem:[%s284 + $0xdc0] sm:$0xf]
        %v1182 = vld [vmem:[%s284 + $0xdc4] sm:$0xf]
        %v1183 = vld [vmem:[%s284 + $0xdc8] sm:$0xf]
        %v1184 = vld [vmem:[%s284 + $0xdcc] sm:$0xf]
        %v1185 = vld [vmem:[%s284 + $0xdd0] sm:$0xf]
        %v1186 = vld [vmem:[%s284 + $0xdd4] sm:$0xf]
        %v1187 = vld [vmem:[%s284 + $0xdd8] sm:$0xf]
        %v1188 = vld [vmem:[%s284 + $0xddc] sm:$0xf]
        %v1189 = vld [vmem:[%s284 + $0xde0] sm:$0xf]
        %v1190 = vld [vmem:[%s284 + $0xde4] sm:$0xf]
        %v1191 = vld [vmem:[%s284 + $0xde8] sm:$0xf]
        %v1192 = vld [vmem:[%s284 + $0xdec] sm:$0xf]
        %v1193 = vld [vmem:[%s284 + $0xdf0] sm:$0xf]
        %v1194 = vld [vmem:[%s284 + $0xdf4] sm:$0xf]
        %v1195 = vld [vmem:[%s284 + $0xdf8] sm:$0xf]
        %v1196 = vld [vmem:[%s284 + $0xdfc] sm:$0xf]
        %v1197 = vld [vmem:[%s284 + $0xe00] sm:$0xf]
        %v1198 = vld [vmem:[%s284 + $0xe04] sm:$0xf]
        %v1199 = vld [vmem:[%s284 + $0xe08] sm:$0xf]
        %v1200 = vld [vmem:[%s284 + $0xe0c] sm:$0xf]
        %v1201 = vld [vmem:[%s284 + $0xe10] sm:$0xf]
        %v1202 = vld [vmem:[%s284 + $0xe14] sm:$0xf]
        %v1203 = vld [vmem:[%s284 + $0xe18] sm:$0xf]
        %v1204 = vld [vmem:[%s284 + $0xe1c] sm:$0xf]
        %v1205 = vld [vmem:[%s284 + $0xe20] sm:$0xf]
        %v1206 = vld [vmem:[%s284 + $0xe24] sm:$0xf]
        %v1207 = vld [vmem:[%s284 + $0xe28] sm:$0xf]
        %v1208 = vld [vmem:[%s284 + $0xe2c] sm:$0xf]
        %v1209 = vld [vmem:[%s284 + $0xe30] sm:$0xf]
        %v1210 = vld [vmem:[%s284 + $0xe34] sm:$0xf]
        %v1211 = vld [vmem:[%s284 + $0xe38] sm:$0xf]
        %v1212 = vld [vmem:[%s284 + $0xe3c] sm:$0xf]
        %v1213 = vld [vmem:[%s284 + $0xe40] sm:$0xf]
        %v1214 = vld [vmem:[%s284 + $0xe44] sm:$0xf]
        %v1215 = vld [vmem:[%s284 + $0xe48] sm:$0xf]
        %v1216 = vld [vmem:[%s284 + $0xe4c] sm:$0xf]
        %v1217 = vld [vmem:[%s284 + $0xe50] sm:$0xf]
        %v1218 = vld [vmem:[%s284 + $0xe54] sm:$0xf]
        %v1219 = vld [vmem:[%s284 + $0xe58] sm:$0xf]
        %v1220 = vld [vmem:[%s284 + $0xe5c] sm:$0xf]
        %v1221 = vld [vmem:[%s284 + $0xe60] sm:$0xf]
        %v1222 = vld [vmem:[%s284 + $0xe64] sm:$0xf]
        %v1223 = vld [vmem:[%s284 + $0xe68] sm:$0xf]
        %v1224 = vld [vmem:[%s284 + $0xe6c] sm:$0xf]
        %v1225 = vld [vmem:[%s284 + $0xe70] sm:$0xf]
        %v1226 = vld [vmem:[%s284 + $0xe74] sm:$0xf]
        %v1227 = vld [vmem:[%s284 + $0xe78] sm:$0xf]
        %v1228 = vld [vmem:[%s284 + $0xe7c] sm:$0xf]
        %v1229 = vld [vmem:[%s284 + $0xe80] sm:$0xf]
        %v1230 = vld [vmem:[%s284 + $0xe84] sm:$0xf]
        %v1231 = vld [vmem:[%s284 + $0xe88] sm:$0xf]
        %v1232 = vld [vmem:[%s284 + $0xe8c] sm:$0xf]
        %v1233 = vld [vmem:[%s284 + $0xe90] sm:$0xf]
        %v1234 = vld [vmem:[%s284 + $0xe94] sm:$0xf]
        %v1235 = vld [vmem:[%s284 + $0xe98] sm:$0xf]
        %v1236 = vld [vmem:[%s284 + $0xe9c] sm:$0xf]
        %v1237 = vld [vmem:[%s284 + $0xea0] sm:$0xf]
        %v1238 = vld [vmem:[%s284 + $0xea4] sm:$0xf]
        %v1239 = vld [vmem:[%s284 + $0xea8] sm:$0xf]
        %v1240 = vld [vmem:[%s284 + $0xeac] sm:$0xf]
        %v1241 = vld [vmem:[%s284 + $0xeb0] sm:$0xf]
        %v1242 = vld [vmem:[%s284 + $0xeb4] sm:$0xf]
        %v1243 = vld [vmem:[%s284 + $0xeb8] sm:$0xf]
        %v1244 = vld [vmem:[%s284 + $0xebc] sm:$0xf]
        %v1245 = vld [vmem:[%s284 + $0xec0] sm:$0xf]
        %v1246 = vld [vmem:[%s284 + $0xec4] sm:$0xf]
        %v1247 = vld [vmem:[%s284 + $0xec8] sm:$0xf]
        %v1248 = vld [vmem:[%s284 + $0xecc] sm:$0xf]
        %v1249 = vld [vmem:[%s284 + $0xed0] sm:$0xf]
        %v1250 = vld [vmem:[%s284 + $0xed4] sm:$0xf]
        %v1251 = vld [vmem:[%s284 + $0xed8] sm:$0xf]
        %v1252 = vld [vmem:[%s284 + $0xedc] sm:$0xf]
        %v1253 = vld [vmem:[%s284 + $0xee0] sm:$0xf]
        %v1254 = vld [vmem:[%s284 + $0xee4] sm:$0xf]
        %v1255 = vld [vmem:[%s284 + $0xee8] sm:$0xf]
        %v1256 = vld [vmem:[%s284 + $0xeec] sm:$0xf]
        %v1257 = vld [vmem:[%s284 + $0xef0] sm:$0xf]
        %v1258 = vld [vmem:[%s284 + $0xef4] sm:$0xf]
        %v1259 = vld [vmem:[%s284 + $0xef8] sm:$0xf]
        %v1260 = vld [vmem:[%s284 + $0xefc] sm:$0xf]
        %v1261 = vld [vmem:[%s284 + $0xf00] sm:$0xf]
        %v1262 = vld [vmem:[%s284 + $0xf04] sm:$0xf]
        %v1263 = vld [vmem:[%s284 + $0xf08] sm:$0xf]
        %v1264 = vld [vmem:[%s284 + $0xf0c] sm:$0xf]
        %v1265 = vld [vmem:[%s284 + $0xf10] sm:$0xf]
        %v1266 = vld [vmem:[%s284 + $0xf14] sm:$0xf]
        %v1267 = vld [vmem:[%s284 + $0xf18] sm:$0xf]
        %v1268 = vld [vmem:[%s284 + $0xf1c] sm:$0xf]
        %v1269 = vld [vmem:[%s284 + $0xf20] sm:$0xf]
        %v1270 = vld [vmem:[%s284 + $0xf24] sm:$0xf]
        %v1271 = vld [vmem:[%s284 + $0xf28] sm:$0xf]
        %v1272 = vld [vmem:[%s284 + $0xf2c] sm:$0xf]
        %v1273 = vld [vmem:[%s284 + $0xf30] sm:$0xf]
        %v1274 = vld [vmem:[%s284 + $0xf34] sm:$0xf]
        %v1275 = vld [vmem:[%s284 + $0xf38] sm:$0xf]
        %v1276 = vld [vmem:[%s284 + $0xf3c] sm:$0xf]
        %v1277 = vld [vmem:[%s284 + $0xf40] sm:$0xf]
        %v1278 = vld [vmem:[%s284 + $0xf44] sm:$0xf]
        %v1279 = vld [vmem:[%s284 + $0xf48] sm:$0xf]
        %v1280 = vld [vmem:[%s284 + $0xf4c] sm:$0xf]
        %v1281 = vld [vmem:[%s284 + $0xf50] sm:$0xf]
        %v1282 = vld [vmem:[%s284 + $0xf54] sm:$0xf]
        %v1283 = vld [vmem:[%s284 + $0xf58] sm:$0xf]
        %v1284 = vld [vmem:[%s284 + $0xf5c] sm:$0xf]
        %v1285 = vld [vmem:[%s284 + $0xf60] sm:$0xf]
        %v1286 = vld [vmem:[%s284 + $0xf64] sm:$0xf]
        %v1287 = vld [vmem:[%s284 + $0xf68] sm:$0xf]
        %v1288 = vld [vmem:[%s284 + $0xf6c] sm:$0xf]
        %v1289 = vld [vmem:[%s284 + $0xf70] sm:$0xf]
        %v1290 = vld [vmem:[%s284 + $0xf74] sm:$0xf]
        %v1291 = vld [vmem:[%s284 + $0xf78] sm:$0xf]
        %v1292 = vld [vmem:[%s284 + $0xf7c] sm:$0xf]
        %v1293 = vld [vmem:[%s284 + $0xf80] sm:$0xf]
        %v1294 = vld [vmem:[%s284 + $0xf84] sm:$0xf]
        %v1295 = vld [vmem:[%s284 + $0xf88] sm:$0xf]
        %v1296 = vld [vmem:[%s284 + $0xf8c] sm:$0xf]
        %v1297 = vld [vmem:[%s284 + $0xf90] sm:$0xf]
        %v1298 = vld [vmem:[%s284 + $0xf94] sm:$0xf]
        %v1299 = vld [vmem:[%s284 + $0xf98] sm:$0xf]
        %v1300 = vld [vmem:[%s284 + $0xf9c] sm:$0xf]
        %v1301 = vld [vmem:[%s284 + $0xfa0] sm:$0xf]
        %v1302 = vld [vmem:[%s284 + $0xfa4] sm:$0xf]
        %v1303 = vld [vmem:[%s284 + $0xfa8] sm:$0xf]
        %v1304 = vld [vmem:[%s284 + $0xfac] sm:$0xf]
        %v1305 = vld [vmem:[%s284 + $0xfb0] sm:$0xf]
        %v1306 = vld [vmem:[%s284 + $0xfb4] sm:$0xf]
        %v1307 = vld [vmem:[%s284 + $0xfb8] sm:$0xf]
        %v1308 = vld [vmem:[%s284 + $0xfbc] sm:$0xf]
        %v1309 = vld [vmem:[%s284 + $0xfc0] sm:$0xf]
        %v1310 = vld [vmem:[%s284 + $0xfc4] sm:$0xf]
        %v1311 = vld [vmem:[%s284 + $0xfc8] sm:$0xf]
        %v1312 = vld [vmem:[%s284 + $0xfcc] sm:$0xf]
        %v1313 = vld [vmem:[%s284 + $0xfd0] sm:$0xf]
        %v1314 = vld [vmem:[%s284 + $0xfd4] sm:$0xf]
        %v1315 = vld [vmem:[%s284 + $0xfd8] sm:$0xf]
        %v1316 = vld [vmem:[%s284 + $0xfdc] sm:$0xf]
        %v1317 = vld [vmem:[%s284 + $0xfe0] sm:$0xf]
        %v1318 = vld [vmem:[%s284 + $0xfe4] sm:$0xf]
        %v1319 = vld [vmem:[%s284 + $0xfe8] sm:$0xf]
        %v1320 = vld [vmem:[%s284 + $0xfec] sm:$0xf]
        %v1321 = vld [vmem:[%s284 + $0xff0] sm:$0xf]
        %v1322 = vld [vmem:[%s284 + $0xff4] sm:$0xf]
        %v1323 = vld [vmem:[%s284 + $0xff8] sm:$0xf]
        %v1324 = vld [vmem:[%s284 + $0xffc] sm:$0xf]
        %v1333 = vcombine.high %v293, %v293
        %v1335 = vunpack.c.l.s4 1966171168
        %v1336 = vunpack.c.0.s8 %v1335
        %v1337 = vlaneseq
        %v1338 = vshrl.u32 %v1337, 7
        %v1339 = vsub.s32 %v1336, %v1338
        %v1340 = vrot.slane %v293, %v1339
        %v1342 = vunpack.c.l.s4 1966171168
        %v1343 = vunpack.c.0.s8 %v1342
        %v1344 = vlaneseq
        %v1345 = vshrl.u32 %v1344, 7
        %v1346 = vsub.s32 %v1343, %v1345
        %v1347 = vrot.slane %v1333, %v1346
        %v1348 = vcombine.high %v1340, %v1340
        %v1349 = vcombine.high %v1347, %v1347
        %v1351 = vunpack.c.l.s4 1966171168
        %v1352 = vunpack.c.0.s8 %v1351
        %v1353 = vlaneseq
        %v1354 = vshrl.u32 %v1353, 7
        %v1355 = vsub.s32 %v1352, %v1354
        %v1356 = vrot.slane %v1340, %v1355
        %v1358 = vunpack.c.l.s4 1966171168
        %v1359 = vunpack.c.0.s8 %v1358
        %v1360 = vlaneseq
        %v1361 = vshrl.u32 %v1360, 7
        %v1362 = vsub.s32 %v1359, %v1361
        %v1363 = vrot.slane %v1347, %v1362
        %v1365 = vunpack.c.l.s4 1966171168
        %v1366 = vunpack.c.0.s8 %v1365
        %v1367 = vlaneseq
        %v1368 = vshrl.u32 %v1367, 7
        %v1369 = vsub.s32 %v1366, %v1368
        %v1370 = vrot.slane %v1348, %v1369
        %v1372 = vunpack.c.l.s4 1966171168
        %v1373 = vunpack.c.0.s8 %v1372
        %v1374 = vlaneseq
        %v1375 = vshrl.u32 %v1374, 7
        %v1376 = vsub.s32 %v1373, %v1375
        %v1377 = vrot.slane %v1349, %v1376
        %v1378 = vcombine.high %v1356, %v1356
        %v1379 = vcombine.high %v1363, %v1363
        %v1380 = vcombine.high %v1370, %v1370
        %v1381 = vcombine.high %v1377, %v1377
        %v1382 = vcombine.high %v294, %v294
        %v1384 = vunpack.c.l.s4 1966171168
        %v1385 = vunpack.c.0.s8 %v1384
        %v1386 = vlaneseq
        %v1387 = vshrl.u32 %v1386, 7
        %v1388 = vsub.s32 %v1385, %v1387
        %v1389 = vrot.slane %v294, %v1388
        %v1391 = vunpack.c.l.s4 1966171168
        %v1392 = vunpack.c.0.s8 %v1391
        %v1393 = vlaneseq
        %v1394 = vshrl.u32 %v1393, 7
        %v1395 = vsub.s32 %v1392, %v1394
        %v1396 = vrot.slane %v1382, %v1395
        %v1397 = vcombine.high %v1389, %v1389
        %v1398 = vcombine.high %v1396, %v1396
        %v1400 = vunpack.c.l.s4 1966171168
        %v1401 = vunpack.c.0.s8 %v1400
        %v1402 = vlaneseq
        %v1403 = vshrl.u32 %v1402, 7
        %v1404 = vsub.s32 %v1401, %v1403
        %v1405 = vrot.slane %v1389, %v1404
        %v1407 = vunpack.c.l.s4 1966171168
        %v1408 = vunpack.c.0.s8 %v1407
        %v1409 = vlaneseq
        %v1410 = vshrl.u32 %v1409, 7
        %v1411 = vsub.s32 %v1408, %v1410
        %v1412 = vrot.slane %v1396, %v1411
        %v1414 = vunpack.c.l.s4 1966171168
        %v1415 = vunpack.c.0.s8 %v1414
        %v1416 = vlaneseq
        %v1417 = vshrl.u32 %v1416, 7
        %v1418 = vsub.s32 %v1415, %v1417
        %v1419 = vrot.slane %v1397, %v1418
        %v1421 = vunpack.c.l.s4 1966171168
        %v1422 = vunpack.c.0.s8 %v1421
        %v1423 = vlaneseq
        %v1424 = vshrl.u32 %v1423, 7
        %v1425 = vsub.s32 %v1422, %v1424
        %v1426 = vrot.slane %v1398, %v1425
        %v1427 = vcombine.high %v1405, %v1405
        %v1428 = vcombine.high %v1412, %v1412
        %v1429 = vcombine.high %v1419, %v1419
        %v1430 = vcombine.high %v1426, %v1426
        %v1431 = vcombine.high %v295, %v295
        %v1433 = vunpack.c.l.s4 1966171168
        %v1434 = vunpack.c.0.s8 %v1433
        %v1435 = vlaneseq
        %v1436 = vshrl.u32 %v1435, 7
        %v1437 = vsub.s32 %v1434, %v1436
        %v1438 = vrot.slane %v295, %v1437
        %v1440 = vunpack.c.l.s4 1966171168
        %v1441 = vunpack.c.0.s8 %v1440
        %v1442 = vlaneseq
        %v1443 = vshrl.u32 %v1442, 7
        %v1444 = vsub.s32 %v1441, %v1443
        %v1445 = vrot.slane %v1431, %v1444
        %v1446 = vcombine.high %v1438, %v1438
        %v1447 = vcombine.high %v1445, %v1445
        %v1449 = vunpack.c.l.s4 1966171168
        %v1450 = vunpack.c.0.s8 %v1449
        %v1451 = vlaneseq
        %v1452 = vshrl.u32 %v1451, 7
        %v1453 = vsub.s32 %v1450, %v1452
        %v1454 = vrot.slane %v1438, %v1453
        %v1456 = vunpack.c.l.s4 1966171168
        %v1457 = vunpack.c.0.s8 %v1456
        %v1458 = vlaneseq
        %v1459 = vshrl.u32 %v1458, 7
        %v1460 = vsub.s32 %v1457, %v1459
        %v1461 = vrot.slane %v1445, %v1460
        %v1463 = vunpack.c.l.s4 1966171168
        %v1464 = vunpack.c.0.s8 %v1463
        %v1465 = vlaneseq
        %v1466 = vshrl.u32 %v1465, 7
        %v1467 = vsub.s32 %v1464, %v1466
        %v1468 = vrot.slane %v1446, %v1467
        %v1470 = vunpack.c.l.s4 1966171168
        %v1471 = vunpack.c.0.s8 %v1470
        %v1472 = vlaneseq
        %v1473 = vshrl.u32 %v1472, 7
        %v1474 = vsub.s32 %v1471, %v1473
        %v1475 = vrot.slane %v1447, %v1474
        %v1476 = vcombine.high %v1454, %v1454
        %v1477 = vcombine.high %v1461, %v1461
        %v1478 = vcombine.high %v1468, %v1468
        %v1479 = vcombine.high %v1475, %v1475
        %v1480 = vcombine.high %v296, %v296
        %v1482 = vunpack.c.l.s4 1966171168
        %v1483 = vunpack.c.0.s8 %v1482
        %v1484 = vlaneseq
        %v1485 = vshrl.u32 %v1484, 7
        %v1486 = vsub.s32 %v1483, %v1485
        %v1487 = vrot.slane %v296, %v1486
        %v1489 = vunpack.c.l.s4 1966171168
        %v1490 = vunpack.c.0.s8 %v1489
        %v1491 = vlaneseq
        %v1492 = vshrl.u32 %v1491, 7
        %v1493 = vsub.s32 %v1490, %v1492
        %v1494 = vrot.slane %v1480, %v1493
        %v1495 = vcombine.high %v1487, %v1487
        %v1496 = vcombine.high %v1494, %v1494
        %v1498 = vunpack.c.l.s4 1966171168
        %v1499 = vunpack.c.0.s8 %v1498
        %v1500 = vlaneseq
        %v1501 = vshrl.u32 %v1500, 7
        %v1502 = vsub.s32 %v1499, %v1501
        %v1503 = vrot.slane %v1487, %v1502
        %v1505 = vunpack.c.l.s4 1966171168
        %v1506 = vunpack.c.0.s8 %v1505
        %v1507 = vlaneseq
        %v1508 = vshrl.u32 %v1507, 7
        %v1509 = vsub.s32 %v1506, %v1508
        %v1510 = vrot.slane %v1494, %v1509
        %v1512 = vunpack.c.l.s4 1966171168
        %v1513 = vunpack.c.0.s8 %v1512
        %v1514 = vlaneseq
        %v1515 = vshrl.u32 %v1514, 7
        %v1516 = vsub.s32 %v1513, %v1515
        %v1517 = vrot.slane %v1495, %v1516
        %v1519 = vunpack.c.l.s4 1966171168
        %v1520 = vunpack.c.0.s8 %v1519
        %v1521 = vlaneseq
        %v1522 = vshrl.u32 %v1521, 7
        %v1523 = vsub.s32 %v1520, %v1522
        %v1524 = vrot.slane %v1496, %v1523
        %v1525 = vcombine.high %v1503, %v1503
        %v1526 = vcombine.high %v1510, %v1510
        %v1527 = vcombine.high %v1517, %v1517
        %v1528 = vcombine.high %v1524, %v1524
        %v1529 = vcombine.high %v297, %v297
        %v1531 = vunpack.c.l.s4 1966171168
        %v1532 = vunpack.c.0.s8 %v1531
        %v1533 = vlaneseq
        %v1534 = vshrl.u32 %v1533, 7
        %v1535 = vsub.s32 %v1532, %v1534
        %v1536 = vrot.slane %v297, %v1535
        %v1538 = vunpack.c.l.s4 1966171168
        %v1539 = vunpack.c.0.s8 %v1538
        %v1540 = vlaneseq
        %v1541 = vshrl.u32 %v1540, 7
        %v1542 = vsub.s32 %v1539, %v1541
        %v1543 = vrot.slane %v1529, %v1542
        %v1544 = vcombine.high %v1536, %v1536
        %v1545 = vcombine.high %v1543, %v1543
        %v1547 = vunpack.c.l.s4 1966171168
        %v1548 = vunpack.c.0.s8 %v1547
        %v1549 = vlaneseq
        %v1550 = vshrl.u32 %v1549, 7
        %v1551 = vsub.s32 %v1548, %v1550
        %v1552 = vrot.slane %v1536, %v1551
        %v1554 = vunpack.c.l.s4 1966171168
        %v1555 = vunpack.c.0.s8 %v1554
        %v1556 = vlaneseq
        %v1557 = vshrl.u32 %v1556, 7
        %v1558 = vsub.s32 %v1555, %v1557
        %v1559 = vrot.slane %v1543, %v1558
        %v1561 = vunpack.c.l.s4 1966171168
        %v1562 = vunpack.c.0.s8 %v1561
        %v1563 = vlaneseq
        %v1564 = vshrl.u32 %v1563, 7
        %v1565 = vsub.s32 %v1562, %v1564
        %v1566 = vrot.slane %v1544, %v1565
        %v1568 = vunpack.c.l.s4 1966171168
        %v1569 = vunpack.c.0.s8 %v1568
        %v1570 = vlaneseq
        %v1571 = vshrl.u32 %v1570, 7
        %v1572 = vsub.s32 %v1569, %v1571
        %v1573 = vrot.slane %v1545, %v1572
        %v1574 = vcombine.high %v1552, %v1552
        %v1575 = vcombine.high %v1559, %v1559
        %v1576 = vcombine.high %v1566, %v1566
        %v1577 = vcombine.high %v1573, %v1573
        %v1578 = vcombine.high %v298, %v298
        %v1580 = vunpack.c.l.s4 1966171168
        %v1581 = vunpack.c.0.s8 %v1580
        %v1582 = vlaneseq
        %v1583 = vshrl.u32 %v1582, 7
        %v1584 = vsub.s32 %v1581, %v1583
        %v1585 = vrot.slane %v298, %v1584
        %v1587 = vunpack.c.l.s4 1966171168
        %v1588 = vunpack.c.0.s8 %v1587
        %v1589 = vlaneseq
        %v1590 = vshrl.u32 %v1589, 7
        %v1591 = vsub.s32 %v1588, %v1590
        %v1592 = vrot.slane %v1578, %v1591
        %v1593 = vcombine.high %v1585, %v1585
        %v1594 = vcombine.high %v1592, %v1592
        %v1596 = vunpack.c.l.s4 1966171168
        %v1597 = vunpack.c.0.s8 %v1596
        %v1598 = vlaneseq
        %v1599 = vshrl.u32 %v1598, 7
        %v1600 = vsub.s32 %v1597, %v1599
        %v1601 = vrot.slane %v1585, %v1600
        %v1603 = vunpack.c.l.s4 1966171168
        %v1604 = vunpack.c.0.s8 %v1603
        %v1605 = vlaneseq
        %v1606 = vshrl.u32 %v1605, 7
        %v1607 = vsub.s32 %v1604, %v1606
        %v1608 = vrot.slane %v1592, %v1607
        %v1610 = vunpack.c.l.s4 1966171168
        %v1611 = vunpack.c.0.s8 %v1610
        %v1612 = vlaneseq
        %v1613 = vshrl.u32 %v1612, 7
        %v1614 = vsub.s32 %v1611, %v1613
        %v1615 = vrot.slane %v1593, %v1614
        %v1617 = vunpack.c.l.s4 1966171168
        %v1618 = vunpack.c.0.s8 %v1617
        %v1619 = vlaneseq
        %v1620 = vshrl.u32 %v1619, 7
        %v1621 = vsub.s32 %v1618, %v1620
        %v1622 = vrot.slane %v1594, %v1621
        %v1623 = vcombine.high %v1601, %v1601
        %v1624 = vcombine.high %v1608, %v1608
        %v1625 = vcombine.high %v1615, %v1615
        %v1626 = vcombine.high %v1622, %v1622
        %v1627 = vcombine.high %v299, %v299
        %v1629 = vunpack.c.l.s4 1966171168
        %v1630 = vunpack.c.0.s8 %v1629
        %v1631 = vlaneseq
        %v1632 = vshrl.u32 %v1631, 7
        %v1633 = vsub.s32 %v1630, %v1632
        %v1634 = vrot.slane %v299, %v1633
        %v1636 = vunpack.c.l.s4 1966171168
        %v1637 = vunpack.c.0.s8 %v1636
        %v1638 = vlaneseq
        %v1639 = vshrl.u32 %v1638, 7
        %v1640 = vsub.s32 %v1637, %v1639
        %v1641 = vrot.slane %v1627, %v1640
        %v1642 = vcombine.high %v1634, %v1634
        %v1643 = vcombine.high %v1641, %v1641
        %v1645 = vunpack.c.l.s4 1966171168
        %v1646 = vunpack.c.0.s8 %v1645
        %v1647 = vlaneseq
        %v1648 = vshrl.u32 %v1647, 7
        %v1649 = vsub.s32 %v1646, %v1648
        %v1650 = vrot.slane %v1634, %v1649
        %v1652 = vunpack.c.l.s4 1966171168
        %v1653 = vunpack.c.0.s8 %v1652
        %v1654 = vlaneseq
        %v1655 = vshrl.u32 %v1654, 7
        %v1656 = vsub.s32 %v1653, %v1655
        %v1657 = vrot.slane %v1641, %v1656
        %v1659 = vunpack.c.l.s4 1966171168
        %v1660 = vunpack.c.0.s8 %v1659
        %v1661 = vlaneseq
        %v1662 = vshrl.u32 %v1661, 7
        %v1663 = vsub.s32 %v1660, %v1662
        %v1664 = vrot.slane %v1642, %v1663
        %v1666 = vunpack.c.l.s4 1966171168
        %v1667 = vunpack.c.0.s8 %v1666
        %v1668 = vlaneseq
        %v1669 = vshrl.u32 %v1668, 7
        %v1670 = vsub.s32 %v1667, %v1669
        %v1671 = vrot.slane %v1643, %v1670
        %v1672 = vcombine.high %v1650, %v1650
        %v1673 = vcombine.high %v1657, %v1657
        %v1674 = vcombine.high %v1664, %v1664
        %v1675 = vcombine.high %v1671, %v1671
        %v1676 = vcombine.high %v300, %v300
        %v1678 = vunpack.c.l.s4 1966171168
        %v1679 = vunpack.c.0.s8 %v1678
        %v1680 = vlaneseq
        %v1681 = vshrl.u32 %v1680, 7
        %v1682 = vsub.s32 %v1679, %v1681
        %v1683 = vrot.slane %v300, %v1682
        %v1685 = vunpack.c.l.s4 1966171168
        %v1686 = vunpack.c.0.s8 %v1685
        %v1687 = vlaneseq
        %v1688 = vshrl.u32 %v1687, 7
        %v1689 = vsub.s32 %v1686, %v1688
        %v1690 = vrot.slane %v1676, %v1689
        %v1691 = vcombine.high %v1683, %v1683
        %v1692 = vcombine.high %v1690, %v1690
        %v1694 = vunpack.c.l.s4 1966171168
        %v1695 = vunpack.c.0.s8 %v1694
        %v1696 = vlaneseq
        %v1697 = vshrl.u32 %v1696, 7
        %v1698 = vsub.s32 %v1695, %v1697
        %v1699 = vrot.slane %v1683, %v1698
        %v1701 = vunpack.c.l.s4 1966171168
        %v1702 = vunpack.c.0.s8 %v1701
        %v1703 = vlaneseq
        %v1704 = vshrl.u32 %v1703, 7
        %v1705 = vsub.s32 %v1702, %v1704
        %v1706 = vrot.slane %v1690, %v1705
        %v1708 = vunpack.c.l.s4 1966171168
        %v1709 = vunpack.c.0.s8 %v1708
        %v1710 = vlaneseq
        %v1711 = vshrl.u32 %v1710, 7
        %v1712 = vsub.s32 %v1709, %v1711
        %v1713 = vrot.slane %v1691, %v1712
        %v1715 = vunpack.c.l.s4 1966171168
        %v1716 = vunpack.c.0.s8 %v1715
        %v1717 = vlaneseq
        %v1718 = vshrl.u32 %v1717, 7
        %v1719 = vsub.s32 %v1716, %v1718
        %v1720 = vrot.slane %v1692, %v1719
        %v1721 = vcombine.high %v1699, %v1699
        %v1722 = vcombine.high %v1706, %v1706
        %v1723 = vcombine.high %v1713, %v1713
        %v1724 = vcombine.high %v1720, %v1720
        %v2813 = vunpack.c.l.b16 %v301
        %v2814 = vunpack.c.l.b16 %v302
        %v2815 = vunpack.c.l.b16 %v303
        %v2816 = vunpack.c.l.b16 %v304
        %v2817 = vunpack.c.l.b16 %v305
        %v2818 = vunpack.c.l.b16 %v306
        %v2819 = vunpack.c.l.b16 %v307
        %v2820 = vunpack.c.l.b16 %v308
        %v2821 = vunpack.c.l.b16 %v309
        %v2822 = vunpack.c.l.b16 %v310
        %v2823 = vunpack.c.l.b16 %v311
        %v2824 = vunpack.c.l.b16 %v312
        %v2825 = vunpack.c.l.b16 %v313
        %v2826 = vunpack.c.l.b16 %v314
        %v2827 = vunpack.c.l.b16 %v315
        %v2828 = vunpack.c.l.b16 %v316
        %v2829 = vunpack.c.l.b16 %v317
        %v2830 = vunpack.c.l.b16 %v318
        %v2831 = vunpack.c.l.b16 %v319
        %v2832 = vunpack.c.l.b16 %v320
        %v2833 = vunpack.c.l.b16 %v321
        %v2834 = vunpack.c.l.b16 %v322
        %v2835 = vunpack.c.l.b16 %v323
        %v2836 = vunpack.c.l.b16 %v324
        %v2837 = vunpack.c.l.b16 %v325
        %v2838 = vunpack.c.l.b16 %v326
        %v2839 = vunpack.c.l.b16 %v327
        %v2840 = vunpack.c.l.b16 %v328
        %v2841 = vunpack.c.l.b16 %v329
        %v2842 = vunpack.c.l.b16 %v330
        %v2843 = vunpack.c.l.b16 %v331
        %v2844 = vunpack.c.l.b16 %v332
        %v2845 = vunpack.c.l.b16 %v333
        %v2846 = vunpack.c.l.b16 %v334
        %v2847 = vunpack.c.l.b16 %v335
        %v2848 = vunpack.c.l.b16 %v336
        %v2849 = vunpack.c.l.b16 %v337
        %v2850 = vunpack.c.l.b16 %v338
        %v2851 = vunpack.c.l.b16 %v339
        %v2852 = vunpack.c.l.b16 %v340
        %v2853 = vunpack.c.l.b16 %v341
        %v2854 = vunpack.c.l.b16 %v342
        %v2855 = vunpack.c.l.b16 %v343
        %v2856 = vunpack.c.l.b16 %v344
        %v2857 = vunpack.c.l.b16 %v345
        %v2858 = vunpack.c.l.b16 %v346
        %v2859 = vunpack.c.l.b16 %v347
        %v2860 = vunpack.c.l.b16 %v348
        %v2861 = vunpack.c.l.b16 %v349
        %v2862 = vunpack.c.l.b16 %v350
        %v2863 = vunpack.c.l.b16 %v351
        %v2864 = vunpack.c.l.b16 %v352
        %v2865 = vunpack.c.l.b16 %v353
        %v2866 = vunpack.c.l.b16 %v354
        %v2867 = vunpack.c.l.b16 %v355
        %v2868 = vunpack.c.l.b16 %v356
        %v2869 = vunpack.c.l.b16 %v357
        %v2870 = vunpack.c.l.b16 %v358
        %v2871 = vunpack.c.l.b16 %v359
        %v2872 = vunpack.c.l.b16 %v360
        %v2873 = vunpack.c.l.b16 %v361
        %v2874 = vunpack.c.l.b16 %v362
        %v2875 = vunpack.c.l.b16 %v363
        %v2876 = vunpack.c.l.b16 %v364
        %v2877 = vunpack.c.l.b16 %v365
        %v2878 = vunpack.c.l.b16 %v366
        %v2879 = vunpack.c.l.b16 %v367
        %v2880 = vunpack.c.l.b16 %v368
        %v2881 = vunpack.c.l.b16 %v369
        %v2882 = vunpack.c.l.b16 %v370
        %v2883 = vunpack.c.l.b16 %v371
        %v2884 = vunpack.c.l.b16 %v372
        %v2885 = vunpack.c.l.b16 %v373
        %v2886 = vunpack.c.l.b16 %v374
        %v2887 = vunpack.c.l.b16 %v375
        %v2888 = vunpack.c.l.b16 %v376
        %v2889 = vunpack.c.l.b16 %v377
        %v2890 = vunpack.c.l.b16 %v378
        %v2891 = vunpack.c.l.b16 %v379
        %v2892 = vunpack.c.l.b16 %v380
        %v2893 = vunpack.c.l.b16 %v381
        %v2894 = vunpack.c.l.b16 %v382
        %v2895 = vunpack.c.l.b16 %v383
        %v2896 = vunpack.c.l.b16 %v384
        %v2897 = vunpack.c.l.b16 %v385
        %v2898 = vunpack.c.l.b16 %v386
        %v2899 = vunpack.c.l.b16 %v387
        %v2900 = vunpack.c.l.b16 %v388
        %v2901 = vunpack.c.l.b16 %v389
        %v2902 = vunpack.c.l.b16 %v390
        %v2903 = vunpack.c.l.b16 %v391
        %v2904 = vunpack.c.l.b16 %v392
        %v2905 = vunpack.c.l.b16 %v393
        %v2906 = vunpack.c.l.b16 %v394
        %v2907 = vunpack.c.l.b16 %v395
        %v2908 = vunpack.c.l.b16 %v396
        %v2909 = vunpack.c.l.b16 %v397
        %v2910 = vunpack.c.l.b16 %v398
        %v2911 = vunpack.c.l.b16 %v399
        %v2912 = vunpack.c.l.b16 %v400
        %v2913 = vunpack.c.l.b16 %v401
        %v2914 = vunpack.c.l.b16 %v402
        %v2915 = vunpack.c.l.b16 %v403
        %v2916 = vunpack.c.l.b16 %v404
        %v2917 = vunpack.c.l.b16 %v405
        %v2918 = vunpack.c.l.b16 %v406
        %v2919 = vunpack.c.l.b16 %v407
        %v2920 = vunpack.c.l.b16 %v408
        %v2921 = vunpack.c.l.b16 %v409
        %v2922 = vunpack.c.l.b16 %v410
        %v2923 = vunpack.c.l.b16 %v411
        %v2924 = vunpack.c.l.b16 %v412
        %v2925 = vunpack.c.l.b16 %v413
        %v2926 = vunpack.c.l.b16 %v414
        %v2927 = vunpack.c.l.b16 %v415
        %v2928 = vunpack.c.l.b16 %v416
        %v2929 = vunpack.c.l.b16 %v417
        %v2930 = vunpack.c.l.b16 %v418
        %v2931 = vunpack.c.l.b16 %v419
        %v2932 = vunpack.c.l.b16 %v420
        %v2933 = vunpack.c.l.b16 %v421
        %v2934 = vunpack.c.l.b16 %v422
        %v2935 = vunpack.c.l.b16 %v423
        %v2936 = vunpack.c.l.b16 %v424
        %v2937 = vunpack.c.l.b16 %v425
        %v2938 = vunpack.c.l.b16 %v426
        %v2939 = vunpack.c.l.b16 %v427
        %v2940 = vunpack.c.l.b16 %v428
        %v2941 = vunpack.c.l.b16 %v429
        %v2942 = vunpack.c.l.b16 %v430
        %v2943 = vunpack.c.l.b16 %v431
        %v2944 = vunpack.c.l.b16 %v432
        %v2945 = vunpack.c.l.b16 %v433
        %v2946 = vunpack.c.l.b16 %v434
        %v2947 = vunpack.c.l.b16 %v435
        %v2948 = vunpack.c.l.b16 %v436
        %v2949 = vunpack.c.l.b16 %v437
        %v2950 = vunpack.c.l.b16 %v438
        %v2951 = vunpack.c.l.b16 %v439
        %v2952 = vunpack.c.l.b16 %v440
        %v2953 = vunpack.c.l.b16 %v441
        %v2954 = vunpack.c.l.b16 %v442
        %v2955 = vunpack.c.l.b16 %v443
        %v2956 = vunpack.c.l.b16 %v444
        %v2957 = vunpack.c.l.b16 %v445
        %v2958 = vunpack.c.l.b16 %v446
        %v2959 = vunpack.c.l.b16 %v447
        %v2960 = vunpack.c.l.b16 %v448
        %v2961 = vunpack.c.l.b16 %v449
        %v2962 = vunpack.c.l.b16 %v450
        %v2963 = vunpack.c.l.b16 %v451
        %v2964 = vunpack.c.l.b16 %v452
        %v2965 = vunpack.c.l.b16 %v453
        %v2966 = vunpack.c.l.b16 %v454
        %v2967 = vunpack.c.l.b16 %v455
        %v2968 = vunpack.c.l.b16 %v456
        %v2969 = vunpack.c.l.b16 %v457
        %v2970 = vunpack.c.l.b16 %v458
        %v2971 = vunpack.c.l.b16 %v459
        %v2972 = vunpack.c.l.b16 %v460
        %v2973 = vunpack.c.l.b16 %v461
        %v2974 = vunpack.c.l.b16 %v462
        %v2975 = vunpack.c.l.b16 %v463
        %v2976 = vunpack.c.l.b16 %v464
        %v2977 = vunpack.c.l.b16 %v465
        %v2978 = vunpack.c.l.b16 %v466
        %v2979 = vunpack.c.l.b16 %v467
        %v2980 = vunpack.c.l.b16 %v468
        %v2981 = vunpack.c.l.b16 %v469
        %v2982 = vunpack.c.l.b16 %v470
        %v2983 = vunpack.c.l.b16 %v471
        %v2984 = vunpack.c.l.b16 %v472
        %v2985 = vunpack.c.l.b16 %v473
        %v2986 = vunpack.c.l.b16 %v474
        %v2987 = vunpack.c.l.b16 %v475
        %v2988 = vunpack.c.l.b16 %v476
        %v2989 = vunpack.c.l.b16 %v477
        %v2990 = vunpack.c.l.b16 %v478
        %v2991 = vunpack.c.l.b16 %v479
        %v2992 = vunpack.c.l.b16 %v480
        %v2993 = vunpack.c.l.b16 %v481
        %v2994 = vunpack.c.l.b16 %v482
        %v2995 = vunpack.c.l.b16 %v483
        %v2996 = vunpack.c.l.b16 %v484
        %v2997 = vunpack.c.l.b16 %v485
        %v2998 = vunpack.c.l.b16 %v486
        %v2999 = vunpack.c.l.b16 %v487
        %v3000 = vunpack.c.l.b16 %v488
        %v3001 = vunpack.c.l.b16 %v489
        %v3002 = vunpack.c.l.b16 %v490
        %v3003 = vunpack.c.l.b16 %v491
        %v3004 = vunpack.c.l.b16 %v492
        %v3005 = vunpack.c.l.b16 %v493
        %v3006 = vunpack.c.l.b16 %v494
        %v3007 = vunpack.c.l.b16 %v495
        %v3008 = vunpack.c.l.b16 %v496
        %v3009 = vunpack.c.l.b16 %v497
        %v3010 = vunpack.c.l.b16 %v498
        %v3011 = vunpack.c.l.b16 %v499
        %v3012 = vunpack.c.l.b16 %v500
        %v3013 = vunpack.c.l.b16 %v501
        %v3014 = vunpack.c.l.b16 %v502
        %v3015 = vunpack.c.l.b16 %v503
        %v3016 = vunpack.c.l.b16 %v504
        %v3017 = vunpack.c.l.b16 %v505
        %v3018 = vunpack.c.l.b16 %v506
        %v3019 = vunpack.c.l.b16 %v507
        %v3020 = vunpack.c.l.b16 %v508
        %v3021 = vunpack.c.l.b16 %v509
        %v3022 = vunpack.c.l.b16 %v510
        %v3023 = vunpack.c.l.b16 %v511
        %v3024 = vunpack.c.l.b16 %v512
        %v3025 = vunpack.c.l.b16 %v513
        %v3026 = vunpack.c.l.b16 %v514
        %v3027 = vunpack.c.l.b16 %v515
        %v3028 = vunpack.c.l.b16 %v516
        %v3029 = vunpack.c.l.b16 %v517
        %v3030 = vunpack.c.l.b16 %v518
        %v3031 = vunpack.c.l.b16 %v519
        %v3032 = vunpack.c.l.b16 %v520
        %v3033 = vunpack.c.l.b16 %v521
        %v3034 = vunpack.c.l.b16 %v522
        %v3035 = vunpack.c.l.b16 %v523
        %v3036 = vunpack.c.l.b16 %v524
        %v3037 = vunpack.c.l.b16 %v525
        %v3038 = vunpack.c.l.b16 %v526
        %v3039 = vunpack.c.l.b16 %v527
        %v3040 = vunpack.c.l.b16 %v528
        %v3041 = vunpack.c.l.b16 %v529
        %v3042 = vunpack.c.l.b16 %v530
        %v3043 = vunpack.c.l.b16 %v531
        %v3044 = vunpack.c.l.b16 %v532
        %v3045 = vunpack.c.l.b16 %v533
        %v3046 = vunpack.c.l.b16 %v534
        %v3047 = vunpack.c.l.b16 %v535
        %v3048 = vunpack.c.l.b16 %v536
        %v3049 = vunpack.c.l.b16 %v537
        %v3050 = vunpack.c.l.b16 %v538
        %v3051 = vunpack.c.l.b16 %v539
        %v3052 = vunpack.c.l.b16 %v540
        %v3053 = vunpack.c.l.b16 %v541
        %v3054 = vunpack.c.l.b16 %v542
        %v3055 = vunpack.c.l.b16 %v543
        %v3056 = vunpack.c.l.b16 %v544
        %v3057 = vunpack.c.l.b16 %v545
        %v3058 = vunpack.c.l.b16 %v546
        %v3059 = vunpack.c.l.b16 %v547
        %v3060 = vunpack.c.l.b16 %v548
        %v3061 = vunpack.c.l.b16 %v549
        %v3062 = vunpack.c.l.b16 %v550
        %v3063 = vunpack.c.l.b16 %v551
        %v3064 = vunpack.c.l.b16 %v552
        %v3065 = vunpack.c.l.b16 %v553
        %v3066 = vunpack.c.l.b16 %v554
        %v3067 = vunpack.c.l.b16 %v555
        %v3068 = vunpack.c.l.b16 %v556
        %v3069 = vunpack.c.l.b16 %v557
        %v3070 = vunpack.c.l.b16 %v558
        %v3071 = vunpack.c.l.b16 %v559
        %v3072 = vunpack.c.l.b16 %v560
        %v3073 = vunpack.c.l.b16 %v561
        %v3074 = vunpack.c.l.b16 %v562
        %v3075 = vunpack.c.l.b16 %v563
        %v3076 = vunpack.c.l.b16 %v564
        %v3077 = vunpack.c.l.b16 %v565
        %v3078 = vunpack.c.l.b16 %v566
        %v3079 = vunpack.c.l.b16 %v567
        %v3080 = vunpack.c.l.b16 %v568
        %v3081 = vunpack.c.l.b16 %v569
        %v3082 = vunpack.c.l.b16 %v570
        %v3083 = vunpack.c.l.b16 %v571
        %v3084 = vunpack.c.l.b16 %v572
        %v3085 = vunpack.c.l.b16 %v573
        %v3086 = vunpack.c.l.b16 %v574
        %v3087 = vunpack.c.l.b16 %v575
        %v3088 = vunpack.c.l.b16 %v576
        %v3089 = vunpack.c.l.b16 %v577
        %v3090 = vunpack.c.l.b16 %v578
        %v3091 = vunpack.c.l.b16 %v579
        %v3092 = vunpack.c.l.b16 %v580
        %v3093 = vunpack.c.l.b16 %v581
        %v3094 = vunpack.c.l.b16 %v582
        %v3095 = vunpack.c.l.b16 %v583
        %v3096 = vunpack.c.l.b16 %v584
        %v3097 = vunpack.c.l.b16 %v585
        %v3098 = vunpack.c.l.b16 %v586
        %v3099 = vunpack.c.l.b16 %v587
        %v3100 = vunpack.c.l.b16 %v588
        %v3101 = vunpack.c.l.b16 %v589
        %v3102 = vunpack.c.l.b16 %v590
        %v3103 = vunpack.c.l.b16 %v591
        %v3104 = vunpack.c.l.b16 %v592
        %v3105 = vunpack.c.l.b16 %v593
        %v3106 = vunpack.c.l.b16 %v594
        %v3107 = vunpack.c.l.b16 %v595
        %v3108 = vunpack.c.l.b16 %v596
        %v3109 = vunpack.c.l.b16 %v597
        %v3110 = vunpack.c.l.b16 %v598
        %v3111 = vunpack.c.l.b16 %v599
        %v3112 = vunpack.c.l.b16 %v600
        %v3113 = vunpack.c.l.b16 %v601
        %v3114 = vunpack.c.l.b16 %v602
        %v3115 = vunpack.c.l.b16 %v603
        %v3116 = vunpack.c.l.b16 %v604
        %v3117 = vunpack.c.l.b16 %v605
        %v3118 = vunpack.c.l.b16 %v606
        %v3119 = vunpack.c.l.b16 %v607
        %v3120 = vunpack.c.l.b16 %v608
        %v3121 = vunpack.c.l.b16 %v609
        %v3122 = vunpack.c.l.b16 %v610
        %v3123 = vunpack.c.l.b16 %v611
        %v3124 = vunpack.c.l.b16 %v612
        %v3125 = vunpack.c.l.b16 %v613
        %v3126 = vunpack.c.l.b16 %v614
        %v3127 = vunpack.c.l.b16 %v615
        %v3128 = vunpack.c.l.b16 %v616
        %v3129 = vunpack.c.l.b16 %v617
        %v3130 = vunpack.c.l.b16 %v618
        %v3131 = vunpack.c.l.b16 %v619
        %v3132 = vunpack.c.l.b16 %v620
        %v3133 = vunpack.c.l.b16 %v621
        %v3134 = vunpack.c.l.b16 %v622
        %v3135 = vunpack.c.l.b16 %v623
        %v3136 = vunpack.c.l.b16 %v624
        %v3137 = vunpack.c.l.b16 %v625
        %v3138 = vunpack.c.l.b16 %v626
        %v3139 = vunpack.c.l.b16 %v627
        %v3140 = vunpack.c.l.b16 %v628
        %v3141 = vunpack.c.l.b16 %v629
        %v3142 = vunpack.c.l.b16 %v630
        %v3143 = vunpack.c.l.b16 %v631
        %v3144 = vunpack.c.l.b16 %v632
        %v3145 = vunpack.c.l.b16 %v633
        %v3146 = vunpack.c.l.b16 %v634
        %v3147 = vunpack.c.l.b16 %v635
        %v3148 = vunpack.c.l.b16 %v636
        %v3149 = vunpack.c.l.b16 %v637
        %v3150 = vunpack.c.l.b16 %v638
        %v3151 = vunpack.c.l.b16 %v639
        %v3152 = vunpack.c.l.b16 %v640
        %v3153 = vunpack.c.l.b16 %v641
        %v3154 = vunpack.c.l.b16 %v642
        %v3155 = vunpack.c.l.b16 %v643
        %v3156 = vunpack.c.l.b16 %v644
        %v3157 = vunpack.c.l.b16 %v645
        %v3158 = vunpack.c.l.b16 %v646
        %v3159 = vunpack.c.l.b16 %v647
        %v3160 = vunpack.c.l.b16 %v648
        %v3161 = vunpack.c.l.b16 %v649
        %v3162 = vunpack.c.l.b16 %v650
        %v3163 = vunpack.c.l.b16 %v651
        %v3164 = vunpack.c.l.b16 %v652
        %v3165 = vunpack.c.l.b16 %v653
        %v3166 = vunpack.c.l.b16 %v654
        %v3167 = vunpack.c.l.b16 %v655
        %v3168 = vunpack.c.l.b16 %v656
        %v3169 = vunpack.c.l.b16 %v657
        %v3170 = vunpack.c.l.b16 %v658
        %v3171 = vunpack.c.l.b16 %v659
        %v3172 = vunpack.c.l.b16 %v660
        %v3173 = vunpack.c.l.b16 %v661
        %v3174 = vunpack.c.l.b16 %v662
        %v3175 = vunpack.c.l.b16 %v663
        %v3176 = vunpack.c.l.b16 %v664
        %v3177 = vunpack.c.l.b16 %v665
        %v3178 = vunpack.c.l.b16 %v666
        %v3179 = vunpack.c.l.b16 %v667
        %v3180 = vunpack.c.l.b16 %v668
        %v3181 = vunpack.c.l.b16 %v669
        %v3182 = vunpack.c.l.b16 %v670
        %v3183 = vunpack.c.l.b16 %v671
        %v3184 = vunpack.c.l.b16 %v672
        %v3185 = vunpack.c.l.b16 %v673
        %v3186 = vunpack.c.l.b16 %v674
        %v3187 = vunpack.c.l.b16 %v675
        %v3188 = vunpack.c.l.b16 %v676
        %v3189 = vunpack.c.l.b16 %v677
        %v3190 = vunpack.c.l.b16 %v678
        %v3191 = vunpack.c.l.b16 %v679
        %v3192 = vunpack.c.l.b16 %v680
        %v3193 = vunpack.c.l.b16 %v681
        %v3194 = vunpack.c.l.b16 %v682
        %v3195 = vunpack.c.l.b16 %v683
        %v3196 = vunpack.c.l.b16 %v684
        %v3197 = vunpack.c.l.b16 %v685
        %v3198 = vunpack.c.l.b16 %v686
        %v3199 = vunpack.c.l.b16 %v687
        %v3200 = vunpack.c.l.b16 %v688
        %v3201 = vunpack.c.l.b16 %v689
        %v3202 = vunpack.c.l.b16 %v690
        %v3203 = vunpack.c.l.b16 %v691
        %v3204 = vunpack.c.l.b16 %v692
        %v3205 = vunpack.c.l.b16 %v693
        %v3206 = vunpack.c.l.b16 %v694
        %v3207 = vunpack.c.l.b16 %v695
        %v3208 = vunpack.c.l.b16 %v696
        %v3209 = vunpack.c.l.b16 %v697
        %v3210 = vunpack.c.l.b16 %v698
        %v3211 = vunpack.c.l.b16 %v699
        %v3212 = vunpack.c.l.b16 %v700
        %v3213 = vunpack.c.l.b16 %v701
        %v3214 = vunpack.c.l.b16 %v702
        %v3215 = vunpack.c.l.b16 %v703
        %v3216 = vunpack.c.l.b16 %v704
        %v3217 = vunpack.c.l.b16 %v705
        %v3218 = vunpack.c.l.b16 %v706
        %v3219 = vunpack.c.l.b16 %v707
        %v3220 = vunpack.c.l.b16 %v708
        %v3221 = vunpack.c.l.b16 %v709
        %v3222 = vunpack.c.l.b16 %v710
        %v3223 = vunpack.c.l.b16 %v711
        %v3224 = vunpack.c.l.b16 %v712
        %v3225 = vunpack.c.l.b16 %v713
        %v3226 = vunpack.c.l.b16 %v714
        %v3227 = vunpack.c.l.b16 %v715
        %v3228 = vunpack.c.l.b16 %v716
        %v3229 = vunpack.c.l.b16 %v717
        %v3230 = vunpack.c.l.b16 %v718
        %v3231 = vunpack.c.l.b16 %v719
        %v3232 = vunpack.c.l.b16 %v720
        %v3233 = vunpack.c.l.b16 %v721
        %v3234 = vunpack.c.l.b16 %v722
        %v3235 = vunpack.c.l.b16 %v723
        %v3236 = vunpack.c.l.b16 %v724
        %v3237 = vunpack.c.l.b16 %v725
        %v3238 = vunpack.c.l.b16 %v726
        %v3239 = vunpack.c.l.b16 %v727
        %v3240 = vunpack.c.l.b16 %v728
        %v3241 = vunpack.c.l.b16 %v729
        %v3242 = vunpack.c.l.b16 %v730
        %v3243 = vunpack.c.l.b16 %v731
        %v3244 = vunpack.c.l.b16 %v732
        %v3245 = vunpack.c.l.b16 %v733
        %v3246 = vunpack.c.l.b16 %v734
        %v3247 = vunpack.c.l.b16 %v735
        %v3248 = vunpack.c.l.b16 %v736
        %v3249 = vunpack.c.l.b16 %v737
        %v3250 = vunpack.c.l.b16 %v738
        %v3251 = vunpack.c.l.b16 %v739
        %v3252 = vunpack.c.l.b16 %v740
        %v3253 = vunpack.c.l.b16 %v741
        %v3254 = vunpack.c.l.b16 %v742
        %v3255 = vunpack.c.l.b16 %v743
        %v3256 = vunpack.c.l.b16 %v744
        %v3257 = vunpack.c.l.b16 %v745
        %v3258 = vunpack.c.l.b16 %v746
        %v3259 = vunpack.c.l.b16 %v747
        %v3260 = vunpack.c.l.b16 %v748
        %v3261 = vunpack.c.l.b16 %v749
        %v3262 = vunpack.c.l.b16 %v750
        %v3263 = vunpack.c.l.b16 %v751
        %v3264 = vunpack.c.l.b16 %v752
        %v3265 = vunpack.c.l.b16 %v753
        %v3266 = vunpack.c.l.b16 %v754
        %v3267 = vunpack.c.l.b16 %v755
        %v3268 = vunpack.c.l.b16 %v756
        %v3269 = vunpack.c.l.b16 %v757
        %v3270 = vunpack.c.l.b16 %v758
        %v3271 = vunpack.c.l.b16 %v759
        %v3272 = vunpack.c.l.b16 %v760
        %v3273 = vunpack.c.l.b16 %v761
        %v3274 = vunpack.c.l.b16 %v762
        %v3275 = vunpack.c.l.b16 %v763
        %v3276 = vunpack.c.l.b16 %v764
        %v3277 = vunpack.c.l.b16 %v765
        %v3278 = vunpack.c.l.b16 %v766
        %v3279 = vunpack.c.l.b16 %v767
        %v3280 = vunpack.c.l.b16 %v768
        %v3281 = vunpack.c.l.b16 %v769
        %v3282 = vunpack.c.l.b16 %v770
        %v3283 = vunpack.c.l.b16 %v771
        %v3284 = vunpack.c.l.b16 %v772
        %v3285 = vunpack.c.l.b16 %v773
        %v3286 = vunpack.c.l.b16 %v774
        %v3287 = vunpack.c.l.b16 %v775
        %v3288 = vunpack.c.l.b16 %v776
        %v3289 = vunpack.c.l.b16 %v777
        %v3290 = vunpack.c.l.b16 %v778
        %v3291 = vunpack.c.l.b16 %v779
        %v3292 = vunpack.c.l.b16 %v780
        %v3293 = vunpack.c.l.b16 %v781
        %v3294 = vunpack.c.l.b16 %v782
        %v3295 = vunpack.c.l.b16 %v783
        %v3296 = vunpack.c.l.b16 %v784
        %v3297 = vunpack.c.l.b16 %v785
        %v3298 = vunpack.c.l.b16 %v786
        %v3299 = vunpack.c.l.b16 %v787
        %v3300 = vunpack.c.l.b16 %v788
        %v3301 = vunpack.c.l.b16 %v789
        %v3302 = vunpack.c.l.b16 %v790
        %v3303 = vunpack.c.l.b16 %v791
        %v3304 = vunpack.c.l.b16 %v792
        %v3305 = vunpack.c.l.b16 %v793
        %v3306 = vunpack.c.l.b16 %v794
        %v3307 = vunpack.c.l.b16 %v795
        %v3308 = vunpack.c.l.b16 %v796
        %v3309 = vunpack.c.l.b16 %v797
        %v3310 = vunpack.c.l.b16 %v798
        %v3311 = vunpack.c.l.b16 %v799
        %v3312 = vunpack.c.l.b16 %v800
        %v3313 = vunpack.c.l.b16 %v801
        %v3314 = vunpack.c.l.b16 %v802
        %v3315 = vunpack.c.l.b16 %v803
        %v3316 = vunpack.c.l.b16 %v804
        %v3317 = vunpack.c.l.b16 %v805
        %v3318 = vunpack.c.l.b16 %v806
        %v3319 = vunpack.c.l.b16 %v807
        %v3320 = vunpack.c.l.b16 %v808
        %v3321 = vunpack.c.l.b16 %v809
        %v3322 = vunpack.c.l.b16 %v810
        %v3323 = vunpack.c.l.b16 %v811
        %v3324 = vunpack.c.l.b16 %v812
        %v3325 = vunpack.c.l.b16 %v813
        %v3326 = vunpack.c.l.b16 %v814
        %v3327 = vunpack.c.l.b16 %v815
        %v3328 = vunpack.c.l.b16 %v816
        %v3329 = vunpack.c.l.b16 %v817
        %v3330 = vunpack.c.l.b16 %v818
        %v3331 = vunpack.c.l.b16 %v819
        %v3332 = vunpack.c.l.b16 %v820
        %v3333 = vunpack.c.l.b16 %v821
        %v3334 = vunpack.c.l.b16 %v822
        %v3335 = vunpack.c.l.b16 %v823
        %v3336 = vunpack.c.l.b16 %v824
        %v3337 = vunpack.c.l.b16 %v825
        %v3338 = vunpack.c.l.b16 %v826
        %v3339 = vunpack.c.l.b16 %v827
        %v3340 = vunpack.c.l.b16 %v828
        %v3341 = vunpack.c.l.b16 %v829
        %v3342 = vunpack.c.l.b16 %v830
        %v3343 = vunpack.c.l.b16 %v831
        %v3344 = vunpack.c.l.b16 %v832
        %v3345 = vunpack.c.l.b16 %v833
        %v3346 = vunpack.c.l.b16 %v834
        %v3347 = vunpack.c.l.b16 %v835
        %v3348 = vunpack.c.l.b16 %v836
        %v3349 = vunpack.c.l.b16 %v837
        %v3350 = vunpack.c.l.b16 %v838
        %v3351 = vunpack.c.l.b16 %v839
        %v3352 = vunpack.c.l.b16 %v840
        %v3353 = vunpack.c.l.b16 %v841
        %v3354 = vunpack.c.l.b16 %v842
        %v3355 = vunpack.c.l.b16 %v843
        %v3356 = vunpack.c.l.b16 %v844
        %v3357 = vunpack.c.l.b16 %v845
        %v3358 = vunpack.c.l.b16 %v846
        %v3359 = vunpack.c.l.b16 %v847
        %v3360 = vunpack.c.l.b16 %v848
        %v3361 = vunpack.c.l.b16 %v849
        %v3362 = vunpack.c.l.b16 %v850
        %v3363 = vunpack.c.l.b16 %v851
        %v3364 = vunpack.c.l.b16 %v852
        %v3365 = vunpack.c.l.b16 %v853
        %v3366 = vunpack.c.l.b16 %v854
        %v3367 = vunpack.c.l.b16 %v855
        %v3368 = vunpack.c.l.b16 %v856
        %v3369 = vunpack.c.l.b16 %v857
        %v3370 = vunpack.c.l.b16 %v858
        %v3371 = vunpack.c.l.b16 %v859
        %v3372 = vunpack.c.l.b16 %v860
        %v3373 = vunpack.c.l.b16 %v861
        %v3374 = vunpack.c.l.b16 %v862
        %v3375 = vunpack.c.l.b16 %v863
        %v3376 = vunpack.c.l.b16 %v864
        %v3377 = vunpack.c.l.b16 %v865
        %v3378 = vunpack.c.l.b16 %v866
        %v3379 = vunpack.c.l.b16 %v867
        %v3380 = vunpack.c.l.b16 %v868
        %v3381 = vunpack.c.l.b16 %v869
        %v3382 = vunpack.c.l.b16 %v870
        %v3383 = vunpack.c.l.b16 %v871
        %v3384 = vunpack.c.l.b16 %v872
        %v3385 = vunpack.c.l.b16 %v873
        %v3386 = vunpack.c.l.b16 %v874
        %v3387 = vunpack.c.l.b16 %v875
        %v3388 = vunpack.c.l.b16 %v876
        %v3389 = vunpack.c.l.b16 %v877
        %v3390 = vunpack.c.l.b16 %v878
        %v3391 = vunpack.c.l.b16 %v879
        %v3392 = vunpack.c.l.b16 %v880
        %v3393 = vunpack.c.l.b16 %v881
        %v3394 = vunpack.c.l.b16 %v882
        %v3395 = vunpack.c.l.b16 %v883
        %v3396 = vunpack.c.l.b16 %v884
        %v3397 = vunpack.c.l.b16 %v885
        %v3398 = vunpack.c.l.b16 %v886
        %v3399 = vunpack.c.l.b16 %v887
        %v3400 = vunpack.c.l.b16 %v888
        %v3401 = vunpack.c.l.b16 %v889
        %v3402 = vunpack.c.l.b16 %v890
        %v3403 = vunpack.c.l.b16 %v891
        %v3404 = vunpack.c.l.b16 %v892
        %v3405 = vunpack.c.l.b16 %v893
        %v3406 = vunpack.c.l.b16 %v894
        %v3407 = vunpack.c.l.b16 %v895
        %v3408 = vunpack.c.l.b16 %v896
        %v3409 = vunpack.c.l.b16 %v897
        %v3410 = vunpack.c.l.b16 %v898
        %v3411 = vunpack.c.l.b16 %v899
        %v3412 = vunpack.c.l.b16 %v900
        %v3413 = vunpack.c.l.b16 %v901
        %v3414 = vunpack.c.l.b16 %v902
        %v3415 = vunpack.c.l.b16 %v903
        %v3416 = vunpack.c.l.b16 %v904
        %v3417 = vunpack.c.l.b16 %v905
        %v3418 = vunpack.c.l.b16 %v906
        %v3419 = vunpack.c.l.b16 %v907
        %v3420 = vunpack.c.l.b16 %v908
        %v3421 = vunpack.c.l.b16 %v909
        %v3422 = vunpack.c.l.b16 %v910
        %v3423 = vunpack.c.l.b16 %v911
        %v3424 = vunpack.c.l.b16 %v912
        %v3425 = vunpack.c.l.b16 %v913
        %v3426 = vunpack.c.l.b16 %v914
        %v3427 = vunpack.c.l.b16 %v915
        %v3428 = vunpack.c.l.b16 %v916
        %v3429 = vunpack.c.l.b16 %v917
        %v3430 = vunpack.c.l.b16 %v918
        %v3431 = vunpack.c.l.b16 %v919
        %v3432 = vunpack.c.l.b16 %v920
        %v3433 = vunpack.c.l.b16 %v921
        %v3434 = vunpack.c.l.b16 %v922
        %v3435 = vunpack.c.l.b16 %v923
        %v3436 = vunpack.c.l.b16 %v924
        %v3437 = vunpack.c.l.b16 %v925
        %v3438 = vunpack.c.l.b16 %v926
        %v3439 = vunpack.c.l.b16 %v927
        %v3440 = vunpack.c.l.b16 %v928
        %v3441 = vunpack.c.l.b16 %v929
        %v3442 = vunpack.c.l.b16 %v930
        %v3443 = vunpack.c.l.b16 %v931
        %v3444 = vunpack.c.l.b16 %v932
        %v3445 = vunpack.c.l.b16 %v933
        %v3446 = vunpack.c.l.b16 %v934
        %v3447 = vunpack.c.l.b16 %v935
        %v3448 = vunpack.c.l.b16 %v936
        %v3449 = vunpack.c.l.b16 %v937
        %v3450 = vunpack.c.l.b16 %v938
        %v3451 = vunpack.c.l.b16 %v939
        %v3452 = vunpack.c.l.b16 %v940
        %v3453 = vunpack.c.l.b16 %v941
        %v3454 = vunpack.c.l.b16 %v942
        %v3455 = vunpack.c.l.b16 %v943
        %v3456 = vunpack.c.l.b16 %v944
        %v3457 = vunpack.c.l.b16 %v945
        %v3458 = vunpack.c.l.b16 %v946
        %v3459 = vunpack.c.l.b16 %v947
        %v3460 = vunpack.c.l.b16 %v948
        %v3461 = vunpack.c.l.b16 %v949
        %v3462 = vunpack.c.l.b16 %v950
        %v3463 = vunpack.c.l.b16 %v951
        %v3464 = vunpack.c.l.b16 %v952
        %v3465 = vunpack.c.l.b16 %v953
        %v3466 = vunpack.c.l.b16 %v954
        %v3467 = vunpack.c.l.b16 %v955
        %v3468 = vunpack.c.l.b16 %v956
        %v3469 = vunpack.c.l.b16 %v957
        %v3470 = vunpack.c.l.b16 %v958
        %v3471 = vunpack.c.l.b16 %v959
        %v3472 = vunpack.c.l.b16 %v960
        %v3473 = vunpack.c.l.b16 %v961
        %v3474 = vunpack.c.l.b16 %v962
        %v3475 = vunpack.c.l.b16 %v963
        %v3476 = vunpack.c.l.b16 %v964
        %v3477 = vunpack.c.l.b16 %v965
        %v3478 = vunpack.c.l.b16 %v966
        %v3479 = vunpack.c.l.b16 %v967
        %v3480 = vunpack.c.l.b16 %v968
        %v3481 = vunpack.c.l.b16 %v969
        %v3482 = vunpack.c.l.b16 %v970
        %v3483 = vunpack.c.l.b16 %v971
        %v3484 = vunpack.c.l.b16 %v972
        %v3485 = vunpack.c.l.b16 %v973
        %v3486 = vunpack.c.l.b16 %v974
        %v3487 = vunpack.c.l.b16 %v975
        %v3488 = vunpack.c.l.b16 %v976
        %v3489 = vunpack.c.l.b16 %v977
        %v3490 = vunpack.c.l.b16 %v978
        %v3491 = vunpack.c.l.b16 %v979
        %v3492 = vunpack.c.l.b16 %v980
        %v3493 = vunpack.c.l.b16 %v981
        %v3494 = vunpack.c.l.b16 %v982
        %v3495 = vunpack.c.l.b16 %v983
        %v3496 = vunpack.c.l.b16 %v984
        %v3497 = vunpack.c.l.b16 %v985
        %v3498 = vunpack.c.l.b16 %v986
        %v3499 = vunpack.c.l.b16 %v987
        %v3500 = vunpack.c.l.b16 %v988
        %v3501 = vunpack.c.l.b16 %v989
        %v3502 = vunpack.c.l.b16 %v990
        %v3503 = vunpack.c.l.b16 %v991
        %v3504 = vunpack.c.l.b16 %v992
        %v3505 = vunpack.c.l.b16 %v993
        %v3506 = vunpack.c.l.b16 %v994
        %v3507 = vunpack.c.l.b16 %v995
        %v3508 = vunpack.c.l.b16 %v996
        %v3509 = vunpack.c.l.b16 %v997
        %v3510 = vunpack.c.l.b16 %v998
        %v3511 = vunpack.c.l.b16 %v999
        %v3512 = vunpack.c.l.b16 %v1000
        %v3513 = vunpack.c.l.b16 %v1001
        %v3514 = vunpack.c.l.b16 %v1002
        %v3515 = vunpack.c.l.b16 %v1003
        %v3516 = vunpack.c.l.b16 %v1004
        %v3517 = vunpack.c.l.b16 %v1005
        %v3518 = vunpack.c.l.b16 %v1006
        %v3519 = vunpack.c.l.b16 %v1007
        %v3520 = vunpack.c.l.b16 %v1008
        %v3521 = vunpack.c.l.b16 %v1009
        %v3522 = vunpack.c.l.b16 %v1010
        %v3523 = vunpack.c.l.b16 %v1011
        %v3524 = vunpack.c.l.b16 %v1012
        %v3525 = vunpack.c.l.b16 %v1013
        %v3526 = vunpack.c.l.b16 %v1014
        %v3527 = vunpack.c.l.b16 %v1015
        %v3528 = vunpack.c.l.b16 %v1016
        %v3529 = vunpack.c.l.b16 %v1017
        %v3530 = vunpack.c.l.b16 %v1018
        %v3531 = vunpack.c.l.b16 %v1019
        %v3532 = vunpack.c.l.b16 %v1020
        %v3533 = vunpack.c.l.b16 %v1021
        %v3534 = vunpack.c.l.b16 %v1022
        %v3535 = vunpack.c.l.b16 %v1023
        %v3536 = vunpack.c.l.b16 %v1024
        %v3537 = vunpack.c.l.b16 %v1025
        %v3538 = vunpack.c.l.b16 %v1026
        %v3539 = vunpack.c.l.b16 %v1027
        %v3540 = vunpack.c.l.b16 %v1028
        %v3541 = vunpack.c.l.b16 %v1029
        %v3542 = vunpack.c.l.b16 %v1030
        %v3543 = vunpack.c.l.b16 %v1031
        %v3544 = vunpack.c.l.b16 %v1032
        %v3545 = vunpack.c.l.b16 %v1033
        %v3546 = vunpack.c.l.b16 %v1034
        %v3547 = vunpack.c.l.b16 %v1035
        %v3548 = vunpack.c.l.b16 %v1036
        %v3549 = vunpack.c.l.b16 %v1037
        %v3550 = vunpack.c.l.b16 %v1038
        %v3551 = vunpack.c.l.b16 %v1039
        %v3552 = vunpack.c.l.b16 %v1040
        %v3553 = vunpack.c.l.b16 %v1041
        %v3554 = vunpack.c.l.b16 %v1042
        %v3555 = vunpack.c.l.b16 %v1043
        %v3556 = vunpack.c.l.b16 %v1044
        %v3557 = vunpack.c.l.b16 %v1045
        %v3558 = vunpack.c.l.b16 %v1046
        %v3559 = vunpack.c.l.b16 %v1047
        %v3560 = vunpack.c.l.b16 %v1048
        %v3561 = vunpack.c.l.b16 %v1049
        %v3562 = vunpack.c.l.b16 %v1050
        %v3563 = vunpack.c.l.b16 %v1051
        %v3564 = vunpack.c.l.b16 %v1052
        %v3565 = vunpack.c.l.b16 %v1053
        %v3566 = vunpack.c.l.b16 %v1054
        %v3567 = vunpack.c.l.b16 %v1055
        %v3568 = vunpack.c.l.b16 %v1056
        %v3569 = vunpack.c.l.b16 %v1057
        %v3570 = vunpack.c.l.b16 %v1058
        %v3571 = vunpack.c.l.b16 %v1059
        %v3572 = vunpack.c.l.b16 %v1060
        %v3573 = vunpack.c.l.b16 %v1061
        %v3574 = vunpack.c.l.b16 %v1062
        %v3575 = vunpack.c.l.b16 %v1063
        %v3576 = vunpack.c.l.b16 %v1064
        %v3577 = vunpack.c.l.b16 %v1065
        %v3578 = vunpack.c.l.b16 %v1066
        %v3579 = vunpack.c.l.b16 %v1067
        %v3580 = vunpack.c.l.b16 %v1068
        %v3581 = vunpack.c.l.b16 %v1069
        %v3582 = vunpack.c.l.b16 %v1070
        %v3583 = vunpack.c.l.b16 %v1071
        %v3584 = vunpack.c.l.b16 %v1072
        %v3585 = vunpack.c.l.b16 %v1073
        %v3586 = vunpack.c.l.b16 %v1074
        %v3587 = vunpack.c.l.b16 %v1075
        %v3588 = vunpack.c.l.b16 %v1076
        %v3589 = vunpack.c.l.b16 %v1077
        %v3590 = vunpack.c.l.b16 %v1078
        %v3591 = vunpack.c.l.b16 %v1079
        %v3592 = vunpack.c.l.b16 %v1080
        %v3593 = vunpack.c.l.b16 %v1081
        %v3594 = vunpack.c.l.b16 %v1082
        %v3595 = vunpack.c.l.b16 %v1083
        %v3596 = vunpack.c.l.b16 %v1084
        %v3597 = vunpack.c.l.b16 %v1085
        %v3598 = vunpack.c.l.b16 %v1086
        %v3599 = vunpack.c.l.b16 %v1087
        %v3600 = vunpack.c.l.b16 %v1088
        %v3601 = vunpack.c.l.b16 %v1089
        %v3602 = vunpack.c.l.b16 %v1090
        %v3603 = vunpack.c.l.b16 %v1091
        %v3604 = vunpack.c.l.b16 %v1092
        %v3605 = vunpack.c.l.b16 %v1093
        %v3606 = vunpack.c.l.b16 %v1094
        %v3607 = vunpack.c.l.b16 %v1095
        %v3608 = vunpack.c.l.b16 %v1096
        %v3609 = vunpack.c.l.b16 %v1097
        %v3610 = vunpack.c.l.b16 %v1098
        %v3611 = vunpack.c.l.b16 %v1099
        %v3612 = vunpack.c.l.b16 %v1100
        %v3613 = vunpack.c.l.b16 %v1101
        %v3614 = vunpack.c.l.b16 %v1102
        %v3615 = vunpack.c.l.b16 %v1103
        %v3616 = vunpack.c.l.b16 %v1104
        %v3617 = vunpack.c.l.b16 %v1105
        %v3618 = vunpack.c.l.b16 %v1106
        %v3619 = vunpack.c.l.b16 %v1107
        %v3620 = vunpack.c.l.b16 %v1108
        %v3621 = vunpack.c.l.b16 %v1109
        %v3622 = vunpack.c.l.b16 %v1110
        %v3623 = vunpack.c.l.b16 %v1111
        %v3624 = vunpack.c.l.b16 %v1112
        %v3625 = vunpack.c.l.b16 %v1113
        %v3626 = vunpack.c.l.b16 %v1114
        %v3627 = vunpack.c.l.b16 %v1115
        %v3628 = vunpack.c.l.b16 %v1116
        %v3629 = vunpack.c.l.b16 %v1117
        %v3630 = vunpack.c.l.b16 %v1118
        %v3631 = vunpack.c.l.b16 %v1119
        %v3632 = vunpack.c.l.b16 %v1120
        %v3633 = vunpack.c.l.b16 %v1121
        %v3634 = vunpack.c.l.b16 %v1122
        %v3635 = vunpack.c.l.b16 %v1123
        %v3636 = vunpack.c.l.b16 %v1124
        %v3637 = vunpack.c.l.b16 %v1125
        %v3638 = vunpack.c.l.b16 %v1126
        %v3639 = vunpack.c.l.b16 %v1127
        %v3640 = vunpack.c.l.b16 %v1128
        %v3641 = vunpack.c.l.b16 %v1129
        %v3642 = vunpack.c.l.b16 %v1130
        %v3643 = vunpack.c.l.b16 %v1131
        %v3644 = vunpack.c.l.b16 %v1132
        %v3645 = vunpack.c.l.b16 %v1133
        %v3646 = vunpack.c.l.b16 %v1134
        %v3647 = vunpack.c.l.b16 %v1135
        %v3648 = vunpack.c.l.b16 %v1136
        %v3649 = vunpack.c.l.b16 %v1137
        %v3650 = vunpack.c.l.b16 %v1138
        %v3651 = vunpack.c.l.b16 %v1139
        %v3652 = vunpack.c.l.b16 %v1140
        %v3653 = vunpack.c.l.b16 %v1141
        %v3654 = vunpack.c.l.b16 %v1142
        %v3655 = vunpack.c.l.b16 %v1143
        %v3656 = vunpack.c.l.b16 %v1144
        %v3657 = vunpack.c.l.b16 %v1145
        %v3658 = vunpack.c.l.b16 %v1146
        %v3659 = vunpack.c.l.b16 %v1147
        %v3660 = vunpack.c.l.b16 %v1148
        %v3661 = vunpack.c.l.b16 %v1149
        %v3662 = vunpack.c.l.b16 %v1150
        %v3663 = vunpack.c.l.b16 %v1151
        %v3664 = vunpack.c.l.b16 %v1152
        %v3665 = vunpack.c.l.b16 %v1153
        %v3666 = vunpack.c.l.b16 %v1154
        %v3667 = vunpack.c.l.b16 %v1155
        %v3668 = vunpack.c.l.b16 %v1156
        %v3669 = vunpack.c.l.b16 %v1157
        %v3670 = vunpack.c.l.b16 %v1158
        %v3671 = vunpack.c.l.b16 %v1159
        %v3672 = vunpack.c.l.b16 %v1160
        %v3673 = vunpack.c.l.b16 %v1161
        %v3674 = vunpack.c.l.b16 %v1162
        %v3675 = vunpack.c.l.b16 %v1163
        %v3676 = vunpack.c.l.b16 %v1164
        %v3677 = vunpack.c.l.b16 %v1165
        %v3678 = vunpack.c.l.b16 %v1166
        %v3679 = vunpack.c.l.b16 %v1167
        %v3680 = vunpack.c.l.b16 %v1168
        %v3681 = vunpack.c.l.b16 %v1169
        %v3682 = vunpack.c.l.b16 %v1170
        %v3683 = vunpack.c.l.b16 %v1171
        %v3684 = vunpack.c.l.b16 %v1172
        %v3685 = vunpack.c.l.b16 %v1173
        %v3686 = vunpack.c.l.b16 %v1174
        %v3687 = vunpack.c.l.b16 %v1175
        %v3688 = vunpack.c.l.b16 %v1176
        %v3689 = vunpack.c.l.b16 %v1177
        %v3690 = vunpack.c.l.b16 %v1178
        %v3691 = vunpack.c.l.b16 %v1179
        %v3692 = vunpack.c.l.b16 %v1180
        %v3693 = vunpack.c.l.b16 %v1181
        %v3694 = vunpack.c.l.b16 %v1182
        %v3695 = vunpack.c.l.b16 %v1183
        %v3696 = vunpack.c.l.b16 %v1184
        %v3697 = vunpack.c.l.b16 %v1185
        %v3698 = vunpack.c.l.b16 %v1186
        %v3699 = vunpack.c.l.b16 %v1187
        %v3700 = vunpack.c.l.b16 %v1188
        %v3701 = vunpack.c.l.b16 %v1189
        %v3702 = vunpack.c.l.b16 %v1190
        %v3703 = vunpack.c.l.b16 %v1191
        %v3704 = vunpack.c.l.b16 %v1192
        %v3705 = vunpack.c.l.b16 %v1193
        %v3706 = vunpack.c.l.b16 %v1194
        %v3707 = vunpack.c.l.b16 %v1195
        %v3708 = vunpack.c.l.b16 %v1196
        %v3709 = vunpack.c.l.b16 %v1197
        %v3710 = vunpack.c.l.b16 %v1198
        %v3711 = vunpack.c.l.b16 %v1199
        %v3712 = vunpack.c.l.b16 %v1200
        %v3713 = vunpack.c.l.b16 %v1201
        %v3714 = vunpack.c.l.b16 %v1202
        %v3715 = vunpack.c.l.b16 %v1203
        %v3716 = vunpack.c.l.b16 %v1204
        %v3717 = vunpack.c.l.b16 %v1205
        %v3718 = vunpack.c.l.b16 %v1206
        %v3719 = vunpack.c.l.b16 %v1207
        %v3720 = vunpack.c.l.b16 %v1208
        %v3721 = vunpack.c.l.b16 %v1209
        %v3722 = vunpack.c.l.b16 %v1210
        %v3723 = vunpack.c.l.b16 %v1211
        %v3724 = vunpack.c.l.b16 %v1212
        %v3725 = vunpack.c.l.b16 %v1213
        %v3726 = vunpack.c.l.b16 %v1214
        %v3727 = vunpack.c.l.b16 %v1215
        %v3728 = vunpack.c.l.b16 %v1216
        %v3729 = vunpack.c.l.b16 %v1217
        %v3730 = vunpack.c.l.b16 %v1218
        %v3731 = vunpack.c.l.b16 %v1219
        %v3732 = vunpack.c.l.b16 %v1220
        %v3733 = vunpack.c.l.b16 %v1221
        %v3734 = vunpack.c.l.b16 %v1222
        %v3735 = vunpack.c.l.b16 %v1223
        %v3736 = vunpack.c.l.b16 %v1224
        %v3737 = vunpack.c.l.b16 %v1225
        %v3738 = vunpack.c.l.b16 %v1226
        %v3739 = vunpack.c.l.b16 %v1227
        %v3740 = vunpack.c.l.b16 %v1228
        %v3741 = vunpack.c.l.b16 %v1229
        %v3742 = vunpack.c.l.b16 %v1230
        %v3743 = vunpack.c.l.b16 %v1231
        %v3744 = vunpack.c.l.b16 %v1232
        %v3745 = vunpack.c.l.b16 %v1233
        %v3746 = vunpack.c.l.b16 %v1234
        %v3747 = vunpack.c.l.b16 %v1235
        %v3748 = vunpack.c.l.b16 %v1236
        %v3749 = vunpack.c.l.b16 %v1237
        %v3750 = vunpack.c.l.b16 %v1238
        %v3751 = vunpack.c.l.b16 %v1239
        %v3752 = vunpack.c.l.b16 %v1240
        %v3753 = vunpack.c.l.b16 %v1241
        %v3754 = vunpack.c.l.b16 %v1242
        %v3755 = vunpack.c.l.b16 %v1243
        %v3756 = vunpack.c.l.b16 %v1244
        %v3757 = vunpack.c.l.b16 %v1245
        %v3758 = vunpack.c.l.b16 %v1246
        %v3759 = vunpack.c.l.b16 %v1247
        %v3760 = vunpack.c.l.b16 %v1248
        %v3761 = vunpack.c.l.b16 %v1249
        %v3762 = vunpack.c.l.b16 %v1250
        %v3763 = vunpack.c.l.b16 %v1251
        %v3764 = vunpack.c.l.b16 %v1252
        %v3765 = vunpack.c.l.b16 %v1253
        %v3766 = vunpack.c.l.b16 %v1254
        %v3767 = vunpack.c.l.b16 %v1255
        %v3768 = vunpack.c.l.b16 %v1256
        %v3769 = vunpack.c.l.b16 %v1257
        %v3770 = vunpack.c.l.b16 %v1258
        %v3771 = vunpack.c.l.b16 %v1259
        %v3772 = vunpack.c.l.b16 %v1260
        %v3773 = vunpack.c.l.b16 %v1261
        %v3774 = vunpack.c.l.b16 %v1262
        %v3775 = vunpack.c.l.b16 %v1263
        %v3776 = vunpack.c.l.b16 %v1264
        %v3777 = vunpack.c.l.b16 %v1265
        %v3778 = vunpack.c.l.b16 %v1266
        %v3779 = vunpack.c.l.b16 %v1267
        %v3780 = vunpack.c.l.b16 %v1268
        %v3781 = vunpack.c.l.b16 %v1269
        %v3782 = vunpack.c.l.b16 %v1270
        %v3783 = vunpack.c.l.b16 %v1271
        %v3784 = vunpack.c.l.b16 %v1272
        %v3785 = vunpack.c.l.b16 %v1273
        %v3786 = vunpack.c.l.b16 %v1274
        %v3787 = vunpack.c.l.b16 %v1275
        %v3788 = vunpack.c.l.b16 %v1276
        %v3789 = vunpack.c.l.b16 %v1277
        %v3790 = vunpack.c.l.b16 %v1278
        %v3791 = vunpack.c.l.b16 %v1279
        %v3792 = vunpack.c.l.b16 %v1280
        %v3793 = vunpack.c.l.b16 %v1281
        %v3794 = vunpack.c.l.b16 %v1282
        %v3795 = vunpack.c.l.b16 %v1283
        %v3796 = vunpack.c.l.b16 %v1284
        %v3797 = vunpack.c.l.b16 %v1285
        %v3798 = vunpack.c.l.b16 %v1286
        %v3799 = vunpack.c.l.b16 %v1287
        %v3800 = vunpack.c.l.b16 %v1288
        %v3801 = vunpack.c.l.b16 %v1289
        %v3802 = vunpack.c.l.b16 %v1290
        %v3803 = vunpack.c.l.b16 %v1291
        %v3804 = vunpack.c.l.b16 %v1292
        %v3805 = vunpack.c.l.b16 %v1293
        %v3806 = vunpack.c.l.b16 %v1294
        %v3807 = vunpack.c.l.b16 %v1295
        %v3808 = vunpack.c.l.b16 %v1296
        %v3809 = vunpack.c.l.b16 %v1297
        %v3810 = vunpack.c.l.b16 %v1298
        %v3811 = vunpack.c.l.b16 %v1299
        %v3812 = vunpack.c.l.b16 %v1300
        %v3813 = vunpack.c.l.b16 %v1301
        %v3814 = vunpack.c.l.b16 %v1302
        %v3815 = vunpack.c.l.b16 %v1303
        %v3816 = vunpack.c.l.b16 %v1304
        %v3817 = vunpack.c.l.b16 %v1305
        %v3818 = vunpack.c.l.b16 %v1306
        %v3819 = vunpack.c.l.b16 %v1307
        %v3820 = vunpack.c.l.b16 %v1308
        %v3821 = vunpack.c.l.b16 %v1309
        %v3822 = vunpack.c.l.b16 %v1310
        %v3823 = vunpack.c.l.b16 %v1311
        %v3824 = vunpack.c.l.b16 %v1312
        %v3825 = vunpack.c.l.b16 %v1313
        %v3826 = vunpack.c.l.b16 %v1314
        %v3827 = vunpack.c.l.b16 %v1315
        %v3828 = vunpack.c.l.b16 %v1316
        %v3829 = vunpack.c.l.b16 %v1317
        %v3830 = vunpack.c.l.b16 %v1318
        %v3831 = vunpack.c.l.b16 %v1319
        %v3832 = vunpack.c.l.b16 %v1320
        %v3833 = vunpack.c.l.b16 %v1321
        %v3834 = vunpack.c.l.b16 %v1322
        %v3835 = vunpack.c.l.b16 %v1323
        %v3836 = vunpack.c.l.b16 %v1324
        %v3837 = vpack.c.b16 %v2814, %v2813
        %v3838 = vpack.c.b16 %v2816, %v2815
        %v3839 = vpack.c.b16 %v2818, %v2817
        %v3840 = vpack.c.b16 %v2820, %v2819
        %v3841 = vpack.c.b16 %v2822, %v2821
        %v3842 = vpack.c.b16 %v2824, %v2823
        %v3843 = vpack.c.b16 %v2826, %v2825
        %v3844 = vpack.c.b16 %v2828, %v2827
        %v3845 = vpack.c.b16 %v2830, %v2829
        %v3846 = vpack.c.b16 %v2832, %v2831
        %v3847 = vpack.c.b16 %v2834, %v2833
        %v3848 = vpack.c.b16 %v2836, %v2835
        %v3849 = vpack.c.b16 %v2838, %v2837
        %v3850 = vpack.c.b16 %v2840, %v2839
        %v3851 = vpack.c.b16 %v2842, %v2841
        %v3852 = vpack.c.b16 %v2844, %v2843
        %v3853 = vpack.c.b16 %v2846, %v2845
        %v3854 = vpack.c.b16 %v2848, %v2847
        %v3855 = vpack.c.b16 %v2850, %v2849
        %v3856 = vpack.c.b16 %v2852, %v2851
        %v3857 = vpack.c.b16 %v2854, %v2853
        %v3858 = vpack.c.b16 %v2856, %v2855
        %v3859 = vpack.c.b16 %v2858, %v2857
        %v3860 = vpack.c.b16 %v2860, %v2859
        %v3861 = vpack.c.b16 %v2862, %v2861
        %v3862 = vpack.c.b16 %v2864, %v2863
        %v3863 = vpack.c.b16 %v2866, %v2865
        %v3864 = vpack.c.b16 %v2868, %v2867
        %v3865 = vpack.c.b16 %v2870, %v2869
        %v3866 = vpack.c.b16 %v2872, %v2871
        %v3867 = vpack.c.b16 %v2874, %v2873
        %v3868 = vpack.c.b16 %v2876, %v2875
        %v3869 = vpack.c.b16 %v2878, %v2877
        %v3870 = vpack.c.b16 %v2880, %v2879
        %v3871 = vpack.c.b16 %v2882, %v2881
        %v3872 = vpack.c.b16 %v2884, %v2883
        %v3873 = vpack.c.b16 %v2886, %v2885
        %v3874 = vpack.c.b16 %v2888, %v2887
        %v3875 = vpack.c.b16 %v2890, %v2889
        %v3876 = vpack.c.b16 %v2892, %v2891
        %v3877 = vpack.c.b16 %v2894, %v2893
        %v3878 = vpack.c.b16 %v2896, %v2895
        %v3879 = vpack.c.b16 %v2898, %v2897
        %v3880 = vpack.c.b16 %v2900, %v2899
        %v3881 = vpack.c.b16 %v2902, %v2901
        %v3882 = vpack.c.b16 %v2904, %v2903
        %v3883 = vpack.c.b16 %v2906, %v2905
        %v3884 = vpack.c.b16 %v2908, %v2907
        %v3885 = vpack.c.b16 %v2910, %v2909
        %v3886 = vpack.c.b16 %v2912, %v2911
        %v3887 = vpack.c.b16 %v2914, %v2913
        %v3888 = vpack.c.b16 %v2916, %v2915
        %v3889 = vpack.c.b16 %v2918, %v2917
        %v3890 = vpack.c.b16 %v2920, %v2919
        %v3891 = vpack.c.b16 %v2922, %v2921
        %v3892 = vpack.c.b16 %v2924, %v2923
        %v3893 = vpack.c.b16 %v2926, %v2925
        %v3894 = vpack.c.b16 %v2928, %v2927
        %v3895 = vpack.c.b16 %v2930, %v2929
        %v3896 = vpack.c.b16 %v2932, %v2931
        %v3897 = vpack.c.b16 %v2934, %v2933
        %v3898 = vpack.c.b16 %v2936, %v2935
        %v3899 = vpack.c.b16 %v2938, %v2937
        %v3900 = vpack.c.b16 %v2940, %v2939
        %v3901 = vpack.c.b16 %v2942, %v2941
        %v3902 = vpack.c.b16 %v2944, %v2943
        %v3903 = vpack.c.b16 %v2946, %v2945
        %v3904 = vpack.c.b16 %v2948, %v2947
        %v3905 = vpack.c.b16 %v2950, %v2949
        %v3906 = vpack.c.b16 %v2952, %v2951
        %v3907 = vpack.c.b16 %v2954, %v2953
        %v3908 = vpack.c.b16 %v2956, %v2955
        %v3909 = vpack.c.b16 %v2958, %v2957
        %v3910 = vpack.c.b16 %v2960, %v2959
        %v3911 = vpack.c.b16 %v2962, %v2961
        %v3912 = vpack.c.b16 %v2964, %v2963
        %v3913 = vpack.c.b16 %v2966, %v2965
        %v3914 = vpack.c.b16 %v2968, %v2967
        %v3915 = vpack.c.b16 %v2970, %v2969
        %v3916 = vpack.c.b16 %v2972, %v2971
        %v3917 = vpack.c.b16 %v2974, %v2973
        %v3918 = vpack.c.b16 %v2976, %v2975
        %v3919 = vpack.c.b16 %v2978, %v2977
        %v3920 = vpack.c.b16 %v2980, %v2979
        %v3921 = vpack.c.b16 %v2982, %v2981
        %v3922 = vpack.c.b16 %v2984, %v2983
        %v3923 = vpack.c.b16 %v2986, %v2985
        %v3924 = vpack.c.b16 %v2988, %v2987
        %v3925 = vpack.c.b16 %v2990, %v2989
        %v3926 = vpack.c.b16 %v2992, %v2991
        %v3927 = vpack.c.b16 %v2994, %v2993
        %v3928 = vpack.c.b16 %v2996, %v2995
        %v3929 = vpack.c.b16 %v2998, %v2997
        %v3930 = vpack.c.b16 %v3000, %v2999
        %v3931 = vpack.c.b16 %v3002, %v3001
        %v3932 = vpack.c.b16 %v3004, %v3003
        %v3933 = vpack.c.b16 %v3006, %v3005
        %v3934 = vpack.c.b16 %v3008, %v3007
        %v3935 = vpack.c.b16 %v3010, %v3009
        %v3936 = vpack.c.b16 %v3012, %v3011
        %v3937 = vpack.c.b16 %v3014, %v3013
        %v3938 = vpack.c.b16 %v3016, %v3015
        %v3939 = vpack.c.b16 %v3018, %v3017
        %v3940 = vpack.c.b16 %v3020, %v3019
        %v3941 = vpack.c.b16 %v3022, %v3021
        %v3942 = vpack.c.b16 %v3024, %v3023
        %v3943 = vpack.c.b16 %v3026, %v3025
        %v3944 = vpack.c.b16 %v3028, %v3027
        %v3945 = vpack.c.b16 %v3030, %v3029
        %v3946 = vpack.c.b16 %v3032, %v3031
        %v3947 = vpack.c.b16 %v3034, %v3033
        %v3948 = vpack.c.b16 %v3036, %v3035
        %v3949 = vpack.c.b16 %v3038, %v3037
        %v3950 = vpack.c.b16 %v3040, %v3039
        %v3951 = vpack.c.b16 %v3042, %v3041
        %v3952 = vpack.c.b16 %v3044, %v3043
        %v3953 = vpack.c.b16 %v3046, %v3045
        %v3954 = vpack.c.b16 %v3048, %v3047
        %v3955 = vpack.c.b16 %v3050, %v3049
        %v3956 = vpack.c.b16 %v3052, %v3051
        %v3957 = vpack.c.b16 %v3054, %v3053
        %v3958 = vpack.c.b16 %v3056, %v3055
        %v3959 = vpack.c.b16 %v3058, %v3057
        %v3960 = vpack.c.b16 %v3060, %v3059
        %v3961 = vpack.c.b16 %v3062, %v3061
        %v3962 = vpack.c.b16 %v3064, %v3063
        %v3963 = vpack.c.b16 %v3066, %v3065
        %v3964 = vpack.c.b16 %v3068, %v3067
        %v3965 = vpack.c.b16 %v3070, %v3069
        %v3966 = vpack.c.b16 %v3072, %v3071
        %v3967 = vpack.c.b16 %v3074, %v3073
        %v3968 = vpack.c.b16 %v3076, %v3075
        %v3969 = vpack.c.b16 %v3078, %v3077
        %v3970 = vpack.c.b16 %v3080, %v3079
        %v3971 = vpack.c.b16 %v3082, %v3081
        %v3972 = vpack.c.b16 %v3084, %v3083
        %v3973 = vpack.c.b16 %v3086, %v3085
        %v3974 = vpack.c.b16 %v3088, %v3087
        %v3975 = vpack.c.b16 %v3090, %v3089
        %v3976 = vpack.c.b16 %v3092, %v3091
        %v3977 = vpack.c.b16 %v3094, %v3093
        %v3978 = vpack.c.b16 %v3096, %v3095
        %v3979 = vpack.c.b16 %v3098, %v3097
        %v3980 = vpack.c.b16 %v3100, %v3099
        %v3981 = vpack.c.b16 %v3102, %v3101
        %v3982 = vpack.c.b16 %v3104, %v3103
        %v3983 = vpack.c.b16 %v3106, %v3105
        %v3984 = vpack.c.b16 %v3108, %v3107
        %v3985 = vpack.c.b16 %v3110, %v3109
        %v3986 = vpack.c.b16 %v3112, %v3111
        %v3987 = vpack.c.b16 %v3114, %v3113
        %v3988 = vpack.c.b16 %v3116, %v3115
        %v3989 = vpack.c.b16 %v3118, %v3117
        %v3990 = vpack.c.b16 %v3120, %v3119
        %v3991 = vpack.c.b16 %v3122, %v3121
        %v3992 = vpack.c.b16 %v3124, %v3123
        %v3993 = vpack.c.b16 %v3126, %v3125
        %v3994 = vpack.c.b16 %v3128, %v3127
        %v3995 = vpack.c.b16 %v3130, %v3129
        %v3996 = vpack.c.b16 %v3132, %v3131
        %v3997 = vpack.c.b16 %v3134, %v3133
        %v3998 = vpack.c.b16 %v3136, %v3135
        %v3999 = vpack.c.b16 %v3138, %v3137
        %v4000 = vpack.c.b16 %v3140, %v3139
        %v4001 = vpack.c.b16 %v3142, %v3141
        %v4002 = vpack.c.b16 %v3144, %v3143
        %v4003 = vpack.c.b16 %v3146, %v3145
        %v4004 = vpack.c.b16 %v3148, %v3147
        %v4005 = vpack.c.b16 %v3150, %v3149
        %v4006 = vpack.c.b16 %v3152, %v3151
        %v4007 = vpack.c.b16 %v3154, %v3153
        %v4008 = vpack.c.b16 %v3156, %v3155
        %v4009 = vpack.c.b16 %v3158, %v3157
        %v4010 = vpack.c.b16 %v3160, %v3159
        %v4011 = vpack.c.b16 %v3162, %v3161
        %v4012 = vpack.c.b16 %v3164, %v3163
        %v4013 = vpack.c.b16 %v3166, %v3165
        %v4014 = vpack.c.b16 %v3168, %v3167
        %v4015 = vpack.c.b16 %v3170, %v3169
        %v4016 = vpack.c.b16 %v3172, %v3171
        %v4017 = vpack.c.b16 %v3174, %v3173
        %v4018 = vpack.c.b16 %v3176, %v3175
        %v4019 = vpack.c.b16 %v3178, %v3177
        %v4020 = vpack.c.b16 %v3180, %v3179
        %v4021 = vpack.c.b16 %v3182, %v3181
        %v4022 = vpack.c.b16 %v3184, %v3183
        %v4023 = vpack.c.b16 %v3186, %v3185
        %v4024 = vpack.c.b16 %v3188, %v3187
        %v4025 = vpack.c.b16 %v3190, %v3189
        %v4026 = vpack.c.b16 %v3192, %v3191
        %v4027 = vpack.c.b16 %v3194, %v3193
        %v4028 = vpack.c.b16 %v3196, %v3195
        %v4029 = vpack.c.b16 %v3198, %v3197
        %v4030 = vpack.c.b16 %v3200, %v3199
        %v4031 = vpack.c.b16 %v3202, %v3201
        %v4032 = vpack.c.b16 %v3204, %v3203
        %v4033 = vpack.c.b16 %v3206, %v3205
        %v4034 = vpack.c.b16 %v3208, %v3207
        %v4035 = vpack.c.b16 %v3210, %v3209
        %v4036 = vpack.c.b16 %v3212, %v3211
        %v4037 = vpack.c.b16 %v3214, %v3213
        %v4038 = vpack.c.b16 %v3216, %v3215
        %v4039 = vpack.c.b16 %v3218, %v3217
        %v4040 = vpack.c.b16 %v3220, %v3219
        %v4041 = vpack.c.b16 %v3222, %v3221
        %v4042 = vpack.c.b16 %v3224, %v3223
        %v4043 = vpack.c.b16 %v3226, %v3225
        %v4044 = vpack.c.b16 %v3228, %v3227
        %v4045 = vpack.c.b16 %v3230, %v3229
        %v4046 = vpack.c.b16 %v3232, %v3231
        %v4047 = vpack.c.b16 %v3234, %v3233
        %v4048 = vpack.c.b16 %v3236, %v3235
        %v4049 = vpack.c.b16 %v3238, %v3237
        %v4050 = vpack.c.b16 %v3240, %v3239
        %v4051 = vpack.c.b16 %v3242, %v3241
        %v4052 = vpack.c.b16 %v3244, %v3243
        %v4053 = vpack.c.b16 %v3246, %v3245
        %v4054 = vpack.c.b16 %v3248, %v3247
        %v4055 = vpack.c.b16 %v3250, %v3249
        %v4056 = vpack.c.b16 %v3252, %v3251
        %v4057 = vpack.c.b16 %v3254, %v3253
        %v4058 = vpack.c.b16 %v3256, %v3255
        %v4059 = vpack.c.b16 %v3258, %v3257
        %v4060 = vpack.c.b16 %v3260, %v3259
        %v4061 = vpack.c.b16 %v3262, %v3261
        %v4062 = vpack.c.b16 %v3264, %v3263
        %v4063 = vpack.c.b16 %v3266, %v3265
        %v4064 = vpack.c.b16 %v3268, %v3267
        %v4065 = vpack.c.b16 %v3270, %v3269
        %v4066 = vpack.c.b16 %v3272, %v3271
        %v4067 = vpack.c.b16 %v3274, %v3273
        %v4068 = vpack.c.b16 %v3276, %v3275
        %v4069 = vpack.c.b16 %v3278, %v3277
        %v4070 = vpack.c.b16 %v3280, %v3279
        %v4071 = vpack.c.b16 %v3282, %v3281
        %v4072 = vpack.c.b16 %v3284, %v3283
        %v4073 = vpack.c.b16 %v3286, %v3285
        %v4074 = vpack.c.b16 %v3288, %v3287
        %v4075 = vpack.c.b16 %v3290, %v3289
        %v4076 = vpack.c.b16 %v3292, %v3291
        %v4077 = vpack.c.b16 %v3294, %v3293
        %v4078 = vpack.c.b16 %v3296, %v3295
        %v4079 = vpack.c.b16 %v3298, %v3297
        %v4080 = vpack.c.b16 %v3300, %v3299
        %v4081 = vpack.c.b16 %v3302, %v3301
        %v4082 = vpack.c.b16 %v3304, %v3303
        %v4083 = vpack.c.b16 %v3306, %v3305
        %v4084 = vpack.c.b16 %v3308, %v3307
        %v4085 = vpack.c.b16 %v3310, %v3309
        %v4086 = vpack.c.b16 %v3312, %v3311
        %v4087 = vpack.c.b16 %v3314, %v3313
        %v4088 = vpack.c.b16 %v3316, %v3315
        %v4089 = vpack.c.b16 %v3318, %v3317
        %v4090 = vpack.c.b16 %v3320, %v3319
        %v4091 = vpack.c.b16 %v3322, %v3321
        %v4092 = vpack.c.b16 %v3324, %v3323
        %v4093 = vpack.c.b16 %v3326, %v3325
        %v4094 = vpack.c.b16 %v3328, %v3327
        %v4095 = vpack.c.b16 %v3330, %v3329
        %v4096 = vpack.c.b16 %v3332, %v3331
        %v4097 = vpack.c.b16 %v3334, %v3333
        %v4098 = vpack.c.b16 %v3336, %v3335
        %v4099 = vpack.c.b16 %v3338, %v3337
        %v4100 = vpack.c.b16 %v3340, %v3339
        %v4101 = vpack.c.b16 %v3342, %v3341
        %v4102 = vpack.c.b16 %v3344, %v3343
        %v4103 = vpack.c.b16 %v3346, %v3345
        %v4104 = vpack.c.b16 %v3348, %v3347
        %v4105 = vpack.c.b16 %v3350, %v3349
        %v4106 = vpack.c.b16 %v3352, %v3351
        %v4107 = vpack.c.b16 %v3354, %v3353
        %v4108 = vpack.c.b16 %v3356, %v3355
        %v4109 = vpack.c.b16 %v3358, %v3357
        %v4110 = vpack.c.b16 %v3360, %v3359
        %v4111 = vpack.c.b16 %v3362, %v3361
        %v4112 = vpack.c.b16 %v3364, %v3363
        %v4113 = vpack.c.b16 %v3366, %v3365
        %v4114 = vpack.c.b16 %v3368, %v3367
        %v4115 = vpack.c.b16 %v3370, %v3369
        %v4116 = vpack.c.b16 %v3372, %v3371
        %v4117 = vpack.c.b16 %v3374, %v3373
        %v4118 = vpack.c.b16 %v3376, %v3375
        %v4119 = vpack.c.b16 %v3378, %v3377
        %v4120 = vpack.c.b16 %v3380, %v3379
        %v4121 = vpack.c.b16 %v3382, %v3381
        %v4122 = vpack.c.b16 %v3384, %v3383
        %v4123 = vpack.c.b16 %v3386, %v3385
        %v4124 = vpack.c.b16 %v3388, %v3387
        %v4125 = vpack.c.b16 %v3390, %v3389
        %v4126 = vpack.c.b16 %v3392, %v3391
        %v4127 = vpack.c.b16 %v3394, %v3393
        %v4128 = vpack.c.b16 %v3396, %v3395
        %v4129 = vpack.c.b16 %v3398, %v3397
        %v4130 = vpack.c.b16 %v3400, %v3399
        %v4131 = vpack.c.b16 %v3402, %v3401
        %v4132 = vpack.c.b16 %v3404, %v3403
        %v4133 = vpack.c.b16 %v3406, %v3405
        %v4134 = vpack.c.b16 %v3408, %v3407
        %v4135 = vpack.c.b16 %v3410, %v3409
        %v4136 = vpack.c.b16 %v3412, %v3411
        %v4137 = vpack.c.b16 %v3414, %v3413
        %v4138 = vpack.c.b16 %v3416, %v3415
        %v4139 = vpack.c.b16 %v3418, %v3417
        %v4140 = vpack.c.b16 %v3420, %v3419
        %v4141 = vpack.c.b16 %v3422, %v3421
        %v4142 = vpack.c.b16 %v3424, %v3423
        %v4143 = vpack.c.b16 %v3426, %v3425
        %v4144 = vpack.c.b16 %v3428, %v3427
        %v4145 = vpack.c.b16 %v3430, %v3429
        %v4146 = vpack.c.b16 %v3432, %v3431
        %v4147 = vpack.c.b16 %v3434, %v3433
        %v4148 = vpack.c.b16 %v3436, %v3435
        %v4149 = vpack.c.b16 %v3438, %v3437
        %v4150 = vpack.c.b16 %v3440, %v3439
        %v4151 = vpack.c.b16 %v3442, %v3441
        %v4152 = vpack.c.b16 %v3444, %v3443
        %v4153 = vpack.c.b16 %v3446, %v3445
        %v4154 = vpack.c.b16 %v3448, %v3447
        %v4155 = vpack.c.b16 %v3450, %v3449
        %v4156 = vpack.c.b16 %v3452, %v3451
        %v4157 = vpack.c.b16 %v3454, %v3453
        %v4158 = vpack.c.b16 %v3456, %v3455
        %v4159 = vpack.c.b16 %v3458, %v3457
        %v4160 = vpack.c.b16 %v3460, %v3459
        %v4161 = vpack.c.b16 %v3462, %v3461
        %v4162 = vpack.c.b16 %v3464, %v3463
        %v4163 = vpack.c.b16 %v3466, %v3465
        %v4164 = vpack.c.b16 %v3468, %v3467
        %v4165 = vpack.c.b16 %v3470, %v3469
        %v4166 = vpack.c.b16 %v3472, %v3471
        %v4167 = vpack.c.b16 %v3474, %v3473
        %v4168 = vpack.c.b16 %v3476, %v3475
        %v4169 = vpack.c.b16 %v3478, %v3477
        %v4170 = vpack.c.b16 %v3480, %v3479
        %v4171 = vpack.c.b16 %v3482, %v3481
        %v4172 = vpack.c.b16 %v3484, %v3483
        %v4173 = vpack.c.b16 %v3486, %v3485
        %v4174 = vpack.c.b16 %v3488, %v3487
        %v4175 = vpack.c.b16 %v3490, %v3489
        %v4176 = vpack.c.b16 %v3492, %v3491
        %v4177 = vpack.c.b16 %v3494, %v3493
        %v4178 = vpack.c.b16 %v3496, %v3495
        %v4179 = vpack.c.b16 %v3498, %v3497
        %v4180 = vpack.c.b16 %v3500, %v3499
        %v4181 = vpack.c.b16 %v3502, %v3501
        %v4182 = vpack.c.b16 %v3504, %v3503
        %v4183 = vpack.c.b16 %v3506, %v3505
        %v4184 = vpack.c.b16 %v3508, %v3507
        %v4185 = vpack.c.b16 %v3510, %v3509
        %v4186 = vpack.c.b16 %v3512, %v3511
        %v4187 = vpack.c.b16 %v3514, %v3513
        %v4188 = vpack.c.b16 %v3516, %v3515
        %v4189 = vpack.c.b16 %v3518, %v3517
        %v4190 = vpack.c.b16 %v3520, %v3519
        %v4191 = vpack.c.b16 %v3522, %v3521
        %v4192 = vpack.c.b16 %v3524, %v3523
        %v4193 = vpack.c.b16 %v3526, %v3525
        %v4194 = vpack.c.b16 %v3528, %v3527
        %v4195 = vpack.c.b16 %v3530, %v3529
        %v4196 = vpack.c.b16 %v3532, %v3531
        %v4197 = vpack.c.b16 %v3534, %v3533
        %v4198 = vpack.c.b16 %v3536, %v3535
        %v4199 = vpack.c.b16 %v3538, %v3537
        %v4200 = vpack.c.b16 %v3540, %v3539
        %v4201 = vpack.c.b16 %v3542, %v3541
        %v4202 = vpack.c.b16 %v3544, %v3543
        %v4203 = vpack.c.b16 %v3546, %v3545
        %v4204 = vpack.c.b16 %v3548, %v3547
        %v4205 = vpack.c.b16 %v3550, %v3549
        %v4206 = vpack.c.b16 %v3552, %v3551
        %v4207 = vpack.c.b16 %v3554, %v3553
        %v4208 = vpack.c.b16 %v3556, %v3555
        %v4209 = vpack.c.b16 %v3558, %v3557
        %v4210 = vpack.c.b16 %v3560, %v3559
        %v4211 = vpack.c.b16 %v3562, %v3561
        %v4212 = vpack.c.b16 %v3564, %v3563
        %v4213 = vpack.c.b16 %v3566, %v3565
        %v4214 = vpack.c.b16 %v3568, %v3567
        %v4215 = vpack.c.b16 %v3570, %v3569
        %v4216 = vpack.c.b16 %v3572, %v3571
        %v4217 = vpack.c.b16 %v3574, %v3573
        %v4218 = vpack.c.b16 %v3576, %v3575
        %v4219 = vpack.c.b16 %v3578, %v3577
        %v4220 = vpack.c.b16 %v3580, %v3579
        %v4221 = vpack.c.b16 %v3582, %v3581
        %v4222 = vpack.c.b16 %v3584, %v3583
        %v4223 = vpack.c.b16 %v3586, %v3585
        %v4224 = vpack.c.b16 %v3588, %v3587
        %v4225 = vpack.c.b16 %v3590, %v3589
        %v4226 = vpack.c.b16 %v3592, %v3591
        %v4227 = vpack.c.b16 %v3594, %v3593
        %v4228 = vpack.c.b16 %v3596, %v3595
        %v4229 = vpack.c.b16 %v3598, %v3597
        %v4230 = vpack.c.b16 %v3600, %v3599
        %v4231 = vpack.c.b16 %v3602, %v3601
        %v4232 = vpack.c.b16 %v3604, %v3603
        %v4233 = vpack.c.b16 %v3606, %v3605
        %v4234 = vpack.c.b16 %v3608, %v3607
        %v4235 = vpack.c.b16 %v3610, %v3609
        %v4236 = vpack.c.b16 %v3612, %v3611
        %v4237 = vpack.c.b16 %v3614, %v3613
        %v4238 = vpack.c.b16 %v3616, %v3615
        %v4239 = vpack.c.b16 %v3618, %v3617
        %v4240 = vpack.c.b16 %v3620, %v3619
        %v4241 = vpack.c.b16 %v3622, %v3621
        %v4242 = vpack.c.b16 %v3624, %v3623
        %v4243 = vpack.c.b16 %v3626, %v3625
        %v4244 = vpack.c.b16 %v3628, %v3627
        %v4245 = vpack.c.b16 %v3630, %v3629
        %v4246 = vpack.c.b16 %v3632, %v3631
        %v4247 = vpack.c.b16 %v3634, %v3633
        %v4248 = vpack.c.b16 %v3636, %v3635
        %v4249 = vpack.c.b16 %v3638, %v3637
        %v4250 = vpack.c.b16 %v3640, %v3639
        %v4251 = vpack.c.b16 %v3642, %v3641
        %v4252 = vpack.c.b16 %v3644, %v3643
        %v4253 = vpack.c.b16 %v3646, %v3645
        %v4254 = vpack.c.b16 %v3648, %v3647
        %v4255 = vpack.c.b16 %v3650, %v3649
        %v4256 = vpack.c.b16 %v3652, %v3651
        %v4257 = vpack.c.b16 %v3654, %v3653
        %v4258 = vpack.c.b16 %v3656, %v3655
        %v4259 = vpack.c.b16 %v3658, %v3657
        %v4260 = vpack.c.b16 %v3660, %v3659
        %v4261 = vpack.c.b16 %v3662, %v3661
        %v4262 = vpack.c.b16 %v3664, %v3663
        %v4263 = vpack.c.b16 %v3666, %v3665
        %v4264 = vpack.c.b16 %v3668, %v3667
        %v4265 = vpack.c.b16 %v3670, %v3669
        %v4266 = vpack.c.b16 %v3672, %v3671
        %v4267 = vpack.c.b16 %v3674, %v3673
        %v4268 = vpack.c.b16 %v3676, %v3675
        %v4269 = vpack.c.b16 %v3678, %v3677
        %v4270 = vpack.c.b16 %v3680, %v3679
        %v4271 = vpack.c.b16 %v3682, %v3681
        %v4272 = vpack.c.b16 %v3684, %v3683
        %v4273 = vpack.c.b16 %v3686, %v3685
        %v4274 = vpack.c.b16 %v3688, %v3687
        %v4275 = vpack.c.b16 %v3690, %v3689
        %v4276 = vpack.c.b16 %v3692, %v3691
        %v4277 = vpack.c.b16 %v3694, %v3693
        %v4278 = vpack.c.b16 %v3696, %v3695
        %v4279 = vpack.c.b16 %v3698, %v3697
        %v4280 = vpack.c.b16 %v3700, %v3699
        %v4281 = vpack.c.b16 %v3702, %v3701
        %v4282 = vpack.c.b16 %v3704, %v3703
        %v4283 = vpack.c.b16 %v3706, %v3705
        %v4284 = vpack.c.b16 %v3708, %v3707
        %v4285 = vpack.c.b16 %v3710, %v3709
        %v4286 = vpack.c.b16 %v3712, %v3711
        %v4287 = vpack.c.b16 %v3714, %v3713
        %v4288 = vpack.c.b16 %v3716, %v3715
        %v4289 = vpack.c.b16 %v3718, %v3717
        %v4290 = vpack.c.b16 %v3720, %v3719
        %v4291 = vpack.c.b16 %v3722, %v3721
        %v4292 = vpack.c.b16 %v3724, %v3723
        %v4293 = vpack.c.b16 %v3726, %v3725
        %v4294 = vpack.c.b16 %v3728, %v3727
        %v4295 = vpack.c.b16 %v3730, %v3729
        %v4296 = vpack.c.b16 %v3732, %v3731
        %v4297 = vpack.c.b16 %v3734, %v3733
        %v4298 = vpack.c.b16 %v3736, %v3735
        %v4299 = vpack.c.b16 %v3738, %v3737
        %v4300 = vpack.c.b16 %v3740, %v3739
        %v4301 = vpack.c.b16 %v3742, %v3741
        %v4302 = vpack.c.b16 %v3744, %v3743
        %v4303 = vpack.c.b16 %v3746, %v3745
        %v4304 = vpack.c.b16 %v3748, %v3747
        %v4305 = vpack.c.b16 %v3750, %v3749
        %v4306 = vpack.c.b16 %v3752, %v3751
        %v4307 = vpack.c.b16 %v3754, %v3753
        %v4308 = vpack.c.b16 %v3756, %v3755
        %v4309 = vpack.c.b16 %v3758, %v3757
        %v4310 = vpack.c.b16 %v3760, %v3759
        %v4311 = vpack.c.b16 %v3762, %v3761
        %v4312 = vpack.c.b16 %v3764, %v3763
        %v4313 = vpack.c.b16 %v3766, %v3765
        %v4314 = vpack.c.b16 %v3768, %v3767
        %v4315 = vpack.c.b16 %v3770, %v3769
        %v4316 = vpack.c.b16 %v3772, %v3771
        %v4317 = vpack.c.b16 %v3774, %v3773
        %v4318 = vpack.c.b16 %v3776, %v3775
        %v4319 = vpack.c.b16 %v3778, %v3777
        %v4320 = vpack.c.b16 %v3780, %v3779
        %v4321 = vpack.c.b16 %v3782, %v3781
        %v4322 = vpack.c.b16 %v3784, %v3783
        %v4323 = vpack.c.b16 %v3786, %v3785
        %v4324 = vpack.c.b16 %v3788, %v3787
        %v4325 = vpack.c.b16 %v3790, %v3789
        %v4326 = vpack.c.b16 %v3792, %v3791
        %v4327 = vpack.c.b16 %v3794, %v3793
        %v4328 = vpack.c.b16 %v3796, %v3795
        %v4329 = vpack.c.b16 %v3798, %v3797
        %v4330 = vpack.c.b16 %v3800, %v3799
        %v4331 = vpack.c.b16 %v3802, %v3801
        %v4332 = vpack.c.b16 %v3804, %v3803
        %v4333 = vpack.c.b16 %v3806, %v3805
        %v4334 = vpack.c.b16 %v3808, %v3807
        %v4335 = vpack.c.b16 %v3810, %v3809
        %v4336 = vpack.c.b16 %v3812, %v3811
        %v4337 = vpack.c.b16 %v3814, %v3813
        %v4338 = vpack.c.b16 %v3816, %v3815
        %v4339 = vpack.c.b16 %v3818, %v3817
        %v4340 = vpack.c.b16 %v3820, %v3819
        %v4341 = vpack.c.b16 %v3822, %v3821
        %v4342 = vpack.c.b16 %v3824, %v3823
        %v4343 = vpack.c.b16 %v3826, %v3825
        %v4344 = vpack.c.b16 %v3828, %v3827
        %v4345 = vpack.c.b16 %v3830, %v3829
        %v4346 = vpack.c.b16 %v3832, %v3831
        %v4347 = vpack.c.b16 %v3834, %v3833
        %v4348 = vpack.c.b16 %v3836, %v3835
        %4861 = vmatprep.subr.bf16.mxu0 0
        %4862 = vmatpush1.bf16.msra.mxu0 %v3844
        %4863 = vmatprep.subr.bf16.mxu0 0
        %4864 = vmatpush1.bf16.msra.mxu0 %v3843
        %4865 = vmatprep.subr.bf16.mxu0 0
        %4866 = vmatpush1.bf16.msra.mxu0 %v3842
        %4867 = vmatprep.subr.bf16.mxu0 0
        %4868 = vmatpush1.bf16.msra.mxu0 %v3841
        %4869 = vmatprep.subr.bf16.mxu0 0
        %4870 = vmatpush1.bf16.msra.mxu0 %v3840
        %4871 = vmatprep.subr.bf16.mxu0 0
        %4872 = vmatpush1.bf16.msra.mxu0 %v3839
        %4873 = vmatprep.subr.bf16.mxu0 0
        %4874 = vmatpush1.bf16.msra.mxu0 %v3838
        %4875 = vmatprep.subr.bf16.mxu0 0
        %4876 = vmatpush1.bf16.msra.mxu0 %v3837
        %4877 = vmatprep.subr.bf16.mxu0 0
        %4878 = vmatpush2.bf16.msra.mxu0 %v3852
        %4879 = vmatprep.subr.bf16.mxu0 0
        %4880 = vmatpush2.bf16.msra.mxu0 %v3851
        %4881 = vmatprep.subr.bf16.mxu0 0
        %4882 = vmatpush2.bf16.msra.mxu0 %v3850
        %4883 = vmatprep.subr.bf16.mxu0 0
        %4884 = vmatpush2.bf16.msra.mxu0 %v3849
        %4885 = vmatprep.subr.bf16.mxu0 0
        %4886 = vmatpush2.bf16.msra.mxu0 %v3848
        %4887 = vmatprep.subr.bf16.mxu0 0
        %4888 = vmatpush2.bf16.msra.mxu0 %v3847
        %4889 = vmatprep.subr.bf16.mxu0 0
        %4890 = vmatpush2.bf16.msra.mxu0 %v3846
        %4891 = vmatprep.subr.bf16.mxu0 0
        %4892 = vmatpush2.bf16.msra.mxu0 %v3845
        %4893 = vmatprep.mubr.bf16.mxu0 %v1370
        %4894 = vmatmul.mubr.bf16.gmra.mxu0 %v1356
        %v4895 = vpop.f32.mrf.mxu0
        %v4896 = vadd.f32 0.0, %v4895
        %v4897 = vpop.f32.mrf.mxu0
        %v4898 = vpop.f32.mrf.mxu0
        %v4899 = vpop.f32.mrf.mxu0
        %4900 = vdwg.mxu0
        %4901 = vmatprep.subr.bf16.mxu0 0
        %4902 = vmatpush1.bf16.msra.mxu0 %v3860
        %4903 = vmatprep.subr.bf16.mxu0 0
        %4904 = vmatpush1.bf16.msra.mxu0 %v3859
        %4905 = vmatprep.subr.bf16.mxu0 0
        %4906 = vmatpush1.bf16.msra.mxu0 %v3858
        %4907 = vmatprep.subr.bf16.mxu0 0
        %4908 = vmatpush1.bf16.msra.mxu0 %v3857
        %4909 = vmatprep.subr.bf16.mxu0 0
        %4910 = vmatpush1.bf16.msra.mxu0 %v3856
        %4911 = vmatprep.subr.bf16.mxu0 0
        %4912 = vmatpush1.bf16.msra.mxu0 %v3855
        %4913 = vmatprep.subr.bf16.mxu0 0
        %4914 = vmatpush1.bf16.msra.mxu0 %v3854
        %4915 = vmatprep.subr.bf16.mxu0 0
        %4916 = vmatpush1.bf16.msra.mxu0 %v3853
        %4917 = vmatprep.subr.bf16.mxu0 0
        %4918 = vmatpush2.bf16.msra.mxu0 %v3868
        %4919 = vmatprep.subr.bf16.mxu0 0
        %4920 = vmatpush2.bf16.msra.mxu0 %v3867
        %4921 = vmatprep.subr.bf16.mxu0 0
        %4922 = vmatpush2.bf16.msra.mxu0 %v3866
        %4923 = vmatprep.subr.bf16.mxu0 0
        %4924 = vmatpush2.bf16.msra.mxu0 %v3865
        %4925 = vmatprep.subr.bf16.mxu0 0
        %4926 = vmatpush2.bf16.msra.mxu0 %v3864
        %4927 = vmatprep.subr.bf16.mxu0 0
        %4928 = vmatpush2.bf16.msra.mxu0 %v3863
        %4929 = vmatprep.subr.bf16.mxu0 0
        %4930 = vmatpush2.bf16.msra.mxu0 %v3862
        %4931 = vmatprep.subr.bf16.mxu0 0
        %4932 = vmatpush2.bf16.msra.mxu0 %v3861
        %4933 = vmatprep.mubr.bf16.mxu0 %v1380
        %4934 = vmatmul.mubr.bf16.gmra.mxu0 %v1378
        %v4935 = vpop.f32.mrf.mxu0
        %v4936 = vadd.f32 %v4896, %v4935
        %v4937 = vpop.f32.mrf.mxu0
        %v4938 = vpop.f32.mrf.mxu0
        %v4939 = vpop.f32.mrf.mxu0
        %4940 = vdwg.mxu0
        %4941 = vmatprep.subr.bf16.mxu0 0
        %4942 = vmatpush1.bf16.msra.mxu0 %v3876
        %4943 = vmatprep.subr.bf16.mxu0 0
        %4944 = vmatpush1.bf16.msra.mxu0 %v3875
        %4945 = vmatprep.subr.bf16.mxu0 0
        %4946 = vmatpush1.bf16.msra.mxu0 %v3874
        %4947 = vmatprep.subr.bf16.mxu0 0
        %4948 = vmatpush1.bf16.msra.mxu0 %v3873
        %4949 = vmatprep.subr.bf16.mxu0 0
        %4950 = vmatpush1.bf16.msra.mxu0 %v3872
        %4951 = vmatprep.subr.bf16.mxu0 0
        %4952 = vmatpush1.bf16.msra.mxu0 %v3871
        %4953 = vmatprep.subr.bf16.mxu0 0
        %4954 = vmatpush1.bf16.msra.mxu0 %v3870
        %4955 = vmatprep.subr.bf16.mxu0 0
        %4956 = vmatpush1.bf16.msra.mxu0 %v3869
        %4957 = vmatprep.subr.bf16.mxu0 0
        %4958 = vmatpush2.bf16.msra.mxu0 %v3884
        %4959 = vmatprep.subr.bf16.mxu0 0
        %4960 = vmatpush2.bf16.msra.mxu0 %v3883
        %4961 = vmatprep.subr.bf16.mxu0 0
        %4962 = vmatpush2.bf16.msra.mxu0 %v3882
        %4963 = vmatprep.subr.bf16.mxu0 0
        %4964 = vmatpush2.bf16.msra.mxu0 %v3881
        %4965 = vmatprep.subr.bf16.mxu0 0
        %4966 = vmatpush2.bf16.msra.mxu0 %v3880
        %4967 = vmatprep.subr.bf16.mxu0 0
        %4968 = vmatpush2.bf16.msra.mxu0 %v3879
        %4969 = vmatprep.subr.bf16.mxu0 0
        %4970 = vmatpush2.bf16.msra.mxu0 %v3878
        %4971 = vmatprep.subr.bf16.mxu0 0
        %4972 = vmatpush2.bf16.msra.mxu0 %v3877
        %4973 = vmatprep.mubr.bf16.mxu0 %v1377
        %4974 = vmatmul.mubr.bf16.gmra.mxu0 %v1363
        %v4975 = vpop.f32.mrf.mxu0
        %v4976 = vadd.f32 %v4936, %v4975
        %v4977 = vpop.f32.mrf.mxu0
        %v4978 = vpop.f32.mrf.mxu0
        %v4979 = vpop.f32.mrf.mxu0
        %4980 = vdwg.mxu0
        %4981 = vmatprep.subr.bf16.mxu0 0
        %4982 = vmatpush1.bf16.msra.mxu0 %v3892
        %4983 = vmatprep.subr.bf16.mxu0 0
        %4984 = vmatpush1.bf16.msra.mxu0 %v3891
        %4985 = vmatprep.subr.bf16.mxu0 0
        %4986 = vmatpush1.bf16.msra.mxu0 %v3890
        %4987 = vmatprep.subr.bf16.mxu0 0
        %4988 = vmatpush1.bf16.msra.mxu0 %v3889
        %4989 = vmatprep.subr.bf16.mxu0 0
        %4990 = vmatpush1.bf16.msra.mxu0 %v3888
        %4991 = vmatprep.subr.bf16.mxu0 0
        %4992 = vmatpush1.bf16.msra.mxu0 %v3887
        %4993 = vmatprep.subr.bf16.mxu0 0
        %4994 = vmatpush1.bf16.msra.mxu0 %v3886
        %4995 = vmatprep.subr.bf16.mxu0 0
        %4996 = vmatpush1.bf16.msra.mxu0 %v3885
        %4997 = vmatprep.subr.bf16.mxu0 0
        %4998 = vmatpush2.bf16.msra.mxu0 %v3900
        %4999 = vmatprep.subr.bf16.mxu0 0
        %5000 = vmatpush2.bf16.msra.mxu0 %v3899
        %5001 = vmatprep.subr.bf16.mxu0 0
        %5002 = vmatpush2.bf16.msra.mxu0 %v3898
        %5003 = vmatprep.subr.bf16.mxu0 0
        %5004 = vmatpush2.bf16.msra.mxu0 %v3897
        %5005 = vmatprep.subr.bf16.mxu0 0
        %5006 = vmatpush2.bf16.msra.mxu0 %v3896
        %5007 = vmatprep.subr.bf16.mxu0 0
        %5008 = vmatpush2.bf16.msra.mxu0 %v3895
        %5009 = vmatprep.subr.bf16.mxu0 0
        %5010 = vmatpush2.bf16.msra.mxu0 %v3894
        %5011 = vmatprep.subr.bf16.mxu0 0
        %5012 = vmatpush2.bf16.msra.mxu0 %v3893
        %5013 = vmatprep.mubr.bf16.mxu0 %v1381
        %5014 = vmatmul.mubr.bf16.gmra.mxu0 %v1379
        %v5015 = vpop.f32.mrf.mxu0
        %v5016 = vadd.f32 %v4976, %v5015
        %v5017 = vpop.f32.mrf.mxu0
        %v5018 = vpop.f32.mrf.mxu0
        %v5019 = vpop.f32.mrf.mxu0
        %5020 = vdwg.mxu0
        %5021 = vmatprep.subr.bf16.mxu0 0
        %5022 = vmatpush1.bf16.msra.mxu0 %v3908
        %5023 = vmatprep.subr.bf16.mxu0 0
        %5024 = vmatpush1.bf16.msra.mxu0 %v3907
        %5025 = vmatprep.subr.bf16.mxu0 0
        %5026 = vmatpush1.bf16.msra.mxu0 %v3906
        %5027 = vmatprep.subr.bf16.mxu0 0
        %5028 = vmatpush1.bf16.msra.mxu0 %v3905
        %5029 = vmatprep.subr.bf16.mxu0 0
        %5030 = vmatpush1.bf16.msra.mxu0 %v3904
        %5031 = vmatprep.subr.bf16.mxu0 0
        %5032 = vmatpush1.bf16.msra.mxu0 %v3903
        %5033 = vmatprep.subr.bf16.mxu0 0
        %5034 = vmatpush1.bf16.msra.mxu0 %v3902
        %5035 = vmatprep.subr.bf16.mxu0 0
        %5036 = vmatpush1.bf16.msra.mxu0 %v3901
        %5037 = vmatprep.subr.bf16.mxu0 0
        %5038 = vmatpush2.bf16.msra.mxu0 %v3916
        %5039 = vmatprep.subr.bf16.mxu0 0
        %5040 = vmatpush2.bf16.msra.mxu0 %v3915
        %5041 = vmatprep.subr.bf16.mxu0 0
        %5042 = vmatpush2.bf16.msra.mxu0 %v3914
        %5043 = vmatprep.subr.bf16.mxu0 0
        %5044 = vmatpush2.bf16.msra.mxu0 %v3913
        %5045 = vmatprep.subr.bf16.mxu0 0
        %5046 = vmatpush2.bf16.msra.mxu0 %v3912
        %5047 = vmatprep.subr.bf16.mxu0 0
        %5048 = vmatpush2.bf16.msra.mxu0 %v3911
        %5049 = vmatprep.subr.bf16.mxu0 0
        %5050 = vmatpush2.bf16.msra.mxu0 %v3910
        %5051 = vmatprep.subr.bf16.mxu0 0
        %5052 = vmatpush2.bf16.msra.mxu0 %v3909
        %5053 = vmatprep.mubr.bf16.mxu0 %v1419
        %5054 = vmatmul.mubr.bf16.gmra.mxu0 %v1405
        %v5055 = vpop.f32.mrf.mxu0
        %v5056 = vadd.f32 %v5016, %v5055
        %v5057 = vpop.f32.mrf.mxu0
        %v5058 = vpop.f32.mrf.mxu0
        %v5059 = vpop.f32.mrf.mxu0
        %5060 = vdwg.mxu0
        %5061 = vmatprep.subr.bf16.mxu0 0
        %5062 = vmatpush1.bf16.msra.mxu0 %v3924
        %5063 = vmatprep.subr.bf16.mxu0 0
        %5064 = vmatpush1.bf16.msra.mxu0 %v3923
        %5065 = vmatprep.subr.bf16.mxu0 0
        %5066 = vmatpush1.bf16.msra.mxu0 %v3922
        %5067 = vmatprep.subr.bf16.mxu0 0
        %5068 = vmatpush1.bf16.msra.mxu0 %v3921
        %5069 = vmatprep.subr.bf16.mxu0 0
        %5070 = vmatpush1.bf16.msra.mxu0 %v3920
        %5071 = vmatprep.subr.bf16.mxu0 0
        %5072 = vmatpush1.bf16.msra.mxu0 %v3919
        %5073 = vmatprep.subr.bf16.mxu0 0
        %5074 = vmatpush1.bf16.msra.mxu0 %v3918
        %5075 = vmatprep.subr.bf16.mxu0 0
        %5076 = vmatpush1.bf16.msra.mxu0 %v3917
        %5077 = vmatprep.subr.bf16.mxu0 0
        %5078 = vmatpush2.bf16.msra.mxu0 %v3932
        %5079 = vmatprep.subr.bf16.mxu0 0
        %5080 = vmatpush2.bf16.msra.mxu0 %v3931
        %5081 = vmatprep.subr.bf16.mxu0 0
        %5082 = vmatpush2.bf16.msra.mxu0 %v3930
        %5083 = vmatprep.subr.bf16.mxu0 0
        %5084 = vmatpush2.bf16.msra.mxu0 %v3929
        %5085 = vmatprep.subr.bf16.mxu0 0
        %5086 = vmatpush2.bf16.msra.mxu0 %v3928
        %5087 = vmatprep.subr.bf16.mxu0 0
        %5088 = vmatpush2.bf16.msra.mxu0 %v3927
        %5089 = vmatprep.subr.bf16.mxu0 0
        %5090 = vmatpush2.bf16.msra.mxu0 %v3926
        %5091 = vmatprep.subr.bf16.mxu0 0
        %5092 = vmatpush2.bf16.msra.mxu0 %v3925
        %5093 = vmatprep.mubr.bf16.mxu0 %v1429
        %5094 = vmatmul.mubr.bf16.gmra.mxu0 %v1427
        %v5095 = vpop.f32.mrf.mxu0
        %v5096 = vadd.f32 %v5056, %v5095
        %v5097 = vpop.f32.mrf.mxu0
        %v5098 = vpop.f32.mrf.mxu0
        %v5099 = vpop.f32.mrf.mxu0
        %5100 = vdwg.mxu0
        %5101 = vmatprep.subr.bf16.mxu0 0
        %5102 = vmatpush1.bf16.msra.mxu0 %v3940
        %5103 = vmatprep.subr.bf16.mxu0 0
        %5104 = vmatpush1.bf16.msra.mxu0 %v3939
        %5105 = vmatprep.subr.bf16.mxu0 0
        %5106 = vmatpush1.bf16.msra.mxu0 %v3938
        %5107 = vmatprep.subr.bf16.mxu0 0
        %5108 = vmatpush1.bf16.msra.mxu0 %v3937
        %5109 = vmatprep.subr.bf16.mxu0 0
        %5110 = vmatpush1.bf16.msra.mxu0 %v3936
        %5111 = vmatprep.subr.bf16.mxu0 0
        %5112 = vmatpush1.bf16.msra.mxu0 %v3935
        %5113 = vmatprep.subr.bf16.mxu0 0
        %5114 = vmatpush1.bf16.msra.mxu0 %v3934
        %5115 = vmatprep.subr.bf16.mxu0 0
        %5116 = vmatpush1.bf16.msra.mxu0 %v3933
        %5117 = vmatprep.subr.bf16.mxu0 0
        %5118 = vmatpush2.bf16.msra.mxu0 %v3948
        %5119 = vmatprep.subr.bf16.mxu0 0
        %5120 = vmatpush2.bf16.msra.mxu0 %v3947
        %5121 = vmatprep.subr.bf16.mxu0 0
        %5122 = vmatpush2.bf16.msra.mxu0 %v3946
        %5123 = vmatprep.subr.bf16.mxu0 0
        %5124 = vmatpush2.bf16.msra.mxu0 %v3945
        %5125 = vmatprep.subr.bf16.mxu0 0
        %5126 = vmatpush2.bf16.msra.mxu0 %v3944
        %5127 = vmatprep.subr.bf16.mxu0 0
        %5128 = vmatpush2.bf16.msra.mxu0 %v3943
        %5129 = vmatprep.subr.bf16.mxu0 0
        %5130 = vmatpush2.bf16.msra.mxu0 %v3942
        %5131 = vmatprep.subr.bf16.mxu0 0
        %5132 = vmatpush2.bf16.msra.mxu0 %v3941
        %5133 = vmatprep.mubr.bf16.mxu0 %v1426
        %5134 = vmatmul.mubr.bf16.gmra.mxu0 %v1412
        %v5135 = vpop.f32.mrf.mxu0
        %v5136 = vadd.f32 %v5096, %v5135
        %v5137 = vpop.f32.mrf.mxu0
        %v5138 = vpop.f32.mrf.mxu0
        %v5139 = vpop.f32.mrf.mxu0
        %5140 = vdwg.mxu0
        %5141 = vmatprep.subr.bf16.mxu0 0
        %5142 = vmatpush1.bf16.msra.mxu0 %v3956
        %5143 = vmatprep.subr.bf16.mxu0 0
        %5144 = vmatpush1.bf16.msra.mxu0 %v3955
        %5145 = vmatprep.subr.bf16.mxu0 0
        %5146 = vmatpush1.bf16.msra.mxu0 %v3954
        %5147 = vmatprep.subr.bf16.mxu0 0
        %5148 = vmatpush1.bf16.msra.mxu0 %v3953
        %5149 = vmatprep.subr.bf16.mxu0 0
        %5150 = vmatpush1.bf16.msra.mxu0 %v3952
        %5151 = vmatprep.subr.bf16.mxu0 0
        %5152 = vmatpush1.bf16.msra.mxu0 %v3951
        %5153 = vmatprep.subr.bf16.mxu0 0
        %5154 = vmatpush1.bf16.msra.mxu0 %v3950
        %5155 = vmatprep.subr.bf16.mxu0 0
        %5156 = vmatpush1.bf16.msra.mxu0 %v3949
        %5157 = vmatprep.subr.bf16.mxu0 0
        %5158 = vmatpush2.bf16.msra.mxu0 %v3964
        %5159 = vmatprep.subr.bf16.mxu0 0
        %5160 = vmatpush2.bf16.msra.mxu0 %v3963
        %5161 = vmatprep.subr.bf16.mxu0 0
        %5162 = vmatpush2.bf16.msra.mxu0 %v3962
        %5163 = vmatprep.subr.bf16.mxu0 0
        %5164 = vmatpush2.bf16.msra.mxu0 %v3961
        %5165 = vmatprep.subr.bf16.mxu0 0
        %5166 = vmatpush2.bf16.msra.mxu0 %v3960
        %5167 = vmatprep.subr.bf16.mxu0 0
        %5168 = vmatpush2.bf16.msra.mxu0 %v3959
        %5169 = vmatprep.subr.bf16.mxu0 0
        %5170 = vmatpush2.bf16.msra.mxu0 %v3958
        %5171 = vmatprep.subr.bf16.mxu0 0
        %5172 = vmatpush2.bf16.msra.mxu0 %v3957
        %5173 = vmatprep.mubr.bf16.mxu0 %v1430
        %5174 = vmatmul.mubr.bf16.gmra.mxu0 %v1428
        %v5175 = vpop.f32.mrf.mxu0
        %v5176 = vadd.f32 %v5136, %v5175
        %v5177 = vpop.f32.mrf.mxu0
        %v5178 = vpop.f32.mrf.mxu0
        %v5179 = vpop.f32.mrf.mxu0
        %5180 = vdwg.mxu0
        %5181 = vmatprep.subr.bf16.mxu0 0
        %5182 = vmatpush1.bf16.msra.mxu0 %v3972
        %5183 = vmatprep.subr.bf16.mxu0 0
        %5184 = vmatpush1.bf16.msra.mxu0 %v3971
        %5185 = vmatprep.subr.bf16.mxu0 0
        %5186 = vmatpush1.bf16.msra.mxu0 %v3970
        %5187 = vmatprep.subr.bf16.mxu0 0
        %5188 = vmatpush1.bf16.msra.mxu0 %v3969
        %5189 = vmatprep.subr.bf16.mxu0 0
        %5190 = vmatpush1.bf16.msra.mxu0 %v3968
        %5191 = vmatprep.subr.bf16.mxu0 0
        %5192 = vmatpush1.bf16.msra.mxu0 %v3967
        %5193 = vmatprep.subr.bf16.mxu0 0
        %5194 = vmatpush1.bf16.msra.mxu0 %v3966
        %5195 = vmatprep.subr.bf16.mxu0 0
        %5196 = vmatpush1.bf16.msra.mxu0 %v3965
        %5197 = vmatprep.subr.bf16.mxu0 0
        %5198 = vmatpush2.bf16.msra.mxu0 %v3980
        %5199 = vmatprep.subr.bf16.mxu0 0
        %5200 = vmatpush2.bf16.msra.mxu0 %v3979
        %5201 = vmatprep.subr.bf16.mxu0 0
        %5202 = vmatpush2.bf16.msra.mxu0 %v3978
        %5203 = vmatprep.subr.bf16.mxu0 0
        %5204 = vmatpush2.bf16.msra.mxu0 %v3977
        %5205 = vmatprep.subr.bf16.mxu0 0
        %5206 = vmatpush2.bf16.msra.mxu0 %v3976
        %5207 = vmatprep.subr.bf16.mxu0 0
        %5208 = vmatpush2.bf16.msra.mxu0 %v3975
        %5209 = vmatprep.subr.bf16.mxu0 0
        %5210 = vmatpush2.bf16.msra.mxu0 %v3974
        %5211 = vmatprep.subr.bf16.mxu0 0
        %5212 = vmatpush2.bf16.msra.mxu0 %v3973
        %5213 = vmatprep.mubr.bf16.mxu0 %v1468
        %5214 = vmatmul.mubr.bf16.gmra.mxu0 %v1454
        %v5215 = vpop.f32.mrf.mxu0
        %v5216 = vadd.f32 %v5176, %v5215
        %v5217 = vpop.f32.mrf.mxu0
        %v5218 = vpop.f32.mrf.mxu0
        %v5219 = vpop.f32.mrf.mxu0
        %5220 = vdwg.mxu0
        %5221 = vmatprep.subr.bf16.mxu0 0
        %5222 = vmatpush1.bf16.msra.mxu0 %v3988
        %5223 = vmatprep.subr.bf16.mxu0 0
        %5224 = vmatpush1.bf16.msra.mxu0 %v3987
        %5225 = vmatprep.subr.bf16.mxu0 0
        %5226 = vmatpush1.bf16.msra.mxu0 %v3986
        %5227 = vmatprep.subr.bf16.mxu0 0
        %5228 = vmatpush1.bf16.msra.mxu0 %v3985
        %5229 = vmatprep.subr.bf16.mxu0 0
        %5230 = vmatpush1.bf16.msra.mxu0 %v3984
        %5231 = vmatprep.subr.bf16.mxu0 0
        %5232 = vmatpush1.bf16.msra.mxu0 %v3983
        %5233 = vmatprep.subr.bf16.mxu0 0
        %5234 = vmatpush1.bf16.msra.mxu0 %v3982
        %5235 = vmatprep.subr.bf16.mxu0 0
        %5236 = vmatpush1.bf16.msra.mxu0 %v3981
        %5237 = vmatprep.subr.bf16.mxu0 0
        %5238 = vmatpush2.bf16.msra.mxu0 %v3996
        %5239 = vmatprep.subr.bf16.mxu0 0
        %5240 = vmatpush2.bf16.msra.mxu0 %v3995
        %5241 = vmatprep.subr.bf16.mxu0 0
        %5242 = vmatpush2.bf16.msra.mxu0 %v3994
        %5243 = vmatprep.subr.bf16.mxu0 0
        %5244 = vmatpush2.bf16.msra.mxu0 %v3993
        %5245 = vmatprep.subr.bf16.mxu0 0
        %5246 = vmatpush2.bf16.msra.mxu0 %v3992
        %5247 = vmatprep.subr.bf16.mxu0 0
        %5248 = vmatpush2.bf16.msra.mxu0 %v3991
        %5249 = vmatprep.subr.bf16.mxu0 0
        %5250 = vmatpush2.bf16.msra.mxu0 %v3990
        %5251 = vmatprep.subr.bf16.mxu0 0
        %5252 = vmatpush2.bf16.msra.mxu0 %v3989
        %5253 = vmatprep.mubr.bf16.mxu0 %v1478
        %5254 = vmatmul.mubr.bf16.gmra.mxu0 %v1476
        %v5255 = vpop.f32.mrf.mxu0
        %v5256 = vadd.f32 %v5216, %v5255
        %v5257 = vpop.f32.mrf.mxu0
        %v5258 = vpop.f32.mrf.mxu0
        %v5259 = vpop.f32.mrf.mxu0
        %5260 = vdwg.mxu0
        %5261 = vmatprep.subr.bf16.mxu0 0
        %5262 = vmatpush1.bf16.msra.mxu0 %v4004
        %5263 = vmatprep.subr.bf16.mxu0 0
        %5264 = vmatpush1.bf16.msra.mxu0 %v4003
        %5265 = vmatprep.subr.bf16.mxu0 0
        %5266 = vmatpush1.bf16.msra.mxu0 %v4002
        %5267 = vmatprep.subr.bf16.mxu0 0
        %5268 = vmatpush1.bf16.msra.mxu0 %v4001
        %5269 = vmatprep.subr.bf16.mxu0 0
        %5270 = vmatpush1.bf16.msra.mxu0 %v4000
        %5271 = vmatprep.subr.bf16.mxu0 0
        %5272 = vmatpush1.bf16.msra.mxu0 %v3999
        %5273 = vmatprep.subr.bf16.mxu0 0
        %5274 = vmatpush1.bf16.msra.mxu0 %v3998
        %5275 = vmatprep.subr.bf16.mxu0 0
        %5276 = vmatpush1.bf16.msra.mxu0 %v3997
        %5277 = vmatprep.subr.bf16.mxu0 0
        %5278 = vmatpush2.bf16.msra.mxu0 %v4012
        %5279 = vmatprep.subr.bf16.mxu0 0
        %5280 = vmatpush2.bf16.msra.mxu0 %v4011
        %5281 = vmatprep.subr.bf16.mxu0 0
        %5282 = vmatpush2.bf16.msra.mxu0 %v4010
        %5283 = vmatprep.subr.bf16.mxu0 0
        %5284 = vmatpush2.bf16.msra.mxu0 %v4009
        %5285 = vmatprep.subr.bf16.mxu0 0
        %5286 = vmatpush2.bf16.msra.mxu0 %v4008
        %5287 = vmatprep.subr.bf16.mxu0 0
        %5288 = vmatpush2.bf16.msra.mxu0 %v4007
        %5289 = vmatprep.subr.bf16.mxu0 0
        %5290 = vmatpush2.bf16.msra.mxu0 %v4006
        %5291 = vmatprep.subr.bf16.mxu0 0
        %5292 = vmatpush2.bf16.msra.mxu0 %v4005
        %5293 = vmatprep.mubr.bf16.mxu0 %v1475
        %5294 = vmatmul.mubr.bf16.gmra.mxu0 %v1461
        %v5295 = vpop.f32.mrf.mxu0
        %v5296 = vadd.f32 %v5256, %v5295
        %v5297 = vpop.f32.mrf.mxu0
        %v5298 = vpop.f32.mrf.mxu0
        %v5299 = vpop.f32.mrf.mxu0
        %5300 = vdwg.mxu0
        %5301 = vmatprep.subr.bf16.mxu0 0
        %5302 = vmatpush1.bf16.msra.mxu0 %v4020
        %5303 = vmatprep.subr.bf16.mxu0 0
        %5304 = vmatpush1.bf16.msra.mxu0 %v4019
        %5305 = vmatprep.subr.bf16.mxu0 0
        %5306 = vmatpush1.bf16.msra.mxu0 %v4018
        %5307 = vmatprep.subr.bf16.mxu0 0
        %5308 = vmatpush1.bf16.msra.mxu0 %v4017
        %5309 = vmatprep.subr.bf16.mxu0 0
        %5310 = vmatpush1.bf16.msra.mxu0 %v4016
        %5311 = vmatprep.subr.bf16.mxu0 0
        %5312 = vmatpush1.bf16.msra.mxu0 %v4015
        %5313 = vmatprep.subr.bf16.mxu0 0
        %5314 = vmatpush1.bf16.msra.mxu0 %v4014
        %5315 = vmatprep.subr.bf16.mxu0 0
        %5316 = vmatpush1.bf16.msra.mxu0 %v4013
        %5317 = vmatprep.subr.bf16.mxu0 0
        %5318 = vmatpush2.bf16.msra.mxu0 %v4028
        %5319 = vmatprep.subr.bf16.mxu0 0
        %5320 = vmatpush2.bf16.msra.mxu0 %v4027
        %5321 = vmatprep.subr.bf16.mxu0 0
        %5322 = vmatpush2.bf16.msra.mxu0 %v4026
        %5323 = vmatprep.subr.bf16.mxu0 0
        %5324 = vmatpush2.bf16.msra.mxu0 %v4025
        %5325 = vmatprep.subr.bf16.mxu0 0
        %5326 = vmatpush2.bf16.msra.mxu0 %v4024
        %5327 = vmatprep.subr.bf16.mxu0 0
        %5328 = vmatpush2.bf16.msra.mxu0 %v4023
        %5329 = vmatprep.subr.bf16.mxu0 0
        %5330 = vmatpush2.bf16.msra.mxu0 %v4022
        %5331 = vmatprep.subr.bf16.mxu0 0
        %5332 = vmatpush2.bf16.msra.mxu0 %v4021
        %5333 = vmatprep.mubr.bf16.mxu0 %v1479
        %5334 = vmatmul.mubr.bf16.gmra.mxu0 %v1477
        %v5335 = vpop.f32.mrf.mxu0
        %v5336 = vadd.f32 %v5296, %v5335
        %v5337 = vpop.f32.mrf.mxu0
        %v5338 = vpop.f32.mrf.mxu0
        %v5339 = vpop.f32.mrf.mxu0
        %5340 = vdwg.mxu0
        %5341 = vmatprep.subr.bf16.mxu0 0
        %5342 = vmatpush1.bf16.msra.mxu0 %v4036
        %5343 = vmatprep.subr.bf16.mxu0 0
        %5344 = vmatpush1.bf16.msra.mxu0 %v4035
        %5345 = vmatprep.subr.bf16.mxu0 0
        %5346 = vmatpush1.bf16.msra.mxu0 %v4034
        %5347 = vmatprep.subr.bf16.mxu0 0
        %5348 = vmatpush1.bf16.msra.mxu0 %v4033
        %5349 = vmatprep.subr.bf16.mxu0 0
        %5350 = vmatpush1.bf16.msra.mxu0 %v4032
        %5351 = vmatprep.subr.bf16.mxu0 0
        %5352 = vmatpush1.bf16.msra.mxu0 %v4031
        %5353 = vmatprep.subr.bf16.mxu0 0
        %5354 = vmatpush1.bf16.msra.mxu0 %v4030
        %5355 = vmatprep.subr.bf16.mxu0 0
        %5356 = vmatpush1.bf16.msra.mxu0 %v4029
        %5357 = vmatprep.subr.bf16.mxu0 0
        %5358 = vmatpush2.bf16.msra.mxu0 %v4044
        %5359 = vmatprep.subr.bf16.mxu0 0
        %5360 = vmatpush2.bf16.msra.mxu0 %v4043
        %5361 = vmatprep.subr.bf16.mxu0 0
        %5362 = vmatpush2.bf16.msra.mxu0 %v4042
        %5363 = vmatprep.subr.bf16.mxu0 0
        %5364 = vmatpush2.bf16.msra.mxu0 %v4041
        %5365 = vmatprep.subr.bf16.mxu0 0
        %5366 = vmatpush2.bf16.msra.mxu0 %v4040
        %5367 = vmatprep.subr.bf16.mxu0 0
        %5368 = vmatpush2.bf16.msra.mxu0 %v4039
        %5369 = vmatprep.subr.bf16.mxu0 0
        %5370 = vmatpush2.bf16.msra.mxu0 %v4038
        %5371 = vmatprep.subr.bf16.mxu0 0
        %5372 = vmatpush2.bf16.msra.mxu0 %v4037
        %5373 = vmatprep.mubr.bf16.mxu0 %v1517
        %5374 = vmatmul.mubr.bf16.gmra.mxu0 %v1503
        %v5375 = vpop.f32.mrf.mxu0
        %v5376 = vadd.f32 %v5336, %v5375
        %v5377 = vpop.f32.mrf.mxu0
        %v5378 = vpop.f32.mrf.mxu0
        %v5379 = vpop.f32.mrf.mxu0
        %5380 = vdwg.mxu0
        %5381 = vmatprep.subr.bf16.mxu0 0
        %5382 = vmatpush1.bf16.msra.mxu0 %v4052
        %5383 = vmatprep.subr.bf16.mxu0 0
        %5384 = vmatpush1.bf16.msra.mxu0 %v4051
        %5385 = vmatprep.subr.bf16.mxu0 0
        %5386 = vmatpush1.bf16.msra.mxu0 %v4050
        %5387 = vmatprep.subr.bf16.mxu0 0
        %5388 = vmatpush1.bf16.msra.mxu0 %v4049
        %5389 = vmatprep.subr.bf16.mxu0 0
        %5390 = vmatpush1.bf16.msra.mxu0 %v4048
        %5391 = vmatprep.subr.bf16.mxu0 0
        %5392 = vmatpush1.bf16.msra.mxu0 %v4047
        %5393 = vmatprep.subr.bf16.mxu0 0
        %5394 = vmatpush1.bf16.msra.mxu0 %v4046
        %5395 = vmatprep.subr.bf16.mxu0 0
        %5396 = vmatpush1.bf16.msra.mxu0 %v4045
        %5397 = vmatprep.subr.bf16.mxu0 0
        %5398 = vmatpush2.bf16.msra.mxu0 %v4060
        %5399 = vmatprep.subr.bf16.mxu0 0
        %5400 = vmatpush2.bf16.msra.mxu0 %v4059
        %5401 = vmatprep.subr.bf16.mxu0 0
        %5402 = vmatpush2.bf16.msra.mxu0 %v4058
        %5403 = vmatprep.subr.bf16.mxu0 0
        %5404 = vmatpush2.bf16.msra.mxu0 %v4057
        %5405 = vmatprep.subr.bf16.mxu0 0
        %5406 = vmatpush2.bf16.msra.mxu0 %v4056
        %5407 = vmatprep.subr.bf16.mxu0 0
        %5408 = vmatpush2.bf16.msra.mxu0 %v4055
        %5409 = vmatprep.subr.bf16.mxu0 0
        %5410 = vmatpush2.bf16.msra.mxu0 %v4054
        %5411 = vmatprep.subr.bf16.mxu0 0
        %5412 = vmatpush2.bf16.msra.mxu0 %v4053
        %5413 = vmatprep.mubr.bf16.mxu0 %v1527
        %5414 = vmatmul.mubr.bf16.gmra.mxu0 %v1525
        %v5415 = vpop.f32.mrf.mxu0
        %v5416 = vadd.f32 %v5376, %v5415
        %v5417 = vpop.f32.mrf.mxu0
        %v5418 = vpop.f32.mrf.mxu0
        %v5419 = vpop.f32.mrf.mxu0
        %5420 = vdwg.mxu0
        %5421 = vmatprep.subr.bf16.mxu0 0
        %5422 = vmatpush1.bf16.msra.mxu0 %v4068
        %5423 = vmatprep.subr.bf16.mxu0 0
        %5424 = vmatpush1.bf16.msra.mxu0 %v4067
        %5425 = vmatprep.subr.bf16.mxu0 0
        %5426 = vmatpush1.bf16.msra.mxu0 %v4066
        %5427 = vmatprep.subr.bf16.mxu0 0
        %5428 = vmatpush1.bf16.msra.mxu0 %v4065
        %5429 = vmatprep.subr.bf16.mxu0 0
        %5430 = vmatpush1.bf16.msra.mxu0 %v4064
        %5431 = vmatprep.subr.bf16.mxu0 0
        %5432 = vmatpush1.bf16.msra.mxu0 %v4063
        %5433 = vmatprep.subr.bf16.mxu0 0
        %5434 = vmatpush1.bf16.msra.mxu0 %v4062
        %5435 = vmatprep.subr.bf16.mxu0 0
        %5436 = vmatpush1.bf16.msra.mxu0 %v4061
        %5437 = vmatprep.subr.bf16.mxu0 0
        %5438 = vmatpush2.bf16.msra.mxu0 %v4076
        %5439 = vmatprep.subr.bf16.mxu0 0
        %5440 = vmatpush2.bf16.msra.mxu0 %v4075
        %5441 = vmatprep.subr.bf16.mxu0 0
        %5442 = vmatpush2.bf16.msra.mxu0 %v4074
        %5443 = vmatprep.subr.bf16.mxu0 0
        %5444 = vmatpush2.bf16.msra.mxu0 %v4073
        %5445 = vmatprep.subr.bf16.mxu0 0
        %5446 = vmatpush2.bf16.msra.mxu0 %v4072
        %5447 = vmatprep.subr.bf16.mxu0 0
        %5448 = vmatpush2.bf16.msra.mxu0 %v4071
        %5449 = vmatprep.subr.bf16.mxu0 0
        %5450 = vmatpush2.bf16.msra.mxu0 %v4070
        %5451 = vmatprep.subr.bf16.mxu0 0
        %5452 = vmatpush2.bf16.msra.mxu0 %v4069
        %5453 = vmatprep.mubr.bf16.mxu0 %v1524
        %5454 = vmatmul.mubr.bf16.gmra.mxu0 %v1510
        %v5455 = vpop.f32.mrf.mxu0
        %v5456 = vadd.f32 %v5416, %v5455
        %v5457 = vpop.f32.mrf.mxu0
        %v5458 = vpop.f32.mrf.mxu0
        %v5459 = vpop.f32.mrf.mxu0
        %5460 = vdwg.mxu0
        %5461 = vmatprep.subr.bf16.mxu0 0
        %5462 = vmatpush1.bf16.msra.mxu0 %v4084
        %5463 = vmatprep.subr.bf16.mxu0 0
        %5464 = vmatpush1.bf16.msra.mxu0 %v4083
        %5465 = vmatprep.subr.bf16.mxu0 0
        %5466 = vmatpush1.bf16.msra.mxu0 %v4082
        %5467 = vmatprep.subr.bf16.mxu0 0
        %5468 = vmatpush1.bf16.msra.mxu0 %v4081
        %5469 = vmatprep.subr.bf16.mxu0 0
        %5470 = vmatpush1.bf16.msra.mxu0 %v4080
        %5471 = vmatprep.subr.bf16.mxu0 0
        %5472 = vmatpush1.bf16.msra.mxu0 %v4079
        %5473 = vmatprep.subr.bf16.mxu0 0
        %5474 = vmatpush1.bf16.msra.mxu0 %v4078
        %5475 = vmatprep.subr.bf16.mxu0 0
        %5476 = vmatpush1.bf16.msra.mxu0 %v4077
        %5477 = vmatprep.subr.bf16.mxu0 0
        %5478 = vmatpush2.bf16.msra.mxu0 %v4092
        %5479 = vmatprep.subr.bf16.mxu0 0
        %5480 = vmatpush2.bf16.msra.mxu0 %v4091
        %5481 = vmatprep.subr.bf16.mxu0 0
        %5482 = vmatpush2.bf16.msra.mxu0 %v4090
        %5483 = vmatprep.subr.bf16.mxu0 0
        %5484 = vmatpush2.bf16.msra.mxu0 %v4089
        %5485 = vmatprep.subr.bf16.mxu0 0
        %5486 = vmatpush2.bf16.msra.mxu0 %v4088
        %5487 = vmatprep.subr.bf16.mxu0 0
        %5488 = vmatpush2.bf16.msra.mxu0 %v4087
        %5489 = vmatprep.subr.bf16.mxu0 0
        %5490 = vmatpush2.bf16.msra.mxu0 %v4086
        %5491 = vmatprep.subr.bf16.mxu0 0
        %5492 = vmatpush2.bf16.msra.mxu0 %v4085
        %5493 = vmatprep.mubr.bf16.mxu0 %v1528
        %5494 = vmatmul.mubr.bf16.gmra.mxu0 %v1526
        %v5495 = vpop.f32.mrf.mxu0
        %v5496 = vadd.f32 %v5456, %v5495
        %v5497 = vpop.f32.mrf.mxu0
        %v5498 = vpop.f32.mrf.mxu0
        %v5499 = vpop.f32.mrf.mxu0
        %5500 = vdwg.mxu0
        %5501 = vmatprep.subr.bf16.mxu0 0
        %5502 = vmatpush1.bf16.msra.mxu0 %v4100
        %5503 = vmatprep.subr.bf16.mxu0 0
        %5504 = vmatpush1.bf16.msra.mxu0 %v4099
        %5505 = vmatprep.subr.bf16.mxu0 0
        %5506 = vmatpush1.bf16.msra.mxu0 %v4098
        %5507 = vmatprep.subr.bf16.mxu0 0
        %5508 = vmatpush1.bf16.msra.mxu0 %v4097
        %5509 = vmatprep.subr.bf16.mxu0 0
        %5510 = vmatpush1.bf16.msra.mxu0 %v4096
        %5511 = vmatprep.subr.bf16.mxu0 0
        %5512 = vmatpush1.bf16.msra.mxu0 %v4095
        %5513 = vmatprep.subr.bf16.mxu0 0
        %5514 = vmatpush1.bf16.msra.mxu0 %v4094
        %5515 = vmatprep.subr.bf16.mxu0 0
        %5516 = vmatpush1.bf16.msra.mxu0 %v4093
        %5517 = vmatprep.subr.bf16.mxu0 0
        %5518 = vmatpush2.bf16.msra.mxu0 %v4108
        %5519 = vmatprep.subr.bf16.mxu0 0
        %5520 = vmatpush2.bf16.msra.mxu0 %v4107
        %5521 = vmatprep.subr.bf16.mxu0 0
        %5522 = vmatpush2.bf16.msra.mxu0 %v4106
        %5523 = vmatprep.subr.bf16.mxu0 0
        %5524 = vmatpush2.bf16.msra.mxu0 %v4105
        %5525 = vmatprep.subr.bf16.mxu0 0
        %5526 = vmatpush2.bf16.msra.mxu0 %v4104
        %5527 = vmatprep.subr.bf16.mxu0 0
        %5528 = vmatpush2.bf16.msra.mxu0 %v4103
        %5529 = vmatprep.subr.bf16.mxu0 0
        %5530 = vmatpush2.bf16.msra.mxu0 %v4102
        %5531 = vmatprep.subr.bf16.mxu0 0
        %5532 = vmatpush2.bf16.msra.mxu0 %v4101
        %5533 = vmatprep.mubr.bf16.mxu0 %v1566
        %5534 = vmatmul.mubr.bf16.gmra.mxu0 %v1552
        %v5535 = vpop.f32.mrf.mxu0
        %v5536 = vadd.f32 %v5496, %v5535
        %v5537 = vpop.f32.mrf.mxu0
        %v5538 = vpop.f32.mrf.mxu0
        %v5539 = vpop.f32.mrf.mxu0
        %5540 = vdwg.mxu0
        %5541 = vmatprep.subr.bf16.mxu0 0
        %5542 = vmatpush1.bf16.msra.mxu0 %v4116
        %5543 = vmatprep.subr.bf16.mxu0 0
        %5544 = vmatpush1.bf16.msra.mxu0 %v4115
        %5545 = vmatprep.subr.bf16.mxu0 0
        %5546 = vmatpush1.bf16.msra.mxu0 %v4114
        %5547 = vmatprep.subr.bf16.mxu0 0
        %5548 = vmatpush1.bf16.msra.mxu0 %v4113
        %5549 = vmatprep.subr.bf16.mxu0 0
        %5550 = vmatpush1.bf16.msra.mxu0 %v4112
        %5551 = vmatprep.subr.bf16.mxu0 0
        %5552 = vmatpush1.bf16.msra.mxu0 %v4111
        %5553 = vmatprep.subr.bf16.mxu0 0
        %5554 = vmatpush1.bf16.msra.mxu0 %v4110
        %5555 = vmatprep.subr.bf16.mxu0 0
        %5556 = vmatpush1.bf16.msra.mxu0 %v4109
        %5557 = vmatprep.subr.bf16.mxu0 0
        %5558 = vmatpush2.bf16.msra.mxu0 %v4124
        %5559 = vmatprep.subr.bf16.mxu0 0
        %5560 = vmatpush2.bf16.msra.mxu0 %v4123
        %5561 = vmatprep.subr.bf16.mxu0 0
        %5562 = vmatpush2.bf16.msra.mxu0 %v4122
        %5563 = vmatprep.subr.bf16.mxu0 0
        %5564 = vmatpush2.bf16.msra.mxu0 %v4121
        %5565 = vmatprep.subr.bf16.mxu0 0
        %5566 = vmatpush2.bf16.msra.mxu0 %v4120
        %5567 = vmatprep.subr.bf16.mxu0 0
        %5568 = vmatpush2.bf16.msra.mxu0 %v4119
        %5569 = vmatprep.subr.bf16.mxu0 0
        %5570 = vmatpush2.bf16.msra.mxu0 %v4118
        %5571 = vmatprep.subr.bf16.mxu0 0
        %5572 = vmatpush2.bf16.msra.mxu0 %v4117
        %5573 = vmatprep.mubr.bf16.mxu0 %v1576
        %5574 = vmatmul.mubr.bf16.gmra.mxu0 %v1574
        %v5575 = vpop.f32.mrf.mxu0
        %v5576 = vadd.f32 %v5536, %v5575
        %v5577 = vpop.f32.mrf.mxu0
        %v5578 = vpop.f32.mrf.mxu0
        %v5579 = vpop.f32.mrf.mxu0
        %5580 = vdwg.mxu0
        %5581 = vmatprep.subr.bf16.mxu0 0
        %5582 = vmatpush1.bf16.msra.mxu0 %v4132
        %5583 = vmatprep.subr.bf16.mxu0 0
        %5584 = vmatpush1.bf16.msra.mxu0 %v4131
        %5585 = vmatprep.subr.bf16.mxu0 0
        %5586 = vmatpush1.bf16.msra.mxu0 %v4130
        %5587 = vmatprep.subr.bf16.mxu0 0
        %5588 = vmatpush1.bf16.msra.mxu0 %v4129
        %5589 = vmatprep.subr.bf16.mxu0 0
        %5590 = vmatpush1.bf16.msra.mxu0 %v4128
        %5591 = vmatprep.subr.bf16.mxu0 0
        %5592 = vmatpush1.bf16.msra.mxu0 %v4127
        %5593 = vmatprep.subr.bf16.mxu0 0
        %5594 = vmatpush1.bf16.msra.mxu0 %v4126
        %5595 = vmatprep.subr.bf16.mxu0 0
        %5596 = vmatpush1.bf16.msra.mxu0 %v4125
        %5597 = vmatprep.subr.bf16.mxu0 0
        %5598 = vmatpush2.bf16.msra.mxu0 %v4140
        %5599 = vmatprep.subr.bf16.mxu0 0
        %5600 = vmatpush2.bf16.msra.mxu0 %v4139
        %5601 = vmatprep.subr.bf16.mxu0 0
        %5602 = vmatpush2.bf16.msra.mxu0 %v4138
        %5603 = vmatprep.subr.bf16.mxu0 0
        %5604 = vmatpush2.bf16.msra.mxu0 %v4137
        %5605 = vmatprep.subr.bf16.mxu0 0
        %5606 = vmatpush2.bf16.msra.mxu0 %v4136
        %5607 = vmatprep.subr.bf16.mxu0 0
        %5608 = vmatpush2.bf16.msra.mxu0 %v4135
        %5609 = vmatprep.subr.bf16.mxu0 0
        %5610 = vmatpush2.bf16.msra.mxu0 %v4134
        %5611 = vmatprep.subr.bf16.mxu0 0
        %5612 = vmatpush2.bf16.msra.mxu0 %v4133
        %5613 = vmatprep.mubr.bf16.mxu0 %v1573
        %5614 = vmatmul.mubr.bf16.gmra.mxu0 %v1559
        %v5615 = vpop.f32.mrf.mxu0
        %v5616 = vadd.f32 %v5576, %v5615
        %v5617 = vpop.f32.mrf.mxu0
        %v5618 = vpop.f32.mrf.mxu0
        %v5619 = vpop.f32.mrf.mxu0
        %5620 = vdwg.mxu0
        %5621 = vmatprep.subr.bf16.mxu0 0
        %5622 = vmatpush1.bf16.msra.mxu0 %v4148
        %5623 = vmatprep.subr.bf16.mxu0 0
        %5624 = vmatpush1.bf16.msra.mxu0 %v4147
        %5625 = vmatprep.subr.bf16.mxu0 0
        %5626 = vmatpush1.bf16.msra.mxu0 %v4146
        %5627 = vmatprep.subr.bf16.mxu0 0
        %5628 = vmatpush1.bf16.msra.mxu0 %v4145
        %5629 = vmatprep.subr.bf16.mxu0 0
        %5630 = vmatpush1.bf16.msra.mxu0 %v4144
        %5631 = vmatprep.subr.bf16.mxu0 0
        %5632 = vmatpush1.bf16.msra.mxu0 %v4143
        %5633 = vmatprep.subr.bf16.mxu0 0
        %5634 = vmatpush1.bf16.msra.mxu0 %v4142
        %5635 = vmatprep.subr.bf16.mxu0 0
        %5636 = vmatpush1.bf16.msra.mxu0 %v4141
        %5637 = vmatprep.subr.bf16.mxu0 0
        %5638 = vmatpush2.bf16.msra.mxu0 %v4156
        %5639 = vmatprep.subr.bf16.mxu0 0
        %5640 = vmatpush2.bf16.msra.mxu0 %v4155
        %5641 = vmatprep.subr.bf16.mxu0 0
        %5642 = vmatpush2.bf16.msra.mxu0 %v4154
        %5643 = vmatprep.subr.bf16.mxu0 0
        %5644 = vmatpush2.bf16.msra.mxu0 %v4153
        %5645 = vmatprep.subr.bf16.mxu0 0
        %5646 = vmatpush2.bf16.msra.mxu0 %v4152
        %5647 = vmatprep.subr.bf16.mxu0 0
        %5648 = vmatpush2.bf16.msra.mxu0 %v4151
        %5649 = vmatprep.subr.bf16.mxu0 0
        %5650 = vmatpush2.bf16.msra.mxu0 %v4150
        %5651 = vmatprep.subr.bf16.mxu0 0
        %5652 = vmatpush2.bf16.msra.mxu0 %v4149
        %5653 = vmatprep.mubr.bf16.mxu0 %v1577
        %5654 = vmatmul.mubr.bf16.gmra.mxu0 %v1575
        %v5655 = vpop.f32.mrf.mxu0
        %v5656 = vadd.f32 %v5616, %v5655
        %v5657 = vpop.f32.mrf.mxu0
        %v5658 = vpop.f32.mrf.mxu0
        %v5659 = vpop.f32.mrf.mxu0
        %5660 = vdwg.mxu0
        %5661 = vmatprep.subr.bf16.mxu0 0
        %5662 = vmatpush1.bf16.msra.mxu0 %v4164
        %5663 = vmatprep.subr.bf16.mxu0 0
        %5664 = vmatpush1.bf16.msra.mxu0 %v4163
        %5665 = vmatprep.subr.bf16.mxu0 0
        %5666 = vmatpush1.bf16.msra.mxu0 %v4162
        %5667 = vmatprep.subr.bf16.mxu0 0
        %5668 = vmatpush1.bf16.msra.mxu0 %v4161
        %5669 = vmatprep.subr.bf16.mxu0 0
        %5670 = vmatpush1.bf16.msra.mxu0 %v4160
        %5671 = vmatprep.subr.bf16.mxu0 0
        %5672 = vmatpush1.bf16.msra.mxu0 %v4159
        %5673 = vmatprep.subr.bf16.mxu0 0
        %5674 = vmatpush1.bf16.msra.mxu0 %v4158
        %5675 = vmatprep.subr.bf16.mxu0 0
        %5676 = vmatpush1.bf16.msra.mxu0 %v4157
        %5677 = vmatprep.subr.bf16.mxu0 0
        %5678 = vmatpush2.bf16.msra.mxu0 %v4172
        %5679 = vmatprep.subr.bf16.mxu0 0
        %5680 = vmatpush2.bf16.msra.mxu0 %v4171
        %5681 = vmatprep.subr.bf16.mxu0 0
        %5682 = vmatpush2.bf16.msra.mxu0 %v4170
        %5683 = vmatprep.subr.bf16.mxu0 0
        %5684 = vmatpush2.bf16.msra.mxu0 %v4169
        %5685 = vmatprep.subr.bf16.mxu0 0
        %5686 = vmatpush2.bf16.msra.mxu0 %v4168
        %5687 = vmatprep.subr.bf16.mxu0 0
        %5688 = vmatpush2.bf16.msra.mxu0 %v4167
        %5689 = vmatprep.subr.bf16.mxu0 0
        %5690 = vmatpush2.bf16.msra.mxu0 %v4166
        %5691 = vmatprep.subr.bf16.mxu0 0
        %5692 = vmatpush2.bf16.msra.mxu0 %v4165
        %5693 = vmatprep.mubr.bf16.mxu0 %v1615
        %5694 = vmatmul.mubr.bf16.gmra.mxu0 %v1601
        %v5695 = vpop.f32.mrf.mxu0
        %v5696 = vadd.f32 %v5656, %v5695
        %v5697 = vpop.f32.mrf.mxu0
        %v5698 = vpop.f32.mrf.mxu0
        %v5699 = vpop.f32.mrf.mxu0
        %5700 = vdwg.mxu0
        %5701 = vmatprep.subr.bf16.mxu0 0
        %5702 = vmatpush1.bf16.msra.mxu0 %v4180
        %5703 = vmatprep.subr.bf16.mxu0 0
        %5704 = vmatpush1.bf16.msra.mxu0 %v4179
        %5705 = vmatprep.subr.bf16.mxu0 0
        %5706 = vmatpush1.bf16.msra.mxu0 %v4178
        %5707 = vmatprep.subr.bf16.mxu0 0
        %5708 = vmatpush1.bf16.msra.mxu0 %v4177
        %5709 = vmatprep.subr.bf16.mxu0 0
        %5710 = vmatpush1.bf16.msra.mxu0 %v4176
        %5711 = vmatprep.subr.bf16.mxu0 0
        %5712 = vmatpush1.bf16.msra.mxu0 %v4175
        %5713 = vmatprep.subr.bf16.mxu0 0
        %5714 = vmatpush1.bf16.msra.mxu0 %v4174
        %5715 = vmatprep.subr.bf16.mxu0 0
        %5716 = vmatpush1.bf16.msra.mxu0 %v4173
        %5717 = vmatprep.subr.bf16.mxu0 0
        %5718 = vmatpush2.bf16.msra.mxu0 %v4188
        %5719 = vmatprep.subr.bf16.mxu0 0
        %5720 = vmatpush2.bf16.msra.mxu0 %v4187
        %5721 = vmatprep.subr.bf16.mxu0 0
        %5722 = vmatpush2.bf16.msra.mxu0 %v4186
        %5723 = vmatprep.subr.bf16.mxu0 0
        %5724 = vmatpush2.bf16.msra.mxu0 %v4185
        %5725 = vmatprep.subr.bf16.mxu0 0
        %5726 = vmatpush2.bf16.msra.mxu0 %v4184
        %5727 = vmatprep.subr.bf16.mxu0 0
        %5728 = vmatpush2.bf16.msra.mxu0 %v4183
        %5729 = vmatprep.subr.bf16.mxu0 0
        %5730 = vmatpush2.bf16.msra.mxu0 %v4182
        %5731 = vmatprep.subr.bf16.mxu0 0
        %5732 = vmatpush2.bf16.msra.mxu0 %v4181
        %5733 = vmatprep.mubr.bf16.mxu0 %v1625
        %5734 = vmatmul.mubr.bf16.gmra.mxu0 %v1623
        %v5735 = vpop.f32.mrf.mxu0
        %v5736 = vadd.f32 %v5696, %v5735
        %v5737 = vpop.f32.mrf.mxu0
        %v5738 = vpop.f32.mrf.mxu0
        %v5739 = vpop.f32.mrf.mxu0
        %5740 = vdwg.mxu0
        %5741 = vmatprep.subr.bf16.mxu0 0
        %5742 = vmatpush1.bf16.msra.mxu0 %v4196
        %5743 = vmatprep.subr.bf16.mxu0 0
        %5744 = vmatpush1.bf16.msra.mxu0 %v4195
        %5745 = vmatprep.subr.bf16.mxu0 0
        %5746 = vmatpush1.bf16.msra.mxu0 %v4194
        %5747 = vmatprep.subr.bf16.mxu0 0
        %5748 = vmatpush1.bf16.msra.mxu0 %v4193
        %5749 = vmatprep.subr.bf16.mxu0 0
        %5750 = vmatpush1.bf16.msra.mxu0 %v4192
        %5751 = vmatprep.subr.bf16.mxu0 0
        %5752 = vmatpush1.bf16.msra.mxu0 %v4191
        %5753 = vmatprep.subr.bf16.mxu0 0
        %5754 = vmatpush1.bf16.msra.mxu0 %v4190
        %5755 = vmatprep.subr.bf16.mxu0 0
        %5756 = vmatpush1.bf16.msra.mxu0 %v4189
        %5757 = vmatprep.subr.bf16.mxu0 0
        %5758 = vmatpush2.bf16.msra.mxu0 %v4204
        %5759 = vmatprep.subr.bf16.mxu0 0
        %5760 = vmatpush2.bf16.msra.mxu0 %v4203
        %5761 = vmatprep.subr.bf16.mxu0 0
        %5762 = vmatpush2.bf16.msra.mxu0 %v4202
        %5763 = vmatprep.subr.bf16.mxu0 0
        %5764 = vmatpush2.bf16.msra.mxu0 %v4201
        %5765 = vmatprep.subr.bf16.mxu0 0
        %5766 = vmatpush2.bf16.msra.mxu0 %v4200
        %5767 = vmatprep.subr.bf16.mxu0 0
        %5768 = vmatpush2.bf16.msra.mxu0 %v4199
        %5769 = vmatprep.subr.bf16.mxu0 0
        %5770 = vmatpush2.bf16.msra.mxu0 %v4198
        %5771 = vmatprep.subr.bf16.mxu0 0
        %5772 = vmatpush2.bf16.msra.mxu0 %v4197
        %5773 = vmatprep.mubr.bf16.mxu0 %v1622
        %5774 = vmatmul.mubr.bf16.gmra.mxu0 %v1608
        %v5775 = vpop.f32.mrf.mxu0
        %v5776 = vadd.f32 %v5736, %v5775
        %v5777 = vpop.f32.mrf.mxu0
        %v5778 = vpop.f32.mrf.mxu0
        %v5779 = vpop.f32.mrf.mxu0
        %5780 = vdwg.mxu0
        %5781 = vmatprep.subr.bf16.mxu0 0
        %5782 = vmatpush1.bf16.msra.mxu0 %v4212
        %5783 = vmatprep.subr.bf16.mxu0 0
        %5784 = vmatpush1.bf16.msra.mxu0 %v4211
        %5785 = vmatprep.subr.bf16.mxu0 0
        %5786 = vmatpush1.bf16.msra.mxu0 %v4210
        %5787 = vmatprep.subr.bf16.mxu0 0
        %5788 = vmatpush1.bf16.msra.mxu0 %v4209
        %5789 = vmatprep.subr.bf16.mxu0 0
        %5790 = vmatpush1.bf16.msra.mxu0 %v4208
        %5791 = vmatprep.subr.bf16.mxu0 0
        %5792 = vmatpush1.bf16.msra.mxu0 %v4207
        %5793 = vmatprep.subr.bf16.mxu0 0
        %5794 = vmatpush1.bf16.msra.mxu0 %v4206
        %5795 = vmatprep.subr.bf16.mxu0 0
        %5796 = vmatpush1.bf16.msra.mxu0 %v4205
        %5797 = vmatprep.subr.bf16.mxu0 0
        %5798 = vmatpush2.bf16.msra.mxu0 %v4220
        %5799 = vmatprep.subr.bf16.mxu0 0
        %5800 = vmatpush2.bf16.msra.mxu0 %v4219
        %5801 = vmatprep.subr.bf16.mxu0 0
        %5802 = vmatpush2.bf16.msra.mxu0 %v4218
        %5803 = vmatprep.subr.bf16.mxu0 0
        %5804 = vmatpush2.bf16.msra.mxu0 %v4217
        %5805 = vmatprep.subr.bf16.mxu0 0
        %5806 = vmatpush2.bf16.msra.mxu0 %v4216
        %5807 = vmatprep.subr.bf16.mxu0 0
        %5808 = vmatpush2.bf16.msra.mxu0 %v4215
        %5809 = vmatprep.subr.bf16.mxu0 0
        %5810 = vmatpush2.bf16.msra.mxu0 %v4214
        %5811 = vmatprep.subr.bf16.mxu0 0
        %5812 = vmatpush2.bf16.msra.mxu0 %v4213
        %5813 = vmatprep.mubr.bf16.mxu0 %v1626
        %5814 = vmatmul.mubr.bf16.gmra.mxu0 %v1624
        %v5815 = vpop.f32.mrf.mxu0
        %v5816 = vadd.f32 %v5776, %v5815
        %v5817 = vpop.f32.mrf.mxu0
        %v5818 = vpop.f32.mrf.mxu0
        %v5819 = vpop.f32.mrf.mxu0
        %5820 = vdwg.mxu0
        %5821 = vmatprep.subr.bf16.mxu0 0
        %5822 = vmatpush1.bf16.msra.mxu0 %v4228
        %5823 = vmatprep.subr.bf16.mxu0 0
        %5824 = vmatpush1.bf16.msra.mxu0 %v4227
        %5825 = vmatprep.subr.bf16.mxu0 0
        %5826 = vmatpush1.bf16.msra.mxu0 %v4226
        %5827 = vmatprep.subr.bf16.mxu0 0
        %5828 = vmatpush1.bf16.msra.mxu0 %v4225
        %5829 = vmatprep.subr.bf16.mxu0 0
        %5830 = vmatpush1.bf16.msra.mxu0 %v4224
        %5831 = vmatprep.subr.bf16.mxu0 0
        %5832 = vmatpush1.bf16.msra.mxu0 %v4223
        %5833 = vmatprep.subr.bf16.mxu0 0
        %5834 = vmatpush1.bf16.msra.mxu0 %v4222
        %5835 = vmatprep.subr.bf16.mxu0 0
        %5836 = vmatpush1.bf16.msra.mxu0 %v4221
        %5837 = vmatprep.subr.bf16.mxu0 0
        %5838 = vmatpush2.bf16.msra.mxu0 %v4236
        %5839 = vmatprep.subr.bf16.mxu0 0
        %5840 = vmatpush2.bf16.msra.mxu0 %v4235
        %5841 = vmatprep.subr.bf16.mxu0 0
        %5842 = vmatpush2.bf16.msra.mxu0 %v4234
        %5843 = vmatprep.subr.bf16.mxu0 0
        %5844 = vmatpush2.bf16.msra.mxu0 %v4233
        %5845 = vmatprep.subr.bf16.mxu0 0
        %5846 = vmatpush2.bf16.msra.mxu0 %v4232
        %5847 = vmatprep.subr.bf16.mxu0 0
        %5848 = vmatpush2.bf16.msra.mxu0 %v4231
        %5849 = vmatprep.subr.bf16.mxu0 0
        %5850 = vmatpush2.bf16.msra.mxu0 %v4230
        %5851 = vmatprep.subr.bf16.mxu0 0
        %5852 = vmatpush2.bf16.msra.mxu0 %v4229
        %5853 = vmatprep.mubr.bf16.mxu0 %v1664
        %5854 = vmatmul.mubr.bf16.gmra.mxu0 %v1650
        %v5855 = vpop.f32.mrf.mxu0
        %v5856 = vadd.f32 %v5816, %v5855
        %v5857 = vpop.f32.mrf.mxu0
        %v5858 = vpop.f32.mrf.mxu0
        %v5859 = vpop.f32.mrf.mxu0
        %5860 = vdwg.mxu0
        %5861 = vmatprep.subr.bf16.mxu0 0
        %5862 = vmatpush1.bf16.msra.mxu0 %v4244
        %5863 = vmatprep.subr.bf16.mxu0 0
        %5864 = vmatpush1.bf16.msra.mxu0 %v4243
        %5865 = vmatprep.subr.bf16.mxu0 0
        %5866 = vmatpush1.bf16.msra.mxu0 %v4242
        %5867 = vmatprep.subr.bf16.mxu0 0
        %5868 = vmatpush1.bf16.msra.mxu0 %v4241
        %5869 = vmatprep.subr.bf16.mxu0 0
        %5870 = vmatpush1.bf16.msra.mxu0 %v4240
        %5871 = vmatprep.subr.bf16.mxu0 0
        %5872 = vmatpush1.bf16.msra.mxu0 %v4239
        %5873 = vmatprep.subr.bf16.mxu0 0
        %5874 = vmatpush1.bf16.msra.mxu0 %v4238
        %5875 = vmatprep.subr.bf16.mxu0 0
        %5876 = vmatpush1.bf16.msra.mxu0 %v4237
        %5877 = vmatprep.subr.bf16.mxu0 0
        %5878 = vmatpush2.bf16.msra.mxu0 %v4252
        %5879 = vmatprep.subr.bf16.mxu0 0
        %5880 = vmatpush2.bf16.msra.mxu0 %v4251
        %5881 = vmatprep.subr.bf16.mxu0 0
        %5882 = vmatpush2.bf16.msra.mxu0 %v4250
        %5883 = vmatprep.subr.bf16.mxu0 0
        %5884 = vmatpush2.bf16.msra.mxu0 %v4249
        %5885 = vmatprep.subr.bf16.mxu0 0
        %5886 = vmatpush2.bf16.msra.mxu0 %v4248
        %5887 = vmatprep.subr.bf16.mxu0 0
        %5888 = vmatpush2.bf16.msra.mxu0 %v4247
        %5889 = vmatprep.subr.bf16.mxu0 0
        %5890 = vmatpush2.bf16.msra.mxu0 %v4246
        %5891 = vmatprep.subr.bf16.mxu0 0
        %5892 = vmatpush2.bf16.msra.mxu0 %v4245
        %5893 = vmatprep.mubr.bf16.mxu0 %v1674
        %5894 = vmatmul.mubr.bf16.gmra.mxu0 %v1672
        %v5895 = vpop.f32.mrf.mxu0
        %v5896 = vadd.f32 %v5856, %v5895
        %v5897 = vpop.f32.mrf.mxu0
        %v5898 = vpop.f32.mrf.mxu0
        %v5899 = vpop.f32.mrf.mxu0
        %5900 = vdwg.mxu0
        %5901 = vmatprep.subr.bf16.mxu0 0
        %5902 = vmatpush1.bf16.msra.mxu0 %v4260
        %5903 = vmatprep.subr.bf16.mxu0 0
        %5904 = vmatpush1.bf16.msra.mxu0 %v4259
        %5905 = vmatprep.subr.bf16.mxu0 0
        %5906 = vmatpush1.bf16.msra.mxu0 %v4258
        %5907 = vmatprep.subr.bf16.mxu0 0
        %5908 = vmatpush1.bf16.msra.mxu0 %v4257
        %5909 = vmatprep.subr.bf16.mxu0 0
        %5910 = vmatpush1.bf16.msra.mxu0 %v4256
        %5911 = vmatprep.subr.bf16.mxu0 0
        %5912 = vmatpush1.bf16.msra.mxu0 %v4255
        %5913 = vmatprep.subr.bf16.mxu0 0
        %5914 = vmatpush1.bf16.msra.mxu0 %v4254
        %5915 = vmatprep.subr.bf16.mxu0 0
        %5916 = vmatpush1.bf16.msra.mxu0 %v4253
        %5917 = vmatprep.subr.bf16.mxu0 0
        %5918 = vmatpush2.bf16.msra.mxu0 %v4268
        %5919 = vmatprep.subr.bf16.mxu0 0
        %5920 = vmatpush2.bf16.msra.mxu0 %v4267
        %5921 = vmatprep.subr.bf16.mxu0 0
        %5922 = vmatpush2.bf16.msra.mxu0 %v4266
        %5923 = vmatprep.subr.bf16.mxu0 0
        %5924 = vmatpush2.bf16.msra.mxu0 %v4265
        %5925 = vmatprep.subr.bf16.mxu0 0
        %5926 = vmatpush2.bf16.msra.mxu0 %v4264
        %5927 = vmatprep.subr.bf16.mxu0 0
        %5928 = vmatpush2.bf16.msra.mxu0 %v4263
        %5929 = vmatprep.subr.bf16.mxu0 0
        %5930 = vmatpush2.bf16.msra.mxu0 %v4262
        %5931 = vmatprep.subr.bf16.mxu0 0
        %5932 = vmatpush2.bf16.msra.mxu0 %v4261
        %5933 = vmatprep.mubr.bf16.mxu0 %v1671
        %5934 = vmatmul.mubr.bf16.gmra.mxu0 %v1657
        %v5935 = vpop.f32.mrf.mxu0
        %v5936 = vadd.f32 %v5896, %v5935
        %v5937 = vpop.f32.mrf.mxu0
        %v5938 = vpop.f32.mrf.mxu0
        %v5939 = vpop.f32.mrf.mxu0
        %5940 = vdwg.mxu0
        %5941 = vmatprep.subr.bf16.mxu0 0
        %5942 = vmatpush1.bf16.msra.mxu0 %v4276
        %5943 = vmatprep.subr.bf16.mxu0 0
        %5944 = vmatpush1.bf16.msra.mxu0 %v4275
        %5945 = vmatprep.subr.bf16.mxu0 0
        %5946 = vmatpush1.bf16.msra.mxu0 %v4274
        %5947 = vmatprep.subr.bf16.mxu0 0
        %5948 = vmatpush1.bf16.msra.mxu0 %v4273
        %5949 = vmatprep.subr.bf16.mxu0 0
        %5950 = vmatpush1.bf16.msra.mxu0 %v4272
        %5951 = vmatprep.subr.bf16.mxu0 0
        %5952 = vmatpush1.bf16.msra.mxu0 %v4271
        %5953 = vmatprep.subr.bf16.mxu0 0
        %5954 = vmatpush1.bf16.msra.mxu0 %v4270
        %5955 = vmatprep.subr.bf16.mxu0 0
        %5956 = vmatpush1.bf16.msra.mxu0 %v4269
        %5957 = vmatprep.subr.bf16.mxu0 0
        %5958 = vmatpush2.bf16.msra.mxu0 %v4284
        %5959 = vmatprep.subr.bf16.mxu0 0
        %5960 = vmatpush2.bf16.msra.mxu0 %v4283
        %5961 = vmatprep.subr.bf16.mxu0 0
        %5962 = vmatpush2.bf16.msra.mxu0 %v4282
        %5963 = vmatprep.subr.bf16.mxu0 0
        %5964 = vmatpush2.bf16.msra.mxu0 %v4281
        %5965 = vmatprep.subr.bf16.mxu0 0
        %5966 = vmatpush2.bf16.msra.mxu0 %v4280
        %5967 = vmatprep.subr.bf16.mxu0 0
        %5968 = vmatpush2.bf16.msra.mxu0 %v4279
        %5969 = vmatprep.subr.bf16.mxu0 0
        %5970 = vmatpush2.bf16.msra.mxu0 %v4278
        %5971 = vmatprep.subr.bf16.mxu0 0
        %5972 = vmatpush2.bf16.msra.mxu0 %v4277
        %5973 = vmatprep.mubr.bf16.mxu0 %v1675
        %5974 = vmatmul.mubr.bf16.gmra.mxu0 %v1673
        %v5975 = vpop.f32.mrf.mxu0
        %v5976 = vadd.f32 %v5936, %v5975
        %v5977 = vpop.f32.mrf.mxu0
        %v5978 = vpop.f32.mrf.mxu0
        %v5979 = vpop.f32.mrf.mxu0
        %5980 = vdwg.mxu0
        %5981 = vmatprep.subr.bf16.mxu0 0
        %5982 = vmatpush1.bf16.msra.mxu0 %v4292
        %5983 = vmatprep.subr.bf16.mxu0 0
        %5984 = vmatpush1.bf16.msra.mxu0 %v4291
        %5985 = vmatprep.subr.bf16.mxu0 0
        %5986 = vmatpush1.bf16.msra.mxu0 %v4290
        %5987 = vmatprep.subr.bf16.mxu0 0
        %5988 = vmatpush1.bf16.msra.mxu0 %v4289
        %5989 = vmatprep.subr.bf16.mxu0 0
        %5990 = vmatpush1.bf16.msra.mxu0 %v4288
        %5991 = vmatprep.subr.bf16.mxu0 0
        %5992 = vmatpush1.bf16.msra.mxu0 %v4287
        %5993 = vmatprep.subr.bf16.mxu0 0
        %5994 = vmatpush1.bf16.msra.mxu0 %v4286
        %5995 = vmatprep.subr.bf16.mxu0 0
        %5996 = vmatpush1.bf16.msra.mxu0 %v4285
        %5997 = vmatprep.subr.bf16.mxu0 0
        %5998 = vmatpush2.bf16.msra.mxu0 %v4300
        %5999 = vmatprep.subr.bf16.mxu0 0
        %6000 = vmatpush2.bf16.msra.mxu0 %v4299
        %6001 = vmatprep.subr.bf16.mxu0 0
        %6002 = vmatpush2.bf16.msra.mxu0 %v4298
        %6003 = vmatprep.subr.bf16.mxu0 0
        %6004 = vmatpush2.bf16.msra.mxu0 %v4297
        %6005 = vmatprep.subr.bf16.mxu0 0
        %6006 = vmatpush2.bf16.msra.mxu0 %v4296
        %6007 = vmatprep.subr.bf16.mxu0 0
        %6008 = vmatpush2.bf16.msra.mxu0 %v4295
        %6009 = vmatprep.subr.bf16.mxu0 0
        %6010 = vmatpush2.bf16.msra.mxu0 %v4294
        %6011 = vmatprep.subr.bf16.mxu0 0
        %6012 = vmatpush2.bf16.msra.mxu0 %v4293
        %6013 = vmatprep.mubr.bf16.mxu0 %v1713
        %6014 = vmatmul.mubr.bf16.gmra.mxu0 %v1699
        %v6015 = vpop.f32.mrf.mxu0
        %v6016 = vadd.f32 %v5976, %v6015
        %v6017 = vpop.f32.mrf.mxu0
        %v6018 = vpop.f32.mrf.mxu0
        %v6019 = vpop.f32.mrf.mxu0
        %6020 = vdwg.mxu0
        %6021 = vmatprep.subr.bf16.mxu0 0
        %6022 = vmatpush1.bf16.msra.mxu0 %v4308
        %6023 = vmatprep.subr.bf16.mxu0 0
        %6024 = vmatpush1.bf16.msra.mxu0 %v4307
        %6025 = vmatprep.subr.bf16.mxu0 0
        %6026 = vmatpush1.bf16.msra.mxu0 %v4306
        %6027 = vmatprep.subr.bf16.mxu0 0
        %6028 = vmatpush1.bf16.msra.mxu0 %v4305
        %6029 = vmatprep.subr.bf16.mxu0 0
        %6030 = vmatpush1.bf16.msra.mxu0 %v4304
        %6031 = vmatprep.subr.bf16.mxu0 0
        %6032 = vmatpush1.bf16.msra.mxu0 %v4303
        %6033 = vmatprep.subr.bf16.mxu0 0
        %6034 = vmatpush1.bf16.msra.mxu0 %v4302
        %6035 = vmatprep.subr.bf16.mxu0 0
        %6036 = vmatpush1.bf16.msra.mxu0 %v4301
        %6037 = vmatprep.subr.bf16.mxu0 0
        %6038 = vmatpush2.bf16.msra.mxu0 %v4316
        %6039 = vmatprep.subr.bf16.mxu0 0
        %6040 = vmatpush2.bf16.msra.mxu0 %v4315
        %6041 = vmatprep.subr.bf16.mxu0 0
        %6042 = vmatpush2.bf16.msra.mxu0 %v4314
        %6043 = vmatprep.subr.bf16.mxu0 0
        %6044 = vmatpush2.bf16.msra.mxu0 %v4313
        %6045 = vmatprep.subr.bf16.mxu0 0
        %6046 = vmatpush2.bf16.msra.mxu0 %v4312
        %6047 = vmatprep.subr.bf16.mxu0 0
        %6048 = vmatpush2.bf16.msra.mxu0 %v4311
        %6049 = vmatprep.subr.bf16.mxu0 0
        %6050 = vmatpush2.bf16.msra.mxu0 %v4310
        %6051 = vmatprep.subr.bf16.mxu0 0
        %6052 = vmatpush2.bf16.msra.mxu0 %v4309
        %6053 = vmatprep.mubr.bf16.mxu0 %v1723
        %6054 = vmatmul.mubr.bf16.gmra.mxu0 %v1721
        %v6055 = vpop.f32.mrf.mxu0
        %v6056 = vadd.f32 %v6016, %v6055
        %v6057 = vpop.f32.mrf.mxu0
        %v6058 = vpop.f32.mrf.mxu0
        %v6059 = vpop.f32.mrf.mxu0
        %6060 = vdwg.mxu0
        %6061 = vmatprep.subr.bf16.mxu0 0
        %6062 = vmatpush1.bf16.msra.mxu0 %v4324
        %6063 = vmatprep.subr.bf16.mxu0 0
        %6064 = vmatpush1.bf16.msra.mxu0 %v4323
        %6065 = vmatprep.subr.bf16.mxu0 0
        %6066 = vmatpush1.bf16.msra.mxu0 %v4322
        %6067 = vmatprep.subr.bf16.mxu0 0
        %6068 = vmatpush1.bf16.msra.mxu0 %v4321
        %6069 = vmatprep.subr.bf16.mxu0 0
        %6070 = vmatpush1.bf16.msra.mxu0 %v4320
        %6071 = vmatprep.subr.bf16.mxu0 0
        %6072 = vmatpush1.bf16.msra.mxu0 %v4319
        %6073 = vmatprep.subr.bf16.mxu0 0
        %6074 = vmatpush1.bf16.msra.mxu0 %v4318
        %6075 = vmatprep.subr.bf16.mxu0 0
        %6076 = vmatpush1.bf16.msra.mxu0 %v4317
        %6077 = vmatprep.subr.bf16.mxu0 0
        %6078 = vmatpush2.bf16.msra.mxu0 %v4332
        %6079 = vmatprep.subr.bf16.mxu0 0
        %6080 = vmatpush2.bf16.msra.mxu0 %v4331
        %6081 = vmatprep.subr.bf16.mxu0 0
        %6082 = vmatpush2.bf16.msra.mxu0 %v4330
        %6083 = vmatprep.subr.bf16.mxu0 0
        %6084 = vmatpush2.bf16.msra.mxu0 %v4329
        %6085 = vmatprep.subr.bf16.mxu0 0
        %6086 = vmatpush2.bf16.msra.mxu0 %v4328
        %6087 = vmatprep.subr.bf16.mxu0 0
        %6088 = vmatpush2.bf16.msra.mxu0 %v4327
        %6089 = vmatprep.subr.bf16.mxu0 0
        %6090 = vmatpush2.bf16.msra.mxu0 %v4326
        %6091 = vmatprep.subr.bf16.mxu0 0
        %6092 = vmatpush2.bf16.msra.mxu0 %v4325
        %6093 = vmatprep.mubr.bf16.mxu0 %v1720
        %6094 = vmatmul.mubr.bf16.gmra.mxu0 %v1706
        %v6095 = vpop.f32.mrf.mxu0
        %v6096 = vadd.f32 %v6056, %v6095
        %v6097 = vpop.f32.mrf.mxu0
        %v6098 = vpop.f32.mrf.mxu0
        %v6099 = vpop.f32.mrf.mxu0
        %6100 = vdwg.mxu0
        %6101 = vmatprep.subr.bf16.mxu0 0
        %6102 = vmatpush1.bf16.msra.mxu0 %v4340
        %6103 = vmatprep.subr.bf16.mxu0 0
        %6104 = vmatpush1.bf16.msra.mxu0 %v4339
        %6105 = vmatprep.subr.bf16.mxu0 0
        %6106 = vmatpush1.bf16.msra.mxu0 %v4338
        %6107 = vmatprep.subr.bf16.mxu0 0
        %6108 = vmatpush1.bf16.msra.mxu0 %v4337
        %6109 = vmatprep.subr.bf16.mxu0 0
        %6110 = vmatpush1.bf16.msra.mxu0 %v4336
        %6111 = vmatprep.subr.bf16.mxu0 0
        %6112 = vmatpush1.bf16.msra.mxu0 %v4335
        %6113 = vmatprep.subr.bf16.mxu0 0
        %6114 = vmatpush1.bf16.msra.mxu0 %v4334
        %6115 = vmatprep.subr.bf16.mxu0 0
        %6116 = vmatpush1.bf16.msra.mxu0 %v4333
        %6117 = vmatprep.subr.bf16.mxu0 0
        %6118 = vmatpush2.bf16.msra.mxu0 %v4348
        %6119 = vmatprep.subr.bf16.mxu0 0
        %6120 = vmatpush2.bf16.msra.mxu0 %v4347
        %6121 = vmatprep.subr.bf16.mxu0 0
        %6122 = vmatpush2.bf16.msra.mxu0 %v4346
        %6123 = vmatprep.subr.bf16.mxu0 0
        %6124 = vmatpush2.bf16.msra.mxu0 %v4345
        %6125 = vmatprep.subr.bf16.mxu0 0
        %6126 = vmatpush2.bf16.msra.mxu0 %v4344
        %6127 = vmatprep.subr.bf16.mxu0 0
        %6128 = vmatpush2.bf16.msra.mxu0 %v4343
        %6129 = vmatprep.subr.bf16.mxu0 0
        %6130 = vmatpush2.bf16.msra.mxu0 %v4342
        %6131 = vmatprep.subr.bf16.mxu0 0
        %6132 = vmatpush2.bf16.msra.mxu0 %v4341
        %6133 = vmatprep.mubr.bf16.mxu0 %v1724
        %6134 = vmatmul.mubr.bf16.gmra.mxu0 %v1722
        %v6135 = vpop.f32.mrf.mxu0
        %v6136 = vadd.f32 %v6096, %v6135
        %v6137 = vpop.f32.mrf.mxu0
        %v6138 = vpop.f32.mrf.mxu0
        %v6139 = vpop.f32.mrf.mxu0
        %6140 = vdwg.mxu0
        %v6141 = vadd.f32 %v292, %v6136
        %6142 = vst [vmem:[#allocation2] sm:$0x3] %v6141
        %p6143 = scmp.eq.s32.totalorder %s19, 4
        // Predicated region
        $region53: #{net_forward.5} parent=47 // pred_check
          %p6144 = pneg %p6143
        $region54: #{net_forward.5} parent=47 // pred_check_branch
          %6146 = sbr.rel (%p6144) target = $region56
        $region55: #{net_forward.5} parent=47 // pred_region
          %v6147 = vld [vmem:[#allocation2] sm:$0x3]
          %v6148 = vld [vmem:[%s2] sm:$0x1]
          %v6150 = vlaneseq
          %v6151 = vshrl.u32 %v6150, 7
          %v6152 = vsub.s32 0, %v6151
          %v6153 = vrot.slane %v6148, %v6152
          %v6155 = vadd.f32 %v6147, %v6153
          %v6156 = vmax.f32 %v6155, 0.0
          %v6157 = vld [vmem:[%s3] sm:$0xff]
          %v6158 = vld [vmem:[%s3 + $0x8] sm:$0xff]
          %v6159 = vld [vmem:[%s3 + $0x10] sm:$0xff]
          %v6160 = vld [vmem:[%s3 + $0x18] sm:$0xff]
          %v6161 = vld [vmem:[%s3 + $0x20] sm:$0xff]
          %v6162 = vld [vmem:[%s3 + $0x28] sm:$0xff]
          %v6163 = vld [vmem:[%s3 + $0x30] sm:$0xff]
          %v6164 = vld [vmem:[%s3 + $0x38] sm:$0xff]
          %v6165 = vld [vmem:[%s3 + $0x40] sm:$0xff]
          %v6166 = vld [vmem:[%s3 + $0x48] sm:$0xff]
          %v6167 = vld [vmem:[%s3 + $0x50] sm:$0xff]
          %v6168 = vld [vmem:[%s3 + $0x58] sm:$0xff]
          %v6169 = vld [vmem:[%s3 + $0x60] sm:$0xff]
          %v6170 = vld [vmem:[%s3 + $0x68] sm:$0xff]
          %v6171 = vld [vmem:[%s3 + $0x70] sm:$0xff]
          %v6172 = vld [vmem:[%s3 + $0x78] sm:$0xff]
          %v6173 = vld [vmem:[%s4] sm:$0x1]
          %v6175 = vlaneseq
          %v6176 = vshrl.u32 %v6175, 7
          %v6177 = vsub.s32 0, %v6176
          %v6178 = vrot.slane %v6173, %v6177
          %6180 = vmatprep.subr.mxu0 0.0
          %6181 = vmatpush1.msra.mxu0 %v6172
          %6182 = vmatprep.subr.mxu0 0.0
          %6183 = vmatpush1.msra.mxu0 %v6171
          %6184 = vmatprep.subr.mxu0 0.0
          %6185 = vmatpush1.msra.mxu0 %v6170
          %6186 = vmatprep.subr.mxu0 0.0
          %6187 = vmatpush1.msra.mxu0 %v6169
          %6188 = vmatprep.subr.mxu0 0.0
          %6189 = vmatpush1.msra.mxu0 %v6168
          %6190 = vmatprep.subr.mxu0 0.0
          %6191 = vmatpush1.msra.mxu0 %v6167
          %6192 = vmatprep.subr.mxu0 0.0
          %6193 = vmatpush1.msra.mxu0 %v6166
          %6194 = vmatprep.subr.mxu0 0.0
          %6195 = vmatpush1.msra.mxu0 %v6165
          %6196 = vmatprep.subr.mxu0 0.0
          %6197 = vmatpush1.msra.mxu0 %v6164
          %6198 = vmatprep.subr.mxu0 0.0
          %6199 = vmatpush1.msra.mxu0 %v6163
          %6200 = vmatprep.subr.mxu0 0.0
          %6201 = vmatpush1.msra.mxu0 %v6162
          %6202 = vmatprep.subr.mxu0 0.0
          %6203 = vmatpush1.msra.mxu0 %v6161
          %6204 = vmatprep.subr.mxu0 0.0
          %6205 = vmatpush1.msra.mxu0 %v6160
          %6206 = vmatprep.subr.mxu0 0.0
          %6207 = vmatpush1.msra.mxu0 %v6159
          %6208 = vmatprep.subr.mxu0 0.0
          %6209 = vmatpush1.msra.mxu0 %v6158
          %6210 = vmatprep.subr.mxu0 0.0
          %6211 = vmatpush1.msra.mxu0 %v6157
          %6212 = vmatprep.subr.mxu0 0.0
          %6213 = vmatpush2.msra.mxu0 0.0
          %6214 = vmatprep.subr.mxu0 0.0
          %6215 = vmatpush2.msra.mxu0 0.0
          %6216 = vmatprep.subr.mxu0 0.0
          %6217 = vmatpush2.msra.mxu0 0.0
          %6218 = vmatprep.subr.mxu0 0.0
          %6219 = vmatpush2.msra.mxu0 0.0
          %6220 = vmatprep.subr.mxu0 0.0
          %6221 = vmatpush2.msra.mxu0 0.0
          %6222 = vmatprep.subr.mxu0 0.0
          %6223 = vmatpush2.msra.mxu0 0.0
          %6224 = vmatprep.subr.mxu0 0.0
          %6225 = vmatpush2.msra.mxu0 0.0
          %6226 = vmatprep.subr.mxu0 0.0
          %6227 = vmatpush2.msra.mxu0 0.0
          %6228 = vmatprep.subr.mxu0 0.0
          %6229 = vmatpush2.msra.mxu0 0.0
          %6230 = vmatprep.subr.mxu0 0.0
          %6231 = vmatpush2.msra.mxu0 0.0
          %6232 = vmatprep.subr.mxu0 0.0
          %6233 = vmatpush2.msra.mxu0 0.0
          %6234 = vmatprep.subr.mxu0 0.0
          %6235 = vmatpush2.msra.mxu0 0.0
          %6236 = vmatprep.subr.mxu0 0.0
          %6237 = vmatpush2.msra.mxu0 0.0
          %6238 = vmatprep.subr.mxu0 0.0
          %6239 = vmatpush2.msra.mxu0 0.0
          %6240 = vmatprep.subr.mxu0 0.0
          %6241 = vmatpush2.msra.mxu0 0.0
          %6242 = vmatprep.subr.mxu0 0.0
          %6243 = vmatpush2.msra.mxu0 0.0
          %6244 = vmatprep.mubr.f32.mxu0 0.0
          %6245 = vmatmul.mubr.f32.gmra.mxu0 %v6156
          %v6246 = vpop.f32.mrf.mxu0
          %v6247 = vadd.f32 %v6178, %v6246
          %v6248 = vpop.f32.mrf.mxu0
          %6249 = vdwg.mxu0
          %v6250 = vmax.f32 %v6247, 0.0
          %v6251 = vld [vmem:[%s5] sm:$0xff]
          %v6252 = vld [vmem:[%s5 + $0x8] sm:$0xff]
          %v6253 = vld [vmem:[%s5 + $0x10] sm:$0xff]
          %v6254 = vld [vmem:[%s5 + $0x18] sm:$0xff]
          %v6255 = vld [vmem:[%s5 + $0x20] sm:$0xff]
          %v6256 = vld [vmem:[%s5 + $0x28] sm:$0xff]
          %v6257 = vld [vmem:[%s5 + $0x30] sm:$0xff]
          %v6258 = vld [vmem:[%s5 + $0x38] sm:$0xff]
          %v6259 = vld [vmem:[%s6] sm:$0x1]
          %v6261 = vlaneseq
          %v6262 = vshrl.u32 %v6261, 7
          %v6263 = vsub.s32 0, %v6262
          %v6264 = vrot.slane %v6259, %v6263
          %vm6266 = vcmask 523264
          %v6268 = vsel %vm6266, %v6250, 0
          %6270 = vmatprep.subr.mxu0 0.0
          %6271 = vmatpush1.msra.mxu0 0.0
          %6272 = vmatprep.subr.mxu0 0.0
          %6273 = vmatpush1.msra.mxu0 0.0
          %6274 = vmatprep.subr.mxu0 0.0
          %6275 = vmatpush1.msra.mxu0 0.0
          %6276 = vmatprep.subr.mxu0 0.0
          %6277 = vmatpush1.msra.mxu0 0.0
          %6278 = vmatprep.subr.mxu0 0.0
          %6279 = vmatpush1.msra.mxu0 0.0
          %6280 = vmatprep.subr.mxu0 0.0
          %6281 = vmatpush1.msra.mxu0 0.0
          %6282 = vmatprep.subr.mxu0 0.0
          %6283 = vmatpush1.msra.mxu0 0.0
          %6284 = vmatprep.subr.mxu0 0.0
          %6285 = vmatpush1.msra.mxu0 0.0
          %6286 = vmatprep.subr.mxu0 0.0
          %6287 = vmatpush1.msra.mxu0 %v6258
          %6288 = vmatprep.subr.mxu0 0.0
          %6289 = vmatpush1.msra.mxu0 %v6257
          %6290 = vmatprep.subr.mxu0 0.0
          %6291 = vmatpush1.msra.mxu0 %v6256
          %6292 = vmatprep.subr.mxu0 0.0
          %6293 = vmatpush1.msra.mxu0 %v6255
          %6294 = vmatprep.subr.mxu0 0.0
          %6295 = vmatpush1.msra.mxu0 %v6254
          %6296 = vmatprep.subr.mxu0 0.0
          %6297 = vmatpush1.msra.mxu0 %v6253
          %6298 = vmatprep.subr.mxu0 0.0
          %6299 = vmatpush1.msra.mxu0 %v6252
          %6300 = vmatprep.subr.mxu0 0.0
          %6301 = vmatpush1.msra.mxu0 %v6251
          %6302 = vmatprep.subr.mxu0 0.0
          %6303 = vmatpush2.msra.mxu0 0.0
          %6304 = vmatprep.subr.mxu0 0.0
          %6305 = vmatpush2.msra.mxu0 0.0
          %6306 = vmatprep.subr.mxu0 0.0
          %6307 = vmatpush2.msra.mxu0 0.0
          %6308 = vmatprep.subr.mxu0 0.0
          %6309 = vmatpush2.msra.mxu0 0.0
          %6310 = vmatprep.subr.mxu0 0.0
          %6311 = vmatpush2.msra.mxu0 0.0
          %6312 = vmatprep.subr.mxu0 0.0
          %6313 = vmatpush2.msra.mxu0 0.0
          %6314 = vmatprep.subr.mxu0 0.0
          %6315 = vmatpush2.msra.mxu0 0.0
          %6316 = vmatprep.subr.mxu0 0.0
          %6317 = vmatpush2.msra.mxu0 0.0
          %6318 = vmatprep.subr.mxu0 0.0
          %6319 = vmatpush2.msra.mxu0 0.0
          %6320 = vmatprep.subr.mxu0 0.0
          %6321 = vmatpush2.msra.mxu0 0.0
          %6322 = vmatprep.subr.mxu0 0.0
          %6323 = vmatpush2.msra.mxu0 0.0
          %6324 = vmatprep.subr.mxu0 0.0
          %6325 = vmatpush2.msra.mxu0 0.0
          %6326 = vmatprep.subr.mxu0 0.0
          %6327 = vmatpush2.msra.mxu0 0.0
          %6328 = vmatprep.subr.mxu0 0.0
          %6329 = vmatpush2.msra.mxu0 0.0
          %6330 = vmatprep.subr.mxu0 0.0
          %6331 = vmatpush2.msra.mxu0 0.0
          %6332 = vmatprep.subr.mxu0 0.0
          %6333 = vmatpush2.msra.mxu0 0.0
          %6334 = vmatprep.mubr.f32.mxu0 0.0
          %6335 = vmatmul.mubr.f32.gmra.mxu0 %v6268
          %v6336 = vpop.f32.mrf.mxu0
          %v6337 = vadd.f32 %v6264, %v6336
          %v6338 = vpop.f32.mrf.mxu0
          %6339 = vdwg.mxu0
          %vm6340 = vcmask 9216
          %6341 = vst.msk [vmem:[#allocation3] sm:$0x3] %vm6340, %v6337
        $region56: #{net_forward.5} parent=47 // pred_fallthru
          _
        // Predicated region
        $region57: #{net_forward.5} parent=47 // pred_check
          %p6342 = pneg %p189
        $region58: #{net_forward.5} parent=47 // pred_check_branch
          %6344 = sbr.rel (%p6342) target = $region60
        $region59: #{net_forward.5} parent=47 // pred_region
          %s6346 = ssub.s32 32, 32
          %6347 = vsyncadd [#allocation4], %s6346
          %s6349 = sshll.u32 [#allocation3], 4
          %s6350 = int_to_ptr.vmem [resolvable:$true] %s6349
          %6352 = dma.vmem_to_hbm [thread:$0]  %s6350, 32, %s7, [#allocation4]
        $region60: #{net_forward.5} parent=47 // pred_fallthru
          _
        // Predicated region
        $region61: #{net_forward.5} parent=47 // pred_check
          %p6353 = pneg %p189
        $region62: #{net_forward.5} parent=47 // pred_check_branch
          %6355 = sbr.rel (%p6353) target = $region64
        $region63: #{net_forward.5} parent=47 // pred_region
          %6356 = dma.done [#allocation4], 32
        $region64: #{net_forward.5} parent=47 // pred_fallthru
          _
      $region48: #{net_forward.5} parent=5 // pred_fallthru
        _
      %p6357 = scmp.le.s32.totalorder 2, %s14
      // Predicated region
      $region65: #{net_forward.5} parent=5 // pred_check
        %p6358 = pneg %p6357
      $region66: #{net_forward.5} parent=5 // pred_check_branch
        %6360 = sbr.rel (%p6358) target = $region68
      $region67: #{net_forward.5} parent=5 // pred_region
        %s6361 = ssub.s32 %s14, 2
      $region68: #{net_forward.5} parent=5 // pred_fallthru
        _
    $region6: #{net_forward.5} parent=1 // loop_footer
      %s18 = sadd.s32 1, %s14
    $region7: #{net_forward.5} parent=1 // loop_footer_branch
      %13 = sbr.rel target = $region3
    $region8: #{net_forward.5} parent=1 // loop_exit
      _
    %6362 = vsyncpa [#allocation4], 1
    %s6363 = scalar_lea.sflag [#allocation4], 1
    %6364 = vsyncpa %s6363, 1

</llo_original>
